<compile_context>
chip_gen: v7x
topology: tpu7x:2x2x1
jax: 0.10.0
libtpu: 0.0.40
codegen_flags: <defaults>
</compile_context>

<pallas_src>
import functools

import jax
import jax.numpy as jnp
from jax.experimental import pallas as pl
from jax.experimental.pallas import tpu as pltpu

# Small, CLAM-consistent demo shapes (real CLAM: size=[1024, 512, 256], N ~ 1e3-1e5).
D_IN, D_HID, D_ATT = 64, 32, 16
N_CLASSES = 2
OUT_LANES = 128  # lane-dense output slab width


def clam_kernel(n_valid_ref,            # SMEM prefetch: [B] int32, valid instances per bag
                x_ref,                  # [1, TN, D_IN] bf16
                w_enc_ref, b_enc_ref,   # [D_IN, D_HID] bf16, [1, D_HID] f32
                w_vu_ref, b_vu_ref,     # fused gate: [D_HID, 2*D_ATT_PAD] bf16, [1, 2*D_ATT_PAD] f32
                w_a_ref, b_a_ref,       # [D_ATT_PAD, 1] f32, [1, 1] f32
                w_cls_ref, b_cls_ref,   # [D_HID, C] f32, [1, C] f32
                out_ref,                # [1, 1, OUT_LANES] f32 lane-dense slab
                m_sc, l_sc, acc_sc,     # online-softmax scratch: [1,1], [1,1], [1,D_HID] f32
                *, tn, d_att_pad, n_classes, out_lanes):
    b = pl.program_id(0)
    t = pl.program_id(1)
    NEG = jnp.float32(-1e30)

    @pl.when(t == 0)
    def _():
        m_sc[...] = jnp.full(m_sc.shape, NEG, jnp.float32)
        l_sc[...] = jnp.zeros(l_sc.shape, jnp.float32)
        acc_sc[...] = jnp.zeros(acc_sc.shape, jnp.float32)

    x = x_ref[0]                                                        # [TN, D_IN] bf16

    # ---- encoder: Linear + ReLU (bf16 MXU, f32 accumulate) -----------------------
    h = jnp.dot(x, w_enc_ref[...], preferred_element_type=jnp.float32) + b_enc_ref[...]
    h = jnp.maximum(h, 0.0)                                             # [TN, D_HID] f32

    # ---- gated attention (fused V/U projection, each half 128-lane aligned) ------
    z = (jnp.dot(h.astype(w_vu_ref.dtype), w_vu_ref[...],
                 preferred_element_type=jnp.float32) + b_vu_ref[...])   # [TN, 2*D_ATT_PAD]
    gated = jnp.tanh(z[:, :d_att_pad]) * jax.nn.sigmoid(z[:, d_att_pad:])

    # attention scores on the MXU: Linear(D_ATT, 1); padded lanes contribute 0
    s = jnp.dot(gated, w_a_ref[...], preferred_element_type=jnp.float32) + b_a_ref[...]

    # mask padded instances of the last tile (exp(NEG - m) underflows to 0)
    gidx = t * tn + jax.lax.broadcasted_iota(jnp.int32, s.shape, 0)
    s = jnp.where(gidx < n_valid_ref[b], s, NEG)

    # ---- online softmax over instances (torch: softmax(A.T, dim=1)) --------------
    m_prev = m_sc[...]                                                  # [1, 1]
    m_new = jnp.maximum(m_prev, jnp.max(s, axis=0, keepdims=True))
    alpha = jnp.exp(m_prev - m_new)
    p = jnp.exp(s - m_new)                                              # [TN, 1]
    l_sc[...] = alpha * l_sc[...] + jnp.sum(p, axis=0, keepdims=True)
    # p^T @ h on the MXU: contract the instance axis -> [1, D_HID]
    acc_sc[...] = alpha * acc_sc[...] + jax.lax.dot_general(
        p, h, (((0,), (0,)), ((), ())), preferred_element_type=jnp.float32)
    m_sc[...] = m_new

    # ---- finalize on the last instance tile ---------------------------------------
    @pl.when(t == pl.num_programs(1) - 1)
    def _():
        inv_l = 1.0 / jnp.maximum(l_sc[...], jnp.float32(1e-30))        # guard: empty bag
        M = acc_sc[...] * inv_l                                         # [1, D_HID]
        logits = (jnp.dot(M, w_cls_ref[...], preferred_element_type=jnp.float32)
                  + b_cls_ref[...])                                     # [1, C] f32

        # Y_prob = softmax(logits, dim=1)
        lmax = jnp.max(logits, axis=1, keepdims=True)
        e = jnp.exp(logits - lmax)
        prob = e * (1.0 / jnp.sum(e, axis=1, keepdims=True))

        # Y_hat = argmax(logits, dim=1) (first index attaining the max)
        cidx = jax.lax.broadcasted_iota(jnp.int32, logits.shape, 1)
        yhat = jnp.min(jnp.where(logits == lmax, cidx, jnp.int32(n_classes)),
                       axis=1, keepdims=True).astype(jnp.float32)       # [1, 1]

        # assemble [logits | prob | yhat | 0-pad] in registers; one full-block store
        pad = jnp.zeros((1, out_lanes - 2 * n_classes - 1), jnp.float32)
        row = jnp.concatenate([logits, prob, yhat, pad], axis=1)        # [1, OUT_LANES]
        out_ref[...] = row.reshape(1, 1, out_lanes)


def clam_forward(x, params, *, tn=512):
    """x: [B, N, D_IN] batch of bags (all bags share N here). Returns dict of outputs."""
    (w_enc, b_enc, w_v, b_v, w_u, b_u, w_a, b_a, w_cls, b_cls) = params
    B, N, d_in = x.shape
    d_hid = w_enc.shape[1]
    d_att = w_v.shape[1]
    n_classes = w_cls.shape[1]
    assert 2 * n_classes + 1 <= OUT_LANES

    n_tiles = pl.cdiv(N, tn)
    n_pad = n_tiles * tn - N
    if n_pad:
        x = jnp.pad(x, ((0, 0), (0, n_pad), (0, 0)))

    # Pad each gate half to a 128-lane boundary so tanh/sigmoid halves slice on
    # lane-tile boundaries (padded weight/bias columns are zero -> gated pad = 0,
    # and the padded rows of w_a^T are zero, so scores are unchanged).
    d_att_pad = max(128, ((d_att + 127) // 128) * 128)
    def _pad_gate(w, bias):
        return (jnp.pad(w, ((0, 0), (0, d_att_pad - d_att))),
                jnp.pad(bias, ((0, 0), (0, d_att_pad - d_att))))
    w_v_p, b_v_p = _pad_gate(w_v, b_v)
    w_u_p, b_u_p = _pad_gate(w_u, b_u)
    w_vu = jnp.concatenate([w_v_p, w_u_p], axis=1)               # [D_HID, 2*D_ATT_PAD]
    b_vu = jnp.concatenate([b_v_p, b_u_p], axis=1)               # [1, 2*D_ATT_PAD]
    w_a_t = jnp.pad(w_a.T, ((0, d_att_pad - d_att), (0, 0)))     # [D_ATT_PAD, 1]

    # bf16 for the streamed tensor and the two big weights; f32 accumulation in-kernel.
    x_bf = x.astype(jnp.bfloat16)
    w_enc_bf = w_enc.astype(jnp.bfloat16)
    w_vu_bf = w_vu.astype(jnp.bfloat16)

    n_valid = jnp.full((B,), N, jnp.int32)                       # per-bag valid instances

    # --- explicit VMEM budget (x double-buffer + weights + output + scratch) ------
    x_tile_bytes = tn * d_in * 2                                 # bf16
    weight_bytes = sum(int(a.size) * a.dtype.itemsize for a in
                       (w_enc_bf, b_enc, w_vu_bf, b_vu, w_a_t, b_a, w_cls, b_cls))
    out_bytes = OUT_LANES * 4
    scratch_bytes = (1 + 1 + d_hid) * 4
    footprint = 2 * x_tile_bytes + 2 * weight_bytes + 2 * out_bytes + scratch_bytes
    # generous compiler headroom; stay under v7x's 64 MiB physical VMEM
    vmem_limit = int(min(max(2 * footprint + (8 << 20), 32 << 20), 60 << 20))

    kernel = functools.partial(clam_kernel, tn=tn, d_att_pad=d_att_pad,
                               n_classes=n_classes, out_lanes=OUT_LANES)

    def run(weight_mode):
        def wspec(shape):
            # Constant-index weight blocks: DMA'd once; weight_mode=Buffered(1)
            # drops the dead second VMEM buffer.
            return pl.BlockSpec(shape, lambda b, t, nv: (0, 0), pipeline_mode=weight_mode)

        grid_spec = pltpu.PrefetchScalarGridSpec(
            num_scalar_prefetch=1,
            grid=(B, n_tiles),
            in_specs=[
                pl.BlockSpec((1, tn, d_in), lambda b, t, nv: (b, t, 0)),   # x tile (streamed)
                wspec((d_in, d_hid)),                                      # w_enc
                wspec((1, d_hid)),                                         # b_enc
                wspec((d_hid, 2 * d_att_pad)),                             # w_vu (fused gate)
                wspec((1, 2 * d_att_pad)),                                 # b_vu
                wspec((d_att_pad, 1)),                                     # w_a^T
                wspec((1, 1)),                                             # b_a
                wspec((d_hid, n_classes)),                                 # w_cls
                wspec((1, n_classes)),                                     # b_cls
            ],
            out_specs=pl.BlockSpec((1, 1, OUT_LANES), lambda b, t, nv: (b, 0, 0)),
            scratch_shapes=[
                pltpu.VMEM((1, 1), jnp.float32),        # running max
                pltpu.VMEM((1, 1), jnp.float32),        # running sum
                pltpu.VMEM((1, d_hid), jnp.float32),    # running attn-weighted h
            ],
        )
        return pl.pallas_call(
            kernel,
            out_shape=jax.ShapeDtypeStruct((B, 1, OUT_LANES), jnp.float32),
            grid_spec=grid_spec,
            compiler_params=pltpu.CompilerParams(
                dimension_semantics=("parallel", "arbitrary"),
                vmem_limit_bytes=vmem_limit),
        )(n_valid, x_bf, w_enc_bf, b_enc, w_vu_bf, b_vu, w_a_t, b_a, w_cls, b_cls)

    try:
        slab = run(pl.Buffered(1))   # single-buffer the constant weights
    except Exception:
        # TODO(synk): pipeline_mode=pl.Buffered(1) rejected on this jax/libtpu;
        # fall back to default double-buffering of the (constant-index) weights.
        slab = run(None)

    logits = slab[:, 0, 0:n_classes]
    prob = slab[:, 0, n_classes:2 * n_classes]
    yhat = slab[:, 0, 2 * n_classes].astype(jnp.int32)
    return {"logits": logits, "Y_prob": prob, "Y_hat": yhat}


def make_params(key):
    """Deterministic synthetic parameters (PyTorch Linear shapes, pre-transposed [in,out])."""
    ks = jax.random.split(key, 11)
    s = 0.1
    w_enc = jax.random.normal(ks[0], (D_IN, D_HID), jnp.float32) * s
    b_enc = jax.random.normal(ks[1], (1, D_HID), jnp.float32) * s
    w_v = jax.random.normal(ks[2], (D_HID, D_ATT), jnp.float32) * s
    b_v = jax.random.normal(ks[3], (1, D_ATT), jnp.float32) * s
    w_u = jax.random.normal(ks[4], (D_HID, D_ATT), jnp.float32) * s
    b_u = jax.random.normal(ks[5], (1, D_ATT), jnp.float32) * s
    w_a = jax.random.normal(ks[6], (1, D_ATT), jnp.float32) * s     # Linear(D_ATT, 1) weight
    b_a = jax.random.normal(ks[7], (1, 1), jnp.float32) * s
    w_cls = jax.random.normal(ks[8], (D_HID, N_CLASSES), jnp.float32) * s
    b_cls = jax.random.normal(ks[9], (1, N_CLASSES), jnp.float32) * s
    return (w_enc, b_enc, w_v, b_v, w_u, b_u, w_a, b_a, w_cls, b_cls)


def clam_reference(x, params, compute_dtype=jnp.float32):
    """Pure-JAX single-bag reference mirroring the PyTorch forward (instance_eval=False).

    compute_dtype controls the dtype of the big matmul inputs so the reference
    can mirror the kernel's bf16 compute / f32 accumulate numerics.
    """
    (w_enc, b_enc, w_v, b_v, w_u, b_u, w_a, b_a, w_cls, b_cls) = params
    cd = compute_dtype
    hi = jax.lax.Precision.HIGHEST
    f32 = jnp.float32
    h = jnp.maximum(jnp.dot(x.astype(cd), w_enc.astype(cd),
                            preferred_element_type=f32) + b_enc, 0.0)
    hv = h.astype(cd)
    a_v = jnp.tanh(jnp.dot(hv, w_v.astype(cd), preferred_element_type=f32) + b_v)
    a_u = jax.nn.sigmoid(jnp.dot(hv, w_u.astype(cd), preferred_element_type=f32) + b_u)
    A = jnp.dot(a_v * a_u, w_a.T, precision=hi, preferred_element_type=f32) + b_a   # [N, 1]
    A = jax.nn.softmax(A.T, axis=1)                                                  # [1, N]
    M = jnp.dot(A, h, precision=hi, preferred_element_type=f32)                      # [1, D_HID]
    logits = jnp.dot(M, w_cls, precision=hi, preferred_element_type=f32) + b_cls     # [1, C]
    return {
        "logits": logits,
        "Y_prob": jax.nn.softmax(logits, axis=1),
        "Y_hat": jnp.argmax(logits, axis=1).astype(jnp.int32),
    }


if __name__ == "__main__":
    key = jax.random.PRNGKey(0)
    kx1, kx2, kp = jax.random.split(key, 3)
    params = make_params(kp)

    # Config 1: production-style tile (single padded tile; exercises the mask path).
    B1, N1 = 2, 13
    x1 = jax.random.normal(kx1, (B1, N1, D_IN), jnp.float32)
    out1 = clam_forward(x1, params, tn=512)

    # Config 2: multi-tile online softmax (3 tiles, ragged last tile).
    B2, N2 = 2, 300
    x2 = jax.random.normal(kx2, (B2, N2, D_IN), jnp.float32)
    out2 = clam_forward(x2, params, tn=128)

    out1, out2 = jax.tree_util.tree_map(jax.block_until_ready, (out1, out2))

    for x, out in ((x1, out1), (x2, out2)):
        for b in range(x.shape[0]):
            ref = clam_reference(x[b], params, compute_dtype=jnp.bfloat16)
            assert jnp.allclose(out["logits"][b], ref["logits"][0], atol=2e-3, rtol=2e-3)
            assert jnp.allclose(out["Y_prob"][b], ref["Y_prob"][0], atol=2e-3, rtol=2e-3)
            # in-kernel argmax must be consistent with the kernel's own logits
            assert int(out["Y_hat"][b]) == int(jnp.argmax(out["logits"][b]))

    print("KERNEL_OK")
</pallas_src>

<mosaic_0001>
module attributes {stable_mosaic.version = 11 : i64} {
  func.func @clam_kernel(%arg0: i32, %arg1: i32, %arg2: memref<2xi32, #tpu.memory_space<smem>>, %arg3: memref<1x512x64xbf16, #tpu.memory_space<vmem>>, %arg4: memref<64x32xbf16, #tpu.memory_space<vmem>>, %arg5: memref<1x32xf32, #tpu.memory_space<vmem>>, %arg6: memref<32x256xbf16, #tpu.memory_space<vmem>>, %arg7: memref<1x256xf32, #tpu.memory_space<vmem>>, %arg8: memref<128x1xf32, #tpu.memory_space<vmem>>, %arg9: memref<1x1xf32, #tpu.memory_space<vmem>>, %arg10: memref<32x2xf32, #tpu.memory_space<vmem>>, %arg11: memref<1x2xf32, #tpu.memory_space<vmem>>, %arg12: memref<1x1x128xf32, #tpu.memory_space<vmem>>, %arg13: memref<1x1xf32, #tpu.memory_space<vmem>>, %arg14: memref<1x1xf32, #tpu.memory_space<vmem>>, %arg15: memref<1x32xf32, #tpu.memory_space<vmem>>) attributes {dimension_semantics = [#tpu.dimension_semantics<parallel>, #tpu.dimension_semantics<arbitrary>], iteration_bounds = array<i64: 2, 1>, scalar_prefetch = 1 : i64, scratch_operands = 3 : i64, tpu.core_type = #tpu.core_type<tc>, window_params = [{transform_indices = @transform_0, window_bounds = array<i64: 1, 512, 64>}, {pipeline_mode = #tpu.pipeline_mode<synchronous>, transform_indices = @transform_1, window_bounds = array<i64: 64, 32>}, {pipeline_mode = #tpu.pipeline_mode<synchronous>, transform_indices = @transform_2, window_bounds = array<i64: 1, 32>}, {pipeline_mode = #tpu.pipeline_mode<synchronous>, transform_indices = @transform_3, window_bounds = array<i64: 32, 256>}, {pipeline_mode = #tpu.pipeline_mode<synchronous>, transform_indices = @transform_4, window_bounds = array<i64: 1, 256>}, {pipeline_mode = #tpu.pipeline_mode<synchronous>, transform_indices = @transform_5, window_bounds = array<i64: 128, 1>}, {pipeline_mode = #tpu.pipeline_mode<synchronous>, transform_indices = @transform_6, window_bounds = array<i64: 1, 1>}, {pipeline_mode = #tpu.pipeline_mode<synchronous>, transform_indices = @transform_7, window_bounds = array<i64: 32, 2>}, {pipeline_mode = #tpu.pipeline_mode<synchronous>, transform_indices = @transform_8, window_bounds = array<i64: 1, 2>}, {transform_indices = @transform_9, window_bounds = array<i64: 1, 1, 128>}]} {
    %c0_i32 = arith.constant 0 : i32
    %0 = arith.cmpi eq, %arg1, %c0_i32 : i32
    %1 = arith.extui %0 : i1 to i32
    %cst = arith.constant -1.000000e+30 : f32
    %c0_i32_0 = arith.constant 0 : i32
    %2 = arith.cmpi ne, %1, %c0_i32_0 : i32
    scf.if %2 {
      %67 = vector.broadcast %cst : f32 to vector<1x1xf32>
      %c0_38 = arith.constant 0 : index
      %c0_39 = arith.constant 0 : index
      %68 = vector.load %arg13[%c0_38, %c0_39] : memref<1x1xf32, #tpu.memory_space<vmem>>, vector<1x1xf32>
      tpu.vector_store %arg13[%c0_38, %c0_39], %67 {strides = array<i32>} : memref<1x1xf32, #tpu.memory_space<vmem>>, vector<1x1xf32>,
      %cst_40 = arith.constant 0.000000e+00 : f32
      %69 = vector.broadcast %cst_40 : f32 to vector<1x1xf32>
      %c0_41 = arith.constant 0 : index
      %c0_42 = arith.constant 0 : index
      %70 = vector.load %arg14[%c0_41, %c0_42] : memref<1x1xf32, #tpu.memory_space<vmem>>, vector<1x1xf32>
      tpu.vector_store %arg14[%c0_41, %c0_42], %69 {strides = array<i32>} : memref<1x1xf32, #tpu.memory_space<vmem>>, vector<1x1xf32>,
      %cst_43 = arith.constant 0.000000e+00 : f32
      %71 = vector.broadcast %cst_43 : f32 to vector<1x32xf32>
      %c0_44 = arith.constant 0 : index
      %c0_45 = arith.constant 0 : index
      %72 = vector.load %arg15[%c0_44, %c0_45] : memref<1x32xf32, #tpu.memory_space<vmem>>, vector<1x32xf32>
      tpu.vector_store %arg15[%c0_44, %c0_45], %71 {strides = array<i32>} : memref<1x32xf32, #tpu.memory_space<vmem>>, vector<1x32xf32>,
    } else {
    }
    %c0 = arith.constant 0 : index
    %c0_1 = arith.constant 0 : index
    %c0_2 = arith.constant 0 : index
    %3 = vector.load %arg3[%c0, %c0_1, %c0_2] : memref<1x512x64xbf16, #tpu.memory_space<vmem>>, vector<1x512x64xbf16>
    %4 = vector.shape_cast %3 : vector<1x512x64xbf16> to vector<512x64xbf16>
    %c0_3 = arith.constant 0 : index
    %c0_4 = arith.constant 0 : index
    %5 = vector.load %arg4[%c0_3, %c0_4] : memref<64x32xbf16, #tpu.memory_space<vmem>>, vector<64x32xbf16>
    %cst_5 = arith.constant dense<0.000000e+00> : vector<512x32xf32>
    %6 = tpu.matmul %4, %5, %cst_5 {dimension_numbers = #tpu.dot_dimension_numbers<[1], [0], [0], [1], [0, 0, 1, 1], [], []>} : vector<512x64xbf16>, vector<64x32xbf16>, vector<512x32xf32> -> vector<512x32xf32>
    %c0_6 = arith.constant 0 : index
    %c0_7 = arith.constant 0 : index
    %7 = vector.load %arg5[%c0_6, %c0_7] : memref<1x32xf32, #tpu.memory_space<vmem>>, vector<1x32xf32>
    %8 = vector.broadcast %7 : vector<1x32xf32> to vector<512x32xf32>
    %9 = arith.addf %6, %8 : vector<512x32xf32>
    %cst_8 = arith.constant 0.000000e+00 : f32
    %10 = vector.broadcast %cst_8 : f32 to vector<512x32xf32>
    %11 = arith.maximumf %9, %10 : vector<512x32xf32>
    %12 = arith.truncf %11 : vector<512x32xf32> to vector<512x32xbf16>
    %c0_9 = arith.constant 0 : index
    %c0_10 = arith.constant 0 : index
    %13 = vector.load %arg6[%c0_9, %c0_10] : memref<32x256xbf16, #tpu.memory_space<vmem>>, vector<32x256xbf16>
    %cst_11 = arith.constant dense<0.000000e+00> : vector<512x256xf32>
    %14 = tpu.matmul %12, %13, %cst_11 {dimension_numbers = #tpu.dot_dimension_numbers<[1], [0], [0], [1], [0, 0, 1, 1], [], []>} : vector<512x32xbf16>, vector<32x256xbf16>, vector<512x256xf32> -> vector<512x256xf32>
    %c0_12 = arith.constant 0 : index
    %c0_13 = arith.constant 0 : index
    %15 = vector.load %arg7[%c0_12, %c0_13] : memref<1x256xf32, #tpu.memory_space<vmem>>, vector<1x256xf32>
    %16 = vector.broadcast %15 : vector<1x256xf32> to vector<512x256xf32>
    %17 = arith.addf %14, %16 : vector<512x256xf32>
    %18 = vector.extract_strided_slice %17 {offsets = [0, 0], sizes = [512, 128], strides = [1, 1]} : vector<512x256xf32> to vector<512x128xf32>
    %19 = math.tanh %18 : vector<512x128xf32>
    %20 = vector.extract_strided_slice %17 {offsets = [0, 128], sizes = [512, 128], strides = [1, 1]} : vector<512x256xf32> to vector<512x128xf32>
    %21 = arith.negf %20 : vector<512x128xf32>
    %22 = math.exp %21 : vector<512x128xf32>
    %cst_14 = arith.constant 1.000000e+00 : f32
    %23 = vector.broadcast %cst_14 : f32 to vector<512x128xf32>
    %24 = arith.addf %23, %22 : vector<512x128xf32>
    %25 = arith.divf %23, %24 : vector<512x128xf32>
    %26 = arith.mulf %19, %25 : vector<512x128xf32>
    %c0_15 = arith.constant 0 : index
    %c0_16 = arith.constant 0 : index
    %27 = vector.load %arg8[%c0_15, %c0_16] : memref<128x1xf32, #tpu.memory_space<vmem>>, vector<128x1xf32>
    %cst_17 = arith.constant dense<0.000000e+00> : vector<512x1xf32>
    %28 = tpu.matmul %26, %27, %cst_17 {dimension_numbers = #tpu.dot_dimension_numbers<[1], [0], [0], [1], [0, 0, 1, 1], [], []>} : vector<512x128xf32>, vector<128x1xf32>, vector<512x1xf32> -> vector<512x1xf32>
    %c0_18 = arith.constant 0 : index
    %c0_19 = arith.constant 0 : index
    %29 = vector.load %arg9[%c0_18, %c0_19] : memref<1x1xf32, #tpu.memory_space<vmem>>, vector<1x1xf32>
    %30 = vector.broadcast %29 : vector<1x1xf32> to vector<512x1xf32>
    %31 = arith.addf %28, %30 : vector<512x1xf32>
    %c512_i32 = arith.constant 512 : i32
    %32 = arith.muli %arg1, %c512_i32 : i32
    %33 = tpu.iota {dimensions = array<i32: 0>} : vector<512x1xi32>
    %34 = vector.broadcast %32 : i32 to vector<512x1xi32>
    %35 = arith.addi %34, %33 : vector<512x1xi32>
    %36 = arith.index_cast %arg0 : i32 to index
    %37 = memref.load %arg2[%36] : memref<2xi32, #tpu.memory_space<smem>>
    %38 = vector.broadcast %37 : i32 to vector<512x1xi32>
    %39 = arith.cmpi slt, %35, %38 : vector<512x1xi32>
    %cst_20 = arith.constant -1.000000e+30 : f32
    %40 = vector.broadcast %cst_20 : f32 to vector<512x1xf32>
    %41 = arith.select %39, %31, %40 : vector<512x1xi1>, vector<512x1xf32>
    %c0_21 = arith.constant 0 : index
    %c0_22 = arith.constant 0 : index
    %42 = vector.load %arg13[%c0_21, %c0_22] : memref<1x1xf32, #tpu.memory_space<vmem>>, vector<1x1xf32>
    %cst_23 = arith.constant dense<0xFF800000> : vector<1xf32>
    %43 = vector.multi_reduction <maximumf>, %41, %cst_23 [0] : vector<512x1xf32> to vector<1xf32>
    %44 = vector.shape_cast %43 : vector<1xf32> to vector<1x1xf32>
    %45 = arith.maximumf %42, %44 : vector<1x1xf32>
    %46 = arith.subf %42, %45 : vector<1x1xf32>
    %47 = math.exp %46 : vector<1x1xf32>
    %48 = vector.broadcast %45 : vector<1x1xf32> to vector<512x1xf32>
    %49 = arith.subf %41, %48 : vector<512x1xf32>
    %50 = math.exp %49 : vector<512x1xf32>
    %c0_24 = arith.constant 0 : index
    %c0_25 = arith.constant 0 : index
    %51 = vector.load %arg14[%c0_24, %c0_25] : memref<1x1xf32, #tpu.memory_space<vmem>>, vector<1x1xf32>
    %52 = arith.mulf %47, %51 : vector<1x1xf32>
    %cst_26 = arith.constant dense<0.000000e+00> : vector<1xf32>
    %53 = vector.multi_reduction <add>, %50, %cst_26 [0] : vector<512x1xf32> to vector<1xf32>
    %54 = vector.shape_cast %53 : vector<1xf32> to vector<1x1xf32>
    %55 = arith.addf %52, %54 : vector<1x1xf32>
    %c0_27 = arith.constant 0 : index
    %c0_28 = arith.constant 0 : index
    %56 = vector.load %arg14[%c0_27, %c0_28] : memref<1x1xf32, #tpu.memory_space<vmem>>, vector<1x1xf32>
    tpu.vector_store %arg14[%c0_27, %c0_28], %55 {strides = array<i32>} : memref<1x1xf32, #tpu.memory_space<vmem>>, vector<1x1xf32>,
    %c0_29 = arith.constant 0 : index
    %c0_30 = arith.constant 0 : index
    %57 = vector.load %arg15[%c0_29, %c0_30] : memref<1x32xf32, #tpu.memory_space<vmem>>, vector<1x32xf32>
    %58 = vector.broadcast %47 : vector<1x1xf32> to vector<1x32xf32>
    %59 = arith.mulf %58, %57 : vector<1x32xf32>
    %cst_31 = arith.constant dense<0.000000e+00> : vector<1x32xf32>
    %60 = tpu.matmul %50, %11, %cst_31 {dimension_numbers = #tpu.dot_dimension_numbers<[0], [0], [1], [1], [0, 1, 1, 1], [], []>} : vector<512x1xf32>, vector<512x32xf32>, vector<1x32xf32> -> vector<1x32xf32>
    %61 = arith.addf %59, %60 : vector<1x32xf32>
    %c0_32 = arith.constant 0 : index
    %c0_33 = arith.constant 0 : index
    %62 = vector.load %arg15[%c0_32, %c0_33] : memref<1x32xf32, #tpu.memory_space<vmem>>, vector<1x32xf32>
    tpu.vector_store %arg15[%c0_32, %c0_33], %61 {strides = array<i32>} : memref<1x32xf32, #tpu.memory_space<vmem>>, vector<1x32xf32>,
    %c0_34 = arith.constant 0 : index
    %c0_35 = arith.constant 0 : index
    %63 = vector.load %arg13[%c0_34, %c0_35] : memref<1x1xf32, #tpu.memory_space<vmem>>, vector<1x1xf32>
    tpu.vector_store %arg13[%c0_34, %c0_35], %45 {strides = array<i32>} : memref<1x1xf32, #tpu.memory_space<vmem>>, vector<1x1xf32>,
    %c0_i32_36 = arith.constant 0 : i32
    %64 = arith.cmpi eq, %arg1, %c0_i32_36 : i32
    %65 = arith.extui %64 : i1 to i32
    %c0_i32_37 = arith.constant 0 : i32
    %66 = arith.cmpi ne, %65, %c0_i32_37 : i32
    scf.if %66 {
      %c0_38 = arith.constant 0 : index
      %c0_39 = arith.constant 0 : index
      %67 = vector.load %arg14[%c0_38, %c0_39] : memref<1x1xf32, #tpu.memory_space<vmem>>, vector<1x1xf32>
      %cst_40 = arith.constant 1.000000e-30 : f32
      %68 = vector.broadcast %cst_40 : f32 to vector<1x1xf32>
      %69 = arith.maximumf %67, %68 : vector<1x1xf32>
      %cst_41 = arith.constant 1.000000e+00 : f32
      %70 = vector.broadcast %cst_41 : f32 to vector<1x1xf32>
      %71 = arith.divf %70, %69 : vector<1x1xf32>
      %c0_42 = arith.constant 0 : index
      %c0_43 = arith.constant 0 : index
      %72 = vector.load %arg15[%c0_42, %c0_43] : memref<1x32xf32, #tpu.memory_space<vmem>>, vector<1x32xf32>
      %73 = vector.broadcast %71 : vector<1x1xf32> to vector<1x32xf32>
      %74 = arith.mulf %72, %73 : vector<1x32xf32>
      %c0_44 = arith.constant 0 : index
      %c0_45 = arith.constant 0 : index
      %75 = vector.load %arg10[%c0_44, %c0_45] : memref<32x2xf32, #tpu.memory_space<vmem>>, vector<32x2xf32>
      %cst_46 = arith.constant dense<0.000000e+00> : vector<1x2xf32>
      %76 = tpu.matmul %74, %75, %cst_46 {dimension_numbers = #tpu.dot_dimension_numbers<[1], [0], [0], [1], [0, 0, 1, 1], [], []>} : vector<1x32xf32>, vector<32x2xf32>, vector<1x2xf32> -> vector<1x2xf32>
      %c0_47 = arith.constant 0 : index
      %c0_48 = arith.constant 0 : index
      %77 = vector.load %arg11[%c0_47, %c0_48] : memref<1x2xf32, #tpu.memory_space<vmem>>, vector<1x2xf32>
      %78 = arith.addf %76, %77 : vector<1x2xf32>
      %cst_49 = arith.constant dense<0xFF800000> : vector<1xf32>
      %79 = vector.multi_reduction <maximumf>, %78, %cst_49 [1] : vector<1x2xf32> to vector<1xf32>
      %80 = vector.shape_cast %79 : vector<1xf32> to vector<1x1xf32>
      %81 = vector.broadcast %80 : vector<1x1xf32> to vector<1x2xf32>
      %82 = arith.subf %78, %81 : vector<1x2xf32>
      %83 = math.exp %82 : vector<1x2xf32>
      %cst_50 = arith.constant dense<0.000000e+00> : vector<1xf32>
      %84 = vector.multi_reduction <add>, %83, %cst_50 [1] : vector<1x2xf32> to vector<1xf32>
      %85 = vector.shape_cast %84 : vector<1xf32> to vector<1x1xf32>
      %cst_51 = arith.constant 1.000000e+00 : f32
      %86 = vector.broadcast %cst_51 : f32 to vector<1x1xf32>
      %87 = arith.divf %86, %85 : vector<1x1xf32>
      %88 = vector.broadcast %87 : vector<1x1xf32> to vector<1x2xf32>
      %89 = arith.mulf %83, %88 : vector<1x2xf32>
      %90 = tpu.iota {dimensions = array<i32: 1>} : vector<1x2xi32>
      %91 = vector.broadcast %80 : vector<1x1xf32> to vector<1x2xf32>
      %92 = arith.cmpf oeq, %78, %91 : vector<1x2xf32>
      %c2_i32 = arith.constant 2 : i32
      %93 = vector.broadcast %c2_i32 : i32 to vector<1x2xi32>
      %94 = arith.select %92, %90, %93 : vector<1x2xi1>, vector<1x2xi32>
      %cst_52 = arith.constant dense<2147483647> : vector<1xi32>
      %95 = vector.multi_reduction <minsi>, %94, %cst_52 [1] : vector<1x2xi32> to vector<1xi32>
      %96 = vector.shape_cast %95 : vector<1xi32> to vector<1x1xi32>
      %97 = arith.sitofp %96 : vector<1x1xi32> to vector<1x1xf32>
      %cst_53 = arith.constant 0.000000e+00 : f32
      %98 = vector.broadcast %cst_53 : f32 to vector<1x123xf32>
      %99 = tpu.concatenate %78, %89, %97, %98 in 1 : vector<1x2xf32>, vector<1x2xf32>, vector<1x1xf32>, vector<1x123xf32> -> vector<1x128xf32>
      %100 = vector.shape_cast %99 : vector<1x128xf32> to vector<1x1x128xf32>
      %c0_54 = arith.constant 0 : index
      %c0_55 = arith.constant 0 : index
      %c0_56 = arith.constant 0 : index
      %101 = vector.load %arg12[%c0_54, %c0_55, %c0_56] : memref<1x1x128xf32, #tpu.memory_space<vmem>>, vector<1x1x128xf32>
      tpu.vector_store %arg12[%c0_54, %c0_55, %c0_56], %100 {strides = array<i32>} : memref<1x1x128xf32, #tpu.memory_space<vmem>>, vector<1x1x128xf32>,
    } else {
    }
    return
  }
  func.func @transform_0(%arg0: i32, %arg1: i32, %arg2: memref<2xi32, #tpu.memory_space<smem>>) -> (i32, i32, i32) {
    %c0_i32 = arith.constant 0 : i32
    %c0_i32_0 = arith.constant 0 : i32
    return %arg0, %arg1, %c0_i32 : i32, i32, i32
  }
  func.func @transform_1(%arg0: i32, %arg1: i32, %arg2: memref<2xi32, #tpu.memory_space<smem>>) -> (i32, i32) {
    %c0_i32 = arith.constant 0 : i32
    %c0_i32_0 = arith.constant 0 : i32
    %c0_i32_1 = arith.constant 0 : i32
    return %c0_i32, %c0_i32_0 : i32, i32
  }
  func.func @transform_2(%arg0: i32, %arg1: i32, %arg2: memref<2xi32, #tpu.memory_space<smem>>) -> (i32, i32) {
    %c0_i32 = arith.constant 0 : i32
    %c0_i32_0 = arith.constant 0 : i32
    %c0_i32_1 = arith.constant 0 : i32
    return %c0_i32, %c0_i32_0 : i32, i32
  }
  func.func @transform_3(%arg0: i32, %arg1: i32, %arg2: memref<2xi32, #tpu.memory_space<smem>>) -> (i32, i32) {
    %c0_i32 = arith.constant 0 : i32
    %c0_i32_0 = arith.constant 0 : i32
    %c0_i32_1 = arith.constant 0 : i32
    return %c0_i32, %c0_i32_0 : i32, i32
  }
  func.func @transform_4(%arg0: i32, %arg1: i32, %arg2: memref<2xi32, #tpu.memory_space<smem>>) -> (i32, i32) {
    %c0_i32 = arith.constant 0 : i32
    %c0_i32_0 = arith.constant 0 : i32
    %c0_i32_1 = arith.constant 0 : i32
    return %c0_i32, %c0_i32_0 : i32, i32
  }
  func.func @transform_5(%arg0: i32, %arg1: i32, %arg2: memref<2xi32, #tpu.memory_space<smem>>) -> (i32, i32) {
    %c0_i32 = arith.constant 0 : i32
    %c0_i32_0 = arith.constant 0 : i32
    %c0_i32_1 = arith.constant 0 : i32
    return %c0_i32, %c0_i32_0 : i32, i32
  }
  func.func @transform_6(%arg0: i32, %arg1: i32, %arg2: memref<2xi32, #tpu.memory_space<smem>>) -> (i32, i32) {
    %c0_i32 = arith.constant 0 : i32
    %c0_i32_0 = arith.constant 0 : i32
    %c0_i32_1 = arith.constant 0 : i32
    return %c0_i32, %c0_i32_0 : i32, i32
  }
  func.func @transform_7(%arg0: i32, %arg1: i32, %arg2: memref<2xi32, #tpu.memory_space<smem>>) -> (i32, i32) {
    %c0_i32 = arith.constant 0 : i32
    %c0_i32_0 = arith.constant 0 : i32
    %c0_i32_1 = arith.constant 0 : i32
    return %c0_i32, %c0_i32_0 : i32, i32
  }
  func.func @transform_8(%arg0: i32, %arg1: i32, %arg2: memref<2xi32, #tpu.memory_space<smem>>) -> (i32, i32) {
    %c0_i32 = arith.constant 0 : i32
    %c0_i32_0 = arith.constant 0 : i32
    %c0_i32_1 = arith.constant 0 : i32
    return %c0_i32, %c0_i32_0 : i32, i32
  }
  func.func @transform_9(%arg0: i32, %arg1: i32, %arg2: memref<2xi32, #tpu.memory_space<smem>>) -> (i32, i32, i32) {
    %c0_i32 = arith.constant 0 : i32
    %c0_i32_0 = arith.constant 0 : i32
    %c0_i32_1 = arith.constant 0 : i32
    return %arg0, %c0_i32, %c0_i32_0 : i32, i32, i32
  }
}

module attributes {stable_mosaic.version = 11 : i64} {
  func.func @clam_kernel(%arg0: i32, %arg1: i32, %arg2: memref<2xi32, #tpu.memory_space<smem>>, %arg3: memref<1x512x64xbf16, #tpu.memory_space<vmem>>, %arg4: memref<64x32xbf16, #tpu.memory_space<vmem>>, %arg5: memref<1x32xf32, #tpu.memory_space<vmem>>, %arg6: memref<32x256xbf16, #tpu.memory_space<vmem>>, %arg7: memref<1x256xf32, #tpu.memory_space<vmem>>, %arg8: memref<128x1xf32, #tpu.memory_space<vmem>>, %arg9: memref<1x1xf32, #tpu.memory_space<vmem>>, %arg10: memref<32x2xf32, #tpu.memory_space<vmem>>, %arg11: memref<1x2xf32, #tpu.memory_space<vmem>>, %arg12: memref<1x1x128xf32, #tpu.memory_space<vmem>>, %arg13: memref<1x1xf32, #tpu.memory_space<vmem>>, %arg14: memref<1x1xf32, #tpu.memory_space<vmem>>, %arg15: memref<1x32xf32, #tpu.memory_space<vmem>>) attributes {dimension_semantics = [#tpu.dimension_semantics<parallel>, #tpu.dimension_semantics<arbitrary>], iteration_bounds = array<i64: 2, 1>, scalar_prefetch = 1 : i64, scratch_operands = 3 : i64, tpu.core_type = #tpu.core_type<tc>, window_params = [{transform_indices = @transform_0, window_bounds = array<i64: 1, 512, 64>}, {pipeline_mode = #tpu.pipeline_mode<synchronous>, transform_indices = @transform_1, window_bounds = array<i64: 64, 32>}, {pipeline_mode = #tpu.pipeline_mode<synchronous>, transform_indices = @transform_2, window_bounds = array<i64: 1, 32>}, {pipeline_mode = #tpu.pipeline_mode<synchronous>, transform_indices = @transform_3, window_bounds = array<i64: 32, 256>}, {pipeline_mode = #tpu.pipeline_mode<synchronous>, transform_indices = @transform_4, window_bounds = array<i64: 1, 256>}, {pipeline_mode = #tpu.pipeline_mode<synchronous>, transform_indices = @transform_5, window_bounds = array<i64: 128, 1>}, {pipeline_mode = #tpu.pipeline_mode<synchronous>, transform_indices = @transform_6, window_bounds = array<i64: 1, 1>}, {pipeline_mode = #tpu.pipeline_mode<synchronous>, transform_indices = @transform_7, window_bounds = array<i64: 32, 2>}, {pipeline_mode = #tpu.pipeline_mode<synchronous>, transform_indices = @transform_8, window_bounds = array<i64: 1, 2>}, {transform_indices = @transform_9, window_bounds = array<i64: 1, 1, 128>}]} {
    %c0_i32 = arith.constant 0 : i32
    %0 = arith.cmpi eq, %arg1, %c0_i32 : i32
    %1 = arith.extui %0 : i1 to i32
    %cst = arith.constant -1.000000e+30 : f32
    %c0_i32_0 = arith.constant 0 : i32
    %2 = arith.cmpi ne, %1, %c0_i32_0 : i32
    scf.if %2 {
      %67 = vector.broadcast %cst : f32 to vector<1x1xf32>
      %c0_38 = arith.constant 0 : index
      %c0_39 = arith.constant 0 : index
      %68 = vector.load %arg13[%c0_38, %c0_39] : memref<1x1xf32, #tpu.memory_space<vmem>>, vector<1x1xf32>
      tpu.vector_store %arg13[%c0_38, %c0_39], %67 {strides = array<i32>} : memref<1x1xf32, #tpu.memory_space<vmem>>, vector<1x1xf32>,
      %cst_40 = arith.constant 0.000000e+00 : f32
      %69 = vector.broadcast %cst_40 : f32 to vector<1x1xf32>
      %c0_41 = arith.constant 0 : index
      %c0_42 = arith.constant 0 : index
      %70 = vector.load %arg14[%c0_41, %c0_42] : memref<1x1xf32, #tpu.memory_space<vmem>>, vector<1x1xf32>
      tpu.vector_store %arg14[%c0_41, %c0_42], %69 {strides = array<i32>} : memref<1x1xf32, #tpu.memory_space<vmem>>, vector<1x1xf32>,
      %cst_43 = arith.constant 0.000000e+00 : f32
      %71 = vector.broadcast %cst_43 : f32 to vector<1x32xf32>
      %c0_44 = arith.constant 0 : index
      %c0_45 = arith.constant 0 : index
      %72 = vector.load %arg15[%c0_44, %c0_45] : memref<1x32xf32, #tpu.memory_space<vmem>>, vector<1x32xf32>
      tpu.vector_store %arg15[%c0_44, %c0_45], %71 {strides = array<i32>} : memref<1x32xf32, #tpu.memory_space<vmem>>, vector<1x32xf32>,
    } else {
    }
    %c0 = arith.constant 0 : index
    %c0_1 = arith.constant 0 : index
    %c0_2 = arith.constant 0 : index
    %3 = vector.load %arg3[%c0, %c0_1, %c0_2] : memref<1x512x64xbf16, #tpu.memory_space<vmem>>, vector<1x512x64xbf16>
    %4 = vector.shape_cast %3 : vector<1x512x64xbf16> to vector<512x64xbf16>
    %c0_3 = arith.constant 0 : index
    %c0_4 = arith.constant 0 : index
    %5 = vector.load %arg4[%c0_3, %c0_4] : memref<64x32xbf16, #tpu.memory_space<vmem>>, vector<64x32xbf16>
    %cst_5 = arith.constant dense<0.000000e+00> : vector<512x32xf32>
    %6 = tpu.matmul %4, %5, %cst_5 {dimension_numbers = #tpu.dot_dimension_numbers<[1], [0], [0], [1], [0, 0, 1, 1], [], []>} : vector<512x64xbf16>, vector<64x32xbf16>, vector<512x32xf32> -> vector<512x32xf32>
    %c0_6 = arith.constant 0 : index
    %c0_7 = arith.constant 0 : index
    %7 = vector.load %arg5[%c0_6, %c0_7] : memref<1x32xf32, #tpu.memory_space<vmem>>, vector<1x32xf32>
    %8 = vector.broadcast %7 : vector<1x32xf32> to vector<512x32xf32>
    %9 = arith.addf %6, %8 : vector<512x32xf32>
    %cst_8 = arith.constant 0.000000e+00 : f32
    %10 = vector.broadcast %cst_8 : f32 to vector<512x32xf32>
    %11 = arith.maximumf %9, %10 : vector<512x32xf32>
    %12 = arith.truncf %11 : vector<512x32xf32> to vector<512x32xbf16>
    %c0_9 = arith.constant 0 : index
    %c0_10 = arith.constant 0 : index
    %13 = vector.load %arg6[%c0_9, %c0_10] : memref<32x256xbf16, #tpu.memory_space<vmem>>, vector<32x256xbf16>
    %cst_11 = arith.constant dense<0.000000e+00> : vector<512x256xf32>
    %14 = tpu.matmul %12, %13, %cst_11 {dimension_numbers = #tpu.dot_dimension_numbers<[1], [0], [0], [1], [0, 0, 1, 1], [], []>} : vector<512x32xbf16>, vector<32x256xbf16>, vector<512x256xf32> -> vector<512x256xf32>
    %c0_12 = arith.constant 0 : index
    %c0_13 = arith.constant 0 : index
    %15 = vector.load %arg7[%c0_12, %c0_13] : memref<1x256xf32, #tpu.memory_space<vmem>>, vector<1x256xf32>
    %16 = vector.broadcast %15 : vector<1x256xf32> to vector<512x256xf32>
    %17 = arith.addf %14, %16 : vector<512x256xf32>
    %18 = vector.extract_strided_slice %17 {offsets = [0, 0], sizes = [512, 128], strides = [1, 1]} : vector<512x256xf32> to vector<512x128xf32>
    %19 = math.tanh %18 : vector<512x128xf32>
    %20 = vector.extract_strided_slice %17 {offsets = [0, 128], sizes = [512, 128], strides = [1, 1]} : vector<512x256xf32> to vector<512x128xf32>
    %21 = arith.negf %20 : vector<512x128xf32>
    %22 = math.exp %21 : vector<512x128xf32>
    %cst_14 = arith.constant 1.000000e+00 : f32
    %23 = vector.broadcast %cst_14 : f32 to vector<512x128xf32>
    %24 = arith.addf %23, %22 : vector<512x128xf32>
    %25 = arith.divf %23, %24 : vector<512x128xf32>
    %26 = arith.mulf %19, %25 : vector<512x128xf32>
    %c0_15 = arith.constant 0 : index
    %c0_16 = arith.constant 0 : index
    %27 = vector.load %arg8[%c0_15, %c0_16] : memref<128x1xf32, #tpu.memory_space<vmem>>, vector<128x1xf32>
    %cst_17 = arith.constant dense<0.000000e+00> : vector<512x1xf32>
    %28 = tpu.matmul %26, %27, %cst_17 {dimension_numbers = #tpu.dot_dimension_numbers<[1], [0], [0], [1], [0, 0, 1, 1], [], []>} : vector<512x128xf32>, vector<128x1xf32>, vector<512x1xf32> -> vector<512x1xf32>
    %c0_18 = arith.constant 0 : index
    %c0_19 = arith.constant 0 : index
    %29 = vector.load %arg9[%c0_18, %c0_19] : memref<1x1xf32, #tpu.memory_space<vmem>>, vector<1x1xf32>
    %30 = vector.broadcast %29 : vector<1x1xf32> to vector<512x1xf32>
    %31 = arith.addf %28, %30 : vector<512x1xf32>
    %c512_i32 = arith.constant 512 : i32
    %32 = arith.muli %arg1, %c512_i32 : i32
    %33 = tpu.iota {dimensions = array<i32: 0>} : vector<512x1xi32>
    %34 = vector.broadcast %32 : i32 to vector<512x1xi32>
    %35 = arith.addi %34, %33 : vector<512x1xi32>
    %36 = arith.index_cast %arg0 : i32 to index
    %37 = memref.load %arg2[%36] : memref<2xi32, #tpu.memory_space<smem>>
    %38 = vector.broadcast %37 : i32 to vector<512x1xi32>
    %39 = arith.cmpi slt, %35, %38 : vector<512x1xi32>
    %cst_20 = arith.constant -1.000000e+30 : f32
    %40 = vector.broadcast %cst_20 : f32 to vector<512x1xf32>
    %41 = arith.select %39, %31, %40 : vector<512x1xi1>, vector<512x1xf32>
    %c0_21 = arith.constant 0 : index
    %c0_22 = arith.constant 0 : index
    %42 = vector.load %arg13[%c0_21, %c0_22] : memref<1x1xf32, #tpu.memory_space<vmem>>, vector<1x1xf32>
    %cst_23 = arith.constant dense<0xFF800000> : vector<1xf32>
    %43 = vector.multi_reduction <maximumf>, %41, %cst_23 [0] : vector<512x1xf32> to vector<1xf32>
    %44 = vector.shape_cast %43 : vector<1xf32> to vector<1x1xf32>
    %45 = arith.maximumf %42, %44 : vector<1x1xf32>
    %46 = arith.subf %42, %45 : vector<1x1xf32>
    %47 = math.exp %46 : vector<1x1xf32>
    %48 = vector.broadcast %45 : vector<1x1xf32> to vector<512x1xf32>
    %49 = arith.subf %41, %48 : vector<512x1xf32>
    %50 = math.exp %49 : vector<512x1xf32>
    %c0_24 = arith.constant 0 : index
    %c0_25 = arith.constant 0 : index
    %51 = vector.load %arg14[%c0_24, %c0_25] : memref<1x1xf32, #tpu.memory_space<vmem>>, vector<1x1xf32>
    %52 = arith.mulf %47, %51 : vector<1x1xf32>
    %cst_26 = arith.constant dense<0.000000e+00> : vector<1xf32>
    %53 = vector.multi_reduction <add>, %50, %cst_26 [0] : vector<512x1xf32> to vector<1xf32>
    %54 = vector.shape_cast %53 : vector<1xf32> to vector<1x1xf32>
    %55 = arith.addf %52, %54 : vector<1x1xf32>
    %c0_27 = arith.constant 0 : index
    %c0_28 = arith.constant 0 : index
    %56 = vector.load %arg14[%c0_27, %c0_28] : memref<1x1xf32, #tpu.memory_space<vmem>>, vector<1x1xf32>
    tpu.vector_store %arg14[%c0_27, %c0_28], %55 {strides = array<i32>} : memref<1x1xf32, #tpu.memory_space<vmem>>, vector<1x1xf32>,
    %c0_29 = arith.constant 0 : index
    %c0_30 = arith.constant 0 : index
    %57 = vector.load %arg15[%c0_29, %c0_30] : memref<1x32xf32, #tpu.memory_space<vmem>>, vector<1x32xf32>
    %58 = vector.broadcast %47 : vector<1x1xf32> to vector<1x32xf32>
    %59 = arith.mulf %58, %57 : vector<1x32xf32>
    %cst_31 = arith.constant dense<0.000000e+00> : vector<1x32xf32>
    %60 = tpu.matmul %50, %11, %cst_31 {dimension_numbers = #tpu.dot_dimension_numbers<[0], [0], [1], [1], [0, 1, 1, 1], [], []>} : vector<512x1xf32>, vector<512x32xf32>, vector<1x32xf32> -> vector<1x32xf32>
    %61 = arith.addf %59, %60 : vector<1x32xf32>
    %c0_32 = arith.constant 0 : index
    %c0_33 = arith.constant 0 : index
    %62 = vector.load %arg15[%c0_32, %c0_33] : memref<1x32xf32, #tpu.memory_space<vmem>>, vector<1x32xf32>
    tpu.vector_store %arg15[%c0_32, %c0_33], %61 {strides = array<i32>} : memref<1x32xf32, #tpu.memory_space<vmem>>, vector<1x32xf32>,
    %c0_34 = arith.constant 0 : index
    %c0_35 = arith.constant 0 : index
    %63 = vector.load %arg13[%c0_34, %c0_35] : memref<1x1xf32, #tpu.memory_space<vmem>>, vector<1x1xf32>
    tpu.vector_store %arg13[%c0_34, %c0_35], %45 {strides = array<i32>} : memref<1x1xf32, #tpu.memory_space<vmem>>, vector<1x1xf32>,
    %c0_i32_36 = arith.constant 0 : i32
    %64 = arith.cmpi eq, %arg1, %c0_i32_36 : i32
    %65 = arith.extui %64 : i1 to i32
    %c0_i32_37 = arith.constant 0 : i32
    %66 = arith.cmpi ne, %65, %c0_i32_37 : i32
    scf.if %66 {
      %c0_38 = arith.constant 0 : index
      %c0_39 = arith.constant 0 : index
      %67 = vector.load %arg14[%c0_38, %c0_39] : memref<1x1xf32, #tpu.memory_space<vmem>>, vector<1x1xf32>
      %cst_40 = arith.constant 1.000000e-30 : f32
      %68 = vector.broadcast %cst_40 : f32 to vector<1x1xf32>
      %69 = arith.maximumf %67, %68 : vector<1x1xf32>
      %cst_41 = arith.constant 1.000000e+00 : f32
      %70 = vector.broadcast %cst_41 : f32 to vector<1x1xf32>
      %71 = arith.divf %70, %69 : vector<1x1xf32>
      %c0_42 = arith.constant 0 : index
      %c0_43 = arith.constant 0 : index
      %72 = vector.load %arg15[%c0_42, %c0_43] : memref<1x32xf32, #tpu.memory_space<vmem>>, vector<1x32xf32>
      %73 = vector.broadcast %71 : vector<1x1xf32> to vector<1x32xf32>
      %74 = arith.mulf %72, %73 : vector<1x32xf32>
      %c0_44 = arith.constant 0 : index
      %c0_45 = arith.constant 0 : index
      %75 = vector.load %arg10[%c0_44, %c0_45] : memref<32x2xf32, #tpu.memory_space<vmem>>, vector<32x2xf32>
      %cst_46 = arith.constant dense<0.000000e+00> : vector<1x2xf32>
      %76 = tpu.matmul %74, %75, %cst_46 {dimension_numbers = #tpu.dot_dimension_numbers<[1], [0], [0], [1], [0, 0, 1, 1], [], []>} : vector<1x32xf32>, vector<32x2xf32>, vector<1x2xf32> -> vector<1x2xf32>
      %c0_47 = arith.constant 0 : index
      %c0_48 = arith.constant 0 : index
      %77 = vector.load %arg11[%c0_47, %c0_48] : memref<1x2xf32, #tpu.memory_space<vmem>>, vector<1x2xf32>
      %78 = arith.addf %76, %77 : vector<1x2xf32>
      %cst_49 = arith.constant dense<0xFF800000> : vector<1xf32>
      %79 = vector.multi_reduction <maximumf>, %78, %cst_49 [1] : vector<1x2xf32> to vector<1xf32>
      %80 = vector.shape_cast %79 : vector<1xf32> to vector<1x1xf32>
      %81 = vector.broadcast %80 : vector<1x1xf32> to vector<1x2xf32>
      %82 = arith.subf %78, %81 : vector<1x2xf32>
      %83 = math.exp %82 : vector<1x2xf32>
      %cst_50 = arith.constant dense<0.000000e+00> : vector<1xf32>
      %84 = vector.multi_reduction <add>, %83, %cst_50 [1] : vector<1x2xf32> to vector<1xf32>
      %85 = vector.shape_cast %84 : vector<1xf32> to vector<1x1xf32>
      %cst_51 = arith.constant 1.000000e+00 : f32
      %86 = vector.broadcast %cst_51 : f32 to vector<1x1xf32>
      %87 = arith.divf %86, %85 : vector<1x1xf32>
      %88 = vector.broadcast %87 : vector<1x1xf32> to vector<1x2xf32>
      %89 = arith.mulf %83, %88 : vector<1x2xf32>
      %90 = tpu.iota {dimensions = array<i32: 1>} : vector<1x2xi32>
      %91 = vector.broadcast %80 : vector<1x1xf32> to vector<1x2xf32>
      %92 = arith.cmpf oeq, %78, %91 : vector<1x2xf32>
      %c2_i32 = arith.constant 2 : i32
      %93 = vector.broadcast %c2_i32 : i32 to vector<1x2xi32>
      %94 = arith.select %92, %90, %93 : vector<1x2xi1>, vector<1x2xi32>
      %cst_52 = arith.constant dense<2147483647> : vector<1xi32>
      %95 = vector.multi_reduction <minsi>, %94, %cst_52 [1] : vector<1x2xi32> to vector<1xi32>
      %96 = vector.shape_cast %95 : vector<1xi32> to vector<1x1xi32>
      %97 = arith.sitofp %96 : vector<1x1xi32> to vector<1x1xf32>
      %cst_53 = arith.constant 0.000000e+00 : f32
      %98 = vector.broadcast %cst_53 : f32 to vector<1x123xf32>
      %99 = tpu.concatenate %78, %89, %97, %98 in 1 : vector<1x2xf32>, vector<1x2xf32>, vector<1x1xf32>, vector<1x123xf32> -> vector<1x128xf32>
      %100 = vector.shape_cast %99 : vector<1x128xf32> to vector<1x1x128xf32>
      %c0_54 = arith.constant 0 : index
      %c0_55 = arith.constant 0 : index
      %c0_56 = arith.constant 0 : index
      %101 = vector.load %arg12[%c0_54, %c0_55, %c0_56] : memref<1x1x128xf32, #tpu.memory_space<vmem>>, vector<1x1x128xf32>
      tpu.vector_store %arg12[%c0_54, %c0_55, %c0_56], %100 {strides = array<i32>} : memref<1x1x128xf32, #tpu.memory_space<vmem>>, vector<1x1x128xf32>,
    } else {
    }
    return
  }
  func.func @transform_0(%arg0: i32, %arg1: i32, %arg2: memref<2xi32, #tpu.memory_space<smem>>) -> (i32, i32, i32) {
    %c0_i32 = arith.constant 0 : i32
    %c0_i32_0 = arith.constant 0 : i32
    return %arg0, %arg1, %c0_i32 : i32, i32, i32
  }
  func.func @transform_1(%arg0: i32, %arg1: i32, %arg2: memref<2xi32, #tpu.memory_space<smem>>) -> (i32, i32) {
    %c0_i32 = arith.constant 0 : i32
    %c0_i32_0 = arith.constant 0 : i32
    %c0_i32_1 = arith.constant 0 : i32
    return %c0_i32, %c0_i32_0 : i32, i32
  }
  func.func @transform_2(%arg0: i32, %arg1: i32, %arg2: memref<2xi32, #tpu.memory_space<smem>>) -> (i32, i32) {
    %c0_i32 = arith.constant 0 : i32
    %c0_i32_0 = arith.constant 0 : i32
    %c0_i32_1 = arith.constant 0 : i32
    return %c0_i32, %c0_i32_0 : i32, i32
  }
  func.func @transform_3(%arg0: i32, %arg1: i32, %arg2: memref<2xi32, #tpu.memory_space<smem>>) -> (i32, i32) {
    %c0_i32 = arith.constant 0 : i32
    %c0_i32_0 = arith.constant 0 : i32
    %c0_i32_1 = arith.constant 0 : i32
    return %c0_i32, %c0_i32_0 : i32, i32
  }
  func.func @transform_4(%arg0: i32, %arg1: i32, %arg2: memref<2xi32, #tpu.memory_space<smem>>) -> (i32, i32) {
    %c0_i32 = arith.constant 0 : i32
    %c0_i32_0 = arith.constant 0 : i32
    %c0_i32_1 = arith.constant 0 : i32
    return %c0_i32, %c0_i32_0 : i32, i32
  }
  func.func @transform_5(%arg0: i32, %arg1: i32, %arg2: memref<2xi32, #tpu.memory_space<smem>>) -> (i32, i32) {
    %c0_i32 = arith.constant 0 : i32
    %c0_i32_0 = arith.constant 0 : i32
    %c0_i32_1 = arith.constant 0 : i32
    return %c0_i32, %c0_i32_0 : i32, i32
  }
  func.func @transform_6(%arg0: i32, %arg1: i32, %arg2: memref<2xi32, #tpu.memory_space<smem>>) -> (i32, i32) {
    %c0_i32 = arith.constant 0 : i32
    %c0_i32_0 = arith.constant 0 : i32
    %c0_i32_1 = arith.constant 0 : i32
    return %c0_i32, %c0_i32_0 : i32, i32
  }
  func.func @transform_7(%arg0: i32, %arg1: i32, %arg2: memref<2xi32, #tpu.memory_space<smem>>) -> (i32, i32) {
    %c0_i32 = arith.constant 0 : i32
    %c0_i32_0 = arith.constant 0 : i32
    %c0_i32_1 = arith.constant 0 : i32
    return %c0_i32, %c0_i32_0 : i32, i32
  }
  func.func @transform_8(%arg0: i32, %arg1: i32, %arg2: memref<2xi32, #tpu.memory_space<smem>>) -> (i32, i32) {
    %c0_i32 = arith.constant 0 : i32
    %c0_i32_0 = arith.constant 0 : i32
    %c0_i32_1 = arith.constant 0 : i32
    return %c0_i32, %c0_i32_0 : i32, i32
  }
  func.func @transform_9(%arg0: i32, %arg1: i32, %arg2: memref<2xi32, #tpu.memory_space<smem>>) -> (i32, i32, i32) {
    %c0_i32 = arith.constant 0 : i32
    %c0_i32_0 = arith.constant 0 : i32
    %c0_i32_1 = arith.constant 0 : i32
    return %arg0, %c0_i32, %c0_i32_0 : i32, i32, i32
  }
}

</mosaic_0001>

<llo_original>
// kernel: tpu_custom_call.1
$region0: #{tpu_custom_call.1}
  #allocation0 [shape = 'u32[]', space=smem, size = 0x4, offset = 0x4, fixed_abs, tag = 'smem constant byte address 0x4 - core index']
  #allocation1 [shape = 'u32[144,128]{1,0:T(1,128)}', space=vmem, size = 0x12000, scoped, tag = 'internal scratch']
  #allocation2 [shape = 'f32[1,1]{1,0:T(1,128)}', space=vmem, size = 0x200, scoped, tag = 'scratch operand']
  #allocation3 [shape = 'f32[1,1]{1,0:T(1,128)}', space=vmem, size = 0x200, scoped, tag = 'scratch operand']
  #allocation4 [shape = 'f32[1,32]{1,0:T(1,128)}', space=vmem, size = 0x200, scoped, tag = 'scratch operand']
  #allocation5 [shape = 's32[1]{0}', space=sflag, size = 0x4, scoped, tag = 'scoped memory for tpu_custom_call.1']
  #allocation6 [shape = 'u8[512]{0}', space=smem, size = 0x200, scoped, tag = 'prefetched SMEM operand 0']
  #allocation7 [shape = 'f32[1,1]{1,0:T(1,128)S(1)}', space=vmem, size = 0x200, scoped, tag = 'scoped memory for tpu_custom_call.1']
  %s0 = inlined_call_operand.vmem [shape: s32[2], index: 0, kind: input, shape index: {}]
  %s1 = inlined_call_operand.vmem [shape: bf16[2,512,64], index: 1, kind: input, shape index: {}]
  %s2 = inlined_call_operand.vmem [shape: bf16[64,32], index: 2, kind: input, shape index: {}]
  %s3 = inlined_call_operand.vmem [shape: f32[1,32], index: 3, kind: input, shape index: {}]
  %s4 = inlined_call_operand.vmem [shape: bf16[32,256], index: 4, kind: input, shape index: {}]
  %s5 = inlined_call_operand.vmem [shape: f32[1,256], index: 5, kind: input, shape index: {}]
  %s6 = inlined_call_operand.vmem [shape: f32[128,1], index: 6, kind: input, shape index: {}]
  %s7 = inlined_call_operand.<no memory space> [shape: f32[1,1], index: 7, kind: input, shape index: {}]
  %s8 = inlined_call_operand.vmem [shape: f32[32,2], index: 8, kind: input, shape index: {}]
  %s9 = inlined_call_operand.vmem [shape: f32[1,2], index: 9, kind: input, shape index: {}]
  %s10 = inlined_call_operand.hbm [shape: f32[2,1,128], index: 10, kind: output, shape index: {}]
  %s11 = sld [smem:[#allocation0]]
  $region77: #{tpu_custom_call.1} parent=0
    _
  %s13 = ssub.s32 1, %s11
  %s14 = scalar_select 0, %s13, %s11
  %s15 = sshll.u32 %s0, 4
  %s16 = int_to_ptr.vmem [resolvable:$true] %s15
  %18 = dma.vmem_to_smem %s16, 16, [#allocation6], [#allocation5]
  %v19 = vstv %s7
  %20 = vst [vmem:[#allocation7] sm:$0x1] %v19
  %21 = dma.done [#allocation5], 16
  %22 = sfence
  $region1: #{tpu_custom_call.1} parent=0
    #allocation8 [shape = 'u8[1024]{0}', space=vmem, size = 0x400, scoped, tag = 'output window, operand 0']
    #allocation9 [shape = 's32[2]{0}', space=sflag, size = 0x8, scoped, tag = 'scoped memory for tpu_custom_call.1']
    %23 = vsyncpa [#allocation9], 0
    %s24 = scalar_lea.sflag [#allocation9], 1
    %25 = vsyncpa %s24, 0
    loop: start=0, step=1, limit=4
    $region2: #{tpu_custom_call.1} parent=1 // loop_pre_header
      _
    $region3: #{tpu_custom_call.1} parent=1 // loop_header
      %s27 = sphi 0, %s31
      %p28 = scmp.ge.s32.totalorder %s27, 4
      %s34 = sphi 0, %s46
      %s35 = sphi 0, %s42
      %s36 = sphi 0, %s34
      %s37 = sphi 0, %s35
      %s38 = sphi 0, %s36
      %s39 = sphi 0, %s37
      %s51 = sphi 0, %s53
      %s54 = sphi 0, %s51
      %s55 = sphi 0, %s54
      %s71 = sphi 0, %s55
      %s75 = sphi 0, %s75
      %s77 = sphi 0, %s75
      %s78 = sphi 0, %s77
      %s92 = sphi 0, %s78
      %s96 = sphi 0, %s96
      %s98 = sphi 0, %s96
      %s99 = sphi 0, %s98
      %s113 = sphi 0, %s99
      %s117 = sphi 0, %s117
      %s119 = sphi 0, %s117
      %s120 = sphi 0, %s119
      %s134 = sphi 0, %s120
      %s138 = sphi 0, %s138
      %s140 = sphi 0, %s138
      %s141 = sphi 0, %s140
      %s155 = sphi 0, %s141
      %s159 = sphi 0, %s159
      %s161 = sphi 0, %s159
      %s162 = sphi 0, %s161
      %s176 = sphi 0, %s162
      %s180 = sphi 0, %s180
      %s182 = sphi 0, %s180
      %s183 = sphi 0, %s182
      %s197 = sphi 0, %s183
      %s201 = sphi 0, %s201
      %s203 = sphi 0, %s201
      %s204 = sphi 0, %s203
      %s218 = sphi 0, %s204
      %s222 = sphi 0, %s222
      %s224 = sphi 0, %s222
      %s225 = sphi 0, %s224
      %s239 = sphi 0, %s225
      %s245 = sphi 0, %s247
      %s248 = sphi 0, %s245
      %s249 = sphi 0, %s248
      %s265 = sphi 0, %s249
    $region4: #{tpu_custom_call.1} parent=1 // loop_header_branch
      %30 = sbr.rel (%p28) target = $region8
    $region5: #{tpu_custom_call.1} parent=1 // loop_body
      %s32 = ssub.s32 %s27, 1
      %s33 = ssub.s32 %s27, 2
      %s40 = sadd.s32 1, %s35
      %p41 = scmp.ge.s32.totalorder %s40, 1
      %s42 = scalar_select %p41, 0, %s40
      %s43 = sadd.s32 1, %s34
      %s44 = scalar_select %p41, %s43, %s34
      %p45 = scmp.ge.s32.totalorder %s44, 2
      %s46 = scalar_select %p45, 0, %s44
      %s47 = ssub.s32 %s34, %s46
      %s48 = ssub.s32 %s35, %s42
      %s49 = sor.u32 %s47, %s48
      %p50 = scmp.eq.s32.totalorder %s49, 0
      %s52 = sadd.s32 %s51, 1
      %s53 = scalar_select %p50, %s51, %s52
      %p56 = pneg %p50
      %p57 = scmp.eq.s32.totalorder %s27, 1
      %p58 = por %p56, %p57
      %p59 = scmp.ne.s32.totalorder %s51, %s54
      %p60 = scmp.eq.s32.totalorder %s27, 0
      %p61 = por %p59, %p60
      %p62 = scmp.ne.s32.totalorder %s51, %s54
      %p63 = scmp.eq.s32.totalorder %s32, 1
      %p64 = por %p62, %p63
      %p65 = scmp.ne.s32.totalorder %s54, %s55
      %p66 = scmp.eq.s32.totalorder %s32, 0
      %p67 = por %p65, %p66
      %p68 = scmp.ne.s32.totalorder %s54, %s55
      %p69 = scmp.eq.s32.totalorder %s33, 1
      %p70 = por %p68, %p69
      %p72 = scmp.ne.s32.totalorder %s55, %s71
      %p73 = scmp.eq.s32.totalorder %s33, 0
      %p74 = por %p72, %p73
      %s76 = sadd.s32 %s75, 1
      %p79 = scmp.eq.s32.totalorder %s27, 1
      %p80 = scmp.ne.s32.totalorder %s75, %s77
      %p81 = scmp.eq.s32.totalorder %s27, 0
      %p82 = por %p80, %p81
      %p83 = scmp.ne.s32.totalorder %s75, %s77
      %p84 = scmp.eq.s32.totalorder %s32, 1
      %p85 = por %p83, %p84
      %p86 = scmp.ne.s32.totalorder %s77, %s78
      %p87 = scmp.eq.s32.totalorder %s32, 0
      %p88 = por %p86, %p87
      %p89 = scmp.ne.s32.totalorder %s77, %s78
      %p90 = scmp.eq.s32.totalorder %s33, 1
      %p91 = por %p89, %p90
      %p93 = scmp.ne.s32.totalorder %s78, %s92
      %p94 = scmp.eq.s32.totalorder %s33, 0
      %p95 = por %p93, %p94
      %s97 = sadd.s32 %s96, 1
      %p100 = scmp.eq.s32.totalorder %s27, 1
      %p101 = scmp.ne.s32.totalorder %s96, %s98
      %p102 = scmp.eq.s32.totalorder %s27, 0
      %p103 = por %p101, %p102
      %p104 = scmp.ne.s32.totalorder %s96, %s98
      %p105 = scmp.eq.s32.totalorder %s32, 1
      %p106 = por %p104, %p105
      %p107 = scmp.ne.s32.totalorder %s98, %s99
      %p108 = scmp.eq.s32.totalorder %s32, 0
      %p109 = por %p107, %p108
      %p110 = scmp.ne.s32.totalorder %s98, %s99
      %p111 = scmp.eq.s32.totalorder %s33, 1
      %p112 = por %p110, %p111
      %p114 = scmp.ne.s32.totalorder %s99, %s113
      %p115 = scmp.eq.s32.totalorder %s33, 0
      %p116 = por %p114, %p115
      %s118 = sadd.s32 %s117, 1
      %p121 = scmp.eq.s32.totalorder %s27, 1
      %p122 = scmp.ne.s32.totalorder %s117, %s119
      %p123 = scmp.eq.s32.totalorder %s27, 0
      %p124 = por %p122, %p123
      %p125 = scmp.ne.s32.totalorder %s117, %s119
      %p126 = scmp.eq.s32.totalorder %s32, 1
      %p127 = por %p125, %p126
      %p128 = scmp.ne.s32.totalorder %s119, %s120
      %p129 = scmp.eq.s32.totalorder %s32, 0
      %p130 = por %p128, %p129
      %p131 = scmp.ne.s32.totalorder %s119, %s120
      %p132 = scmp.eq.s32.totalorder %s33, 1
      %p133 = por %p131, %p132
      %p135 = scmp.ne.s32.totalorder %s120, %s134
      %p136 = scmp.eq.s32.totalorder %s33, 0
      %p137 = por %p135, %p136
      %s139 = sadd.s32 %s138, 1
      %p142 = scmp.eq.s32.totalorder %s27, 1
      %p143 = scmp.ne.s32.totalorder %s138, %s140
      %p144 = scmp.eq.s32.totalorder %s27, 0
      %p145 = por %p143, %p144
      %p146 = scmp.ne.s32.totalorder %s138, %s140
      %p147 = scmp.eq.s32.totalorder %s32, 1
      %p148 = por %p146, %p147
      %p149 = scmp.ne.s32.totalorder %s140, %s141
      %p150 = scmp.eq.s32.totalorder %s32, 0
      %p151 = por %p149, %p150
      %p152 = scmp.ne.s32.totalorder %s140, %s141
      %p153 = scmp.eq.s32.totalorder %s33, 1
      %p154 = por %p152, %p153
      %p156 = scmp.ne.s32.totalorder %s141, %s155
      %p157 = scmp.eq.s32.totalorder %s33, 0
      %p158 = por %p156, %p157
      %s160 = sadd.s32 %s159, 1
      %p163 = scmp.eq.s32.totalorder %s27, 1
      %p164 = scmp.ne.s32.totalorder %s159, %s161
      %p165 = scmp.eq.s32.totalorder %s27, 0
      %p166 = por %p164, %p165
      %p167 = scmp.ne.s32.totalorder %s159, %s161
      %p168 = scmp.eq.s32.totalorder %s32, 1
      %p169 = por %p167, %p168
      %p170 = scmp.ne.s32.totalorder %s161, %s162
      %p171 = scmp.eq.s32.totalorder %s32, 0
      %p172 = por %p170, %p171
      %p173 = scmp.ne.s32.totalorder %s161, %s162
      %p174 = scmp.eq.s32.totalorder %s33, 1
      %p175 = por %p173, %p174
      %p177 = scmp.ne.s32.totalorder %s162, %s176
      %p178 = scmp.eq.s32.totalorder %s33, 0
      %p179 = por %p177, %p178
      %s181 = sadd.s32 %s180, 1
      %p184 = scmp.eq.s32.totalorder %s27, 1
      %p185 = scmp.ne.s32.totalorder %s180, %s182
      %p186 = scmp.eq.s32.totalorder %s27, 0
      %p187 = por %p185, %p186
      %p188 = scmp.ne.s32.totalorder %s180, %s182
      %p189 = scmp.eq.s32.totalorder %s32, 1
      %p190 = por %p188, %p189
      %p191 = scmp.ne.s32.totalorder %s182, %s183
      %p192 = scmp.eq.s32.totalorder %s32, 0
      %p193 = por %p191, %p192
      %p194 = scmp.ne.s32.totalorder %s182, %s183
      %p195 = scmp.eq.s32.totalorder %s33, 1
      %p196 = por %p194, %p195
      %p198 = scmp.ne.s32.totalorder %s183, %s197
      %p199 = scmp.eq.s32.totalorder %s33, 0
      %p200 = por %p198, %p199
      %s202 = sadd.s32 %s201, 1
      %p205 = scmp.eq.s32.totalorder %s27, 1
      %p206 = scmp.ne.s32.totalorder %s201, %s203
      %p207 = scmp.eq.s32.totalorder %s27, 0
      %p208 = por %p206, %p207
      %p209 = scmp.ne.s32.totalorder %s201, %s203
      %p210 = scmp.eq.s32.totalorder %s32, 1
      %p211 = por %p209, %p210
      %p212 = scmp.ne.s32.totalorder %s203, %s204
      %p213 = scmp.eq.s32.totalorder %s32, 0
      %p214 = por %p212, %p213
      %p215 = scmp.ne.s32.totalorder %s203, %s204
      %p216 = scmp.eq.s32.totalorder %s33, 1
      %p217 = por %p215, %p216
      %p219 = scmp.ne.s32.totalorder %s204, %s218
      %p220 = scmp.eq.s32.totalorder %s33, 0
      %p221 = por %p219, %p220
      %s223 = sadd.s32 %s222, 1
      %p226 = scmp.eq.s32.totalorder %s27, 1
      %p227 = scmp.ne.s32.totalorder %s222, %s224
      %p228 = scmp.eq.s32.totalorder %s27, 0
      %p229 = por %p227, %p228
      %p230 = scmp.ne.s32.totalorder %s222, %s224
      %p231 = scmp.eq.s32.totalorder %s32, 1
      %p232 = por %p230, %p231
      %p233 = scmp.ne.s32.totalorder %s224, %s225
      %p234 = scmp.eq.s32.totalorder %s32, 0
      %p235 = por %p233, %p234
      %p236 = scmp.ne.s32.totalorder %s224, %s225
      %p237 = scmp.eq.s32.totalorder %s33, 1
      %p238 = por %p236, %p237
      %p240 = scmp.ne.s32.totalorder %s225, %s239
      %p241 = scmp.eq.s32.totalorder %s33, 0
      %p242 = por %p240, %p241
      %s243 = ssub.s32 %s34, %s46
      %p244 = scmp.eq.s32.totalorder %s243, 0
      %s246 = sadd.s32 %s245, 1
      %s247 = scalar_select %p244, %s245, %s246
      %p250 = pneg %p244
      %p251 = scmp.eq.s32.totalorder %s27, 1
      %p252 = por %p250, %p251
      %p253 = scmp.ne.s32.totalorder %s245, %s248
      %p254 = scmp.eq.s32.totalorder %s27, 0
      %p255 = por %p253, %p254
      %p256 = scmp.ne.s32.totalorder %s245, %s248
      %p257 = scmp.eq.s32.totalorder %s32, 1
      %p258 = por %p256, %p257
      %p259 = scmp.ne.s32.totalorder %s248, %s249
      %p260 = scmp.eq.s32.totalorder %s32, 0
      %p261 = por %p259, %p260
      %p262 = scmp.ne.s32.totalorder %s248, %s249
      %p263 = scmp.eq.s32.totalorder %s33, 1
      %p264 = por %p262, %p263
      %p266 = scmp.ne.s32.totalorder %s249, %s265
      %p267 = scmp.eq.s32.totalorder %s33, 0
      %p268 = por %p266, %p267
      %p269 = scmp.le.s32.totalorder 1, %s27
      %p270 = scmp.lt.s32.totalorder %s27, 3
      %p271 = pnand %p269, %p270
      %p272 = pneg %p271
      // Predicated region
      $region9: #{tpu_custom_call.1} parent=5 // pred_check
        _
      $region10: #{tpu_custom_call.1} parent=5 // pred_check_branch
        %274 = sbr.rel (%p271) target = $region12
      $region11: #{tpu_custom_call.1} parent=5 // pred_region
        %s275 = ssub.s32 %s27, 1
        // Predicated region
        $region13: #{tpu_custom_call.1} parent=11 // pred_check
          %p276 = pneg %p88
        $region14: #{tpu_custom_call.1} parent=11 // pred_check_branch
          %278 = sbr.rel (%p276) target = $region16
        $region15: #{tpu_custom_call.1} parent=11 // pred_region
          _
        $region16: #{tpu_custom_call.1} parent=11 // pred_fallthru
          _
        // Predicated region
        $region17: #{tpu_custom_call.1} parent=11 // pred_check
          %p279 = pneg %p109
        $region18: #{tpu_custom_call.1} parent=11 // pred_check_branch
          %281 = sbr.rel (%p279) target = $region20
        $region19: #{tpu_custom_call.1} parent=11 // pred_region
          _
        $region20: #{tpu_custom_call.1} parent=11 // pred_fallthru
          _
        // Predicated region
        $region21: #{tpu_custom_call.1} parent=11 // pred_check
          %p282 = pneg %p130
        $region22: #{tpu_custom_call.1} parent=11 // pred_check_branch
          %284 = sbr.rel (%p282) target = $region24
        $region23: #{tpu_custom_call.1} parent=11 // pred_region
          _
        $region24: #{tpu_custom_call.1} parent=11 // pred_fallthru
          _
        // Predicated region
        $region25: #{tpu_custom_call.1} parent=11 // pred_check
          %p285 = pneg %p151
        $region26: #{tpu_custom_call.1} parent=11 // pred_check_branch
          %287 = sbr.rel (%p285) target = $region28
        $region27: #{tpu_custom_call.1} parent=11 // pred_region
          _
        $region28: #{tpu_custom_call.1} parent=11 // pred_fallthru
          _
        // Predicated region
        $region29: #{tpu_custom_call.1} parent=11 // pred_check
          %p288 = pneg %p172
        $region30: #{tpu_custom_call.1} parent=11 // pred_check_branch
          %290 = sbr.rel (%p288) target = $region32
        $region31: #{tpu_custom_call.1} parent=11 // pred_region
          _
        $region32: #{tpu_custom_call.1} parent=11 // pred_fallthru
          _
        // Predicated region
        $region33: #{tpu_custom_call.1} parent=11 // pred_check
          %p291 = pneg %p193
        $region34: #{tpu_custom_call.1} parent=11 // pred_check_branch
          %293 = sbr.rel (%p291) target = $region36
        $region35: #{tpu_custom_call.1} parent=11 // pred_region
          _
        $region36: #{tpu_custom_call.1} parent=11 // pred_fallthru
          _
        // Predicated region
        $region37: #{tpu_custom_call.1} parent=11 // pred_check
          %p294 = pneg %p214
        $region38: #{tpu_custom_call.1} parent=11 // pred_check_branch
          %296 = sbr.rel (%p294) target = $region40
        $region39: #{tpu_custom_call.1} parent=11 // pred_region
          _
        $region40: #{tpu_custom_call.1} parent=11 // pred_fallthru
          _
        // Predicated region
        $region41: #{tpu_custom_call.1} parent=11 // pred_check
          %p297 = pneg %p235
        $region42: #{tpu_custom_call.1} parent=11 // pred_check_branch
          %299 = sbr.rel (%p297) target = $region44
        $region43: #{tpu_custom_call.1} parent=11 // pred_region
          _
        $region44: #{tpu_custom_call.1} parent=11 // pred_fallthru
          _
      $region12: #{tpu_custom_call.1} parent=5 // pred_fallthru
        _
      %p300 = scmp.lt.s32.totalorder %s27, 2
      // Predicated region
      $region45: #{tpu_custom_call.1} parent=5 // pred_check
        %p301 = pneg %p300
      $region46: #{tpu_custom_call.1} parent=5 // pred_check_branch
        %303 = sbr.rel (%p301) target = $region48
      $region47: #{tpu_custom_call.1} parent=5 // pred_region
        // Predicated region
        $region49: #{tpu_custom_call.1} parent=47 // pred_check
          %p304 = pneg %p61
        $region50: #{tpu_custom_call.1} parent=47 // pred_check_branch
          %306 = sbr.rel (%p304) target = $region52
        $region51: #{tpu_custom_call.1} parent=47 // pred_region
          %s307 = smul.u32 64, %s35
          %p308 = scmp.lt.s32.totalorder %s34, 1
          %s309 = scalar_select %p308, %s34, 1
          %p310 = scmp.lt.s32.totalorder %s307, 63
          %s311 = scalar_select %p310, %s307, 63
          %s312 = smul.addr %s309, 64
          %s313 = sadd.s32 %s311, %s312
          %s314 = smul.addr %s313, 4
          %s315 = scalar_lea.vmem %s1, %s314
          %s316 = smul.u32 64, %s35
        $region52: #{tpu_custom_call.1} parent=47 // pred_fallthru
          _
      $region48: #{tpu_custom_call.1} parent=5 // pred_fallthru
        _
      %p317 = scmp.le.s32.totalorder 1, %s27
      %p318 = scmp.lt.s32.totalorder %s27, 3
      %p319 = pnand %p317, %p318
      %p320 = pneg %p319
      // Predicated region
      $region53: #{tpu_custom_call.1} parent=5 // pred_check
        _
      $region54: #{tpu_custom_call.1} parent=5 // pred_check_branch
        %322 = sbr.rel (%p319) target = $region56
      $region55: #{tpu_custom_call.1} parent=5 // pred_region
        %s323 = ssub.s32 %s27, 1
        %s324 = smul.u32 64, %s37
        %p325 = scmp.lt.s32.totalorder %s36, 1
        %s326 = scalar_select %p325, %s36, 1
        %p327 = scmp.lt.s32.totalorder %s324, 63
        %s328 = scalar_select %p327, %s324, 63
        %s329 = smul.addr %s326, 64
        %s330 = sadd.s32 %s328, %s329
        %s331 = smul.addr %s330, 4
        %s332 = scalar_lea.vmem %s1, %s331
        %p333 = pneg %p67
        %p334 = pneg %p64
        %p335 = pneg %p88
        %p336 = pneg %p85
        %p337 = pneg %p109
        %p338 = pneg %p106
        %p339 = pneg %p130
        %p340 = pneg %p127
        %p341 = pneg %p151
        %p342 = pneg %p148
        %p343 = pneg %p172
        %p344 = pneg %p169
        %p345 = pneg %p193
        %p346 = pneg %p190
        %p347 = pneg %p214
        %p348 = pneg %p211
        %p349 = pneg %p235
        %p350 = pneg %p232
        %p351 = pneg %p261
        %p352 = pneg %p258
        %s353 = sand.u32 %s248, 1
        %s354 = scalar_lea.sflag [#allocation9], %s353
        %s355 = sand.u32 %s248, 1
        %s356 = scalar_lea.vmem [#allocation8], %s355
        %s357 = smul.u32 64, %s37
        %p358 = scmp.lt.s32.totalorder %s36, 1
        %s359 = scalar_select %p358, %s36, 1
        %p360 = scmp.lt.s32.totalorder %s357, 63
        %s361 = scalar_select %p360, %s357, 63
        %s362 = smul.addr %s359, 64
        %s363 = sadd.s32 %s361, %s362
        %s364 = smul.addr %s363, 4
        %s365 = scalar_lea.vmem %s1, %s364
        %s366 = smul.u32 64, %s37
        %p368 = scmp.eq.s32.totalorder %s37, 0
        // Predicated region
        $region57: #{tpu_custom_call.1} parent=55 // pred_check
          %p369 = pneg %p368
        $region58: #{tpu_custom_call.1} parent=55 // pred_check_branch
          %371 = sbr.rel (%p369) target = $region60
        $region59: #{tpu_custom_call.1} parent=55 // pred_region
          %vm372 = vcmask 0
          %373 = vst.msk [vmem:[#allocation2] sm:$0x1] %vm372, -1e+30
          %374 = vst.msk [vmem:[#allocation3] sm:$0x1] %vm372, 0.0
          %vm375 = vcmask 253952
          %376 = vst.msk [vmem:[#allocation4] sm:$0x1] %vm375, 0.0
        $region60: #{tpu_custom_call.1} parent=55 // pred_fallthru
          _
        %v377 = vld [vmem:[%s365] sm:$0xf]
        %v378 = vld [vmem:[%s365 + $0x4] sm:$0xf]
        %v379 = vld [vmem:[%s365 + $0x8] sm:$0xf]
        %v380 = vld [vmem:[%s365 + $0xc] sm:$0xf]
        %v381 = vld [vmem:[%s365 + $0x10] sm:$0xf]
        %v382 = vld [vmem:[%s365 + $0x14] sm:$0xf]
        %v383 = vld [vmem:[%s365 + $0x18] sm:$0xf]
        %v384 = vld [vmem:[%s365 + $0x1c] sm:$0xf]
        %v385 = vld [vmem:[%s365 + $0x20] sm:$0xf]
        %v386 = vld [vmem:[%s365 + $0x24] sm:$0xf]
        %v387 = vld [vmem:[%s365 + $0x28] sm:$0xf]
        %v388 = vld [vmem:[%s365 + $0x2c] sm:$0xf]
        %v389 = vld [vmem:[%s365 + $0x30] sm:$0xf]
        %v390 = vld [vmem:[%s365 + $0x34] sm:$0xf]
        %v391 = vld [vmem:[%s365 + $0x38] sm:$0xf]
        %v392 = vld [vmem:[%s365 + $0x3c] sm:$0xf]
        %v393 = vld [vmem:[%s365 + $0x40] sm:$0xf]
        %v394 = vld [vmem:[%s365 + $0x44] sm:$0xf]
        %v395 = vld [vmem:[%s365 + $0x48] sm:$0xf]
        %v396 = vld [vmem:[%s365 + $0x4c] sm:$0xf]
        %v397 = vld [vmem:[%s365 + $0x50] sm:$0xf]
        %v398 = vld [vmem:[%s365 + $0x54] sm:$0xf]
        %v399 = vld [vmem:[%s365 + $0x58] sm:$0xf]
        %v400 = vld [vmem:[%s365 + $0x5c] sm:$0xf]
        %v401 = vld [vmem:[%s365 + $0x60] sm:$0xf]
        %v402 = vld [vmem:[%s365 + $0x64] sm:$0xf]
        %v403 = vld [vmem:[%s365 + $0x68] sm:$0xf]
        %v404 = vld [vmem:[%s365 + $0x6c] sm:$0xf]
        %v405 = vld [vmem:[%s365 + $0x70] sm:$0xf]
        %v406 = vld [vmem:[%s365 + $0x74] sm:$0xf]
        %v407 = vld [vmem:[%s365 + $0x78] sm:$0xf]
        %v408 = vld [vmem:[%s365 + $0x7c] sm:$0xf]
        %v409 = vld [vmem:[%s365 + $0x80] sm:$0xf]
        %v410 = vld [vmem:[%s365 + $0x84] sm:$0xf]
        %v411 = vld [vmem:[%s365 + $0x88] sm:$0xf]
        %v412 = vld [vmem:[%s365 + $0x8c] sm:$0xf]
        %v413 = vld [vmem:[%s365 + $0x90] sm:$0xf]
        %v414 = vld [vmem:[%s365 + $0x94] sm:$0xf]
        %v415 = vld [vmem:[%s365 + $0x98] sm:$0xf]
        %v416 = vld [vmem:[%s365 + $0x9c] sm:$0xf]
        %v417 = vld [vmem:[%s365 + $0xa0] sm:$0xf]
        %v418 = vld [vmem:[%s365 + $0xa4] sm:$0xf]
        %v419 = vld [vmem:[%s365 + $0xa8] sm:$0xf]
        %v420 = vld [vmem:[%s365 + $0xac] sm:$0xf]
        %v421 = vld [vmem:[%s365 + $0xb0] sm:$0xf]
        %v422 = vld [vmem:[%s365 + $0xb4] sm:$0xf]
        %v423 = vld [vmem:[%s365 + $0xb8] sm:$0xf]
        %v424 = vld [vmem:[%s365 + $0xbc] sm:$0xf]
        %v425 = vld [vmem:[%s365 + $0xc0] sm:$0xf]
        %v426 = vld [vmem:[%s365 + $0xc4] sm:$0xf]
        %v427 = vld [vmem:[%s365 + $0xc8] sm:$0xf]
        %v428 = vld [vmem:[%s365 + $0xcc] sm:$0xf]
        %v429 = vld [vmem:[%s365 + $0xd0] sm:$0xf]
        %v430 = vld [vmem:[%s365 + $0xd4] sm:$0xf]
        %v431 = vld [vmem:[%s365 + $0xd8] sm:$0xf]
        %v432 = vld [vmem:[%s365 + $0xdc] sm:$0xf]
        %v433 = vld [vmem:[%s365 + $0xe0] sm:$0xf]
        %v434 = vld [vmem:[%s365 + $0xe4] sm:$0xf]
        %v435 = vld [vmem:[%s365 + $0xe8] sm:$0xf]
        %v436 = vld [vmem:[%s365 + $0xec] sm:$0xf]
        %v437 = vld [vmem:[%s365 + $0xf0] sm:$0xf]
        %v438 = vld [vmem:[%s365 + $0xf4] sm:$0xf]
        %v439 = vld [vmem:[%s365 + $0xf8] sm:$0xf]
        %v440 = vld [vmem:[%s365 + $0xfc] sm:$0xf]
        %v441 = vld [vmem:[%s2] sm:$0xf]
        %v442 = vld [vmem:[%s2 + $0x4] sm:$0xf]
        %v443 = vld [vmem:[%s2 + $0x8] sm:$0xf]
        %v444 = vld [vmem:[%s2 + $0xc] sm:$0xf]
        %v445 = vld [vmem:[%s2 + $0x10] sm:$0xf]
        %v446 = vld [vmem:[%s2 + $0x14] sm:$0xf]
        %v447 = vld [vmem:[%s2 + $0x18] sm:$0xf]
        %v448 = vld [vmem:[%s2 + $0x1c] sm:$0xf]
        %v449 = vld [vmem:[%s3] sm:$0x1]
        %v451 = vlaneseq
        %v452 = vshrl.u32 %v451, 7
        %v453 = vsub.s32 0, %v452
        %v454 = vrot.slane %v449, %v453
        %v520 = vunpack.c.l.b16 %v377
        %v521 = vunpack.c.l.b16 %v378
        %v522 = vunpack.c.l.b16 %v379
        %v523 = vunpack.c.l.b16 %v380
        %v524 = vunpack.c.l.b16 %v381
        %v525 = vunpack.c.l.b16 %v382
        %v526 = vunpack.c.l.b16 %v383
        %v527 = vunpack.c.l.b16 %v384
        %v528 = vunpack.c.l.b16 %v385
        %v529 = vunpack.c.l.b16 %v386
        %v530 = vunpack.c.l.b16 %v387
        %v531 = vunpack.c.l.b16 %v388
        %v532 = vunpack.c.l.b16 %v389
        %v533 = vunpack.c.l.b16 %v390
        %v534 = vunpack.c.l.b16 %v391
        %v535 = vunpack.c.l.b16 %v392
        %v536 = vunpack.c.l.b16 %v393
        %v537 = vunpack.c.l.b16 %v394
        %v538 = vunpack.c.l.b16 %v395
        %v539 = vunpack.c.l.b16 %v396
        %v540 = vunpack.c.l.b16 %v397
        %v541 = vunpack.c.l.b16 %v398
        %v542 = vunpack.c.l.b16 %v399
        %v543 = vunpack.c.l.b16 %v400
        %v544 = vunpack.c.l.b16 %v401
        %v545 = vunpack.c.l.b16 %v402
        %v546 = vunpack.c.l.b16 %v403
        %v547 = vunpack.c.l.b16 %v404
        %v548 = vunpack.c.l.b16 %v405
        %v549 = vunpack.c.l.b16 %v406
        %v550 = vunpack.c.l.b16 %v407
        %v551 = vunpack.c.l.b16 %v408
        %v552 = vunpack.c.l.b16 %v409
        %v553 = vunpack.c.l.b16 %v410
        %v554 = vunpack.c.l.b16 %v411
        %v555 = vunpack.c.l.b16 %v412
        %v556 = vunpack.c.l.b16 %v413
        %v557 = vunpack.c.l.b16 %v414
        %v558 = vunpack.c.l.b16 %v415
        %v559 = vunpack.c.l.b16 %v416
        %v560 = vunpack.c.l.b16 %v417
        %v561 = vunpack.c.l.b16 %v418
        %v562 = vunpack.c.l.b16 %v419
        %v563 = vunpack.c.l.b16 %v420
        %v564 = vunpack.c.l.b16 %v421
        %v565 = vunpack.c.l.b16 %v422
        %v566 = vunpack.c.l.b16 %v423
        %v567 = vunpack.c.l.b16 %v424
        %v568 = vunpack.c.l.b16 %v425
        %v569 = vunpack.c.l.b16 %v426
        %v570 = vunpack.c.l.b16 %v427
        %v571 = vunpack.c.l.b16 %v428
        %v572 = vunpack.c.l.b16 %v429
        %v573 = vunpack.c.l.b16 %v430
        %v574 = vunpack.c.l.b16 %v431
        %v575 = vunpack.c.l.b16 %v432
        %v576 = vunpack.c.l.b16 %v433
        %v577 = vunpack.c.l.b16 %v434
        %v578 = vunpack.c.l.b16 %v435
        %v579 = vunpack.c.l.b16 %v436
        %v580 = vunpack.c.l.b16 %v437
        %v581 = vunpack.c.l.b16 %v438
        %v582 = vunpack.c.l.b16 %v439
        %v583 = vunpack.c.l.b16 %v440
        %v584 = vpack.c.b16 %v521, %v520
        %v585 = vpack.c.b16 %v523, %v522
        %v586 = vpack.c.b16 %v525, %v524
        %v587 = vpack.c.b16 %v527, %v526
        %v588 = vpack.c.b16 %v529, %v528
        %v589 = vpack.c.b16 %v531, %v530
        %v590 = vpack.c.b16 %v533, %v532
        %v591 = vpack.c.b16 %v535, %v534
        %v592 = vpack.c.b16 %v537, %v536
        %v593 = vpack.c.b16 %v539, %v538
        %v594 = vpack.c.b16 %v541, %v540
        %v595 = vpack.c.b16 %v543, %v542
        %v596 = vpack.c.b16 %v545, %v544
        %v597 = vpack.c.b16 %v547, %v546
        %v598 = vpack.c.b16 %v549, %v548
        %v599 = vpack.c.b16 %v551, %v550
        %v600 = vpack.c.b16 %v553, %v552
        %v601 = vpack.c.b16 %v555, %v554
        %v602 = vpack.c.b16 %v557, %v556
        %v603 = vpack.c.b16 %v559, %v558
        %v604 = vpack.c.b16 %v561, %v560
        %v605 = vpack.c.b16 %v563, %v562
        %v606 = vpack.c.b16 %v565, %v564
        %v607 = vpack.c.b16 %v567, %v566
        %v608 = vpack.c.b16 %v569, %v568
        %v609 = vpack.c.b16 %v571, %v570
        %v610 = vpack.c.b16 %v573, %v572
        %v611 = vpack.c.b16 %v575, %v574
        %v612 = vpack.c.b16 %v577, %v576
        %v613 = vpack.c.b16 %v579, %v578
        %v614 = vpack.c.b16 %v581, %v580
        %v615 = vpack.c.b16 %v583, %v582
        %v624 = vunpack.c.l.b16 %v441
        %v625 = vunpack.c.l.b16 %v442
        %v626 = vunpack.c.l.b16 %v443
        %v627 = vunpack.c.l.b16 %v444
        %v628 = vunpack.c.l.b16 %v445
        %v629 = vunpack.c.l.b16 %v446
        %v630 = vunpack.c.l.b16 %v447
        %v631 = vunpack.c.l.b16 %v448
        %v632 = vpack.c.b16 %v625, %v624
        %v633 = vpack.c.b16 %v627, %v626
        %v634 = vpack.c.b16 %v629, %v628
        %v635 = vpack.c.b16 %v631, %v630
        %vm640 = vcmask 523264
        %v642 = vsel %vm640, %v584, 0
        %v645 = vsel %vm640, %v585, 0
        %v648 = vsel %vm640, %v586, 0
        %v651 = vsel %vm640, %v587, 0
        %v654 = vsel %vm640, %v588, 0
        %v657 = vsel %vm640, %v589, 0
        %v660 = vsel %vm640, %v590, 0
        %v663 = vsel %vm640, %v591, 0
        %v666 = vsel %vm640, %v592, 0
        %v669 = vsel %vm640, %v593, 0
        %v672 = vsel %vm640, %v594, 0
        %v675 = vsel %vm640, %v595, 0
        %v678 = vsel %vm640, %v596, 0
        %v681 = vsel %vm640, %v597, 0
        %v684 = vsel %vm640, %v598, 0
        %v687 = vsel %vm640, %v599, 0
        %v690 = vsel %vm640, %v600, 0
        %v693 = vsel %vm640, %v601, 0
        %v696 = vsel %vm640, %v602, 0
        %v699 = vsel %vm640, %v603, 0
        %v702 = vsel %vm640, %v604, 0
        %v705 = vsel %vm640, %v605, 0
        %v708 = vsel %vm640, %v606, 0
        %v711 = vsel %vm640, %v607, 0
        %v714 = vsel %vm640, %v608, 0
        %v717 = vsel %vm640, %v609, 0
        %v720 = vsel %vm640, %v610, 0
        %v723 = vsel %vm640, %v611, 0
        %v726 = vsel %vm640, %v612, 0
        %v729 = vsel %vm640, %v613, 0
        %v732 = vsel %vm640, %v614, 0
        %v735 = vsel %vm640, %v615, 0
        %737 = vmatprep.subr.bf16.mxu0 0
        %738 = vmatpush1.bf16.msra.mxu0 %v632
        %739 = vmatprep.subr.bf16.mxu0 0
        %740 = vmatpush1.bf16.msra.mxu0 %v633
        %741 = vmatprep.subr.bf16.mxu0 0
        %742 = vmatpush1.bf16.msra.mxu0 %v634
        %743 = vmatprep.subr.bf16.mxu0 0
        %744 = vmatpush1.bf16.msra.mxu0 %v635
        %745 = vmatprep.subr.bf16.mxu0 0
        %746 = vmatpush1.bf16.msra.mxu0 0
        %747 = vmatprep.subr.bf16.mxu0 0
        %748 = vmatpush1.bf16.msra.mxu0 0
        %749 = vmatprep.subr.bf16.mxu0 0
        %750 = vmatpush1.bf16.msra.mxu0 0
        %751 = vmatprep.subr.bf16.mxu0 0
        %752 = vmatpush1.bf16.msra.mxu0 0
        %753 = vmatprep.subr.bf16.mxu0 0
        %754 = vmatpush1.bf16.msra.mxu0 0
        %755 = vmatprep.subr.bf16.mxu0 0
        %756 = vmatpush1.bf16.msra.mxu0 0
        %757 = vmatprep.subr.bf16.mxu0 0
        %758 = vmatpush1.bf16.msra.mxu0 0
        %759 = vmatprep.subr.bf16.mxu0 0
        %760 = vmatpush1.bf16.msra.mxu0 0
        %761 = vmatprep.subr.bf16.mxu0 0
        %762 = vmatpush1.bf16.msra.mxu0 0
        %763 = vmatprep.subr.bf16.mxu0 0
        %764 = vmatpush1.bf16.msra.mxu0 0
        %765 = vmatprep.subr.bf16.mxu0 0
        %766 = vmatpush1.bf16.msra.mxu0 0
        %767 = vmatprep.subr.bf16.mxu0 0
        %768 = vmatpush1.bf16.msra.mxu0 0
        %769 = vmatprep.mubr.bf16.mxu0 0
        %770 = vmatmul.mubr.bf16.gmra.mrb[0].mxu0 %v642
        %v771 = vpop.f32.mrb[0].mxu0
        %v772 = vadd.f32 %v454, %v771
        %v773 = vpop.f32.mrb[0].mxu0
        %v774 = vpop.f32.mrb[0].mxu0
        %v775 = vadd.f32 %v454, %v774
        %v776 = vpop.f32.mrb[0].mxu0
        %777 = vmatprep.mubr.bf16.mxu0 0
        %778 = vmatmul.mubr.bf16.gmra.mrb[0].mxu0 %v645
        %v779 = vpop.f32.mrb[0].mxu0
        %v780 = vadd.f32 %v454, %v779
        %v781 = vpop.f32.mrb[0].mxu0
        %v782 = vpop.f32.mrb[0].mxu0
        %v783 = vadd.f32 %v454, %v782
        %v784 = vpop.f32.mrb[0].mxu0
        %785 = vmatprep.mubr.bf16.mxu0 0
        %786 = vmatmul.mubr.bf16.gmra.mrb[0].mxu0 %v648
        %v787 = vpop.f32.mrb[0].mxu0
        %v788 = vadd.f32 %v454, %v787
        %v789 = vpop.f32.mrb[0].mxu0
        %v790 = vpop.f32.mrb[0].mxu0
        %v791 = vadd.f32 %v454, %v790
        %v792 = vpop.f32.mrb[0].mxu0
        %793 = vmatprep.mubr.bf16.mxu0 0
        %794 = vmatmul.mubr.bf16.gmra.mrb[0].mxu0 %v651
        %v795 = vpop.f32.mrb[0].mxu0
        %v796 = vadd.f32 %v454, %v795
        %v797 = vpop.f32.mrb[0].mxu0
        %v798 = vpop.f32.mrb[0].mxu0
        %v799 = vadd.f32 %v454, %v798
        %v800 = vpop.f32.mrb[0].mxu0
        %801 = vmatprep.mubr.bf16.mxu0 0
        %802 = vmatmul.mubr.bf16.gmra.mrb[0].mxu0 %v654
        %v803 = vpop.f32.mrb[0].mxu0
        %v804 = vadd.f32 %v454, %v803
        %v805 = vpop.f32.mrb[0].mxu0
        %v806 = vpop.f32.mrb[0].mxu0
        %v807 = vadd.f32 %v454, %v806
        %v808 = vpop.f32.mrb[0].mxu0
        %809 = vmatprep.mubr.bf16.mxu0 0
        %810 = vmatmul.mubr.bf16.gmra.mrb[0].mxu0 %v657
        %v811 = vpop.f32.mrb[0].mxu0
        %v812 = vadd.f32 %v454, %v811
        %v813 = vpop.f32.mrb[0].mxu0
        %v814 = vpop.f32.mrb[0].mxu0
        %v815 = vadd.f32 %v454, %v814
        %v816 = vpop.f32.mrb[0].mxu0
        %817 = vmatprep.mubr.bf16.mxu0 0
        %818 = vmatmul.mubr.bf16.gmra.mrb[0].mxu0 %v660
        %v819 = vpop.f32.mrb[0].mxu0
        %v820 = vadd.f32 %v454, %v819
        %v821 = vpop.f32.mrb[0].mxu0
        %v822 = vpop.f32.mrb[0].mxu0
        %v823 = vadd.f32 %v454, %v822
        %v824 = vpop.f32.mrb[0].mxu0
        %825 = vmatprep.mubr.bf16.mxu0 0
        %826 = vmatmul.mubr.bf16.gmra.mrb[0].mxu0 %v663
        %v827 = vpop.f32.mrb[0].mxu0
        %v828 = vadd.f32 %v454, %v827
        %v829 = vpop.f32.mrb[0].mxu0
        %v830 = vpop.f32.mrb[0].mxu0
        %v831 = vadd.f32 %v454, %v830
        %v832 = vpop.f32.mrb[0].mxu0
        %833 = vmatprep.mubr.bf16.mxu0 0
        %834 = vmatmul.mubr.bf16.gmra.mrb[0].mxu0 %v666
        %v835 = vpop.f32.mrb[0].mxu0
        %v836 = vadd.f32 %v454, %v835
        %v837 = vpop.f32.mrb[0].mxu0
        %v838 = vpop.f32.mrb[0].mxu0
        %v839 = vadd.f32 %v454, %v838
        %v840 = vpop.f32.mrb[0].mxu0
        %841 = vmatprep.mubr.bf16.mxu0 0
        %842 = vmatmul.mubr.bf16.gmra.mrb[0].mxu0 %v669
        %v843 = vpop.f32.mrb[0].mxu0
        %v844 = vadd.f32 %v454, %v843
        %v845 = vpop.f32.mrb[0].mxu0
        %v846 = vpop.f32.mrb[0].mxu0
        %v847 = vadd.f32 %v454, %v846
        %v848 = vpop.f32.mrb[0].mxu0
        %849 = vmatprep.mubr.bf16.mxu0 0
        %850 = vmatmul.mubr.bf16.gmra.mrb[0].mxu0 %v672
        %v851 = vpop.f32.mrb[0].mxu0
        %v852 = vadd.f32 %v454, %v851
        %v853 = vpop.f32.mrb[0].mxu0
        %v854 = vpop.f32.mrb[0].mxu0
        %v855 = vadd.f32 %v454, %v854
        %v856 = vpop.f32.mrb[0].mxu0
        %857 = vmatprep.mubr.bf16.mxu0 0
        %858 = vmatmul.mubr.bf16.gmra.mrb[0].mxu0 %v675
        %v859 = vpop.f32.mrb[0].mxu0
        %v860 = vadd.f32 %v454, %v859
        %v861 = vpop.f32.mrb[0].mxu0
        %v862 = vpop.f32.mrb[0].mxu0
        %v863 = vadd.f32 %v454, %v862
        %v864 = vpop.f32.mrb[0].mxu0
        %865 = vmatprep.mubr.bf16.mxu0 0
        %866 = vmatmul.mubr.bf16.gmra.mrb[0].mxu0 %v678
        %v867 = vpop.f32.mrb[0].mxu0
        %v868 = vadd.f32 %v454, %v867
        %v869 = vpop.f32.mrb[0].mxu0
        %v870 = vpop.f32.mrb[0].mxu0
        %v871 = vadd.f32 %v454, %v870
        %v872 = vpop.f32.mrb[0].mxu0
        %873 = vmatprep.mubr.bf16.mxu0 0
        %874 = vmatmul.mubr.bf16.gmra.mrb[0].mxu0 %v681
        %v875 = vpop.f32.mrb[0].mxu0
        %v876 = vadd.f32 %v454, %v875
        %v877 = vpop.f32.mrb[0].mxu0
        %v878 = vpop.f32.mrb[0].mxu0
        %v879 = vadd.f32 %v454, %v878
        %v880 = vpop.f32.mrb[0].mxu0
        %881 = vmatprep.mubr.bf16.mxu0 0
        %882 = vmatmul.mubr.bf16.gmra.mrb[0].mxu0 %v684
        %v883 = vpop.f32.mrb[0].mxu0
        %v884 = vadd.f32 %v454, %v883
        %v885 = vpop.f32.mrb[0].mxu0
        %v886 = vpop.f32.mrb[0].mxu0
        %v887 = vadd.f32 %v454, %v886
        %v888 = vpop.f32.mrb[0].mxu0
        %889 = vmatprep.mubr.bf16.mxu0 0
        %890 = vmatmul.mubr.bf16.gmra.mrb[0].mxu0 %v687
        %v891 = vpop.f32.mrb[0].mxu0
        %v892 = vadd.f32 %v454, %v891
        %v893 = vpop.f32.mrb[0].mxu0
        %v894 = vpop.f32.mrb[0].mxu0
        %v895 = vadd.f32 %v454, %v894
        %v896 = vpop.f32.mrb[0].mxu0
        %897 = vmatprep.mubr.bf16.mxu0 0
        %898 = vmatmul.mubr.bf16.gmra.mrb[0].mxu0 %v690
        %v899 = vpop.f32.mrb[0].mxu0
        %v900 = vadd.f32 %v454, %v899
        %v901 = vpop.f32.mrb[0].mxu0
        %v902 = vpop.f32.mrb[0].mxu0
        %v903 = vadd.f32 %v454, %v902
        %v904 = vpop.f32.mrb[0].mxu0
        %905 = vmatprep.mubr.bf16.mxu0 0
        %906 = vmatmul.mubr.bf16.gmra.mrb[0].mxu0 %v693
        %v907 = vpop.f32.mrb[0].mxu0
        %v908 = vadd.f32 %v454, %v907
        %v909 = vpop.f32.mrb[0].mxu0
        %v910 = vpop.f32.mrb[0].mxu0
        %v911 = vadd.f32 %v454, %v910
        %v912 = vpop.f32.mrb[0].mxu0
        %913 = vmatprep.mubr.bf16.mxu0 0
        %914 = vmatmul.mubr.bf16.gmra.mrb[0].mxu0 %v696
        %v915 = vpop.f32.mrb[0].mxu0
        %v916 = vadd.f32 %v454, %v915
        %v917 = vpop.f32.mrb[0].mxu0
        %v918 = vpop.f32.mrb[0].mxu0
        %v919 = vadd.f32 %v454, %v918
        %v920 = vpop.f32.mrb[0].mxu0
        %921 = vmatprep.mubr.bf16.mxu0 0
        %922 = vmatmul.mubr.bf16.gmra.mrb[0].mxu0 %v699
        %v923 = vpop.f32.mrb[0].mxu0
        %v924 = vadd.f32 %v454, %v923
        %v925 = vpop.f32.mrb[0].mxu0
        %v926 = vpop.f32.mrb[0].mxu0
        %v927 = vadd.f32 %v454, %v926
        %v928 = vpop.f32.mrb[0].mxu0
        %929 = vmatprep.mubr.bf16.mxu0 0
        %930 = vmatmul.mubr.bf16.gmra.mrb[0].mxu0 %v702
        %v931 = vpop.f32.mrb[0].mxu0
        %v932 = vadd.f32 %v454, %v931
        %v933 = vpop.f32.mrb[0].mxu0
        %v934 = vpop.f32.mrb[0].mxu0
        %v935 = vadd.f32 %v454, %v934
        %v936 = vpop.f32.mrb[0].mxu0
        %937 = vmatprep.mubr.bf16.mxu0 0
        %938 = vmatmul.mubr.bf16.gmra.mrb[0].mxu0 %v705
        %v939 = vpop.f32.mrb[0].mxu0
        %v940 = vadd.f32 %v454, %v939
        %v941 = vpop.f32.mrb[0].mxu0
        %v942 = vpop.f32.mrb[0].mxu0
        %v943 = vadd.f32 %v454, %v942
        %v944 = vpop.f32.mrb[0].mxu0
        %945 = vmatprep.mubr.bf16.mxu0 0
        %946 = vmatmul.mubr.bf16.gmra.mrb[0].mxu0 %v708
        %v947 = vpop.f32.mrb[0].mxu0
        %v948 = vadd.f32 %v454, %v947
        %v949 = vpop.f32.mrb[0].mxu0
        %v950 = vpop.f32.mrb[0].mxu0
        %v951 = vadd.f32 %v454, %v950
        %v952 = vpop.f32.mrb[0].mxu0
        %953 = vmatprep.mubr.bf16.mxu0 0
        %954 = vmatmul.mubr.bf16.gmra.mrb[0].mxu0 %v711
        %v955 = vpop.f32.mrb[0].mxu0
        %v956 = vadd.f32 %v454, %v955
        %v957 = vpop.f32.mrb[0].mxu0
        %v958 = vpop.f32.mrb[0].mxu0
        %v959 = vadd.f32 %v454, %v958
        %v960 = vpop.f32.mrb[0].mxu0
        %961 = vmatprep.mubr.bf16.mxu0 0
        %962 = vmatmul.mubr.bf16.gmra.mrb[0].mxu0 %v714
        %v963 = vpop.f32.mrb[0].mxu0
        %v964 = vadd.f32 %v454, %v963
        %v965 = vpop.f32.mrb[0].mxu0
        %v966 = vpop.f32.mrb[0].mxu0
        %v967 = vadd.f32 %v454, %v966
        %v968 = vpop.f32.mrb[0].mxu0
        %969 = vmatprep.mubr.bf16.mxu0 0
        %970 = vmatmul.mubr.bf16.gmra.mrb[0].mxu0 %v717
        %v971 = vpop.f32.mrb[0].mxu0
        %v972 = vadd.f32 %v454, %v971
        %v973 = vpop.f32.mrb[0].mxu0
        %v974 = vpop.f32.mrb[0].mxu0
        %v975 = vadd.f32 %v454, %v974
        %v976 = vpop.f32.mrb[0].mxu0
        %977 = vmatprep.mubr.bf16.mxu0 0
        %978 = vmatmul.mubr.bf16.gmra.mrb[0].mxu0 %v720
        %v979 = vpop.f32.mrb[0].mxu0
        %v980 = vadd.f32 %v454, %v979
        %v981 = vpop.f32.mrb[0].mxu0
        %v982 = vpop.f32.mrb[0].mxu0
        %v983 = vadd.f32 %v454, %v982
        %v984 = vpop.f32.mrb[0].mxu0
        %985 = vmatprep.mubr.bf16.mxu0 0
        %986 = vmatmul.mubr.bf16.gmra.mrb[0].mxu0 %v723
        %v987 = vpop.f32.mrb[0].mxu0
        %v988 = vadd.f32 %v454, %v987
        %v989 = vpop.f32.mrb[0].mxu0
        %v990 = vpop.f32.mrb[0].mxu0
        %v991 = vadd.f32 %v454, %v990
        %v992 = vpop.f32.mrb[0].mxu0
        %993 = vmatprep.mubr.bf16.mxu0 0
        %994 = vmatmul.mubr.bf16.gmra.mrb[0].mxu0 %v726
        %v995 = vpop.f32.mrb[0].mxu0
        %v996 = vadd.f32 %v454, %v995
        %v997 = vpop.f32.mrb[0].mxu0
        %v998 = vpop.f32.mrb[0].mxu0
        %v999 = vadd.f32 %v454, %v998
        %v1000 = vpop.f32.mrb[0].mxu0
        %1001 = vmatprep.mubr.bf16.mxu0 0
        %1002 = vmatmul.mubr.bf16.gmra.mrb[0].mxu0 %v729
        %v1003 = vpop.f32.mrb[0].mxu0
        %v1004 = vadd.f32 %v454, %v1003
        %v1005 = vpop.f32.mrb[0].mxu0
        %v1006 = vpop.f32.mrb[0].mxu0
        %v1007 = vadd.f32 %v454, %v1006
        %v1008 = vpop.f32.mrb[0].mxu0
        %1009 = vmatprep.mubr.bf16.mxu0 0
        %1010 = vmatmul.mubr.bf16.gmra.mrb[0].mxu0 %v732
        %v1011 = vpop.f32.mrb[0].mxu0
        %v1012 = vadd.f32 %v454, %v1011
        %v1013 = vpop.f32.mrb[0].mxu0
        %v1014 = vpop.f32.mrb[0].mxu0
        %v1015 = vadd.f32 %v454, %v1014
        %v1016 = vpop.f32.mrb[0].mxu0
        %1017 = vmatprep.mubr.bf16.mxu0 0
        %1018 = vmatmul.mubr.bf16.gmra.mrb[0].mxu0 %v735
        %v1019 = vpop.f32.mrb[0].mxu0
        %v1020 = vadd.f32 %v454, %v1019
        %v1021 = vpop.f32.mrb[0].mxu0
        %v1022 = vpop.f32.mrb[0].mxu0
        %v1023 = vadd.f32 %v454, %v1022
        %v1024 = vpop.f32.mrb[0].mxu0
        %1025 = vdwg.mxu0
        %v1026 = vmax.f32 %v772, 0.0
        %v1027 = vmax.f32 %v775, 0.0
        %v1028 = vmax.f32 %v780, 0.0
        %v1029 = vmax.f32 %v783, 0.0
        %v1030 = vmax.f32 %v788, 0.0
        %v1031 = vmax.f32 %v791, 0.0
        %v1032 = vmax.f32 %v796, 0.0
        %v1033 = vmax.f32 %v799, 0.0
        %v1034 = vmax.f32 %v804, 0.0
        %v1035 = vmax.f32 %v807, 0.0
        %v1036 = vmax.f32 %v812, 0.0
        %v1037 = vmax.f32 %v815, 0.0
        %v1038 = vmax.f32 %v820, 0.0
        %v1039 = vmax.f32 %v823, 0.0
        %v1040 = vmax.f32 %v828, 0.0
        %v1041 = vmax.f32 %v831, 0.0
        %v1042 = vmax.f32 %v836, 0.0
        %v1043 = vmax.f32 %v839, 0.0
        %v1044 = vmax.f32 %v844, 0.0
        %v1045 = vmax.f32 %v847, 0.0
        %v1046 = vmax.f32 %v852, 0.0
        %v1047 = vmax.f32 %v855, 0.0
        %v1048 = vmax.f32 %v860, 0.0
        %v1049 = vmax.f32 %v863, 0.0
        %v1050 = vmax.f32 %v868, 0.0
        %v1051 = vmax.f32 %v871, 0.0
        %v1052 = vmax.f32 %v876, 0.0
        %v1053 = vmax.f32 %v879, 0.0
        %v1054 = vmax.f32 %v884, 0.0
        %v1055 = vmax.f32 %v887, 0.0
        %v1056 = vmax.f32 %v892, 0.0
        %v1057 = vmax.f32 %v895, 0.0
        %v1058 = vmax.f32 %v900, 0.0
        %v1059 = vmax.f32 %v903, 0.0
        %v1060 = vmax.f32 %v908, 0.0
        %v1061 = vmax.f32 %v911, 0.0
        %v1062 = vmax.f32 %v916, 0.0
        %v1063 = vmax.f32 %v919, 0.0
        %v1064 = vmax.f32 %v924, 0.0
        %v1065 = vmax.f32 %v927, 0.0
        %v1066 = vmax.f32 %v932, 0.0
        %v1067 = vmax.f32 %v935, 0.0
        %v1068 = vmax.f32 %v940, 0.0
        %v1069 = vmax.f32 %v943, 0.0
        %v1070 = vmax.f32 %v948, 0.0
        %v1071 = vmax.f32 %v951, 0.0
        %v1072 = vmax.f32 %v956, 0.0
        %v1073 = vmax.f32 %v959, 0.0
        %v1074 = vmax.f32 %v964, 0.0
        %v1075 = vmax.f32 %v967, 0.0
        %v1076 = vmax.f32 %v972, 0.0
        %v1077 = vmax.f32 %v975, 0.0
        %v1078 = vmax.f32 %v980, 0.0
        %v1079 = vmax.f32 %v983, 0.0
        %v1080 = vmax.f32 %v988, 0.0
        %v1081 = vmax.f32 %v991, 0.0
        %v1082 = vmax.f32 %v996, 0.0
        %v1083 = vmax.f32 %v999, 0.0
        %v1084 = vmax.f32 %v1004, 0.0
        %v1085 = vmax.f32 %v1007, 0.0
        %v1086 = vmax.f32 %v1012, 0.0
        %v1087 = vmax.f32 %v1015, 0.0
        %v1088 = vmax.f32 %v1020, 0.0
        %v1089 = vmax.f32 %v1023, 0.0
        %v1090 = vpack.c.bf16 %v1027, %v1026
        %v1091 = vpack.c.bf16 %v1029, %v1028
        %v1092 = vpack.c.bf16 %v1031, %v1030
        %v1093 = vpack.c.bf16 %v1033, %v1032
        %v1094 = vpack.c.bf16 %v1035, %v1034
        %v1095 = vpack.c.bf16 %v1037, %v1036
        %v1096 = vpack.c.bf16 %v1039, %v1038
        %v1097 = vpack.c.bf16 %v1041, %v1040
        %v1098 = vpack.c.bf16 %v1043, %v1042
        %v1099 = vpack.c.bf16 %v1045, %v1044
        %v1100 = vpack.c.bf16 %v1047, %v1046
        %v1101 = vpack.c.bf16 %v1049, %v1048
        %v1102 = vpack.c.bf16 %v1051, %v1050
        %v1103 = vpack.c.bf16 %v1053, %v1052
        %v1104 = vpack.c.bf16 %v1055, %v1054
        %v1105 = vpack.c.bf16 %v1057, %v1056
        %v1106 = vpack.c.bf16 %v1059, %v1058
        %v1107 = vpack.c.bf16 %v1061, %v1060
        %v1108 = vpack.c.bf16 %v1063, %v1062
        %v1109 = vpack.c.bf16 %v1065, %v1064
        %v1110 = vpack.c.bf16 %v1067, %v1066
        %v1111 = vpack.c.bf16 %v1069, %v1068
        %v1112 = vpack.c.bf16 %v1071, %v1070
        %v1113 = vpack.c.bf16 %v1073, %v1072
        %v1114 = vpack.c.bf16 %v1075, %v1074
        %v1115 = vpack.c.bf16 %v1077, %v1076
        %v1116 = vpack.c.bf16 %v1079, %v1078
        %v1117 = vpack.c.bf16 %v1081, %v1080
        %v1118 = vpack.c.bf16 %v1083, %v1082
        %v1119 = vpack.c.bf16 %v1085, %v1084
        %v1120 = vpack.c.bf16 %v1087, %v1086
        %v1121 = vpack.c.bf16 %v1089, %v1088
        %v1122 = vld [vmem:[%s4] sm:$0xff]
        %v1123 = vld [vmem:[%s4 + $0x8] sm:$0xff]
        %v1124 = vld [vmem:[%s4 + $0x10] sm:$0xff]
        %v1125 = vld [vmem:[%s4 + $0x18] sm:$0xff]
        %v1126 = vld [vmem:[%s5] sm:$0x3]
        %v1128 = vlaneseq
        %v1129 = vshrl.u32 %v1128, 7
        %v1130 = vsub.s32 0, %v1129
        %v1131 = vrot.slane %v1126, %v1130
        %v1132 = vlaneseq
        %v1133 = vshrl.u32 %v1132, 7
        %v1134 = vsub.s32 1, %v1133
        %v1135 = vrot.slane %v1126, %v1134
        %v1142 = vunpack.c.l.b16 %v1122
        %v1143 = vunpack.c.h.b16 %v1122
        %v1144 = vunpack.c.l.b16 %v1123
        %v1145 = vunpack.c.h.b16 %v1123
        %v1146 = vunpack.c.l.b16 %v1124
        %v1147 = vunpack.c.h.b16 %v1124
        %v1148 = vunpack.c.l.b16 %v1125
        %v1149 = vunpack.c.h.b16 %v1125
        %v1150 = vpack.c.b16 %v1144, %v1142
        %v1151 = vpack.c.b16 %v1145, %v1143
        %v1152 = vpack.c.b16 %v1148, %v1146
        %v1153 = vpack.c.b16 %v1149, %v1147
        %vm1158 = vcmask 261120
        %v1160 = vsel %vm1158, %v1090, 0
        %v1163 = vsel %vm1158, %v1091, 0
        %v1166 = vsel %vm1158, %v1092, 0
        %v1169 = vsel %vm1158, %v1093, 0
        %v1172 = vsel %vm1158, %v1094, 0
        %v1175 = vsel %vm1158, %v1095, 0
        %v1178 = vsel %vm1158, %v1096, 0
        %v1181 = vsel %vm1158, %v1097, 0
        %v1184 = vsel %vm1158, %v1098, 0
        %v1187 = vsel %vm1158, %v1099, 0
        %v1190 = vsel %vm1158, %v1100, 0
        %v1193 = vsel %vm1158, %v1101, 0
        %v1196 = vsel %vm1158, %v1102, 0
        %v1199 = vsel %vm1158, %v1103, 0
        %v1202 = vsel %vm1158, %v1104, 0
        %v1205 = vsel %vm1158, %v1105, 0
        %v1208 = vsel %vm1158, %v1106, 0
        %v1211 = vsel %vm1158, %v1107, 0
        %v1214 = vsel %vm1158, %v1108, 0
        %v1217 = vsel %vm1158, %v1109, 0
        %v1220 = vsel %vm1158, %v1110, 0
        %v1223 = vsel %vm1158, %v1111, 0
        %v1226 = vsel %vm1158, %v1112, 0
        %v1229 = vsel %vm1158, %v1113, 0
        %v1232 = vsel %vm1158, %v1114, 0
        %v1235 = vsel %vm1158, %v1115, 0
        %v1238 = vsel %vm1158, %v1116, 0
        %v1241 = vsel %vm1158, %v1117, 0
        %v1244 = vsel %vm1158, %v1118, 0
        %v1247 = vsel %vm1158, %v1119, 0
        %v1250 = vsel %vm1158, %v1120, 0
        %v1253 = vsel %vm1158, %v1121, 0
        %1255 = vmatprep.subr.bf16.mxu0 %v1151
        %1256 = vmatpush1.bf16.msra.mxu0 %v1150
        %1257 = vmatprep.subr.bf16.mxu0 %v1153
        %1258 = vmatpush1.bf16.msra.mxu0 %v1152
        %1259 = vmatprep.subr.bf16.mxu0 0
        %1260 = vmatpush1.bf16.msra.mxu0 0
        %1261 = vmatprep.subr.bf16.mxu0 0
        %1262 = vmatpush1.bf16.msra.mxu0 0
        %1263 = vmatprep.subr.bf16.mxu0 0
        %1264 = vmatpush1.bf16.msra.mxu0 0
        %1265 = vmatprep.subr.bf16.mxu0 0
        %1266 = vmatpush1.bf16.msra.mxu0 0
        %1267 = vmatprep.subr.bf16.mxu0 0
        %1268 = vmatpush1.bf16.msra.mxu0 0
        %1269 = vmatprep.subr.bf16.mxu0 0
        %1270 = vmatpush1.bf16.msra.mxu0 0
        %1271 = vmatprep.subr.bf16.mxu0 0
        %1272 = vmatpush1.bf16.msra.mxu0 0
        %1273 = vmatprep.subr.bf16.mxu0 0
        %1274 = vmatpush1.bf16.msra.mxu0 0
        %1275 = vmatprep.subr.bf16.mxu0 0
        %1276 = vmatpush1.bf16.msra.mxu0 0
        %1277 = vmatprep.subr.bf16.mxu0 0
        %1278 = vmatpush1.bf16.msra.mxu0 0
        %1279 = vmatprep.subr.bf16.mxu0 0
        %1280 = vmatpush1.bf16.msra.mxu0 0
        %1281 = vmatprep.subr.bf16.mxu0 0
        %1282 = vmatpush1.bf16.msra.mxu0 0
        %1283 = vmatprep.subr.bf16.mxu0 0
        %1284 = vmatpush1.bf16.msra.mxu0 0
        %1285 = vmatprep.subr.bf16.mxu0 0
        %1286 = vmatpush1.bf16.msra.mxu0 0
        %1287 = vmatprep.mubr.bf16.mxu0 0
        %1288 = vmatmul.mubr.bf16.gmra.mrb[0].mxu0 %v1160
        %v1289 = vpop.f32.mrb[0].mxu0
        %v1290 = vadd.f32 %v1131, %v1289
        %v1291 = vpop.f32.mrb[0].mxu0
        %v1292 = vadd.f32 %v1135, %v1291
        %v1293 = vpop.f32.mrb[0].mxu0
        %v1294 = vadd.f32 %v1131, %v1293
        %v1295 = vpop.f32.mrb[0].mxu0
        %v1296 = vadd.f32 %v1135, %v1295
        %1297 = vmatprep.mubr.bf16.mxu0 0
        %1298 = vmatmul.mubr.bf16.gmra.mrb[0].mxu0 %v1163
        %v1299 = vpop.f32.mrb[0].mxu0
        %v1300 = vadd.f32 %v1131, %v1299
        %v1301 = vpop.f32.mrb[0].mxu0
        %v1302 = vadd.f32 %v1135, %v1301
        %v1303 = vpop.f32.mrb[0].mxu0
        %v1304 = vadd.f32 %v1131, %v1303
        %v1305 = vpop.f32.mrb[0].mxu0
        %v1306 = vadd.f32 %v1135, %v1305
        %1307 = vmatprep.mubr.bf16.mxu0 0
        %1308 = vmatmul.mubr.bf16.gmra.mrb[0].mxu0 %v1166
        %v1309 = vpop.f32.mrb[0].mxu0
        %v1310 = vadd.f32 %v1131, %v1309
        %v1311 = vpop.f32.mrb[0].mxu0
        %v1312 = vadd.f32 %v1135, %v1311
        %v1313 = vpop.f32.mrb[0].mxu0
        %v1314 = vadd.f32 %v1131, %v1313
        %v1315 = vpop.f32.mrb[0].mxu0
        %v1316 = vadd.f32 %v1135, %v1315
        %1317 = vmatprep.mubr.bf16.mxu0 0
        %1318 = vmatmul.mubr.bf16.gmra.mrb[0].mxu0 %v1169
        %v1319 = vpop.f32.mrb[0].mxu0
        %v1320 = vadd.f32 %v1131, %v1319
        %v1321 = vpop.f32.mrb[0].mxu0
        %v1322 = vadd.f32 %v1135, %v1321
        %v1323 = vpop.f32.mrb[0].mxu0
        %v1324 = vadd.f32 %v1131, %v1323
        %v1325 = vpop.f32.mrb[0].mxu0
        %v1326 = vadd.f32 %v1135, %v1325
        %1327 = vmatprep.mubr.bf16.mxu0 0
        %1328 = vmatmul.mubr.bf16.gmra.mrb[0].mxu0 %v1172
        %v1329 = vpop.f32.mrb[0].mxu0
        %v1330 = vadd.f32 %v1131, %v1329
        %v1331 = vpop.f32.mrb[0].mxu0
        %v1332 = vadd.f32 %v1135, %v1331
        %v1333 = vpop.f32.mrb[0].mxu0
        %v1334 = vadd.f32 %v1131, %v1333
        %v1335 = vpop.f32.mrb[0].mxu0
        %v1336 = vadd.f32 %v1135, %v1335
        %1337 = vmatprep.mubr.bf16.mxu0 0
        %1338 = vmatmul.mubr.bf16.gmra.mrb[0].mxu0 %v1175
        %v1339 = vpop.f32.mrb[0].mxu0
        %v1340 = vadd.f32 %v1131, %v1339
        %v1341 = vpop.f32.mrb[0].mxu0
        %v1342 = vadd.f32 %v1135, %v1341
        %v1343 = vpop.f32.mrb[0].mxu0
        %v1344 = vadd.f32 %v1131, %v1343
        %v1345 = vpop.f32.mrb[0].mxu0
        %v1346 = vadd.f32 %v1135, %v1345
        %1347 = vmatprep.mubr.bf16.mxu0 0
        %1348 = vmatmul.mubr.bf16.gmra.mrb[0].mxu0 %v1178
        %v1349 = vpop.f32.mrb[0].mxu0
        %v1350 = vadd.f32 %v1131, %v1349
        %v1351 = vpop.f32.mrb[0].mxu0
        %v1352 = vadd.f32 %v1135, %v1351
        %v1353 = vpop.f32.mrb[0].mxu0
        %v1354 = vadd.f32 %v1131, %v1353
        %v1355 = vpop.f32.mrb[0].mxu0
        %v1356 = vadd.f32 %v1135, %v1355
        %1357 = vmatprep.mubr.bf16.mxu0 0
        %1358 = vmatmul.mubr.bf16.gmra.mrb[0].mxu0 %v1181
        %v1359 = vpop.f32.mrb[0].mxu0
        %v1360 = vadd.f32 %v1131, %v1359
        %v1361 = vpop.f32.mrb[0].mxu0
        %v1362 = vadd.f32 %v1135, %v1361
        %v1363 = vpop.f32.mrb[0].mxu0
        %v1364 = vadd.f32 %v1131, %v1363
        %v1365 = vpop.f32.mrb[0].mxu0
        %v1366 = vadd.f32 %v1135, %v1365
        %1367 = vmatprep.mubr.bf16.mxu0 0
        %1368 = vmatmul.mubr.bf16.gmra.mrb[0].mxu0 %v1184
        %v1369 = vpop.f32.mrb[0].mxu0
        %v1370 = vadd.f32 %v1131, %v1369
        %v1371 = vpop.f32.mrb[0].mxu0
        %v1372 = vadd.f32 %v1135, %v1371
        %v1373 = vpop.f32.mrb[0].mxu0
        %v1374 = vadd.f32 %v1131, %v1373
        %v1375 = vpop.f32.mrb[0].mxu0
        %v1376 = vadd.f32 %v1135, %v1375
        %1377 = vmatprep.mubr.bf16.mxu0 0
        %1378 = vmatmul.mubr.bf16.gmra.mrb[0].mxu0 %v1187
        %v1379 = vpop.f32.mrb[0].mxu0
        %v1380 = vadd.f32 %v1131, %v1379
        %v1381 = vpop.f32.mrb[0].mxu0
        %v1382 = vadd.f32 %v1135, %v1381
        %v1383 = vpop.f32.mrb[0].mxu0
        %v1384 = vadd.f32 %v1131, %v1383
        %v1385 = vpop.f32.mrb[0].mxu0
        %v1386 = vadd.f32 %v1135, %v1385
        %1387 = vmatprep.mubr.bf16.mxu0 0
        %1388 = vmatmul.mubr.bf16.gmra.mrb[0].mxu0 %v1190
        %v1389 = vpop.f32.mrb[0].mxu0
        %v1390 = vadd.f32 %v1131, %v1389
        %v1391 = vpop.f32.mrb[0].mxu0
        %v1392 = vadd.f32 %v1135, %v1391
        %v1393 = vpop.f32.mrb[0].mxu0
        %v1394 = vadd.f32 %v1131, %v1393
        %v1395 = vpop.f32.mrb[0].mxu0
        %v1396 = vadd.f32 %v1135, %v1395
        %1397 = vmatprep.mubr.bf16.mxu0 0
        %1398 = vmatmul.mubr.bf16.gmra.mrb[0].mxu0 %v1193
        %v1399 = vpop.f32.mrb[0].mxu0
        %v1400 = vadd.f32 %v1131, %v1399
        %v1401 = vpop.f32.mrb[0].mxu0
        %v1402 = vadd.f32 %v1135, %v1401
        %v1403 = vpop.f32.mrb[0].mxu0
        %v1404 = vadd.f32 %v1131, %v1403
        %v1405 = vpop.f32.mrb[0].mxu0
        %v1406 = vadd.f32 %v1135, %v1405
        %1407 = vmatprep.mubr.bf16.mxu0 0
        %1408 = vmatmul.mubr.bf16.gmra.mrb[0].mxu0 %v1196
        %v1409 = vpop.f32.mrb[0].mxu0
        %v1410 = vadd.f32 %v1131, %v1409
        %v1411 = vpop.f32.mrb[0].mxu0
        %v1412 = vadd.f32 %v1135, %v1411
        %v1413 = vpop.f32.mrb[0].mxu0
        %v1414 = vadd.f32 %v1131, %v1413
        %v1415 = vpop.f32.mrb[0].mxu0
        %v1416 = vadd.f32 %v1135, %v1415
        %1417 = vmatprep.mubr.bf16.mxu0 0
        %1418 = vmatmul.mubr.bf16.gmra.mrb[0].mxu0 %v1199
        %v1419 = vpop.f32.mrb[0].mxu0
        %v1420 = vadd.f32 %v1131, %v1419
        %v1421 = vpop.f32.mrb[0].mxu0
        %v1422 = vadd.f32 %v1135, %v1421
        %v1423 = vpop.f32.mrb[0].mxu0
        %v1424 = vadd.f32 %v1131, %v1423
        %v1425 = vpop.f32.mrb[0].mxu0
        %v1426 = vadd.f32 %v1135, %v1425
        %1427 = vmatprep.mubr.bf16.mxu0 0
        %1428 = vmatmul.mubr.bf16.gmra.mrb[0].mxu0 %v1202
        %v1429 = vpop.f32.mrb[0].mxu0
        %v1430 = vadd.f32 %v1131, %v1429
        %v1431 = vpop.f32.mrb[0].mxu0
        %v1432 = vadd.f32 %v1135, %v1431
        %v1433 = vpop.f32.mrb[0].mxu0
        %v1434 = vadd.f32 %v1131, %v1433
        %v1435 = vpop.f32.mrb[0].mxu0
        %v1436 = vadd.f32 %v1135, %v1435
        %1437 = vmatprep.mubr.bf16.mxu0 0
        %1438 = vmatmul.mubr.bf16.gmra.mrb[0].mxu0 %v1205
        %v1439 = vpop.f32.mrb[0].mxu0
        %v1440 = vadd.f32 %v1131, %v1439
        %v1441 = vpop.f32.mrb[0].mxu0
        %v1442 = vadd.f32 %v1135, %v1441
        %v1443 = vpop.f32.mrb[0].mxu0
        %v1444 = vadd.f32 %v1131, %v1443
        %v1445 = vpop.f32.mrb[0].mxu0
        %v1446 = vadd.f32 %v1135, %v1445
        %1447 = vmatprep.mubr.bf16.mxu0 0
        %1448 = vmatmul.mubr.bf16.gmra.mrb[0].mxu0 %v1208
        %v1449 = vpop.f32.mrb[0].mxu0
        %v1450 = vadd.f32 %v1131, %v1449
        %v1451 = vpop.f32.mrb[0].mxu0
        %v1452 = vadd.f32 %v1135, %v1451
        %v1453 = vpop.f32.mrb[0].mxu0
        %v1454 = vadd.f32 %v1131, %v1453
        %v1455 = vpop.f32.mrb[0].mxu0
        %v1456 = vadd.f32 %v1135, %v1455
        %1457 = vmatprep.mubr.bf16.mxu0 0
        %1458 = vmatmul.mubr.bf16.gmra.mrb[0].mxu0 %v1211
        %v1459 = vpop.f32.mrb[0].mxu0
        %v1460 = vadd.f32 %v1131, %v1459
        %v1461 = vpop.f32.mrb[0].mxu0
        %v1462 = vadd.f32 %v1135, %v1461
        %v1463 = vpop.f32.mrb[0].mxu0
        %v1464 = vadd.f32 %v1131, %v1463
        %v1465 = vpop.f32.mrb[0].mxu0
        %v1466 = vadd.f32 %v1135, %v1465
        %1467 = vmatprep.mubr.bf16.mxu0 0
        %1468 = vmatmul.mubr.bf16.gmra.mrb[0].mxu0 %v1214
        %v1469 = vpop.f32.mrb[0].mxu0
        %v1470 = vadd.f32 %v1131, %v1469
        %v1471 = vpop.f32.mrb[0].mxu0
        %v1472 = vadd.f32 %v1135, %v1471
        %v1473 = vpop.f32.mrb[0].mxu0
        %v1474 = vadd.f32 %v1131, %v1473
        %v1475 = vpop.f32.mrb[0].mxu0
        %v1476 = vadd.f32 %v1135, %v1475
        %1477 = vmatprep.mubr.bf16.mxu0 0
        %1478 = vmatmul.mubr.bf16.gmra.mrb[0].mxu0 %v1217
        %v1479 = vpop.f32.mrb[0].mxu0
        %v1480 = vadd.f32 %v1131, %v1479
        %v1481 = vpop.f32.mrb[0].mxu0
        %v1482 = vadd.f32 %v1135, %v1481
        %v1483 = vpop.f32.mrb[0].mxu0
        %v1484 = vadd.f32 %v1131, %v1483
        %v1485 = vpop.f32.mrb[0].mxu0
        %v1486 = vadd.f32 %v1135, %v1485
        %1487 = vmatprep.mubr.bf16.mxu0 0
        %1488 = vmatmul.mubr.bf16.gmra.mrb[0].mxu0 %v1220
        %v1489 = vpop.f32.mrb[0].mxu0
        %v1490 = vadd.f32 %v1131, %v1489
        %v1491 = vpop.f32.mrb[0].mxu0
        %v1492 = vadd.f32 %v1135, %v1491
        %v1493 = vpop.f32.mrb[0].mxu0
        %v1494 = vadd.f32 %v1131, %v1493
        %v1495 = vpop.f32.mrb[0].mxu0
        %v1496 = vadd.f32 %v1135, %v1495
        %1497 = vmatprep.mubr.bf16.mxu0 0
        %1498 = vmatmul.mubr.bf16.gmra.mrb[0].mxu0 %v1223
        %v1499 = vpop.f32.mrb[0].mxu0
        %v1500 = vadd.f32 %v1131, %v1499
        %v1501 = vpop.f32.mrb[0].mxu0
        %v1502 = vadd.f32 %v1135, %v1501
        %v1503 = vpop.f32.mrb[0].mxu0
        %v1504 = vadd.f32 %v1131, %v1503
        %v1505 = vpop.f32.mrb[0].mxu0
        %v1506 = vadd.f32 %v1135, %v1505
        %1507 = vmatprep.mubr.bf16.mxu0 0
        %1508 = vmatmul.mubr.bf16.gmra.mrb[0].mxu0 %v1226
        %v1509 = vpop.f32.mrb[0].mxu0
        %v1510 = vadd.f32 %v1131, %v1509
        %v1511 = vpop.f32.mrb[0].mxu0
        %v1512 = vadd.f32 %v1135, %v1511
        %v1513 = vpop.f32.mrb[0].mxu0
        %v1514 = vadd.f32 %v1131, %v1513
        %v1515 = vpop.f32.mrb[0].mxu0
        %v1516 = vadd.f32 %v1135, %v1515
        %1517 = vmatprep.mubr.bf16.mxu0 0
        %1518 = vmatmul.mubr.bf16.gmra.mrb[0].mxu0 %v1229
        %v1519 = vpop.f32.mrb[0].mxu0
        %v1520 = vadd.f32 %v1131, %v1519
        %v1521 = vpop.f32.mrb[0].mxu0
        %v1522 = vadd.f32 %v1135, %v1521
        %v1523 = vpop.f32.mrb[0].mxu0
        %v1524 = vadd.f32 %v1131, %v1523
        %v1525 = vpop.f32.mrb[0].mxu0
        %v1526 = vadd.f32 %v1135, %v1525
        %1527 = vmatprep.mubr.bf16.mxu0 0
        %1528 = vmatmul.mubr.bf16.gmra.mrb[0].mxu0 %v1232
        %v1529 = vpop.f32.mrb[0].mxu0
        %v1530 = vadd.f32 %v1131, %v1529
        %v1531 = vpop.f32.mrb[0].mxu0
        %v1532 = vadd.f32 %v1135, %v1531
        %v1533 = vpop.f32.mrb[0].mxu0
        %v1534 = vadd.f32 %v1131, %v1533
        %v1535 = vpop.f32.mrb[0].mxu0
        %v1536 = vadd.f32 %v1135, %v1535
        %1537 = vmatprep.mubr.bf16.mxu0 0
        %1538 = vmatmul.mubr.bf16.gmra.mrb[0].mxu0 %v1235
        %v1539 = vpop.f32.mrb[0].mxu0
        %v1540 = vadd.f32 %v1131, %v1539
        %v1541 = vpop.f32.mrb[0].mxu0
        %v1542 = vadd.f32 %v1135, %v1541
        %v1543 = vpop.f32.mrb[0].mxu0
        %v1544 = vadd.f32 %v1131, %v1543
        %v1545 = vpop.f32.mrb[0].mxu0
        %v1546 = vadd.f32 %v1135, %v1545
        %1547 = vmatprep.mubr.bf16.mxu0 0
        %1548 = vmatmul.mubr.bf16.gmra.mrb[0].mxu0 %v1238
        %v1549 = vpop.f32.mrb[0].mxu0
        %v1550 = vadd.f32 %v1131, %v1549
        %v1551 = vpop.f32.mrb[0].mxu0
        %v1552 = vadd.f32 %v1135, %v1551
        %v1553 = vpop.f32.mrb[0].mxu0
        %v1554 = vadd.f32 %v1131, %v1553
        %v1555 = vpop.f32.mrb[0].mxu0
        %v1556 = vadd.f32 %v1135, %v1555
        %1557 = vmatprep.mubr.bf16.mxu0 0
        %1558 = vmatmul.mubr.bf16.gmra.mrb[0].mxu0 %v1241
        %v1559 = vpop.f32.mrb[0].mxu0
        %v1560 = vadd.f32 %v1131, %v1559
        %v1561 = vpop.f32.mrb[0].mxu0
        %v1562 = vadd.f32 %v1135, %v1561
        %v1563 = vpop.f32.mrb[0].mxu0
        %v1564 = vadd.f32 %v1131, %v1563
        %v1565 = vpop.f32.mrb[0].mxu0
        %v1566 = vadd.f32 %v1135, %v1565
        %1567 = vmatprep.mubr.bf16.mxu0 0
        %1568 = vmatmul.mubr.bf16.gmra.mrb[0].mxu0 %v1244
        %v1569 = vpop.f32.mrb[0].mxu0
        %v1570 = vadd.f32 %v1131, %v1569
        %v1571 = vpop.f32.mrb[0].mxu0
        %v1572 = vadd.f32 %v1135, %v1571
        %v1573 = vpop.f32.mrb[0].mxu0
        %v1574 = vadd.f32 %v1131, %v1573
        %v1575 = vpop.f32.mrb[0].mxu0
        %v1576 = vadd.f32 %v1135, %v1575
        %1577 = vmatprep.mubr.bf16.mxu0 0
        %1578 = vmatmul.mubr.bf16.gmra.mrb[0].mxu0 %v1247
        %v1579 = vpop.f32.mrb[0].mxu0
        %v1580 = vadd.f32 %v1131, %v1579
        %v1581 = vpop.f32.mrb[0].mxu0
        %v1582 = vadd.f32 %v1135, %v1581
        %v1583 = vpop.f32.mrb[0].mxu0
        %v1584 = vadd.f32 %v1131, %v1583
        %v1585 = vpop.f32.mrb[0].mxu0
        %v1586 = vadd.f32 %v1135, %v1585
        %1587 = vmatprep.mubr.bf16.mxu0 0
        %1588 = vmatmul.mubr.bf16.gmra.mrb[0].mxu0 %v1250
        %v1589 = vpop.f32.mrb[0].mxu0
        %v1590 = vadd.f32 %v1131, %v1589
        %v1591 = vpop.f32.mrb[0].mxu0
        %v1592 = vadd.f32 %v1135, %v1591
        %v1593 = vpop.f32.mrb[0].mxu0
        %v1594 = vadd.f32 %v1131, %v1593
        %v1595 = vpop.f32.mrb[0].mxu0
        %v1596 = vadd.f32 %v1135, %v1595
        %1597 = vmatprep.mubr.bf16.mxu0 0
        %1598 = vmatmul.mubr.bf16.gmra.mrb[0].mxu0 %v1253
        %v1599 = vpop.f32.mrb[0].mxu0
        %v1600 = vadd.f32 %v1131, %v1599
        %v1601 = vpop.f32.mrb[0].mxu0
        %v1602 = vadd.f32 %v1135, %v1601
        %v1603 = vpop.f32.mrb[0].mxu0
        %v1604 = vadd.f32 %v1131, %v1603
        %v1605 = vpop.f32.mrb[0].mxu0
        %v1606 = vadd.f32 %v1135, %v1605
        %1607 = vdwg.mxu0
        %v1608 = vtanh.pop %v1290
        %v1609 = vtanh.pop %v1294
        %v1610 = vtanh.pop %v1300
        %v1611 = vtanh.pop %v1304
        %v1612 = vtanh.pop %v1310
        %v1613 = vtanh.pop %v1314
        %v1614 = vtanh.pop %v1320
        %v1615 = vtanh.pop %v1324
        %v1616 = vtanh.pop %v1330
        %v1617 = vtanh.pop %v1334
        %v1618 = vtanh.pop %v1340
        %v1619 = vtanh.pop %v1344
        %v1620 = vtanh.pop %v1350
        %v1621 = vtanh.pop %v1354
        %v1622 = vtanh.pop %v1360
        %v1623 = vtanh.pop %v1364
        %v1624 = vtanh.pop %v1370
        %v1625 = vtanh.pop %v1374
        %v1626 = vtanh.pop %v1380
        %v1627 = vtanh.pop %v1384
        %v1628 = vtanh.pop %v1390
        %v1629 = vtanh.pop %v1394
        %v1630 = vtanh.pop %v1400
        %v1631 = vtanh.pop %v1404
        %v1632 = vtanh.pop %v1410
        %v1633 = vtanh.pop %v1414
        %v1634 = vtanh.pop %v1420
        %v1635 = vtanh.pop %v1424
        %v1636 = vtanh.pop %v1430
        %v1637 = vtanh.pop %v1434
        %v1638 = vtanh.pop %v1440
        %v1639 = vtanh.pop %v1444
        %v1640 = vtanh.pop %v1450
        %v1641 = vtanh.pop %v1454
        %v1642 = vtanh.pop %v1460
        %v1643 = vtanh.pop %v1464
        %v1644 = vtanh.pop %v1470
        %v1645 = vtanh.pop %v1474
        %v1646 = vtanh.pop %v1480
        %v1647 = vtanh.pop %v1484
        %v1648 = vtanh.pop %v1490
        %v1649 = vtanh.pop %v1494
        %v1650 = vtanh.pop %v1500
        %v1651 = vtanh.pop %v1504
        %v1652 = vtanh.pop %v1510
        %v1653 = vtanh.pop %v1514
        %v1654 = vtanh.pop %v1520
        %v1655 = vtanh.pop %v1524
        %v1656 = vtanh.pop %v1530
        %v1657 = vtanh.pop %v1534
        %v1658 = vtanh.pop %v1540
        %v1659 = vtanh.pop %v1544
        %v1660 = vtanh.pop %v1550
        %v1661 = vtanh.pop %v1554
        %v1662 = vtanh.pop %v1560
        %v1663 = vtanh.pop %v1564
        %v1664 = vtanh.pop %v1570
        %v1665 = vtanh.pop %v1574
        %v1666 = vtanh.pop %v1580
        %v1667 = vtanh.pop %v1584
        %v1668 = vtanh.pop %v1590
        %v1669 = vtanh.pop %v1594
        %v1670 = vtanh.pop %v1600
        %v1671 = vtanh.pop %v1604
        %v1672 = vxor.u32 %v1292, 2147483648
        %v1673 = vxor.u32 %v1296, 2147483648
        %v1674 = vxor.u32 %v1302, 2147483648
        %v1675 = vxor.u32 %v1306, 2147483648
        %v1676 = vxor.u32 %v1312, 2147483648
        %v1677 = vxor.u32 %v1316, 2147483648
        %v1678 = vxor.u32 %v1322, 2147483648
        %v1679 = vxor.u32 %v1326, 2147483648
        %v1680 = vxor.u32 %v1332, 2147483648
        %v1681 = vxor.u32 %v1336, 2147483648
        %v1682 = vxor.u32 %v1342, 2147483648
        %v1683 = vxor.u32 %v1346, 2147483648
        %v1684 = vxor.u32 %v1352, 2147483648
        %v1685 = vxor.u32 %v1356, 2147483648
        %v1686 = vxor.u32 %v1362, 2147483648
        %v1687 = vxor.u32 %v1366, 2147483648
        %v1688 = vxor.u32 %v1372, 2147483648
        %v1689 = vxor.u32 %v1376, 2147483648
        %v1690 = vxor.u32 %v1382, 2147483648
        %v1691 = vxor.u32 %v1386, 2147483648
        %v1692 = vxor.u32 %v1392, 2147483648
        %v1693 = vxor.u32 %v1396, 2147483648
        %v1694 = vxor.u32 %v1402, 2147483648
        %v1695 = vxor.u32 %v1406, 2147483648
        %v1696 = vxor.u32 %v1412, 2147483648
        %v1697 = vxor.u32 %v1416, 2147483648
        %v1698 = vxor.u32 %v1422, 2147483648
        %v1699 = vxor.u32 %v1426, 2147483648
        %v1700 = vxor.u32 %v1432, 2147483648
        %v1701 = vxor.u32 %v1436, 2147483648
        %v1702 = vxor.u32 %v1442, 2147483648
        %v1703 = vxor.u32 %v1446, 2147483648
        %v1704 = vxor.u32 %v1452, 2147483648
        %v1705 = vxor.u32 %v1456, 2147483648
        %v1706 = vxor.u32 %v1462, 2147483648
        %v1707 = vxor.u32 %v1466, 2147483648
        %v1708 = vxor.u32 %v1472, 2147483648
        %v1709 = vxor.u32 %v1476, 2147483648
        %v1710 = vxor.u32 %v1482, 2147483648
        %v1711 = vxor.u32 %v1486, 2147483648
        %v1712 = vxor.u32 %v1492, 2147483648
        %v1713 = vxor.u32 %v1496, 2147483648
        %v1714 = vxor.u32 %v1502, 2147483648
        %v1715 = vxor.u32 %v1506, 2147483648
        %v1716 = vxor.u32 %v1512, 2147483648
        %v1717 = vxor.u32 %v1516, 2147483648
        %v1718 = vxor.u32 %v1522, 2147483648
        %v1719 = vxor.u32 %v1526, 2147483648
        %v1720 = vxor.u32 %v1532, 2147483648
        %v1721 = vxor.u32 %v1536, 2147483648
        %v1722 = vxor.u32 %v1542, 2147483648
        %v1723 = vxor.u32 %v1546, 2147483648
        %v1724 = vxor.u32 %v1552, 2147483648
        %v1725 = vxor.u32 %v1556, 2147483648
        %v1726 = vxor.u32 %v1562, 2147483648
        %v1727 = vxor.u32 %v1566, 2147483648
        %v1728 = vxor.u32 %v1572, 2147483648
        %v1729 = vxor.u32 %v1576, 2147483648
        %v1730 = vxor.u32 %v1582, 2147483648
        %v1731 = vxor.u32 %v1586, 2147483648
        %v1732 = vxor.u32 %v1592, 2147483648
        %v1733 = vxor.u32 %v1596, 2147483648
        %v1734 = vxor.u32 %v1602, 2147483648
        %v1735 = vxor.u32 %v1606, 2147483648
        %v1736 = vmul.f32 %v1672, 1.442695
        %v1737 = vpow.pop %v1736
        %v1738 = vmul.f32 %v1673, 1.442695
        %v1739 = vpow.pop %v1738
        %v1740 = vmul.f32 %v1674, 1.442695
        %v1741 = vpow.pop %v1740
        %v1742 = vmul.f32 %v1675, 1.442695
        %v1743 = vpow.pop %v1742
        %v1744 = vmul.f32 %v1676, 1.442695
        %v1745 = vpow.pop %v1744
        %v1746 = vmul.f32 %v1677, 1.442695
        %v1747 = vpow.pop %v1746
        %v1748 = vmul.f32 %v1678, 1.442695
        %v1749 = vpow.pop %v1748
        %v1750 = vmul.f32 %v1679, 1.442695
        %v1751 = vpow.pop %v1750
        %v1752 = vmul.f32 %v1680, 1.442695
        %v1753 = vpow.pop %v1752
        %v1754 = vmul.f32 %v1681, 1.442695
        %v1755 = vpow.pop %v1754
        %v1756 = vmul.f32 %v1682, 1.442695
        %v1757 = vpow.pop %v1756
        %v1758 = vmul.f32 %v1683, 1.442695
        %v1759 = vpow.pop %v1758
        %v1760 = vmul.f32 %v1684, 1.442695
        %v1761 = vpow.pop %v1760
        %v1762 = vmul.f32 %v1685, 1.442695
        %v1763 = vpow.pop %v1762
        %v1764 = vmul.f32 %v1686, 1.442695
        %v1765 = vpow.pop %v1764
        %v1766 = vmul.f32 %v1687, 1.442695
        %v1767 = vpow.pop %v1766
        %v1768 = vmul.f32 %v1688, 1.442695
        %v1769 = vpow.pop %v1768
        %v1770 = vmul.f32 %v1689, 1.442695
        %v1771 = vpow.pop %v1770
        %v1772 = vmul.f32 %v1690, 1.442695
        %v1773 = vpow.pop %v1772
        %v1774 = vmul.f32 %v1691, 1.442695
        %v1775 = vpow.pop %v1774
        %v1776 = vmul.f32 %v1692, 1.442695
        %v1777 = vpow.pop %v1776
        %v1778 = vmul.f32 %v1693, 1.442695
        %v1779 = vpow.pop %v1778
        %v1780 = vmul.f32 %v1694, 1.442695
        %v1781 = vpow.pop %v1780
        %v1782 = vmul.f32 %v1695, 1.442695
        %v1783 = vpow.pop %v1782
        %v1784 = vmul.f32 %v1696, 1.442695
        %v1785 = vpow.pop %v1784
        %v1786 = vmul.f32 %v1697, 1.442695
        %v1787 = vpow.pop %v1786
        %v1788 = vmul.f32 %v1698, 1.442695
        %v1789 = vpow.pop %v1788
        %v1790 = vmul.f32 %v1699, 1.442695
        %v1791 = vpow.pop %v1790
        %v1792 = vmul.f32 %v1700, 1.442695
        %v1793 = vpow.pop %v1792
        %v1794 = vmul.f32 %v1701, 1.442695
        %v1795 = vpow.pop %v1794
        %v1796 = vmul.f32 %v1702, 1.442695
        %v1797 = vpow.pop %v1796
        %v1798 = vmul.f32 %v1703, 1.442695
        %v1799 = vpow.pop %v1798
        %v1800 = vmul.f32 %v1704, 1.442695
        %v1801 = vpow.pop %v1800
        %v1802 = vmul.f32 %v1705, 1.442695
        %v1803 = vpow.pop %v1802
        %v1804 = vmul.f32 %v1706, 1.442695
        %v1805 = vpow.pop %v1804
        %v1806 = vmul.f32 %v1707, 1.442695
        %v1807 = vpow.pop %v1806
        %v1808 = vmul.f32 %v1708, 1.442695
        %v1809 = vpow.pop %v1808
        %v1810 = vmul.f32 %v1709, 1.442695
        %v1811 = vpow.pop %v1810
        %v1812 = vmul.f32 %v1710, 1.442695
        %v1813 = vpow.pop %v1812
        %v1814 = vmul.f32 %v1711, 1.442695
        %v1815 = vpow.pop %v1814
        %v1816 = vmul.f32 %v1712, 1.442695
        %v1817 = vpow.pop %v1816
        %v1818 = vmul.f32 %v1713, 1.442695
        %v1819 = vpow.pop %v1818
        %v1820 = vmul.f32 %v1714, 1.442695
        %v1821 = vpow.pop %v1820
        %v1822 = vmul.f32 %v1715, 1.442695
        %v1823 = vpow.pop %v1822
        %v1824 = vmul.f32 %v1716, 1.442695
        %v1825 = vpow.pop %v1824
        %v1826 = vmul.f32 %v1717, 1.442695
        %v1827 = vpow.pop %v1826
        %v1828 = vmul.f32 %v1718, 1.442695
        %v1829 = vpow.pop %v1828
        %v1830 = vmul.f32 %v1719, 1.442695
        %v1831 = vpow.pop %v1830
        %v1832 = vmul.f32 %v1720, 1.442695
        %v1833 = vpow.pop %v1832
        %v1834 = vmul.f32 %v1721, 1.442695
        %v1835 = vpow.pop %v1834
        %v1836 = vmul.f32 %v1722, 1.442695
        %v1837 = vpow.pop %v1836
        %v1838 = vmul.f32 %v1723, 1.442695
        %v1839 = vpow.pop %v1838
        %v1840 = vmul.f32 %v1724, 1.442695
        %v1841 = vpow.pop %v1840
        %v1842 = vmul.f32 %v1725, 1.442695
        %v1843 = vpow.pop %v1842
        %v1844 = vmul.f32 %v1726, 1.442695
        %v1845 = vpow.pop %v1844
        %v1846 = vmul.f32 %v1727, 1.442695
        %v1847 = vpow.pop %v1846
        %v1848 = vmul.f32 %v1728, 1.442695
        %v1849 = vpow.pop %v1848
        %v1850 = vmul.f32 %v1729, 1.442695
        %v1851 = vpow.pop %v1850
        %v1852 = vmul.f32 %v1730, 1.442695
        %v1853 = vpow.pop %v1852
        %v1854 = vmul.f32 %v1731, 1.442695
        %v1855 = vpow.pop %v1854
        %v1856 = vmul.f32 %v1732, 1.442695
        %v1857 = vpow.pop %v1856
        %v1858 = vmul.f32 %v1733, 1.442695
        %v1859 = vpow.pop %v1858
        %v1860 = vmul.f32 %v1734, 1.442695
        %v1861 = vpow.pop %v1860
        %v1862 = vmul.f32 %v1735, 1.442695
        %v1863 = vpow.pop %v1862
        %v1864 = vadd.f32 %v1737, 1.0
        %v1865 = vadd.f32 %v1739, 1.0
        %v1866 = vadd.f32 %v1741, 1.0
        %v1867 = vadd.f32 %v1743, 1.0
        %v1868 = vadd.f32 %v1745, 1.0
        %v1869 = vadd.f32 %v1747, 1.0
        %v1870 = vadd.f32 %v1749, 1.0
        %v1871 = vadd.f32 %v1751, 1.0
        %v1872 = vadd.f32 %v1753, 1.0
        %v1873 = vadd.f32 %v1755, 1.0
        %v1874 = vadd.f32 %v1757, 1.0
        %v1875 = vadd.f32 %v1759, 1.0
        %v1876 = vadd.f32 %v1761, 1.0
        %v1877 = vadd.f32 %v1763, 1.0
        %v1878 = vadd.f32 %v1765, 1.0
        %v1879 = vadd.f32 %v1767, 1.0
        %v1880 = vadd.f32 %v1769, 1.0
        %v1881 = vadd.f32 %v1771, 1.0
        %v1882 = vadd.f32 %v1773, 1.0
        %v1883 = vadd.f32 %v1775, 1.0
        %v1884 = vadd.f32 %v1777, 1.0
        %v1885 = vadd.f32 %v1779, 1.0
        %v1886 = vadd.f32 %v1781, 1.0
        %v1887 = vadd.f32 %v1783, 1.0
        %v1888 = vadd.f32 %v1785, 1.0
        %v1889 = vadd.f32 %v1787, 1.0
        %v1890 = vadd.f32 %v1789, 1.0
        %v1891 = vadd.f32 %v1791, 1.0
        %v1892 = vadd.f32 %v1793, 1.0
        %v1893 = vadd.f32 %v1795, 1.0
        %v1894 = vadd.f32 %v1797, 1.0
        %v1895 = vadd.f32 %v1799, 1.0
        %v1896 = vadd.f32 %v1801, 1.0
        %v1897 = vadd.f32 %v1803, 1.0
        %v1898 = vadd.f32 %v1805, 1.0
        %v1899 = vadd.f32 %v1807, 1.0
        %v1900 = vadd.f32 %v1809, 1.0
        %v1901 = vadd.f32 %v1811, 1.0
        %v1902 = vadd.f32 %v1813, 1.0
        %v1903 = vadd.f32 %v1815, 1.0
        %v1904 = vadd.f32 %v1817, 1.0
        %v1905 = vadd.f32 %v1819, 1.0
        %v1906 = vadd.f32 %v1821, 1.0
        %v1907 = vadd.f32 %v1823, 1.0
        %v1908 = vadd.f32 %v1825, 1.0
        %v1909 = vadd.f32 %v1827, 1.0
        %v1910 = vadd.f32 %v1829, 1.0
        %v1911 = vadd.f32 %v1831, 1.0
        %v1912 = vadd.f32 %v1833, 1.0
        %v1913 = vadd.f32 %v1835, 1.0
        %v1914 = vadd.f32 %v1837, 1.0
        %v1915 = vadd.f32 %v1839, 1.0
        %v1916 = vadd.f32 %v1841, 1.0
        %v1917 = vadd.f32 %v1843, 1.0
        %v1918 = vadd.f32 %v1845, 1.0
        %v1919 = vadd.f32 %v1847, 1.0
        %v1920 = vadd.f32 %v1849, 1.0
        %v1921 = vadd.f32 %v1851, 1.0
        %v1922 = vadd.f32 %v1853, 1.0
        %v1923 = vadd.f32 %v1855, 1.0
        %v1924 = vadd.f32 %v1857, 1.0
        %v1925 = vadd.f32 %v1859, 1.0
        %v1926 = vadd.f32 %v1861, 1.0
        %v1927 = vadd.f32 %v1863, 1.0
        %v1928 = vrcp.pop %v1864
        %v1929 = vmul.f32 1.0, %v1928
        %v1930 = vrcp.pop %v1865
        %v1931 = vmul.f32 1.0, %v1930
        %v1932 = vrcp.pop %v1866
        %v1933 = vmul.f32 1.0, %v1932
        %v1934 = vrcp.pop %v1867
        %v1935 = vmul.f32 1.0, %v1934
        %v1936 = vrcp.pop %v1868
        %v1937 = vmul.f32 1.0, %v1936
        %v1938 = vrcp.pop %v1869
        %v1939 = vmul.f32 1.0, %v1938
        %v1940 = vrcp.pop %v1870
        %v1941 = vmul.f32 1.0, %v1940
        %v1942 = vrcp.pop %v1871
        %v1943 = vmul.f32 1.0, %v1942
        %v1944 = vrcp.pop %v1872
        %v1945 = vmul.f32 1.0, %v1944
        %v1946 = vrcp.pop %v1873
        %v1947 = vmul.f32 1.0, %v1946
        %v1948 = vrcp.pop %v1874
        %v1949 = vmul.f32 1.0, %v1948
        %v1950 = vrcp.pop %v1875
        %v1951 = vmul.f32 1.0, %v1950
        %v1952 = vrcp.pop %v1876
        %v1953 = vmul.f32 1.0, %v1952
        %v1954 = vrcp.pop %v1877
        %v1955 = vmul.f32 1.0, %v1954
        %v1956 = vrcp.pop %v1878
        %v1957 = vmul.f32 1.0, %v1956
        %v1958 = vrcp.pop %v1879
        %v1959 = vmul.f32 1.0, %v1958
        %v1960 = vrcp.pop %v1880
        %v1961 = vmul.f32 1.0, %v1960
        %v1962 = vrcp.pop %v1881
        %v1963 = vmul.f32 1.0, %v1962
        %v1964 = vrcp.pop %v1882
        %v1965 = vmul.f32 1.0, %v1964
        %v1966 = vrcp.pop %v1883
        %v1967 = vmul.f32 1.0, %v1966
        %v1968 = vrcp.pop %v1884
        %v1969 = vmul.f32 1.0, %v1968
        %v1970 = vrcp.pop %v1885
        %v1971 = vmul.f32 1.0, %v1970
        %v1972 = vrcp.pop %v1886
        %v1973 = vmul.f32 1.0, %v1972
        %v1974 = vrcp.pop %v1887
        %v1975 = vmul.f32 1.0, %v1974
        %v1976 = vrcp.pop %v1888
        %v1977 = vmul.f32 1.0, %v1976
        %v1978 = vrcp.pop %v1889
        %v1979 = vmul.f32 1.0, %v1978
        %v1980 = vrcp.pop %v1890
        %v1981 = vmul.f32 1.0, %v1980
        %v1982 = vrcp.pop %v1891
        %v1983 = vmul.f32 1.0, %v1982
        %v1984 = vrcp.pop %v1892
        %v1985 = vmul.f32 1.0, %v1984
        %v1986 = vrcp.pop %v1893
        %v1987 = vmul.f32 1.0, %v1986
        %v1988 = vrcp.pop %v1894
        %v1989 = vmul.f32 1.0, %v1988
        %v1990 = vrcp.pop %v1895
        %v1991 = vmul.f32 1.0, %v1990
        %v1992 = vrcp.pop %v1896
        %v1993 = vmul.f32 1.0, %v1992
        %v1994 = vrcp.pop %v1897
        %v1995 = vmul.f32 1.0, %v1994
        %v1996 = vrcp.pop %v1898
        %v1997 = vmul.f32 1.0, %v1996
        %v1998 = vrcp.pop %v1899
        %v1999 = vmul.f32 1.0, %v1998
        %v2000 = vrcp.pop %v1900
        %v2001 = vmul.f32 1.0, %v2000
        %v2002 = vrcp.pop %v1901
        %v2003 = vmul.f32 1.0, %v2002
        %v2004 = vrcp.pop %v1902
        %v2005 = vmul.f32 1.0, %v2004
        %v2006 = vrcp.pop %v1903
        %v2007 = vmul.f32 1.0, %v2006
        %v2008 = vrcp.pop %v1904
        %v2009 = vmul.f32 1.0, %v2008
        %v2010 = vrcp.pop %v1905
        %v2011 = vmul.f32 1.0, %v2010
        %v2012 = vrcp.pop %v1906
        %v2013 = vmul.f32 1.0, %v2012
        %v2014 = vrcp.pop %v1907
        %v2015 = vmul.f32 1.0, %v2014
        %v2016 = vrcp.pop %v1908
        %v2017 = vmul.f32 1.0, %v2016
        %v2018 = vrcp.pop %v1909
        %v2019 = vmul.f32 1.0, %v2018
        %v2020 = vrcp.pop %v1910
        %v2021 = vmul.f32 1.0, %v2020
        %v2022 = vrcp.pop %v1911
        %v2023 = vmul.f32 1.0, %v2022
        %v2024 = vrcp.pop %v1912
        %v2025 = vmul.f32 1.0, %v2024
        %v2026 = vrcp.pop %v1913
        %v2027 = vmul.f32 1.0, %v2026
        %v2028 = vrcp.pop %v1914
        %v2029 = vmul.f32 1.0, %v2028
        %v2030 = vrcp.pop %v1915
        %v2031 = vmul.f32 1.0, %v2030
        %v2032 = vrcp.pop %v1916
        %v2033 = vmul.f32 1.0, %v2032
        %v2034 = vrcp.pop %v1917
        %v2035 = vmul.f32 1.0, %v2034
        %v2036 = vrcp.pop %v1918
        %v2037 = vmul.f32 1.0, %v2036
        %v2038 = vrcp.pop %v1919
        %v2039 = vmul.f32 1.0, %v2038
        %v2040 = vrcp.pop %v1920
        %v2041 = vmul.f32 1.0, %v2040
        %v2042 = vrcp.pop %v1921
        %v2043 = vmul.f32 1.0, %v2042
        %v2044 = vrcp.pop %v1922
        %v2045 = vmul.f32 1.0, %v2044
        %v2046 = vrcp.pop %v1923
        %v2047 = vmul.f32 1.0, %v2046
        %v2048 = vrcp.pop %v1924
        %v2049 = vmul.f32 1.0, %v2048
        %v2050 = vrcp.pop %v1925
        %v2051 = vmul.f32 1.0, %v2050
        %v2052 = vrcp.pop %v1926
        %v2053 = vmul.f32 1.0, %v2052
        %v2054 = vrcp.pop %v1927
        %v2055 = vmul.f32 1.0, %v2054
        %v2056 = vmul.f32 %v1608, %v1929
        %v2057 = vmul.f32 %v1609, %v1931
        %v2058 = vmul.f32 %v1610, %v1933
        %v2059 = vmul.f32 %v1611, %v1935
        %v2060 = vmul.f32 %v1612, %v1937
        %v2061 = vmul.f32 %v1613, %v1939
        %v2062 = vmul.f32 %v1614, %v1941
        %v2063 = vmul.f32 %v1615, %v1943
        %v2064 = vmul.f32 %v1616, %v1945
        %v2065 = vmul.f32 %v1617, %v1947
        %v2066 = vmul.f32 %v1618, %v1949
        %v2067 = vmul.f32 %v1619, %v1951
        %v2068 = vmul.f32 %v1620, %v1953
        %v2069 = vmul.f32 %v1621, %v1955
        %v2070 = vmul.f32 %v1622, %v1957
        %v2071 = vmul.f32 %v1623, %v1959
        %v2072 = vmul.f32 %v1624, %v1961
        %v2073 = vmul.f32 %v1625, %v1963
        %v2074 = vmul.f32 %v1626, %v1965
        %v2075 = vmul.f32 %v1627, %v1967
        %v2076 = vmul.f32 %v1628, %v1969
        %v2077 = vmul.f32 %v1629, %v1971
        %v2078 = vmul.f32 %v1630, %v1973
        %v2079 = vmul.f32 %v1631, %v1975
        %v2080 = vmul.f32 %v1632, %v1977
        %v2081 = vmul.f32 %v1633, %v1979
        %v2082 = vmul.f32 %v1634, %v1981
        %v2083 = vmul.f32 %v1635, %v1983
        %v2084 = vmul.f32 %v1636, %v1985
        %v2085 = vmul.f32 %v1637, %v1987
        %v2086 = vmul.f32 %v1638, %v1989
        %v2087 = vmul.f32 %v1639, %v1991
        %v2088 = vmul.f32 %v1640, %v1993
        %v2089 = vmul.f32 %v1641, %v1995
        %v2090 = vmul.f32 %v1642, %v1997
        %v2091 = vmul.f32 %v1643, %v1999
        %v2092 = vmul.f32 %v1644, %v2001
        %v2093 = vmul.f32 %v1645, %v2003
        %v2094 = vmul.f32 %v1646, %v2005
        %v2095 = vmul.f32 %v1647, %v2007
        %v2096 = vmul.f32 %v1648, %v2009
        %v2097 = vmul.f32 %v1649, %v2011
        %v2098 = vmul.f32 %v1650, %v2013
        %v2099 = vmul.f32 %v1651, %v2015
        %v2100 = vmul.f32 %v1652, %v2017
        %v2101 = vmul.f32 %v1653, %v2019
        %v2102 = vmul.f32 %v1654, %v2021
        %v2103 = vmul.f32 %v1655, %v2023
        %v2104 = vmul.f32 %v1656, %v2025
        %v2105 = vmul.f32 %v1657, %v2027
        %v2106 = vmul.f32 %v1658, %v2029
        %v2107 = vmul.f32 %v1659, %v2031
        %v2108 = vmul.f32 %v1660, %v2033
        %v2109 = vmul.f32 %v1661, %v2035
        %v2110 = vmul.f32 %v1662, %v2037
        %v2111 = vmul.f32 %v1663, %v2039
        %v2112 = vmul.f32 %v1664, %v2041
        %v2113 = vmul.f32 %v1665, %v2043
        %v2114 = vmul.f32 %v1666, %v2045
        %v2115 = vmul.f32 %v1667, %v2047
        %v2116 = vmul.f32 %v1668, %v2049
        %v2117 = vmul.f32 %v1669, %v2051
        %v2118 = vmul.f32 %v1670, %v2053
        %v2119 = vmul.f32 %v1671, %v2055
        %v2120 = vld [vmem:[%s6] sm:$0xff]
        %v2121 = vld [vmem:[%s6 + $0x8] sm:$0xff]
        %v2122 = vld [vmem:[%s6 + $0x10] sm:$0xff]
        %v2123 = vld [vmem:[%s6 + $0x18] sm:$0xff]
        %v2124 = vld [vmem:[%s6 + $0x20] sm:$0xff]
        %v2125 = vld [vmem:[%s6 + $0x28] sm:$0xff]
        %v2126 = vld [vmem:[%s6 + $0x30] sm:$0xff]
        %v2127 = vld [vmem:[%s6 + $0x38] sm:$0xff]
        %v2128 = vld [vmem:[%s6 + $0x40] sm:$0xff]
        %v2129 = vld [vmem:[%s6 + $0x48] sm:$0xff]
        %v2130 = vld [vmem:[%s6 + $0x50] sm:$0xff]
        %v2131 = vld [vmem:[%s6 + $0x58] sm:$0xff]
        %v2132 = vld [vmem:[%s6 + $0x60] sm:$0xff]
        %v2133 = vld [vmem:[%s6 + $0x68] sm:$0xff]
        %v2134 = vld [vmem:[%s6 + $0x70] sm:$0xff]
        %v2135 = vld [vmem:[%s6 + $0x78] sm:$0xff]
        %v2136 = vld [vmem:[#allocation7] sm:$0x1]
        %v2138 = vlaneseq
        %v2139 = vshrl.u32 %v2138, 7
        %v2140 = vsub.s32 0, %v2139
        %v2141 = vrot.slane %v2136, %v2140
        %2143 = vmatprep.subr.mxu0 0.0
        %2144 = vmatpush1.msra.mxu0 %v2120
        %2145 = vmatprep.subr.mxu0 0.0
        %2146 = vmatpush1.msra.mxu0 %v2121
        %2147 = vmatprep.subr.mxu0 0.0
        %2148 = vmatpush1.msra.mxu0 %v2122
        %2149 = vmatprep.subr.mxu0 0.0
        %2150 = vmatpush1.msra.mxu0 %v2123
        %2151 = vmatprep.subr.mxu0 0.0
        %2152 = vmatpush1.msra.mxu0 %v2124
        %2153 = vmatprep.subr.mxu0 0.0
        %2154 = vmatpush1.msra.mxu0 %v2125
        %2155 = vmatprep.subr.mxu0 0.0
        %2156 = vmatpush1.msra.mxu0 %v2126
        %2157 = vmatprep.subr.mxu0 0.0
        %2158 = vmatpush1.msra.mxu0 %v2127
        %2159 = vmatprep.subr.mxu0 0.0
        %2160 = vmatpush1.msra.mxu0 %v2128
        %2161 = vmatprep.subr.mxu0 0.0
        %2162 = vmatpush1.msra.mxu0 %v2129
        %2163 = vmatprep.subr.mxu0 0.0
        %2164 = vmatpush1.msra.mxu0 %v2130
        %2165 = vmatprep.subr.mxu0 0.0
        %2166 = vmatpush1.msra.mxu0 %v2131
        %2167 = vmatprep.subr.mxu0 0.0
        %2168 = vmatpush1.msra.mxu0 %v2132
        %2169 = vmatprep.subr.mxu0 0.0
        %2170 = vmatpush1.msra.mxu0 %v2133
        %2171 = vmatprep.subr.mxu0 0.0
        %2172 = vmatpush1.msra.mxu0 %v2134
        %2173 = vmatprep.subr.mxu0 0.0
        %2174 = vmatpush1.msra.mxu0 %v2135
        %2175 = vmatprep.subr.mxu0 0.0
        %2176 = vmatpush1.msra.mxu0 0.0
        %2177 = vmatprep.subr.mxu0 0.0
        %2178 = vmatpush1.msra.mxu0 0.0
        %2179 = vmatprep.subr.mxu0 0.0
        %2180 = vmatpush1.msra.mxu0 0.0
        %2181 = vmatprep.subr.mxu0 0.0
        %2182 = vmatpush1.msra.mxu0 0.0
        %2183 = vmatprep.subr.mxu0 0.0
        %2184 = vmatpush1.msra.mxu0 0.0
        %2185 = vmatprep.subr.mxu0 0.0
        %2186 = vmatpush1.msra.mxu0 0.0
        %2187 = vmatprep.subr.mxu0 0.0
        %2188 = vmatpush1.msra.mxu0 0.0
        %2189 = vmatprep.subr.mxu0 0.0
        %2190 = vmatpush1.msra.mxu0 0.0
        %2191 = vmatprep.subr.mxu0 0.0
        %2192 = vmatpush1.msra.mxu0 0.0
        %2193 = vmatprep.subr.mxu0 0.0
        %2194 = vmatpush1.msra.mxu0 0.0
        %2195 = vmatprep.subr.mxu0 0.0
        %2196 = vmatpush1.msra.mxu0 0.0
        %2197 = vmatprep.subr.mxu0 0.0
        %2198 = vmatpush1.msra.mxu0 0.0
        %2199 = vmatprep.subr.mxu0 0.0
        %2200 = vmatpush1.msra.mxu0 0.0
        %2201 = vmatprep.subr.mxu0 0.0
        %2202 = vmatpush1.msra.mxu0 0.0
        %2203 = vmatprep.subr.mxu0 0.0
        %2204 = vmatpush1.msra.mxu0 0.0
        %2205 = vmatprep.subr.mxu0 0.0
        %2206 = vmatpush1.msra.mxu0 0.0
        %2207 = vmatprep.mubr.f32.mxu0 0.0
        %2208 = vmatmul.mubr.f32.gmra.mrb[0].mxu0 %v2056
        %v2209 = vpop.f32.mrb[0].mxu0
        %v2210 = vadd.f32 %v2141, %v2209
        %v2211 = vpop.f32.mrb[0].mxu0
        %2212 = vmatprep.mubr.f32.mxu0 0.0
        %2213 = vmatmul.mubr.f32.gmra.mrb[0].mxu0 %v2057
        %v2214 = vpop.f32.mrb[0].mxu0
        %v2215 = vadd.f32 %v2141, %v2214
        %v2216 = vpop.f32.mrb[0].mxu0
        %2217 = vmatprep.mubr.f32.mxu0 0.0
        %2218 = vmatmul.mubr.f32.gmra.mrb[0].mxu0 %v2058
        %v2219 = vpop.f32.mrb[0].mxu0
        %v2220 = vadd.f32 %v2141, %v2219
        %v2221 = vpop.f32.mrb[0].mxu0
        %2222 = vmatprep.mubr.f32.mxu0 0.0
        %2223 = vmatmul.mubr.f32.gmra.mrb[0].mxu0 %v2059
        %v2224 = vpop.f32.mrb[0].mxu0
        %v2225 = vadd.f32 %v2141, %v2224
        %v2226 = vpop.f32.mrb[0].mxu0
        %2227 = vmatprep.mubr.f32.mxu0 0.0
        %2228 = vmatmul.mubr.f32.gmra.mrb[0].mxu0 %v2060
        %v2229 = vpop.f32.mrb[0].mxu0
        %v2230 = vadd.f32 %v2141, %v2229
        %v2231 = vpop.f32.mrb[0].mxu0
        %2232 = vmatprep.mubr.f32.mxu0 0.0
        %2233 = vmatmul.mubr.f32.gmra.mrb[0].mxu0 %v2061
        %v2234 = vpop.f32.mrb[0].mxu0
        %v2235 = vadd.f32 %v2141, %v2234
        %v2236 = vpop.f32.mrb[0].mxu0
        %2237 = vmatprep.mubr.f32.mxu0 0.0
        %2238 = vmatmul.mubr.f32.gmra.mrb[0].mxu0 %v2062
        %v2239 = vpop.f32.mrb[0].mxu0
        %v2240 = vadd.f32 %v2141, %v2239
        %v2241 = vpop.f32.mrb[0].mxu0
        %2242 = vmatprep.mubr.f32.mxu0 0.0
        %2243 = vmatmul.mubr.f32.gmra.mrb[0].mxu0 %v2063
        %v2244 = vpop.f32.mrb[0].mxu0
        %v2245 = vadd.f32 %v2141, %v2244
        %v2246 = vpop.f32.mrb[0].mxu0
        %2247 = vmatprep.mubr.f32.mxu0 0.0
        %2248 = vmatmul.mubr.f32.gmra.mrb[0].mxu0 %v2064
        %v2249 = vpop.f32.mrb[0].mxu0
        %v2250 = vadd.f32 %v2141, %v2249
        %v2251 = vpop.f32.mrb[0].mxu0
        %2252 = vmatprep.mubr.f32.mxu0 0.0
        %2253 = vmatmul.mubr.f32.gmra.mrb[0].mxu0 %v2065
        %v2254 = vpop.f32.mrb[0].mxu0
        %v2255 = vadd.f32 %v2141, %v2254
        %v2256 = vpop.f32.mrb[0].mxu0
        %2257 = vmatprep.mubr.f32.mxu0 0.0
        %2258 = vmatmul.mubr.f32.gmra.mrb[0].mxu0 %v2066
        %v2259 = vpop.f32.mrb[0].mxu0
        %v2260 = vadd.f32 %v2141, %v2259
        %v2261 = vpop.f32.mrb[0].mxu0
        %2262 = vmatprep.mubr.f32.mxu0 0.0
        %2263 = vmatmul.mubr.f32.gmra.mrb[0].mxu0 %v2067
        %v2264 = vpop.f32.mrb[0].mxu0
        %v2265 = vadd.f32 %v2141, %v2264
        %v2266 = vpop.f32.mrb[0].mxu0
        %2267 = vmatprep.mubr.f32.mxu0 0.0
        %2268 = vmatmul.mubr.f32.gmra.mrb[0].mxu0 %v2068
        %v2269 = vpop.f32.mrb[0].mxu0
        %v2270 = vadd.f32 %v2141, %v2269
        %v2271 = vpop.f32.mrb[0].mxu0
        %2272 = vmatprep.mubr.f32.mxu0 0.0
        %2273 = vmatmul.mubr.f32.gmra.mrb[0].mxu0 %v2069
        %v2274 = vpop.f32.mrb[0].mxu0
        %v2275 = vadd.f32 %v2141, %v2274
        %v2276 = vpop.f32.mrb[0].mxu0
        %2277 = vmatprep.mubr.f32.mxu0 0.0
        %2278 = vmatmul.mubr.f32.gmra.mrb[0].mxu0 %v2070
        %v2279 = vpop.f32.mrb[0].mxu0
        %v2280 = vadd.f32 %v2141, %v2279
        %v2281 = vpop.f32.mrb[0].mxu0
        %2282 = vmatprep.mubr.f32.mxu0 0.0
        %2283 = vmatmul.mubr.f32.gmra.mrb[0].mxu0 %v2071
        %v2284 = vpop.f32.mrb[0].mxu0
        %v2285 = vadd.f32 %v2141, %v2284
        %v2286 = vpop.f32.mrb[0].mxu0
        %2287 = vmatprep.mubr.f32.mxu0 0.0
        %2288 = vmatmul.mubr.f32.gmra.mrb[0].mxu0 %v2072
        %v2289 = vpop.f32.mrb[0].mxu0
        %v2290 = vadd.f32 %v2141, %v2289
        %v2291 = vpop.f32.mrb[0].mxu0
        %2292 = vmatprep.mubr.f32.mxu0 0.0
        %2293 = vmatmul.mubr.f32.gmra.mrb[0].mxu0 %v2073
        %v2294 = vpop.f32.mrb[0].mxu0
        %v2295 = vadd.f32 %v2141, %v2294
        %v2296 = vpop.f32.mrb[0].mxu0
        %2297 = vmatprep.mubr.f32.mxu0 0.0
        %2298 = vmatmul.mubr.f32.gmra.mrb[0].mxu0 %v2074
        %v2299 = vpop.f32.mrb[0].mxu0
        %v2300 = vadd.f32 %v2141, %v2299
        %v2301 = vpop.f32.mrb[0].mxu0
        %2302 = vmatprep.mubr.f32.mxu0 0.0
        %2303 = vmatmul.mubr.f32.gmra.mrb[0].mxu0 %v2075
        %v2304 = vpop.f32.mrb[0].mxu0
        %v2305 = vadd.f32 %v2141, %v2304
        %v2306 = vpop.f32.mrb[0].mxu0
        %2307 = vmatprep.mubr.f32.mxu0 0.0
        %2308 = vmatmul.mubr.f32.gmra.mrb[0].mxu0 %v2076
        %v2309 = vpop.f32.mrb[0].mxu0
        %v2310 = vadd.f32 %v2141, %v2309
        %v2311 = vpop.f32.mrb[0].mxu0
        %2312 = vmatprep.mubr.f32.mxu0 0.0
        %2313 = vmatmul.mubr.f32.gmra.mrb[0].mxu0 %v2077
        %v2314 = vpop.f32.mrb[0].mxu0
        %v2315 = vadd.f32 %v2141, %v2314
        %v2316 = vpop.f32.mrb[0].mxu0
        %2317 = vmatprep.mubr.f32.mxu0 0.0
        %2318 = vmatmul.mubr.f32.gmra.mrb[0].mxu0 %v2078
        %v2319 = vpop.f32.mrb[0].mxu0
        %v2320 = vadd.f32 %v2141, %v2319
        %v2321 = vpop.f32.mrb[0].mxu0
        %2322 = vmatprep.mubr.f32.mxu0 0.0
        %2323 = vmatmul.mubr.f32.gmra.mrb[0].mxu0 %v2079
        %v2324 = vpop.f32.mrb[0].mxu0
        %v2325 = vadd.f32 %v2141, %v2324
        %v2326 = vpop.f32.mrb[0].mxu0
        %2327 = vmatprep.mubr.f32.mxu0 0.0
        %2328 = vmatmul.mubr.f32.gmra.mrb[0].mxu0 %v2080
        %v2329 = vpop.f32.mrb[0].mxu0
        %v2330 = vadd.f32 %v2141, %v2329
        %v2331 = vpop.f32.mrb[0].mxu0
        %2332 = vmatprep.mubr.f32.mxu0 0.0
        %2333 = vmatmul.mubr.f32.gmra.mrb[0].mxu0 %v2081
        %v2334 = vpop.f32.mrb[0].mxu0
        %v2335 = vadd.f32 %v2141, %v2334
        %v2336 = vpop.f32.mrb[0].mxu0
        %2337 = vmatprep.mubr.f32.mxu0 0.0
        %2338 = vmatmul.mubr.f32.gmra.mrb[0].mxu0 %v2082
        %v2339 = vpop.f32.mrb[0].mxu0
        %v2340 = vadd.f32 %v2141, %v2339
        %v2341 = vpop.f32.mrb[0].mxu0
        %2342 = vmatprep.mubr.f32.mxu0 0.0
        %2343 = vmatmul.mubr.f32.gmra.mrb[0].mxu0 %v2083
        %v2344 = vpop.f32.mrb[0].mxu0
        %v2345 = vadd.f32 %v2141, %v2344
        %v2346 = vpop.f32.mrb[0].mxu0
        %2347 = vmatprep.mubr.f32.mxu0 0.0
        %2348 = vmatmul.mubr.f32.gmra.mrb[0].mxu0 %v2084
        %v2349 = vpop.f32.mrb[0].mxu0
        %v2350 = vadd.f32 %v2141, %v2349
        %v2351 = vpop.f32.mrb[0].mxu0
        %2352 = vmatprep.mubr.f32.mxu0 0.0
        %2353 = vmatmul.mubr.f32.gmra.mrb[0].mxu0 %v2085
        %v2354 = vpop.f32.mrb[0].mxu0
        %v2355 = vadd.f32 %v2141, %v2354
        %v2356 = vpop.f32.mrb[0].mxu0
        %2357 = vmatprep.mubr.f32.mxu0 0.0
        %2358 = vmatmul.mubr.f32.gmra.mrb[0].mxu0 %v2086
        %v2359 = vpop.f32.mrb[0].mxu0
        %v2360 = vadd.f32 %v2141, %v2359
        %v2361 = vpop.f32.mrb[0].mxu0
        %2362 = vmatprep.mubr.f32.mxu0 0.0
        %2363 = vmatmul.mubr.f32.gmra.mrb[0].mxu0 %v2087
        %v2364 = vpop.f32.mrb[0].mxu0
        %v2365 = vadd.f32 %v2141, %v2364
        %v2366 = vpop.f32.mrb[0].mxu0
        %2367 = vmatprep.mubr.f32.mxu0 0.0
        %2368 = vmatmul.mubr.f32.gmra.mrb[0].mxu0 %v2088
        %v2369 = vpop.f32.mrb[0].mxu0
        %v2370 = vadd.f32 %v2141, %v2369
        %v2371 = vpop.f32.mrb[0].mxu0
        %2372 = vmatprep.mubr.f32.mxu0 0.0
        %2373 = vmatmul.mubr.f32.gmra.mrb[0].mxu0 %v2089
        %v2374 = vpop.f32.mrb[0].mxu0
        %v2375 = vadd.f32 %v2141, %v2374
        %v2376 = vpop.f32.mrb[0].mxu0
        %2377 = vmatprep.mubr.f32.mxu0 0.0
        %2378 = vmatmul.mubr.f32.gmra.mrb[0].mxu0 %v2090
        %v2379 = vpop.f32.mrb[0].mxu0
        %v2380 = vadd.f32 %v2141, %v2379
        %v2381 = vpop.f32.mrb[0].mxu0
        %2382 = vmatprep.mubr.f32.mxu0 0.0
        %2383 = vmatmul.mubr.f32.gmra.mrb[0].mxu0 %v2091
        %v2384 = vpop.f32.mrb[0].mxu0
        %v2385 = vadd.f32 %v2141, %v2384
        %v2386 = vpop.f32.mrb[0].mxu0
        %2387 = vmatprep.mubr.f32.mxu0 0.0
        %2388 = vmatmul.mubr.f32.gmra.mrb[0].mxu0 %v2092
        %v2389 = vpop.f32.mrb[0].mxu0
        %v2390 = vadd.f32 %v2141, %v2389
        %v2391 = vpop.f32.mrb[0].mxu0
        %2392 = vmatprep.mubr.f32.mxu0 0.0
        %2393 = vmatmul.mubr.f32.gmra.mrb[0].mxu0 %v2093
        %v2394 = vpop.f32.mrb[0].mxu0
        %v2395 = vadd.f32 %v2141, %v2394
        %v2396 = vpop.f32.mrb[0].mxu0
        %2397 = vmatprep.mubr.f32.mxu0 0.0
        %2398 = vmatmul.mubr.f32.gmra.mrb[0].mxu0 %v2094
        %v2399 = vpop.f32.mrb[0].mxu0
        %v2400 = vadd.f32 %v2141, %v2399
        %v2401 = vpop.f32.mrb[0].mxu0
        %2402 = vmatprep.mubr.f32.mxu0 0.0
        %2403 = vmatmul.mubr.f32.gmra.mrb[0].mxu0 %v2095
        %v2404 = vpop.f32.mrb[0].mxu0
        %v2405 = vadd.f32 %v2141, %v2404
        %v2406 = vpop.f32.mrb[0].mxu0
        %2407 = vmatprep.mubr.f32.mxu0 0.0
        %2408 = vmatmul.mubr.f32.gmra.mrb[0].mxu0 %v2096
        %v2409 = vpop.f32.mrb[0].mxu0
        %v2410 = vadd.f32 %v2141, %v2409
        %v2411 = vpop.f32.mrb[0].mxu0
        %2412 = vmatprep.mubr.f32.mxu0 0.0
        %2413 = vmatmul.mubr.f32.gmra.mrb[0].mxu0 %v2097
        %v2414 = vpop.f32.mrb[0].mxu0
        %v2415 = vadd.f32 %v2141, %v2414
        %v2416 = vpop.f32.mrb[0].mxu0
        %2417 = vmatprep.mubr.f32.mxu0 0.0
        %2418 = vmatmul.mubr.f32.gmra.mrb[0].mxu0 %v2098
        %v2419 = vpop.f32.mrb[0].mxu0
        %v2420 = vadd.f32 %v2141, %v2419
        %v2421 = vpop.f32.mrb[0].mxu0
        %2422 = vmatprep.mubr.f32.mxu0 0.0
        %2423 = vmatmul.mubr.f32.gmra.mrb[0].mxu0 %v2099
        %v2424 = vpop.f32.mrb[0].mxu0
        %v2425 = vadd.f32 %v2141, %v2424
        %v2426 = vpop.f32.mrb[0].mxu0
        %2427 = vmatprep.mubr.f32.mxu0 0.0
        %2428 = vmatmul.mubr.f32.gmra.mrb[0].mxu0 %v2100
        %v2429 = vpop.f32.mrb[0].mxu0
        %v2430 = vadd.f32 %v2141, %v2429
        %v2431 = vpop.f32.mrb[0].mxu0
        %2432 = vmatprep.mubr.f32.mxu0 0.0
        %2433 = vmatmul.mubr.f32.gmra.mrb[0].mxu0 %v2101
        %v2434 = vpop.f32.mrb[0].mxu0
        %v2435 = vadd.f32 %v2141, %v2434
        %v2436 = vpop.f32.mrb[0].mxu0
        %2437 = vmatprep.mubr.f32.mxu0 0.0
        %2438 = vmatmul.mubr.f32.gmra.mrb[0].mxu0 %v2102
        %v2439 = vpop.f32.mrb[0].mxu0
        %v2440 = vadd.f32 %v2141, %v2439
        %v2441 = vpop.f32.mrb[0].mxu0
        %2442 = vmatprep.mubr.f32.mxu0 0.0
        %2443 = vmatmul.mubr.f32.gmra.mrb[0].mxu0 %v2103
        %v2444 = vpop.f32.mrb[0].mxu0
        %v2445 = vadd.f32 %v2141, %v2444
        %v2446 = vpop.f32.mrb[0].mxu0
        %2447 = vmatprep.mubr.f32.mxu0 0.0
        %2448 = vmatmul.mubr.f32.gmra.mrb[0].mxu0 %v2104
        %v2449 = vpop.f32.mrb[0].mxu0
        %v2450 = vadd.f32 %v2141, %v2449
        %v2451 = vpop.f32.mrb[0].mxu0
        %2452 = vmatprep.mubr.f32.mxu0 0.0
        %2453 = vmatmul.mubr.f32.gmra.mrb[0].mxu0 %v2105
        %v2454 = vpop.f32.mrb[0].mxu0
        %v2455 = vadd.f32 %v2141, %v2454
        %v2456 = vpop.f32.mrb[0].mxu0
        %2457 = vmatprep.mubr.f32.mxu0 0.0
        %2458 = vmatmul.mubr.f32.gmra.mrb[0].mxu0 %v2106
        %v2459 = vpop.f32.mrb[0].mxu0
        %v2460 = vadd.f32 %v2141, %v2459
        %v2461 = vpop.f32.mrb[0].mxu0
        %2462 = vmatprep.mubr.f32.mxu0 0.0
        %2463 = vmatmul.mubr.f32.gmra.mrb[0].mxu0 %v2107
        %v2464 = vpop.f32.mrb[0].mxu0
        %v2465 = vadd.f32 %v2141, %v2464
        %v2466 = vpop.f32.mrb[0].mxu0
        %2467 = vmatprep.mubr.f32.mxu0 0.0
        %2468 = vmatmul.mubr.f32.gmra.mrb[0].mxu0 %v2108
        %v2469 = vpop.f32.mrb[0].mxu0
        %v2470 = vadd.f32 %v2141, %v2469
        %v2471 = vpop.f32.mrb[0].mxu0
        %2472 = vmatprep.mubr.f32.mxu0 0.0
        %2473 = vmatmul.mubr.f32.gmra.mrb[0].mxu0 %v2109
        %v2474 = vpop.f32.mrb[0].mxu0
        %v2475 = vadd.f32 %v2141, %v2474
        %v2476 = vpop.f32.mrb[0].mxu0
        %2477 = vmatprep.mubr.f32.mxu0 0.0
        %2478 = vmatmul.mubr.f32.gmra.mrb[0].mxu0 %v2110
        %v2479 = vpop.f32.mrb[0].mxu0
        %v2480 = vadd.f32 %v2141, %v2479
        %v2481 = vpop.f32.mrb[0].mxu0
        %2482 = vmatprep.mubr.f32.mxu0 0.0
        %2483 = vmatmul.mubr.f32.gmra.mrb[0].mxu0 %v2111
        %v2484 = vpop.f32.mrb[0].mxu0
        %v2485 = vadd.f32 %v2141, %v2484
        %v2486 = vpop.f32.mrb[0].mxu0
        %2487 = vmatprep.mubr.f32.mxu0 0.0
        %2488 = vmatmul.mubr.f32.gmra.mrb[0].mxu0 %v2112
        %v2489 = vpop.f32.mrb[0].mxu0
        %v2490 = vadd.f32 %v2141, %v2489
        %v2491 = vpop.f32.mrb[0].mxu0
        %2492 = vmatprep.mubr.f32.mxu0 0.0
        %2493 = vmatmul.mubr.f32.gmra.mrb[0].mxu0 %v2113
        %v2494 = vpop.f32.mrb[0].mxu0
        %v2495 = vadd.f32 %v2141, %v2494
        %v2496 = vpop.f32.mrb[0].mxu0
        %2497 = vmatprep.mubr.f32.mxu0 0.0
        %2498 = vmatmul.mubr.f32.gmra.mrb[0].mxu0 %v2114
        %v2499 = vpop.f32.mrb[0].mxu0
        %v2500 = vadd.f32 %v2141, %v2499
        %v2501 = vpop.f32.mrb[0].mxu0
        %2502 = vmatprep.mubr.f32.mxu0 0.0
        %2503 = vmatmul.mubr.f32.gmra.mrb[0].mxu0 %v2115
        %v2504 = vpop.f32.mrb[0].mxu0
        %v2505 = vadd.f32 %v2141, %v2504
        %v2506 = vpop.f32.mrb[0].mxu0
        %2507 = vmatprep.mubr.f32.mxu0 0.0
        %2508 = vmatmul.mubr.f32.gmra.mrb[0].mxu0 %v2116
        %v2509 = vpop.f32.mrb[0].mxu0
        %v2510 = vadd.f32 %v2141, %v2509
        %v2511 = vpop.f32.mrb[0].mxu0
        %2512 = vmatprep.mubr.f32.mxu0 0.0
        %2513 = vmatmul.mubr.f32.gmra.mrb[0].mxu0 %v2117
        %v2514 = vpop.f32.mrb[0].mxu0
        %v2515 = vadd.f32 %v2141, %v2514
        %v2516 = vpop.f32.mrb[0].mxu0
        %2517 = vmatprep.mubr.f32.mxu0 0.0
        %2518 = vmatmul.mubr.f32.gmra.mrb[0].mxu0 %v2118
        %v2519 = vpop.f32.mrb[0].mxu0
        %v2520 = vadd.f32 %v2141, %v2519
        %v2521 = vpop.f32.mrb[0].mxu0
        %2522 = vmatprep.mubr.f32.mxu0 0.0
        %2523 = vmatmul.mubr.f32.gmra.mrb[0].mxu0 %v2119
        %v2524 = vpop.f32.mrb[0].mxu0
        %v2525 = vadd.f32 %v2141, %v2524
        %v2526 = vpop.f32.mrb[0].mxu0
        %2527 = vdwg.mxu0
        %s2528 = smul.u32 %s37, 512
        %v2529 = vlaneseq
        %v2530 = vshrl.u32 %v2529, 7
        %v2531 = vadd.s32 %v2530, 8
        %v2532 = vadd.s32 %v2530, 16
        %v2533 = vadd.s32 %v2530, 24
        %v2534 = vadd.s32 %v2530, 32
        %v2535 = vadd.s32 %v2530, 40
        %v2536 = vadd.s32 %v2530, 48
        %v2537 = vadd.s32 %v2530, 56
        %v2538 = vadd.s32 %v2530, 64
        %v2539 = vadd.s32 %v2530, 72
        %v2540 = vadd.s32 %v2530, 80
        %v2541 = vadd.s32 %v2530, 88
        %v2542 = vadd.s32 %v2530, 96
        %v2543 = vadd.s32 %v2530, 104
        %v2544 = vadd.s32 %v2530, 112
        %v2545 = vadd.s32 %v2530, 120
        %v2546 = vadd.s32 %v2530, 128
        %v2547 = vadd.s32 %v2530, 136
        %v2548 = vadd.s32 %v2530, 144
        %v2549 = vadd.s32 %v2530, 152
        %v2550 = vadd.s32 %v2530, 160
        %v2551 = vadd.s32 %v2530, 168
        %v2552 = vadd.s32 %v2530, 176
        %v2553 = vadd.s32 %v2530, 184
        %v2554 = vadd.s32 %v2530, 192
        %v2555 = vadd.s32 %v2530, 200
        %v2556 = vadd.s32 %v2530, 208
        %v2557 = vadd.s32 %v2530, 216
        %v2558 = vadd.s32 %v2530, 224
        %v2559 = vadd.s32 %v2530, 232
        %v2560 = vadd.s32 %v2530, 240
        %v2561 = vadd.s32 %v2530, 248
        %v2562 = vadd.s32 %v2530, 256
        %v2563 = vadd.s32 %v2530, 264
        %v2564 = vadd.s32 %v2530, 272
        %v2565 = vadd.s32 %v2530, 280
        %v2566 = vadd.s32 %v2530, 288
        %v2567 = vadd.s32 %v2530, 296
        %v2568 = vadd.s32 %v2530, 304
        %v2569 = vadd.s32 %v2530, 312
        %v2570 = vadd.s32 %v2530, 320
        %v2571 = vadd.s32 %v2530, 328
        %v2572 = vadd.s32 %v2530, 336
        %v2573 = vadd.s32 %v2530, 344
        %v2574 = vadd.s32 %v2530, 352
        %v2575 = vadd.s32 %v2530, 360
        %v2576 = vadd.s32 %v2530, 368
        %v2577 = vadd.s32 %v2530, 376
        %v2578 = vadd.s32 %v2530, 384
        %v2579 = vadd.s32 %v2530, 392
        %v2580 = vadd.s32 %v2530, 400
        %v2581 = vadd.s32 %v2530, 408
        %v2582 = vadd.s32 %v2530, 416
        %v2583 = vadd.s32 %v2530, 424
        %v2584 = vadd.s32 %v2530, 432
        %v2585 = vadd.s32 %v2530, 440
        %v2586 = vadd.s32 %v2530, 448
        %v2587 = vadd.s32 %v2530, 456
        %v2588 = vadd.s32 %v2530, 464
        %v2589 = vadd.s32 %v2530, 472
        %v2590 = vadd.s32 %v2530, 480
        %v2591 = vadd.s32 %v2530, 488
        %v2592 = vadd.s32 %v2530, 496
        %v2593 = vadd.s32 %v2530, 504
        %v2594 = vstv %s2528
        %v2595 = vadd.s32 %v2594, %v2530
        %v2596 = vadd.s32 %v2594, %v2531
        %v2597 = vadd.s32 %v2594, %v2532
        %v2598 = vadd.s32 %v2594, %v2533
        %v2599 = vadd.s32 %v2594, %v2534
        %v2600 = vadd.s32 %v2594, %v2535
        %v2601 = vadd.s32 %v2594, %v2536
        %v2602 = vadd.s32 %v2594, %v2537
        %v2603 = vadd.s32 %v2594, %v2538
        %v2604 = vadd.s32 %v2594, %v2539
        %v2605 = vadd.s32 %v2594, %v2540
        %v2606 = vadd.s32 %v2594, %v2541
        %v2607 = vadd.s32 %v2594, %v2542
        %v2608 = vadd.s32 %v2594, %v2543
        %v2609 = vadd.s32 %v2594, %v2544
        %v2610 = vadd.s32 %v2594, %v2545
        %v2611 = vadd.s32 %v2594, %v2546
        %v2612 = vadd.s32 %v2594, %v2547
        %v2613 = vadd.s32 %v2594, %v2548
        %v2614 = vadd.s32 %v2594, %v2549
        %v2615 = vadd.s32 %v2594, %v2550
        %v2616 = vadd.s32 %v2594, %v2551
        %v2617 = vadd.s32 %v2594, %v2552
        %v2618 = vadd.s32 %v2594, %v2553
        %v2619 = vadd.s32 %v2594, %v2554
        %v2620 = vadd.s32 %v2594, %v2555
        %v2621 = vadd.s32 %v2594, %v2556
        %v2622 = vadd.s32 %v2594, %v2557
        %v2623 = vadd.s32 %v2594, %v2558
        %v2624 = vadd.s32 %v2594, %v2559
        %v2625 = vadd.s32 %v2594, %v2560
        %v2626 = vadd.s32 %v2594, %v2561
        %v2627 = vadd.s32 %v2594, %v2562
        %v2628 = vadd.s32 %v2594, %v2563
        %v2629 = vadd.s32 %v2594, %v2564
        %v2630 = vadd.s32 %v2594, %v2565
        %v2631 = vadd.s32 %v2594, %v2566
        %v2632 = vadd.s32 %v2594, %v2567
        %v2633 = vadd.s32 %v2594, %v2568
        %v2634 = vadd.s32 %v2594, %v2569
        %v2635 = vadd.s32 %v2594, %v2570
        %v2636 = vadd.s32 %v2594, %v2571
        %v2637 = vadd.s32 %v2594, %v2572
        %v2638 = vadd.s32 %v2594, %v2573
        %v2639 = vadd.s32 %v2594, %v2574
        %v2640 = vadd.s32 %v2594, %v2575
        %v2641 = vadd.s32 %v2594, %v2576
        %v2642 = vadd.s32 %v2594, %v2577
        %v2643 = vadd.s32 %v2594, %v2578
        %v2644 = vadd.s32 %v2594, %v2579
        %v2645 = vadd.s32 %v2594, %v2580
        %v2646 = vadd.s32 %v2594, %v2581
        %v2647 = vadd.s32 %v2594, %v2582
        %v2648 = vadd.s32 %v2594, %v2583
        %v2649 = vadd.s32 %v2594, %v2584
        %v2650 = vadd.s32 %v2594, %v2585
        %v2651 = vadd.s32 %v2594, %v2586
        %v2652 = vadd.s32 %v2594, %v2587
        %v2653 = vadd.s32 %v2594, %v2588
        %v2654 = vadd.s32 %v2594, %v2589
        %v2655 = vadd.s32 %v2594, %v2590
        %v2656 = vadd.s32 %v2594, %v2591
        %v2657 = vadd.s32 %v2594, %v2592
        %v2658 = vadd.s32 %v2594, %v2593
        %s2659 = sld [smem:[#allocation6 + %s36]]
        %v2660 = vstv %s2659
        %vm2661 = vcmp.lt.s32.totalorder %v2595, %v2660
        %vm2662 = vcmp.lt.s32.totalorder %v2596, %v2660
        %vm2663 = vcmp.lt.s32.totalorder %v2597, %v2660
        %vm2664 = vcmp.lt.s32.totalorder %v2598, %v2660
        %vm2665 = vcmp.lt.s32.totalorder %v2599, %v2660
        %vm2666 = vcmp.lt.s32.totalorder %v2600, %v2660
        %vm2667 = vcmp.lt.s32.totalorder %v2601, %v2660
        %vm2668 = vcmp.lt.s32.totalorder %v2602, %v2660
        %vm2669 = vcmp.lt.s32.totalorder %v2603, %v2660
        %vm2670 = vcmp.lt.s32.totalorder %v2604, %v2660
        %vm2671 = vcmp.lt.s32.totalorder %v2605, %v2660
        %vm2672 = vcmp.lt.s32.totalorder %v2606, %v2660
        %vm2673 = vcmp.lt.s32.totalorder %v2607, %v2660
        %vm2674 = vcmp.lt.s32.totalorder %v2608, %v2660
        %vm2675 = vcmp.lt.s32.totalorder %v2609, %v2660
        %vm2676 = vcmp.lt.s32.totalorder %v2610, %v2660
        %vm2677 = vcmp.lt.s32.totalorder %v2611, %v2660
        %vm2678 = vcmp.lt.s32.totalorder %v2612, %v2660
        %vm2679 = vcmp.lt.s32.totalorder %v2613, %v2660
        %vm2680 = vcmp.lt.s32.totalorder %v2614, %v2660
        %vm2681 = vcmp.lt.s32.totalorder %v2615, %v2660
        %vm2682 = vcmp.lt.s32.totalorder %v2616, %v2660
        %vm2683 = vcmp.lt.s32.totalorder %v2617, %v2660
        %vm2684 = vcmp.lt.s32.totalorder %v2618, %v2660
        %vm2685 = vcmp.lt.s32.totalorder %v2619, %v2660
        %vm2686 = vcmp.lt.s32.totalorder %v2620, %v2660
        %vm2687 = vcmp.lt.s32.totalorder %v2621, %v2660
        %vm2688 = vcmp.lt.s32.totalorder %v2622, %v2660
        %vm2689 = vcmp.lt.s32.totalorder %v2623, %v2660
        %vm2690 = vcmp.lt.s32.totalorder %v2624, %v2660
        %vm2691 = vcmp.lt.s32.totalorder %v2625, %v2660
        %vm2692 = vcmp.lt.s32.totalorder %v2626, %v2660
        %vm2693 = vcmp.lt.s32.totalorder %v2627, %v2660
        %vm2694 = vcmp.lt.s32.totalorder %v2628, %v2660
        %vm2695 = vcmp.lt.s32.totalorder %v2629, %v2660
        %vm2696 = vcmp.lt.s32.totalorder %v2630, %v2660
        %vm2697 = vcmp.lt.s32.totalorder %v2631, %v2660
        %vm2698 = vcmp.lt.s32.totalorder %v2632, %v2660
        %vm2699 = vcmp.lt.s32.totalorder %v2633, %v2660
        %vm2700 = vcmp.lt.s32.totalorder %v2634, %v2660
        %vm2701 = vcmp.lt.s32.totalorder %v2635, %v2660
        %vm2702 = vcmp.lt.s32.totalorder %v2636, %v2660
        %vm2703 = vcmp.lt.s32.totalorder %v2637, %v2660
        %vm2704 = vcmp.lt.s32.totalorder %v2638, %v2660
        %vm2705 = vcmp.lt.s32.totalorder %v2639, %v2660
        %vm2706 = vcmp.lt.s32.totalorder %v2640, %v2660
        %vm2707 = vcmp.lt.s32.totalorder %v2641, %v2660
        %vm2708 = vcmp.lt.s32.totalorder %v2642, %v2660
        %vm2709 = vcmp.lt.s32.totalorder %v2643, %v2660
        %vm2710 = vcmp.lt.s32.totalorder %v2644, %v2660
        %vm2711 = vcmp.lt.s32.totalorder %v2645, %v2660
        %vm2712 = vcmp.lt.s32.totalorder %v2646, %v2660
        %vm2713 = vcmp.lt.s32.totalorder %v2647, %v2660
        %vm2714 = vcmp.lt.s32.totalorder %v2648, %v2660
        %vm2715 = vcmp.lt.s32.totalorder %v2649, %v2660
        %vm2716 = vcmp.lt.s32.totalorder %v2650, %v2660
        %vm2717 = vcmp.lt.s32.totalorder %v2651, %v2660
        %vm2718 = vcmp.lt.s32.totalorder %v2652, %v2660
        %vm2719 = vcmp.lt.s32.totalorder %v2653, %v2660
        %vm2720 = vcmp.lt.s32.totalorder %v2654, %v2660
        %vm2721 = vcmp.lt.s32.totalorder %v2655, %v2660
        %vm2722 = vcmp.lt.s32.totalorder %v2656, %v2660
        %vm2723 = vcmp.lt.s32.totalorder %v2657, %v2660
        %vm2724 = vcmp.lt.s32.totalorder %v2658, %v2660
        %v2725 = vsel %vm2661, %v2210, -1e+30
        %v2726 = vsel %vm2662, %v2215, -1e+30
        %v2727 = vsel %vm2663, %v2220, -1e+30
        %v2728 = vsel %vm2664, %v2225, -1e+30
        %v2729 = vsel %vm2665, %v2230, -1e+30
        %v2730 = vsel %vm2666, %v2235, -1e+30
        %v2731 = vsel %vm2667, %v2240, -1e+30
        %v2732 = vsel %vm2668, %v2245, -1e+30
        %v2733 = vsel %vm2669, %v2250, -1e+30
        %v2734 = vsel %vm2670, %v2255, -1e+30
        %v2735 = vsel %vm2671, %v2260, -1e+30
        %v2736 = vsel %vm2672, %v2265, -1e+30
        %v2737 = vsel %vm2673, %v2270, -1e+30
        %v2738 = vsel %vm2674, %v2275, -1e+30
        %v2739 = vsel %vm2675, %v2280, -1e+30
        %v2740 = vsel %vm2676, %v2285, -1e+30
        %v2741 = vsel %vm2677, %v2290, -1e+30
        %v2742 = vsel %vm2678, %v2295, -1e+30
        %v2743 = vsel %vm2679, %v2300, -1e+30
        %v2744 = vsel %vm2680, %v2305, -1e+30
        %v2745 = vsel %vm2681, %v2310, -1e+30
        %v2746 = vsel %vm2682, %v2315, -1e+30
        %v2747 = vsel %vm2683, %v2320, -1e+30
        %v2748 = vsel %vm2684, %v2325, -1e+30
        %v2749 = vsel %vm2685, %v2330, -1e+30
        %v2750 = vsel %vm2686, %v2335, -1e+30
        %v2751 = vsel %vm2687, %v2340, -1e+30
        %v2752 = vsel %vm2688, %v2345, -1e+30
        %v2753 = vsel %vm2689, %v2350, -1e+30
        %v2754 = vsel %vm2690, %v2355, -1e+30
        %v2755 = vsel %vm2691, %v2360, -1e+30
        %v2756 = vsel %vm2692, %v2365, -1e+30
        %v2757 = vsel %vm2693, %v2370, -1e+30
        %v2758 = vsel %vm2694, %v2375, -1e+30
        %v2759 = vsel %vm2695, %v2380, -1e+30
        %v2760 = vsel %vm2696, %v2385, -1e+30
        %v2761 = vsel %vm2697, %v2390, -1e+30
        %v2762 = vsel %vm2698, %v2395, -1e+30
        %v2763 = vsel %vm2699, %v2400, -1e+30
        %v2764 = vsel %vm2700, %v2405, -1e+30
        %v2765 = vsel %vm2701, %v2410, -1e+30
        %v2766 = vsel %vm2702, %v2415, -1e+30
        %v2767 = vsel %vm2703, %v2420, -1e+30
        %v2768 = vsel %vm2704, %v2425, -1e+30
        %v2769 = vsel %vm2705, %v2430, -1e+30
        %v2770 = vsel %vm2706, %v2435, -1e+30
        %v2771 = vsel %vm2707, %v2440, -1e+30
        %v2772 = vsel %vm2708, %v2445, -1e+30
        %v2773 = vsel %vm2709, %v2450, -1e+30
        %v2774 = vsel %vm2710, %v2455, -1e+30
        %v2775 = vsel %vm2711, %v2460, -1e+30
        %v2776 = vsel %vm2712, %v2465, -1e+30
        %v2777 = vsel %vm2713, %v2470, -1e+30
        %v2778 = vsel %vm2714, %v2475, -1e+30
        %v2779 = vsel %vm2715, %v2480, -1e+30
        %v2780 = vsel %vm2716, %v2485, -1e+30
        %v2781 = vsel %vm2717, %v2490, -1e+30
        %v2782 = vsel %vm2718, %v2495, -1e+30
        %v2783 = vsel %vm2719, %v2500, -1e+30
        %v2784 = vsel %vm2720, %v2505, -1e+30
        %v2785 = vsel %vm2721, %v2510, -1e+30
        %v2786 = vsel %vm2722, %v2515, -1e+30
        %v2787 = vsel %vm2723, %v2520, -1e+30
        %v2788 = vsel %vm2724, %v2525, -1e+30
        %v2789 = vld [vmem:[#allocation2] sm:$0x1]
        %vm2790 = vcmask 7168
        %v2791 = vsel %vm2790, %v2725, -inf
        %v2792 = vsel %vm2790, %v2726, -inf
        %v2793 = vsel %vm2790, %v2727, -inf
        %v2794 = vsel %vm2790, %v2728, -inf
        %v2795 = vsel %vm2790, %v2729, -inf
        %v2796 = vmax.f32 %v2791, %v2795
        %v2797 = vsel %vm2790, %v2730, -inf
        %v2798 = vmax.f32 %v2792, %v2797
        %v2799 = vsel %vm2790, %v2731, -inf
        %v2800 = vmax.f32 %v2793, %v2799
        %v2801 = vsel %vm2790, %v2732, -inf
        %v2802 = vmax.f32 %v2794, %v2801
        %v2803 = vsel %vm2790, %v2733, -inf
        %v2804 = vmax.f32 %v2796, %v2803
        %v2805 = vsel %vm2790, %v2734, -inf
        %v2806 = vmax.f32 %v2798, %v2805
        %v2807 = vsel %vm2790, %v2735, -inf
        %v2808 = vmax.f32 %v2800, %v2807
        %v2809 = vsel %vm2790, %v2736, -inf
        %v2810 = vmax.f32 %v2802, %v2809
        %v2811 = vsel %vm2790, %v2737, -inf
        %v2812 = vmax.f32 %v2804, %v2811
        %v2813 = vsel %vm2790, %v2738, -inf
        %v2814 = vmax.f32 %v2806, %v2813
        %v2815 = vsel %vm2790, %v2739, -inf
        %v2816 = vmax.f32 %v2808, %v2815
        %v2817 = vsel %vm2790, %v2740, -inf
        %v2818 = vmax.f32 %v2810, %v2817
        %v2819 = vsel %vm2790, %v2741, -inf
        %v2820 = vmax.f32 %v2812, %v2819
        %v2821 = vsel %vm2790, %v2742, -inf
        %v2822 = vmax.f32 %v2814, %v2821
        %v2823 = vsel %vm2790, %v2743, -inf
        %v2824 = vmax.f32 %v2816, %v2823
        %v2825 = vsel %vm2790, %v2744, -inf
        %v2826 = vmax.f32 %v2818, %v2825
        %v2827 = vsel %vm2790, %v2745, -inf
        %v2828 = vmax.f32 %v2820, %v2827
        %v2829 = vsel %vm2790, %v2746, -inf
        %v2830 = vmax.f32 %v2822, %v2829
        %v2831 = vsel %vm2790, %v2747, -inf
        %v2832 = vmax.f32 %v2824, %v2831
        %v2833 = vsel %vm2790, %v2748, -inf
        %v2834 = vmax.f32 %v2826, %v2833
        %v2835 = vsel %vm2790, %v2749, -inf
        %v2836 = vmax.f32 %v2828, %v2835
        %v2837 = vsel %vm2790, %v2750, -inf
        %v2838 = vmax.f32 %v2830, %v2837
        %v2839 = vsel %vm2790, %v2751, -inf
        %v2840 = vmax.f32 %v2832, %v2839
        %v2841 = vsel %vm2790, %v2752, -inf
        %v2842 = vmax.f32 %v2834, %v2841
        %v2843 = vsel %vm2790, %v2753, -inf
        %v2844 = vmax.f32 %v2836, %v2843
        %v2845 = vsel %vm2790, %v2754, -inf
        %v2846 = vmax.f32 %v2838, %v2845
        %v2847 = vsel %vm2790, %v2755, -inf
        %v2848 = vmax.f32 %v2840, %v2847
        %v2849 = vsel %vm2790, %v2756, -inf
        %v2850 = vmax.f32 %v2842, %v2849
        %v2851 = vsel %vm2790, %v2757, -inf
        %v2852 = vmax.f32 %v2844, %v2851
        %v2853 = vsel %vm2790, %v2758, -inf
        %v2854 = vmax.f32 %v2846, %v2853
        %v2855 = vsel %vm2790, %v2759, -inf
        %v2856 = vmax.f32 %v2848, %v2855
        %v2857 = vsel %vm2790, %v2760, -inf
        %v2858 = vmax.f32 %v2850, %v2857
        %v2859 = vsel %vm2790, %v2761, -inf
        %v2860 = vmax.f32 %v2852, %v2859
        %v2861 = vsel %vm2790, %v2762, -inf
        %v2862 = vmax.f32 %v2854, %v2861
        %v2863 = vsel %vm2790, %v2763, -inf
        %v2864 = vmax.f32 %v2856, %v2863
        %v2865 = vsel %vm2790, %v2764, -inf
        %v2866 = vmax.f32 %v2858, %v2865
        %v2867 = vsel %vm2790, %v2765, -inf
        %v2868 = vmax.f32 %v2860, %v2867
        %v2869 = vsel %vm2790, %v2766, -inf
        %v2870 = vmax.f32 %v2862, %v2869
        %v2871 = vsel %vm2790, %v2767, -inf
        %v2872 = vmax.f32 %v2864, %v2871
        %v2873 = vsel %vm2790, %v2768, -inf
        %v2874 = vmax.f32 %v2866, %v2873
        %v2875 = vsel %vm2790, %v2769, -inf
        %v2876 = vmax.f32 %v2868, %v2875
        %v2877 = vsel %vm2790, %v2770, -inf
        %v2878 = vmax.f32 %v2870, %v2877
        %v2879 = vsel %vm2790, %v2771, -inf
        %v2880 = vmax.f32 %v2872, %v2879
        %v2881 = vsel %vm2790, %v2772, -inf
        %v2882 = vmax.f32 %v2874, %v2881
        %v2883 = vsel %vm2790, %v2773, -inf
        %v2884 = vmax.f32 %v2876, %v2883
        %v2885 = vsel %vm2790, %v2774, -inf
        %v2886 = vmax.f32 %v2878, %v2885
        %v2887 = vsel %vm2790, %v2775, -inf
        %v2888 = vmax.f32 %v2880, %v2887
        %v2889 = vsel %vm2790, %v2776, -inf
        %v2890 = vmax.f32 %v2882, %v2889
        %v2891 = vsel %vm2790, %v2777, -inf
        %v2892 = vmax.f32 %v2884, %v2891
        %v2893 = vsel %vm2790, %v2778, -inf
        %v2894 = vmax.f32 %v2886, %v2893
        %v2895 = vsel %vm2790, %v2779, -inf
        %v2896 = vmax.f32 %v2888, %v2895
        %v2897 = vsel %vm2790, %v2780, -inf
        %v2898 = vmax.f32 %v2890, %v2897
        %v2899 = vsel %vm2790, %v2781, -inf
        %v2900 = vmax.f32 %v2892, %v2899
        %v2901 = vsel %vm2790, %v2782, -inf
        %v2902 = vmax.f32 %v2894, %v2901
        %v2903 = vsel %vm2790, %v2783, -inf
        %v2904 = vmax.f32 %v2896, %v2903
        %v2905 = vsel %vm2790, %v2784, -inf
        %v2906 = vmax.f32 %v2898, %v2905
        %v2907 = vsel %vm2790, %v2785, -inf
        %v2908 = vmax.f32 %v2900, %v2907
        %v2909 = vsel %vm2790, %v2786, -inf
        %v2910 = vmax.f32 %v2902, %v2909
        %v2911 = vsel %vm2790, %v2787, -inf
        %v2912 = vmax.f32 %v2904, %v2911
        %v2913 = vsel %vm2790, %v2788, -inf
        %v2914 = vmax.f32 %v2906, %v2913
        %v2915 = vmax.f32 %v2908, %v2910
        %v2916 = vmax.f32 %v2912, %v2914
        %v2917 = vmax.f32 %v2915, %v2916
        %v2918 = vrot.slane %v2917, 4
        %v2919 = vmax.f32 %v2917, %v2918
        %v2920 = vrot.slane %v2919, 2
        %v2921 = vmax.f32 %v2919, %v2920
        %v2922 = vrot.slane %v2921, 1
        %v2923 = vmax.f32 %v2921, %v2922
        %v2924 = vmax.f32 %v2789, %v2923
        %v2925 = vsub.f32 %v2789, %v2924
        %v2926 = vmul.f32 %v2925, 1.442695
        %v2927 = vpow.pop %v2926
        %v2929 = vlaneseq
        %v2930 = vshrl.u32 %v2929, 7
        %v2931 = vsub.s32 0, %v2930
        %v2932 = vrot.slane %v2924, %v2931
        %v2934 = vsub.f32 %v2725, %v2932
        %v2935 = vsub.f32 %v2726, %v2932
        %v2936 = vsub.f32 %v2727, %v2932
        %v2937 = vsub.f32 %v2728, %v2932
        %v2938 = vsub.f32 %v2729, %v2932
        %v2939 = vsub.f32 %v2730, %v2932
        %v2940 = vsub.f32 %v2731, %v2932
        %v2941 = vsub.f32 %v2732, %v2932
        %v2942 = vsub.f32 %v2733, %v2932
        %v2943 = vsub.f32 %v2734, %v2932
        %v2944 = vsub.f32 %v2735, %v2932
        %v2945 = vsub.f32 %v2736, %v2932
        %v2946 = vsub.f32 %v2737, %v2932
        %v2947 = vsub.f32 %v2738, %v2932
        %v2948 = vsub.f32 %v2739, %v2932
        %v2949 = vsub.f32 %v2740, %v2932
        %v2950 = vsub.f32 %v2741, %v2932
        %v2951 = vsub.f32 %v2742, %v2932
        %v2952 = vsub.f32 %v2743, %v2932
        %v2953 = vsub.f32 %v2744, %v2932
        %v2954 = vsub.f32 %v2745, %v2932
        %v2955 = vsub.f32 %v2746, %v2932
        %v2956 = vsub.f32 %v2747, %v2932
        %v2957 = vsub.f32 %v2748, %v2932
        %v2958 = vsub.f32 %v2749, %v2932
        %v2959 = vsub.f32 %v2750, %v2932
        %v2960 = vsub.f32 %v2751, %v2932
        %v2961 = vsub.f32 %v2752, %v2932
        %v2962 = vsub.f32 %v2753, %v2932
        %v2963 = vsub.f32 %v2754, %v2932
        %v2964 = vsub.f32 %v2755, %v2932
        %v2965 = vsub.f32 %v2756, %v2932
        %v2966 = vsub.f32 %v2757, %v2932
        %v2967 = vsub.f32 %v2758, %v2932
        %v2968 = vsub.f32 %v2759, %v2932
        %v2969 = vsub.f32 %v2760, %v2932
        %v2970 = vsub.f32 %v2761, %v2932
        %v2971 = vsub.f32 %v2762, %v2932
        %v2972 = vsub.f32 %v2763, %v2932
        %v2973 = vsub.f32 %v2764, %v2932
        %v2974 = vsub.f32 %v2765, %v2932
        %v2975 = vsub.f32 %v2766, %v2932
        %v2976 = vsub.f32 %v2767, %v2932
        %v2977 = vsub.f32 %v2768, %v2932
        %v2978 = vsub.f32 %v2769, %v2932
        %v2979 = vsub.f32 %v2770, %v2932
        %v2980 = vsub.f32 %v2771, %v2932
        %v2981 = vsub.f32 %v2772, %v2932
        %v2982 = vsub.f32 %v2773, %v2932
        %v2983 = vsub.f32 %v2774, %v2932
        %v2984 = vsub.f32 %v2775, %v2932
        %v2985 = vsub.f32 %v2776, %v2932
        %v2986 = vsub.f32 %v2777, %v2932
        %v2987 = vsub.f32 %v2778, %v2932
        %v2988 = vsub.f32 %v2779, %v2932
        %v2989 = vsub.f32 %v2780, %v2932
        %v2990 = vsub.f32 %v2781, %v2932
        %v2991 = vsub.f32 %v2782, %v2932
        %v2992 = vsub.f32 %v2783, %v2932
        %v2993 = vsub.f32 %v2784, %v2932
        %v2994 = vsub.f32 %v2785, %v2932
        %v2995 = vsub.f32 %v2786, %v2932
        %v2996 = vsub.f32 %v2787, %v2932
        %v2997 = vsub.f32 %v2788, %v2932
        %v2998 = vmul.f32 %v2934, 1.442695
        %v2999 = vpow.pop %v2998
        %v3000 = vmul.f32 %v2935, 1.442695
        %v3001 = vpow.pop %v3000
        %v3002 = vmul.f32 %v2936, 1.442695
        %v3003 = vpow.pop %v3002
        %v3004 = vmul.f32 %v2937, 1.442695
        %v3005 = vpow.pop %v3004
        %v3006 = vmul.f32 %v2938, 1.442695
        %v3007 = vpow.pop %v3006
        %v3008 = vmul.f32 %v2939, 1.442695
        %v3009 = vpow.pop %v3008
        %v3010 = vmul.f32 %v2940, 1.442695
        %v3011 = vpow.pop %v3010
        %v3012 = vmul.f32 %v2941, 1.442695
        %v3013 = vpow.pop %v3012
        %v3014 = vmul.f32 %v2942, 1.442695
        %v3015 = vpow.pop %v3014
        %v3016 = vmul.f32 %v2943, 1.442695
        %v3017 = vpow.pop %v3016
        %v3018 = vmul.f32 %v2944, 1.442695
        %v3019 = vpow.pop %v3018
        %v3020 = vmul.f32 %v2945, 1.442695
        %v3021 = vpow.pop %v3020
        %v3022 = vmul.f32 %v2946, 1.442695
        %v3023 = vpow.pop %v3022
        %v3024 = vmul.f32 %v2947, 1.442695
        %v3025 = vpow.pop %v3024
        %v3026 = vmul.f32 %v2948, 1.442695
        %v3027 = vpow.pop %v3026
        %v3028 = vmul.f32 %v2949, 1.442695
        %v3029 = vpow.pop %v3028
        %v3030 = vmul.f32 %v2950, 1.442695
        %v3031 = vpow.pop %v3030
        %v3032 = vmul.f32 %v2951, 1.442695
        %v3033 = vpow.pop %v3032
        %v3034 = vmul.f32 %v2952, 1.442695
        %v3035 = vpow.pop %v3034
        %v3036 = vmul.f32 %v2953, 1.442695
        %v3037 = vpow.pop %v3036
        %v3038 = vmul.f32 %v2954, 1.442695
        %v3039 = vpow.pop %v3038
        %v3040 = vmul.f32 %v2955, 1.442695
        %v3041 = vpow.pop %v3040
        %v3042 = vmul.f32 %v2956, 1.442695
        %v3043 = vpow.pop %v3042
        %v3044 = vmul.f32 %v2957, 1.442695
        %v3045 = vpow.pop %v3044
        %v3046 = vmul.f32 %v2958, 1.442695
        %v3047 = vpow.pop %v3046
        %v3048 = vmul.f32 %v2959, 1.442695
        %v3049 = vpow.pop %v3048
        %v3050 = vmul.f32 %v2960, 1.442695
        %v3051 = vpow.pop %v3050
        %v3052 = vmul.f32 %v2961, 1.442695
        %v3053 = vpow.pop %v3052
        %v3054 = vmul.f32 %v2962, 1.442695
        %v3055 = vpow.pop %v3054
        %v3056 = vmul.f32 %v2963, 1.442695
        %v3057 = vpow.pop %v3056
        %v3058 = vmul.f32 %v2964, 1.442695
        %v3059 = vpow.pop %v3058
        %v3060 = vmul.f32 %v2965, 1.442695
        %v3061 = vpow.pop %v3060
        %v3062 = vmul.f32 %v2966, 1.442695
        %v3063 = vpow.pop %v3062
        %v3064 = vmul.f32 %v2967, 1.442695
        %v3065 = vpow.pop %v3064
        %v3066 = vmul.f32 %v2968, 1.442695
        %v3067 = vpow.pop %v3066
        %v3068 = vmul.f32 %v2969, 1.442695
        %v3069 = vpow.pop %v3068
        %v3070 = vmul.f32 %v2970, 1.442695
        %v3071 = vpow.pop %v3070
        %v3072 = vmul.f32 %v2971, 1.442695
        %v3073 = vpow.pop %v3072
        %v3074 = vmul.f32 %v2972, 1.442695
        %v3075 = vpow.pop %v3074
        %v3076 = vmul.f32 %v2973, 1.442695
        %v3077 = vpow.pop %v3076
        %v3078 = vmul.f32 %v2974, 1.442695
        %v3079 = vpow.pop %v3078
        %v3080 = vmul.f32 %v2975, 1.442695
        %v3081 = vpow.pop %v3080
        %v3082 = vmul.f32 %v2976, 1.442695
        %v3083 = vpow.pop %v3082
        %v3084 = vmul.f32 %v2977, 1.442695
        %v3085 = vpow.pop %v3084
        %v3086 = vmul.f32 %v2978, 1.442695
        %v3087 = vpow.pop %v3086
        %v3088 = vmul.f32 %v2979, 1.442695
        %v3089 = vpow.pop %v3088
        %v3090 = vmul.f32 %v2980, 1.442695
        %v3091 = vpow.pop %v3090
        %v3092 = vmul.f32 %v2981, 1.442695
        %v3093 = vpow.pop %v3092
        %v3094 = vmul.f32 %v2982, 1.442695
        %v3095 = vpow.pop %v3094
        %v3096 = vmul.f32 %v2983, 1.442695
        %v3097 = vpow.pop %v3096
        %v3098 = vmul.f32 %v2984, 1.442695
        %v3099 = vpow.pop %v3098
        %v3100 = vmul.f32 %v2985, 1.442695
        %v3101 = vpow.pop %v3100
        %v3102 = vmul.f32 %v2986, 1.442695
        %v3103 = vpow.pop %v3102
        %v3104 = vmul.f32 %v2987, 1.442695
        %v3105 = vpow.pop %v3104
        %v3106 = vmul.f32 %v2988, 1.442695
        %v3107 = vpow.pop %v3106
        %v3108 = vmul.f32 %v2989, 1.442695
        %v3109 = vpow.pop %v3108
        %v3110 = vmul.f32 %v2990, 1.442695
        %v3111 = vpow.pop %v3110
        %v3112 = vmul.f32 %v2991, 1.442695
        %v3113 = vpow.pop %v3112
        %v3114 = vmul.f32 %v2992, 1.442695
        %v3115 = vpow.pop %v3114
        %v3116 = vmul.f32 %v2993, 1.442695
        %v3117 = vpow.pop %v3116
        %v3118 = vmul.f32 %v2994, 1.442695
        %v3119 = vpow.pop %v3118
        %v3120 = vmul.f32 %v2995, 1.442695
        %v3121 = vpow.pop %v3120
        %v3122 = vmul.f32 %v2996, 1.442695
        %v3123 = vpow.pop %v3122
        %v3124 = vmul.f32 %v2997, 1.442695
        %v3125 = vpow.pop %v3124
        %v3126 = vld [vmem:[#allocation3] sm:$0x1]
        %v3127 = vmul.f32 %v2927, %v3126
        %v3128 = vsel %vm2790, %v2999, 0.0
        %v3129 = vsel %vm2790, %v3001, 0.0
        %v3130 = vadd.f32 %v3128, %v3129
        %v3131 = vsel %vm2790, %v3003, 0.0
        %v3132 = vadd.f32 %v3130, %v3131
        %v3133 = vsel %vm2790, %v3005, 0.0
        %v3134 = vadd.f32 %v3132, %v3133
        %v3135 = vsel %vm2790, %v3007, 0.0
        %v3136 = vadd.f32 %v3134, %v3135
        %v3137 = vsel %vm2790, %v3009, 0.0
        %v3138 = vadd.f32 %v3136, %v3137
        %v3139 = vsel %vm2790, %v3011, 0.0
        %v3140 = vadd.f32 %v3138, %v3139
        %v3141 = vsel %vm2790, %v3013, 0.0
        %v3142 = vadd.f32 %v3140, %v3141
        %v3143 = vsel %vm2790, %v3015, 0.0
        %v3144 = vadd.f32 %v3142, %v3143
        %v3145 = vsel %vm2790, %v3017, 0.0
        %v3146 = vadd.f32 %v3144, %v3145
        %v3147 = vsel %vm2790, %v3019, 0.0
        %v3148 = vadd.f32 %v3146, %v3147
        %v3149 = vsel %vm2790, %v3021, 0.0
        %v3150 = vadd.f32 %v3148, %v3149
        %v3151 = vsel %vm2790, %v3023, 0.0
        %v3152 = vadd.f32 %v3150, %v3151
        %v3153 = vsel %vm2790, %v3025, 0.0
        %v3154 = vadd.f32 %v3152, %v3153
        %v3155 = vsel %vm2790, %v3027, 0.0
        %v3156 = vadd.f32 %v3154, %v3155
        %v3157 = vsel %vm2790, %v3029, 0.0
        %v3158 = vadd.f32 %v3156, %v3157
        %v3159 = vsel %vm2790, %v3031, 0.0
        %v3160 = vadd.f32 %v3158, %v3159
        %v3161 = vsel %vm2790, %v3033, 0.0
        %v3162 = vadd.f32 %v3160, %v3161
        %v3163 = vsel %vm2790, %v3035, 0.0
        %v3164 = vadd.f32 %v3162, %v3163
        %v3165 = vsel %vm2790, %v3037, 0.0
        %v3166 = vadd.f32 %v3164, %v3165
        %v3167 = vsel %vm2790, %v3039, 0.0
        %v3168 = vadd.f32 %v3166, %v3167
        %v3169 = vsel %vm2790, %v3041, 0.0
        %v3170 = vadd.f32 %v3168, %v3169
        %v3171 = vsel %vm2790, %v3043, 0.0
        %v3172 = vadd.f32 %v3170, %v3171
        %v3173 = vsel %vm2790, %v3045, 0.0
        %v3174 = vadd.f32 %v3172, %v3173
        %v3175 = vsel %vm2790, %v3047, 0.0
        %v3176 = vadd.f32 %v3174, %v3175
        %v3177 = vsel %vm2790, %v3049, 0.0
        %v3178 = vadd.f32 %v3176, %v3177
        %v3179 = vsel %vm2790, %v3051, 0.0
        %v3180 = vadd.f32 %v3178, %v3179
        %v3181 = vsel %vm2790, %v3053, 0.0
        %v3182 = vadd.f32 %v3180, %v3181
        %v3183 = vsel %vm2790, %v3055, 0.0
        %v3184 = vadd.f32 %v3182, %v3183
        %v3185 = vsel %vm2790, %v3057, 0.0
        %v3186 = vadd.f32 %v3184, %v3185
        %v3187 = vsel %vm2790, %v3059, 0.0
        %v3188 = vadd.f32 %v3186, %v3187
        %v3189 = vsel %vm2790, %v3061, 0.0
        %v3190 = vadd.f32 %v3188, %v3189
        %v3191 = vsel %vm2790, %v3063, 0.0
        %v3192 = vadd.f32 %v3190, %v3191
        %v3193 = vsel %vm2790, %v3065, 0.0
        %v3194 = vadd.f32 %v3192, %v3193
        %v3195 = vsel %vm2790, %v3067, 0.0
        %v3196 = vadd.f32 %v3194, %v3195
        %v3197 = vsel %vm2790, %v3069, 0.0
        %v3198 = vadd.f32 %v3196, %v3197
        %v3199 = vsel %vm2790, %v3071, 0.0
        %v3200 = vadd.f32 %v3198, %v3199
        %v3201 = vsel %vm2790, %v3073, 0.0
        %v3202 = vadd.f32 %v3200, %v3201
        %v3203 = vsel %vm2790, %v3075, 0.0
        %v3204 = vadd.f32 %v3202, %v3203
        %v3205 = vsel %vm2790, %v3077, 0.0
        %v3206 = vadd.f32 %v3204, %v3205
        %v3207 = vsel %vm2790, %v3079, 0.0
        %v3208 = vadd.f32 %v3206, %v3207
        %v3209 = vsel %vm2790, %v3081, 0.0
        %v3210 = vadd.f32 %v3208, %v3209
        %v3211 = vsel %vm2790, %v3083, 0.0
        %v3212 = vadd.f32 %v3210, %v3211
        %v3213 = vsel %vm2790, %v3085, 0.0
        %v3214 = vadd.f32 %v3212, %v3213
        %v3215 = vsel %vm2790, %v3087, 0.0
        %v3216 = vadd.f32 %v3214, %v3215
        %v3217 = vsel %vm2790, %v3089, 0.0
        %v3218 = vadd.f32 %v3216, %v3217
        %v3219 = vsel %vm2790, %v3091, 0.0
        %v3220 = vadd.f32 %v3218, %v3219
        %v3221 = vsel %vm2790, %v3093, 0.0
        %v3222 = vadd.f32 %v3220, %v3221
        %v3223 = vsel %vm2790, %v3095, 0.0
        %v3224 = vadd.f32 %v3222, %v3223
        %v3225 = vsel %vm2790, %v3097, 0.0
        %v3226 = vadd.f32 %v3224, %v3225
        %v3227 = vsel %vm2790, %v3099, 0.0
        %v3228 = vadd.f32 %v3226, %v3227
        %v3229 = vsel %vm2790, %v3101, 0.0
        %v3230 = vadd.f32 %v3228, %v3229
        %v3231 = vsel %vm2790, %v3103, 0.0
        %v3232 = vadd.f32 %v3230, %v3231
        %v3233 = vsel %vm2790, %v3105, 0.0
        %v3234 = vadd.f32 %v3232, %v3233
        %v3235 = vsel %vm2790, %v3107, 0.0
        %v3236 = vadd.f32 %v3234, %v3235
        %v3237 = vsel %vm2790, %v3109, 0.0
        %v3238 = vadd.f32 %v3236, %v3237
        %v3239 = vsel %vm2790, %v3111, 0.0
        %v3240 = vadd.f32 %v3238, %v3239
        %v3241 = vsel %vm2790, %v3113, 0.0
        %v3242 = vadd.f32 %v3240, %v3241
        %v3243 = vsel %vm2790, %v3115, 0.0
        %v3244 = vadd.f32 %v3242, %v3243
        %v3245 = vsel %vm2790, %v3117, 0.0
        %v3246 = vadd.f32 %v3244, %v3245
        %v3247 = vsel %vm2790, %v3119, 0.0
        %v3248 = vadd.f32 %v3246, %v3247
        %v3249 = vsel %vm2790, %v3121, 0.0
        %v3250 = vadd.f32 %v3248, %v3249
        %v3251 = vsel %vm2790, %v3123, 0.0
        %v3252 = vadd.f32 %v3250, %v3251
        %v3253 = vsel %vm2790, %v3125, 0.0
        %v3254 = vadd.f32 %v3252, %v3253
        %v3255 = vrot.slane %v3254, 4
        %v3256 = vadd.f32 %v3254, %v3255
        %v3257 = vrot.slane %v3256, 2
        %v3258 = vadd.f32 %v3256, %v3257
        %v3259 = vrot.slane %v3258, 1
        %v3260 = vadd.f32 %v3258, %v3259
        %v3261 = vadd.f32 %v3127, %v3260
        %vm3262 = vcmask 0
        %3263 = vst.msk [vmem:[#allocation3] sm:$0x1] %vm3262, %v3261
        %v3264 = vld [vmem:[#allocation4] sm:$0x1]
        %3266 = vset.pattern.permute.xlu0 0
        %3267 = vperm.xlu0 %3266, %v2927
        %v3268 = vpop.permute.xlu0 %3267
        %v3270 = vlaneseq
        %v3271 = vshrl.u32 %v3270, 7
        %v3272 = vsub.s32 0, %v3271
        %v3273 = vrot.slane %v3268, %v3272
        %v3274 = vmul.f32 %v3273, %v3264
        %3275 = vxpose.xlu0.b32.start [1/16] %v2999, 128
        %3276 = vxpose.xlu0.b32.cont [2/16] %v3001, 128
        %3277 = vxpose.xlu0.b32.cont [3/16] %v3003, 128
        %3278 = vxpose.xlu0.b32.cont [4/16] %v3005, 128
        %3279 = vxpose.xlu0.b32.cont [5/16] %v3007, 128
        %3280 = vxpose.xlu0.b32.cont [6/16] %v3009, 128
        %3281 = vxpose.xlu0.b32.cont [7/16] %v3011, 128
        %3282 = vxpose.xlu0.b32.cont [8/16] %v3013, 128
        %3283 = vxpose.xlu0.b32.cont [9/16] %v3015, 128
        %3284 = vxpose.xlu0.b32.cont [10/16] %v3017, 128
        %3285 = vxpose.xlu0.b32.cont [11/16] %v3019, 128
        %3286 = vxpose.xlu0.b32.cont [12/16] %v3021, 128
        %3287 = vxpose.xlu0.b32.cont [13/16] %v3023, 128
        %3288 = vxpose.xlu0.b32.cont [14/16] %v3025, 128
        %3289 = vxpose.xlu0.b32.cont [15/16] %v3027, 128
        %3290 = vxpose.xlu0.b32.end [16/16] %v3029, 128
        %v3291 = vpop.trf.xlu0
        %v3292 = vpop.trf.xlu0
        %v3293 = vpop.trf.xlu0
        %v3294 = vpop.trf.xlu0
        %v3295 = vpop.trf.xlu0
        %v3296 = vpop.trf.xlu0
        %v3297 = vpop.trf.xlu0
        %v3298 = vpop.trf.xlu0
        %v3299 = vpop.trf.xlu0
        %v3300 = vpop.trf.xlu0
        %v3301 = vpop.trf.xlu0
        %v3302 = vpop.trf.xlu0
        %v3303 = vpop.trf.xlu0
        %v3304 = vpop.trf.xlu0
        %v3305 = vpop.trf.xlu0
        %v3306 = vpop.trf.xlu0
        %3307 = vxpose.xlu0.b32.start [1/16] %v3031, 128
        %3308 = vxpose.xlu0.b32.cont [2/16] %v3033, 128
        %3309 = vxpose.xlu0.b32.cont [3/16] %v3035, 128
        %3310 = vxpose.xlu0.b32.cont [4/16] %v3037, 128
        %3311 = vxpose.xlu0.b32.cont [5/16] %v3039, 128
        %3312 = vxpose.xlu0.b32.cont [6/16] %v3041, 128
        %3313 = vxpose.xlu0.b32.cont [7/16] %v3043, 128
        %3314 = vxpose.xlu0.b32.cont [8/16] %v3045, 128
        %3315 = vxpose.xlu0.b32.cont [9/16] %v3047, 128
        %3316 = vxpose.xlu0.b32.cont [10/16] %v3049, 128
        %3317 = vxpose.xlu0.b32.cont [11/16] %v3051, 128
        %3318 = vxpose.xlu0.b32.cont [12/16] %v3053, 128
        %3319 = vxpose.xlu0.b32.cont [13/16] %v3055, 128
        %3320 = vxpose.xlu0.b32.cont [14/16] %v3057, 128
        %3321 = vxpose.xlu0.b32.cont [15/16] %v3059, 128
        %3322 = vxpose.xlu0.b32.end [16/16] %v3061, 128
        %v3323 = vpop.trf.xlu0
        %v3324 = vpop.trf.xlu0
        %v3325 = vpop.trf.xlu0
        %v3326 = vpop.trf.xlu0
        %v3327 = vpop.trf.xlu0
        %v3328 = vpop.trf.xlu0
        %v3329 = vpop.trf.xlu0
        %v3330 = vpop.trf.xlu0
        %v3331 = vpop.trf.xlu0
        %v3332 = vpop.trf.xlu0
        %v3333 = vpop.trf.xlu0
        %v3334 = vpop.trf.xlu0
        %v3335 = vpop.trf.xlu0
        %v3336 = vpop.trf.xlu0
        %v3337 = vpop.trf.xlu0
        %v3338 = vpop.trf.xlu0
        %3339 = vxpose.xlu0.b32.start [1/16] %v3063, 128
        %3340 = vxpose.xlu0.b32.cont [2/16] %v3065, 128
        %3341 = vxpose.xlu0.b32.cont [3/16] %v3067, 128
        %3342 = vxpose.xlu0.b32.cont [4/16] %v3069, 128
        %3343 = vxpose.xlu0.b32.cont [5/16] %v3071, 128
        %3344 = vxpose.xlu0.b32.cont [6/16] %v3073, 128
        %3345 = vxpose.xlu0.b32.cont [7/16] %v3075, 128
        %3346 = vxpose.xlu0.b32.cont [8/16] %v3077, 128
        %3347 = vxpose.xlu0.b32.cont [9/16] %v3079, 128
        %3348 = vxpose.xlu0.b32.cont [10/16] %v3081, 128
        %3349 = vxpose.xlu0.b32.cont [11/16] %v3083, 128
        %3350 = vxpose.xlu0.b32.cont [12/16] %v3085, 128
        %3351 = vxpose.xlu0.b32.cont [13/16] %v3087, 128
        %3352 = vxpose.xlu0.b32.cont [14/16] %v3089, 128
        %3353 = vxpose.xlu0.b32.cont [15/16] %v3091, 128
        %3354 = vxpose.xlu0.b32.end [16/16] %v3093, 128
        %v3355 = vpop.trf.xlu0
        %v3356 = vpop.trf.xlu0
        %v3357 = vpop.trf.xlu0
        %v3358 = vpop.trf.xlu0
        %v3359 = vpop.trf.xlu0
        %v3360 = vpop.trf.xlu0
        %v3361 = vpop.trf.xlu0
        %v3362 = vpop.trf.xlu0
        %v3363 = vpop.trf.xlu0
        %v3364 = vpop.trf.xlu0
        %v3365 = vpop.trf.xlu0
        %v3366 = vpop.trf.xlu0
        %v3367 = vpop.trf.xlu0
        %v3368 = vpop.trf.xlu0
        %v3369 = vpop.trf.xlu0
        %v3370 = vpop.trf.xlu0
        %3371 = vxpose.xlu0.b32.start [1/16] %v3095, 128
        %3372 = vxpose.xlu0.b32.cont [2/16] %v3097, 128
        %3373 = vxpose.xlu0.b32.cont [3/16] %v3099, 128
        %3374 = vxpose.xlu0.b32.cont [4/16] %v3101, 128
        %3375 = vxpose.xlu0.b32.cont [5/16] %v3103, 128
        %3376 = vxpose.xlu0.b32.cont [6/16] %v3105, 128
        %3377 = vxpose.xlu0.b32.cont [7/16] %v3107, 128
        %3378 = vxpose.xlu0.b32.cont [8/16] %v3109, 128
        %3379 = vxpose.xlu0.b32.cont [9/16] %v3111, 128
        %3380 = vxpose.xlu0.b32.cont [10/16] %v3113, 128
        %3381 = vxpose.xlu0.b32.cont [11/16] %v3115, 128
        %3382 = vxpose.xlu0.b32.cont [12/16] %v3117, 128
        %3383 = vxpose.xlu0.b32.cont [13/16] %v3119, 128
        %3384 = vxpose.xlu0.b32.cont [14/16] %v3121, 128
        %3385 = vxpose.xlu0.b32.cont [15/16] %v3123, 128
        %3386 = vxpose.xlu0.b32.end [16/16] %v3125, 128
        %v3387 = vpop.trf.xlu0
        %v3388 = vpop.trf.xlu0
        %v3389 = vpop.trf.xlu0
        %v3390 = vpop.trf.xlu0
        %v3391 = vpop.trf.xlu0
        %v3392 = vpop.trf.xlu0
        %v3393 = vpop.trf.xlu0
        %v3394 = vpop.trf.xlu0
        %v3395 = vpop.trf.xlu0
        %v3396 = vpop.trf.xlu0
        %v3397 = vpop.trf.xlu0
        %v3398 = vpop.trf.xlu0
        %v3399 = vpop.trf.xlu0
        %v3400 = vpop.trf.xlu0
        %v3401 = vpop.trf.xlu0
        %v3402 = vpop.trf.xlu0
        %3403 = vmatprep.subr.mxu0 0.0
        %3404 = vmatpush1.msra.mxu0 %v1026
        %3405 = vmatprep.subr.mxu0 0.0
        %3406 = vmatpush1.msra.mxu0 %v1027
        %3407 = vmatprep.subr.mxu0 0.0
        %3408 = vmatpush1.msra.mxu0 %v1028
        %3409 = vmatprep.subr.mxu0 0.0
        %3410 = vmatpush1.msra.mxu0 %v1029
        %3411 = vmatprep.subr.mxu0 0.0
        %3412 = vmatpush1.msra.mxu0 %v1030
        %3413 = vmatprep.subr.mxu0 0.0
        %3414 = vmatpush1.msra.mxu0 %v1031
        %3415 = vmatprep.subr.mxu0 0.0
        %3416 = vmatpush1.msra.mxu0 %v1032
        %3417 = vmatprep.subr.mxu0 0.0
        %3418 = vmatpush1.msra.mxu0 %v1033
        %3419 = vmatprep.subr.mxu0 0.0
        %3420 = vmatpush1.msra.mxu0 %v1034
        %3421 = vmatprep.subr.mxu0 0.0
        %3422 = vmatpush1.msra.mxu0 %v1035
        %3423 = vmatprep.subr.mxu0 0.0
        %3424 = vmatpush1.msra.mxu0 %v1036
        %3425 = vmatprep.subr.mxu0 0.0
        %3426 = vmatpush1.msra.mxu0 %v1037
        %3427 = vmatprep.subr.mxu0 0.0
        %3428 = vmatpush1.msra.mxu0 %v1038
        %3429 = vmatprep.subr.mxu0 0.0
        %3430 = vmatpush1.msra.mxu0 %v1039
        %3431 = vmatprep.subr.mxu0 0.0
        %3432 = vmatpush1.msra.mxu0 %v1040
        %3433 = vmatprep.subr.mxu0 0.0
        %3434 = vmatpush1.msra.mxu0 %v1041
        %3435 = vmatprep.subr.mxu0 0.0
        %3436 = vmatpush1.msra.mxu0 %v1042
        %3437 = vmatprep.subr.mxu0 0.0
        %3438 = vmatpush1.msra.mxu0 %v1043
        %3439 = vmatprep.subr.mxu0 0.0
        %3440 = vmatpush1.msra.mxu0 %v1044
        %3441 = vmatprep.subr.mxu0 0.0
        %3442 = vmatpush1.msra.mxu0 %v1045
        %3443 = vmatprep.subr.mxu0 0.0
        %3444 = vmatpush1.msra.mxu0 %v1046
        %3445 = vmatprep.subr.mxu0 0.0
        %3446 = vmatpush1.msra.mxu0 %v1047
        %3447 = vmatprep.subr.mxu0 0.0
        %3448 = vmatpush1.msra.mxu0 %v1048
        %3449 = vmatprep.subr.mxu0 0.0
        %3450 = vmatpush1.msra.mxu0 %v1049
        %3451 = vmatprep.subr.mxu0 0.0
        %3452 = vmatpush1.msra.mxu0 %v1050
        %3453 = vmatprep.subr.mxu0 0.0
        %3454 = vmatpush1.msra.mxu0 %v1051
        %3455 = vmatprep.subr.mxu0 0.0
        %3456 = vmatpush1.msra.mxu0 %v1052
        %3457 = vmatprep.subr.mxu0 0.0
        %3458 = vmatpush1.msra.mxu0 %v1053
        %3459 = vmatprep.subr.mxu0 0.0
        %3460 = vmatpush1.msra.mxu0 %v1054
        %3461 = vmatprep.subr.mxu0 0.0
        %3462 = vmatpush1.msra.mxu0 %v1055
        %3463 = vmatprep.subr.mxu0 0.0
        %3464 = vmatpush1.msra.mxu0 %v1056
        %3465 = vmatprep.subr.mxu0 0.0
        %3466 = vmatpush1.msra.mxu0 %v1057
        %3467 = vmatprep.mubr.f32.mxu0 %v3323
        %3468 = vmatmul.mubr.f32.gmra.mrb[0].mxu0 %v3291
        %v3469 = vpop.f32.mrb[0].mxu0
        %v3470 = vadd.f32 0.0, %v3469
        %v3471 = vpop.f32.mrb[0].mxu0
        %3472 = vdwg.mxu0
        %3473 = vmatprep.subr.mxu0 0.0
        %3474 = vmatpush1.msra.mxu0 %v1058
        %3475 = vmatprep.subr.mxu0 0.0
        %3476 = vmatpush1.msra.mxu0 %v1059
        %3477 = vmatprep.subr.mxu0 0.0
        %3478 = vmatpush1.msra.mxu0 %v1060
        %3479 = vmatprep.subr.mxu0 0.0
        %3480 = vmatpush1.msra.mxu0 %v1061
        %3481 = vmatprep.subr.mxu0 0.0
        %3482 = vmatpush1.msra.mxu0 %v1062
        %3483 = vmatprep.subr.mxu0 0.0
        %3484 = vmatpush1.msra.mxu0 %v1063
        %3485 = vmatprep.subr.mxu0 0.0
        %3486 = vmatpush1.msra.mxu0 %v1064
        %3487 = vmatprep.subr.mxu0 0.0
        %3488 = vmatpush1.msra.mxu0 %v1065
        %3489 = vmatprep.subr.mxu0 0.0
        %3490 = vmatpush1.msra.mxu0 %v1066
        %3491 = vmatprep.subr.mxu0 0.0
        %3492 = vmatpush1.msra.mxu0 %v1067
        %3493 = vmatprep.subr.mxu0 0.0
        %3494 = vmatpush1.msra.mxu0 %v1068
        %3495 = vmatprep.subr.mxu0 0.0
        %3496 = vmatpush1.msra.mxu0 %v1069
        %3497 = vmatprep.subr.mxu0 0.0
        %3498 = vmatpush1.msra.mxu0 %v1070
        %3499 = vmatprep.subr.mxu0 0.0
        %3500 = vmatpush1.msra.mxu0 %v1071
        %3501 = vmatprep.subr.mxu0 0.0
        %3502 = vmatpush1.msra.mxu0 %v1072
        %3503 = vmatprep.subr.mxu0 0.0
        %3504 = vmatpush1.msra.mxu0 %v1073
        %3505 = vmatprep.subr.mxu0 0.0
        %3506 = vmatpush1.msra.mxu0 %v1074
        %3507 = vmatprep.subr.mxu0 0.0
        %3508 = vmatpush1.msra.mxu0 %v1075
        %3509 = vmatprep.subr.mxu0 0.0
        %3510 = vmatpush1.msra.mxu0 %v1076
        %3511 = vmatprep.subr.mxu0 0.0
        %3512 = vmatpush1.msra.mxu0 %v1077
        %3513 = vmatprep.subr.mxu0 0.0
        %3514 = vmatpush1.msra.mxu0 %v1078
        %3515 = vmatprep.subr.mxu0 0.0
        %3516 = vmatpush1.msra.mxu0 %v1079
        %3517 = vmatprep.subr.mxu0 0.0
        %3518 = vmatpush1.msra.mxu0 %v1080
        %3519 = vmatprep.subr.mxu0 0.0
        %3520 = vmatpush1.msra.mxu0 %v1081
        %3521 = vmatprep.subr.mxu0 0.0
        %3522 = vmatpush1.msra.mxu0 %v1082
        %3523 = vmatprep.subr.mxu0 0.0
        %3524 = vmatpush1.msra.mxu0 %v1083
        %3525 = vmatprep.subr.mxu0 0.0
        %3526 = vmatpush1.msra.mxu0 %v1084
        %3527 = vmatprep.subr.mxu0 0.0
        %3528 = vmatpush1.msra.mxu0 %v1085
        %3529 = vmatprep.subr.mxu0 0.0
        %3530 = vmatpush1.msra.mxu0 %v1086
        %3531 = vmatprep.subr.mxu0 0.0
        %3532 = vmatpush1.msra.mxu0 %v1087
        %3533 = vmatprep.subr.mxu0 0.0
        %3534 = vmatpush1.msra.mxu0 %v1088
        %3535 = vmatprep.subr.mxu0 0.0
        %3536 = vmatpush1.msra.mxu0 %v1089
        %3537 = vmatprep.mubr.f32.mxu0 %v3387
        %3538 = vmatmul.mubr.f32.gmra.mrb[0].mxu0 %v3355
        %v3539 = vpop.f32.mrb[0].mxu0
        %v3540 = vadd.f32 %v3470, %v3539
        %v3541 = vpop.f32.mrb[0].mxu0
        %3542 = vdwg.mxu0
        %v3543 = vadd.f32 %v3274, %v3540
        %vm3544 = vcmask 253952
        %3545 = vst.msk [vmem:[#allocation4] sm:$0x1] %vm3544, %v3543
        %3546 = vst.msk [vmem:[#allocation2] sm:$0x1] %vm3262, %v2924
        // Predicated region
        $region61: #{tpu_custom_call.1} parent=55 // pred_check
          %p3547 = pneg %p368
        $region62: #{tpu_custom_call.1} parent=55 // pred_check_branch
          %3549 = sbr.rel (%p3547) target = $region64
        $region63: #{tpu_custom_call.1} parent=55 // pred_region
          %v3550 = vld [vmem:[#allocation3] sm:$0x1]
          %v3551 = vmax.f32 %v3550, 1e-30
          %v3552 = vrcp.pop %v3551
          %v3553 = vmul.f32 1.0, %v3552
          %v3554 = vld [vmem:[#allocation4] sm:$0x1]
          %3556 = vset.pattern.permute.xlu0 0
          %3557 = vperm.xlu0 %3556, %v3553
          %v3558 = vpop.permute.xlu0 %3557
          %v3560 = vlaneseq
          %v3561 = vshrl.u32 %v3560, 7
          %v3562 = vsub.s32 0, %v3561
          %v3563 = vrot.slane %v3558, %v3562
          %v3564 = vmul.f32 %v3554, %v3563
          %v3565 = vld [vmem:[%s8] sm:$0xff]
          %v3566 = vld [vmem:[%s8 + $0x8] sm:$0xff]
          %v3567 = vld [vmem:[%s8 + $0x10] sm:$0xff]
          %v3568 = vld [vmem:[%s8 + $0x18] sm:$0xff]
          %v3569 = vld [vmem:[%s9] sm:$0x1]
          %v3571 = vsel %vm1158, %v3564, 0
          %3573 = vmatprep.subr.mxu0 0.0
          %3574 = vmatpush1.msra.mxu0 %v3565
          %3575 = vmatprep.subr.mxu0 0.0
          %3576 = vmatpush1.msra.mxu0 %v3566
          %3577 = vmatprep.subr.mxu0 0.0
          %3578 = vmatpush1.msra.mxu0 %v3567
          %3579 = vmatprep.subr.mxu0 0.0
          %3580 = vmatpush1.msra.mxu0 %v3568
          %3581 = vmatprep.subr.mxu0 0.0
          %3582 = vmatpush1.msra.mxu0 0.0
          %3583 = vmatprep.subr.mxu0 0.0
          %3584 = vmatpush1.msra.mxu0 0.0
          %3585 = vmatprep.subr.mxu0 0.0
          %3586 = vmatpush1.msra.mxu0 0.0
          %3587 = vmatprep.subr.mxu0 0.0
          %3588 = vmatpush1.msra.mxu0 0.0
          %3589 = vmatprep.subr.mxu0 0.0
          %3590 = vmatpush1.msra.mxu0 0.0
          %3591 = vmatprep.subr.mxu0 0.0
          %3592 = vmatpush1.msra.mxu0 0.0
          %3593 = vmatprep.subr.mxu0 0.0
          %3594 = vmatpush1.msra.mxu0 0.0
          %3595 = vmatprep.subr.mxu0 0.0
          %3596 = vmatpush1.msra.mxu0 0.0
          %3597 = vmatprep.subr.mxu0 0.0
          %3598 = vmatpush1.msra.mxu0 0.0
          %3599 = vmatprep.subr.mxu0 0.0
          %3600 = vmatpush1.msra.mxu0 0.0
          %3601 = vmatprep.subr.mxu0 0.0
          %3602 = vmatpush1.msra.mxu0 0.0
          %3603 = vmatprep.subr.mxu0 0.0
          %3604 = vmatpush1.msra.mxu0 0.0
          %3605 = vmatprep.subr.mxu0 0.0
          %3606 = vmatpush1.msra.mxu0 0.0
          %3607 = vmatprep.subr.mxu0 0.0
          %3608 = vmatpush1.msra.mxu0 0.0
          %3609 = vmatprep.subr.mxu0 0.0
          %3610 = vmatpush1.msra.mxu0 0.0
          %3611 = vmatprep.subr.mxu0 0.0
          %3612 = vmatpush1.msra.mxu0 0.0
          %3613 = vmatprep.subr.mxu0 0.0
          %3614 = vmatpush1.msra.mxu0 0.0
          %3615 = vmatprep.subr.mxu0 0.0
          %3616 = vmatpush1.msra.mxu0 0.0
          %3617 = vmatprep.subr.mxu0 0.0
          %3618 = vmatpush1.msra.mxu0 0.0
          %3619 = vmatprep.subr.mxu0 0.0
          %3620 = vmatpush1.msra.mxu0 0.0
          %3621 = vmatprep.subr.mxu0 0.0
          %3622 = vmatpush1.msra.mxu0 0.0
          %3623 = vmatprep.subr.mxu0 0.0
          %3624 = vmatpush1.msra.mxu0 0.0
          %3625 = vmatprep.subr.mxu0 0.0
          %3626 = vmatpush1.msra.mxu0 0.0
          %3627 = vmatprep.subr.mxu0 0.0
          %3628 = vmatpush1.msra.mxu0 0.0
          %3629 = vmatprep.subr.mxu0 0.0
          %3630 = vmatpush1.msra.mxu0 0.0
          %3631 = vmatprep.subr.mxu0 0.0
          %3632 = vmatpush1.msra.mxu0 0.0
          %3633 = vmatprep.subr.mxu0 0.0
          %3634 = vmatpush1.msra.mxu0 0.0
          %3635 = vmatprep.subr.mxu0 0.0
          %3636 = vmatpush1.msra.mxu0 0.0
          %3637 = vmatprep.mubr.f32.mxu0 0.0
          %3638 = vmatmul.mubr.f32.gmra.mrb[0].mxu0 %v3571
          %v3639 = vpop.f32.mrb[0].mxu0
          %v3640 = vadd.f32 %v3569, %v3639
          %v3641 = vpop.f32.mrb[0].mxu0
          %3642 = vdwg.mxu0
          %vm3643 = vcmask 8192
          %v3644 = vsel %vm3643, %v3640, -inf
          %3645 = vmax.xlane.f32.xlu0 %v3644
          %v3646 = vpop.xlane.xlu0 %3645
          %v3647 = vsub.f32 %v3640, %v3646
          %v3648 = vmul.f32 %v3647, 1.442695
          %v3649 = vpow.pop %v3648
          %v3650 = vsel %vm3643, %v3649, 0.0
          %3651 = vadd.xlane.f32.xlu0 %v3650
          %v3652 = vpop.xlane.xlu0 %3651
          %v3653 = vrcp.pop %v3652
          %v3654 = vmul.f32 1.0, %v3653
          %v3655 = vmul.f32 %v3649, %v3654
          %v3656 = vlaneseq
          %v3657 = vand.u32 %v3656, 127
          %vm3658 = vcmp.eq.f32.partialorder %v3640, %v3646
          %v3659 = vsel %vm3658, %v3657, 2
          %v3660 = vsel %vm3643, %v3659, 2147483647
          %v3661 = vand.u32 %v3660, 65535
          %v3662 = vshra.s32 %v3660, 16
          %v3663 = vcvt.s32.f32 %v3661
          %v3664 = vcvt.s32.f32 %v3662
          %3665 = vmin.xlane.f32.xlu0 %v3664
          %v3666 = vpop.xlane.xlu0 %3665
          %vm3667 = vcmp.eq.f32.partialorder %v3664, %v3666
          %v3668 = vsel %vm3667, %v3663, inf
          %3669 = vmin.xlane.f32.xlu0 %v3668
          %v3670 = vpop.xlane.xlu0 %3669
          %v3671 = vcvt.f32.s32 %v3670
          %v3672 = vcvt.f32.s32 %v3666
          %v3673 = vshll.u32 %v3672, 16
          %v3674 = vadd.s32 %v3673, %v3671
          %v3675 = vcvt.s32.f32 %v3674
          %3677 = vrot.lane.b32.xlu0 %v3655, 2
          %v3678 = vpop.permute.xlu0 %3677
          %vm3680 = vcmask 15360
          %v3681 = vsel %vm3680, %v3640, %v3678
          %vm3682 = vcmask 31744
          %v3683 = vsel %vm3682, %v3681, %v3675
          %vm3684 = vcmask 39936
          %v3685 = vsel %vm3684, %v3683, 0.0
          %3686 = vst [vmem:[%s356] sm:$0x1] %v3685
        $region64: #{tpu_custom_call.1} parent=55 // pred_fallthru
          _
        %s3687 = sand.u32 %s248, 1
        %s3688 = scalar_lea.sflag [#allocation9], %s3687
        %s3689 = sand.u32 %s248, 1
        %s3690 = scalar_lea.vmem [#allocation8], %s3689
        // Predicated region
        $region65: #{tpu_custom_call.1} parent=55 // pred_check
          %p3691 = pneg %p258
        $region66: #{tpu_custom_call.1} parent=55 // pred_check_branch
          %3693 = sbr.rel (%p3691) target = $region68
        $region67: #{tpu_custom_call.1} parent=55 // pred_region
          %s3695 = ssub.s32 16, 16
          %3696 = vsyncadd %s3688, %s3695
          %s3697 = smul.addr %s36, 16
          %s3698 = scalar_lea.hbm %s10, %s3697
          %s3700 = sshll.u32 %s3690, 4
          %s3701 = int_to_ptr.vmem [resolvable:$true] %s3700
          %3703 = dma.vmem_to_hbm [thread:$0]  %s3701, 16, %s3698, %s3688
        $region68: #{tpu_custom_call.1} parent=55 // pred_fallthru
          _
      $region56: #{tpu_custom_call.1} parent=5 // pred_fallthru
        _
      %p3704 = scmp.le.s32.totalorder 2, %s27
      // Predicated region
      $region69: #{tpu_custom_call.1} parent=5 // pred_check
        %p3705 = pneg %p3704
      $region70: #{tpu_custom_call.1} parent=5 // pred_check_branch
        %3707 = sbr.rel (%p3705) target = $region72
      $region71: #{tpu_custom_call.1} parent=5 // pred_region
        %s3708 = ssub.s32 %s27, 2
        // Predicated region
        $region73: #{tpu_custom_call.1} parent=71 // pred_check
          %p3709 = pneg %p264
        $region74: #{tpu_custom_call.1} parent=71 // pred_check_branch
          %3711 = sbr.rel (%p3709) target = $region76
        $region75: #{tpu_custom_call.1} parent=71 // pred_region
          %s3712 = sand.u32 %s249, 1
          %s3713 = scalar_lea.sflag [#allocation9], %s3712
          %s3714 = sand.u32 %s249, 1
          %s3715 = scalar_lea.vmem [#allocation8], %s3714
          %3716 = dma.done %s3713, 16
        $region76: #{tpu_custom_call.1} parent=71 // pred_fallthru
          _
      $region72: #{tpu_custom_call.1} parent=5 // pred_fallthru
        _
    $region6: #{tpu_custom_call.1} parent=1 // loop_footer
      %s31 = sadd.s32 1, %s27
    $region7: #{tpu_custom_call.1} parent=1 // loop_footer_branch
      %26 = sbr.rel target = $region3
    $region8: #{tpu_custom_call.1} parent=1 // loop_exit
      _
    %3717 = vsyncpa [#allocation9], 1
    %s3718 = scalar_lea.sflag [#allocation9], 1
    %3719 = vsyncpa %s3718, 1

// kernel: tpu_custom_call.1
$region0: #{tpu_custom_call.1}
  #allocation0 [shape = 'u32[]', space=smem, size = 0x4, offset = 0x4, fixed_abs, tag = 'smem constant byte address 0x4 - core index']
  #allocation1 [shape = 'u32[144,128]{1,0:T(1,128)}', space=vmem, size = 0x12000, scoped, tag = 'internal scratch']
  #allocation2 [shape = 'f32[1,1]{1,0:T(1,128)}', space=vmem, size = 0x200, scoped, tag = 'scratch operand']
  #allocation3 [shape = 'f32[1,1]{1,0:T(1,128)}', space=vmem, size = 0x200, scoped, tag = 'scratch operand']
  #allocation4 [shape = 'f32[1,32]{1,0:T(1,128)}', space=vmem, size = 0x200, scoped, tag = 'scratch operand']
  #allocation5 [shape = 's32[1]{0}', space=sflag, size = 0x4, scoped, tag = 'scoped memory for tpu_custom_call.1']
  #allocation6 [shape = 'u8[512]{0}', space=smem, size = 0x200, scoped, tag = 'prefetched SMEM operand 0']
  #allocation7 [shape = 'f32[1,1]{1,0:T(1,128)S(1)}', space=vmem, size = 0x200, scoped, tag = 'scoped memory for tpu_custom_call.1']
  %s0 = inlined_call_operand.vmem [shape: s32[2], index: 0, kind: input, shape index: {}]
  %s1 = inlined_call_operand.vmem [shape: bf16[2,512,64], index: 1, kind: input, shape index: {}]
  %s2 = inlined_call_operand.vmem [shape: bf16[64,32], index: 2, kind: input, shape index: {}]
  %s3 = inlined_call_operand.vmem [shape: f32[1,32], index: 3, kind: input, shape index: {}]
  %s4 = inlined_call_operand.vmem [shape: bf16[32,256], index: 4, kind: input, shape index: {}]
  %s5 = inlined_call_operand.vmem [shape: f32[1,256], index: 5, kind: input, shape index: {}]
  %s6 = inlined_call_operand.vmem [shape: f32[128,1], index: 6, kind: input, shape index: {}]
  %s7 = inlined_call_operand.<no memory space> [shape: f32[1,1], index: 7, kind: input, shape index: {}]
  %s8 = inlined_call_operand.vmem [shape: f32[32,2], index: 8, kind: input, shape index: {}]
  %s9 = inlined_call_operand.vmem [shape: f32[1,2], index: 9, kind: input, shape index: {}]
  %s10 = inlined_call_operand.hbm [shape: f32[2,1,128], index: 10, kind: output, shape index: {}]
  %s11 = sld [smem:[#allocation0]]
  $region77: #{tpu_custom_call.1} parent=0
    _
  %s13 = ssub.s32 1, %s11
  %s14 = scalar_select 0, %s13, %s11
  %s15 = sshll.u32 %s0, 4
  %s16 = int_to_ptr.vmem [resolvable:$true] %s15
  %18 = dma.vmem_to_smem %s16, 16, [#allocation6], [#allocation5]
  %v19 = vstv %s7
  %20 = vst [vmem:[#allocation7] sm:$0x1] %v19
  %21 = dma.done [#allocation5], 16
  %22 = sfence
  $region1: #{tpu_custom_call.1} parent=0
    #allocation8 [shape = 'u8[1024]{0}', space=vmem, size = 0x400, scoped, tag = 'output window, operand 0']
    #allocation9 [shape = 's32[2]{0}', space=sflag, size = 0x8, scoped, tag = 'scoped memory for tpu_custom_call.1']
    %23 = vsyncpa [#allocation9], 0
    %s24 = scalar_lea.sflag [#allocation9], 1
    %25 = vsyncpa %s24, 0
    loop: start=0, step=1, limit=4
    $region2: #{tpu_custom_call.1} parent=1 // loop_pre_header
      _
    $region3: #{tpu_custom_call.1} parent=1 // loop_header
      %s27 = sphi 0, %s31
      %p28 = scmp.ge.s32.totalorder %s27, 4
      %s34 = sphi 0, %s46
      %s35 = sphi 0, %s42
      %s36 = sphi 0, %s34
      %s37 = sphi 0, %s35
      %s38 = sphi 0, %s36
      %s39 = sphi 0, %s37
      %s51 = sphi 0, %s53
      %s54 = sphi 0, %s51
      %s55 = sphi 0, %s54
      %s71 = sphi 0, %s55
      %s75 = sphi 0, %s75
      %s77 = sphi 0, %s75
      %s78 = sphi 0, %s77
      %s92 = sphi 0, %s78
      %s96 = sphi 0, %s96
      %s98 = sphi 0, %s96
      %s99 = sphi 0, %s98
      %s113 = sphi 0, %s99
      %s117 = sphi 0, %s117
      %s119 = sphi 0, %s117
      %s120 = sphi 0, %s119
      %s134 = sphi 0, %s120
      %s138 = sphi 0, %s138
      %s140 = sphi 0, %s138
      %s141 = sphi 0, %s140
      %s155 = sphi 0, %s141
      %s159 = sphi 0, %s159
      %s161 = sphi 0, %s159
      %s162 = sphi 0, %s161
      %s176 = sphi 0, %s162
      %s180 = sphi 0, %s180
      %s182 = sphi 0, %s180
      %s183 = sphi 0, %s182
      %s197 = sphi 0, %s183
      %s201 = sphi 0, %s201
      %s203 = sphi 0, %s201
      %s204 = sphi 0, %s203
      %s218 = sphi 0, %s204
      %s222 = sphi 0, %s222
      %s224 = sphi 0, %s222
      %s225 = sphi 0, %s224
      %s239 = sphi 0, %s225
      %s245 = sphi 0, %s247
      %s248 = sphi 0, %s245
      %s249 = sphi 0, %s248
      %s265 = sphi 0, %s249
    $region4: #{tpu_custom_call.1} parent=1 // loop_header_branch
      %30 = sbr.rel (%p28) target = $region8
    $region5: #{tpu_custom_call.1} parent=1 // loop_body
      %s32 = ssub.s32 %s27, 1
      %s33 = ssub.s32 %s27, 2
      %s40 = sadd.s32 1, %s35
      %p41 = scmp.ge.s32.totalorder %s40, 1
      %s42 = scalar_select %p41, 0, %s40
      %s43 = sadd.s32 1, %s34
      %s44 = scalar_select %p41, %s43, %s34
      %p45 = scmp.ge.s32.totalorder %s44, 2
      %s46 = scalar_select %p45, 0, %s44
      %s47 = ssub.s32 %s34, %s46
      %s48 = ssub.s32 %s35, %s42
      %s49 = sor.u32 %s47, %s48
      %p50 = scmp.eq.s32.totalorder %s49, 0
      %s52 = sadd.s32 %s51, 1
      %s53 = scalar_select %p50, %s51, %s52
      %p56 = pneg %p50
      %p57 = scmp.eq.s32.totalorder %s27, 1
      %p58 = por %p56, %p57
      %p59 = scmp.ne.s32.totalorder %s51, %s54
      %p60 = scmp.eq.s32.totalorder %s27, 0
      %p61 = por %p59, %p60
      %p62 = scmp.ne.s32.totalorder %s51, %s54
      %p63 = scmp.eq.s32.totalorder %s32, 1
      %p64 = por %p62, %p63
      %p65 = scmp.ne.s32.totalorder %s54, %s55
      %p66 = scmp.eq.s32.totalorder %s32, 0
      %p67 = por %p65, %p66
      %p68 = scmp.ne.s32.totalorder %s54, %s55
      %p69 = scmp.eq.s32.totalorder %s33, 1
      %p70 = por %p68, %p69
      %p72 = scmp.ne.s32.totalorder %s55, %s71
      %p73 = scmp.eq.s32.totalorder %s33, 0
      %p74 = por %p72, %p73
      %s76 = sadd.s32 %s75, 1
      %p79 = scmp.eq.s32.totalorder %s27, 1
      %p80 = scmp.ne.s32.totalorder %s75, %s77
      %p81 = scmp.eq.s32.totalorder %s27, 0
      %p82 = por %p80, %p81
      %p83 = scmp.ne.s32.totalorder %s75, %s77
      %p84 = scmp.eq.s32.totalorder %s32, 1
      %p85 = por %p83, %p84
      %p86 = scmp.ne.s32.totalorder %s77, %s78
      %p87 = scmp.eq.s32.totalorder %s32, 0
      %p88 = por %p86, %p87
      %p89 = scmp.ne.s32.totalorder %s77, %s78
      %p90 = scmp.eq.s32.totalorder %s33, 1
      %p91 = por %p89, %p90
      %p93 = scmp.ne.s32.totalorder %s78, %s92
      %p94 = scmp.eq.s32.totalorder %s33, 0
      %p95 = por %p93, %p94
      %s97 = sadd.s32 %s96, 1
      %p100 = scmp.eq.s32.totalorder %s27, 1
      %p101 = scmp.ne.s32.totalorder %s96, %s98
      %p102 = scmp.eq.s32.totalorder %s27, 0
      %p103 = por %p101, %p102
      %p104 = scmp.ne.s32.totalorder %s96, %s98
      %p105 = scmp.eq.s32.totalorder %s32, 1
      %p106 = por %p104, %p105
      %p107 = scmp.ne.s32.totalorder %s98, %s99
      %p108 = scmp.eq.s32.totalorder %s32, 0
      %p109 = por %p107, %p108
      %p110 = scmp.ne.s32.totalorder %s98, %s99
      %p111 = scmp.eq.s32.totalorder %s33, 1
      %p112 = por %p110, %p111
      %p114 = scmp.ne.s32.totalorder %s99, %s113
      %p115 = scmp.eq.s32.totalorder %s33, 0
      %p116 = por %p114, %p115
      %s118 = sadd.s32 %s117, 1
      %p121 = scmp.eq.s32.totalorder %s27, 1
      %p122 = scmp.ne.s32.totalorder %s117, %s119
      %p123 = scmp.eq.s32.totalorder %s27, 0
      %p124 = por %p122, %p123
      %p125 = scmp.ne.s32.totalorder %s117, %s119
      %p126 = scmp.eq.s32.totalorder %s32, 1
      %p127 = por %p125, %p126
      %p128 = scmp.ne.s32.totalorder %s119, %s120
      %p129 = scmp.eq.s32.totalorder %s32, 0
      %p130 = por %p128, %p129
      %p131 = scmp.ne.s32.totalorder %s119, %s120
      %p132 = scmp.eq.s32.totalorder %s33, 1
      %p133 = por %p131, %p132
      %p135 = scmp.ne.s32.totalorder %s120, %s134
      %p136 = scmp.eq.s32.totalorder %s33, 0
      %p137 = por %p135, %p136
      %s139 = sadd.s32 %s138, 1
      %p142 = scmp.eq.s32.totalorder %s27, 1
      %p143 = scmp.ne.s32.totalorder %s138, %s140
      %p144 = scmp.eq.s32.totalorder %s27, 0
      %p145 = por %p143, %p144
      %p146 = scmp.ne.s32.totalorder %s138, %s140
      %p147 = scmp.eq.s32.totalorder %s32, 1
      %p148 = por %p146, %p147
      %p149 = scmp.ne.s32.totalorder %s140, %s141
      %p150 = scmp.eq.s32.totalorder %s32, 0
      %p151 = por %p149, %p150
      %p152 = scmp.ne.s32.totalorder %s140, %s141
      %p153 = scmp.eq.s32.totalorder %s33, 1
      %p154 = por %p152, %p153
      %p156 = scmp.ne.s32.totalorder %s141, %s155
      %p157 = scmp.eq.s32.totalorder %s33, 0
      %p158 = por %p156, %p157
      %s160 = sadd.s32 %s159, 1
      %p163 = scmp.eq.s32.totalorder %s27, 1
      %p164 = scmp.ne.s32.totalorder %s159, %s161
      %p165 = scmp.eq.s32.totalorder %s27, 0
      %p166 = por %p164, %p165
      %p167 = scmp.ne.s32.totalorder %s159, %s161
      %p168 = scmp.eq.s32.totalorder %s32, 1
      %p169 = por %p167, %p168
      %p170 = scmp.ne.s32.totalorder %s161, %s162
      %p171 = scmp.eq.s32.totalorder %s32, 0
      %p172 = por %p170, %p171
      %p173 = scmp.ne.s32.totalorder %s161, %s162
      %p174 = scmp.eq.s32.totalorder %s33, 1
      %p175 = por %p173, %p174
      %p177 = scmp.ne.s32.totalorder %s162, %s176
      %p178 = scmp.eq.s32.totalorder %s33, 0
      %p179 = por %p177, %p178
      %s181 = sadd.s32 %s180, 1
      %p184 = scmp.eq.s32.totalorder %s27, 1
      %p185 = scmp.ne.s32.totalorder %s180, %s182
      %p186 = scmp.eq.s32.totalorder %s27, 0
      %p187 = por %p185, %p186
      %p188 = scmp.ne.s32.totalorder %s180, %s182
      %p189 = scmp.eq.s32.totalorder %s32, 1
      %p190 = por %p188, %p189
      %p191 = scmp.ne.s32.totalorder %s182, %s183
      %p192 = scmp.eq.s32.totalorder %s32, 0
      %p193 = por %p191, %p192
      %p194 = scmp.ne.s32.totalorder %s182, %s183
      %p195 = scmp.eq.s32.totalorder %s33, 1
      %p196 = por %p194, %p195
      %p198 = scmp.ne.s32.totalorder %s183, %s197
      %p199 = scmp.eq.s32.totalorder %s33, 0
      %p200 = por %p198, %p199
      %s202 = sadd.s32 %s201, 1
      %p205 = scmp.eq.s32.totalorder %s27, 1
      %p206 = scmp.ne.s32.totalorder %s201, %s203
      %p207 = scmp.eq.s32.totalorder %s27, 0
      %p208 = por %p206, %p207
      %p209 = scmp.ne.s32.totalorder %s201, %s203
      %p210 = scmp.eq.s32.totalorder %s32, 1
      %p211 = por %p209, %p210
      %p212 = scmp.ne.s32.totalorder %s203, %s204
      %p213 = scmp.eq.s32.totalorder %s32, 0
      %p214 = por %p212, %p213
      %p215 = scmp.ne.s32.totalorder %s203, %s204
      %p216 = scmp.eq.s32.totalorder %s33, 1
      %p217 = por %p215, %p216
      %p219 = scmp.ne.s32.totalorder %s204, %s218
      %p220 = scmp.eq.s32.totalorder %s33, 0
      %p221 = por %p219, %p220
      %s223 = sadd.s32 %s222, 1
      %p226 = scmp.eq.s32.totalorder %s27, 1
      %p227 = scmp.ne.s32.totalorder %s222, %s224
      %p228 = scmp.eq.s32.totalorder %s27, 0
      %p229 = por %p227, %p228
      %p230 = scmp.ne.s32.totalorder %s222, %s224
      %p231 = scmp.eq.s32.totalorder %s32, 1
      %p232 = por %p230, %p231
      %p233 = scmp.ne.s32.totalorder %s224, %s225
      %p234 = scmp.eq.s32.totalorder %s32, 0
      %p235 = por %p233, %p234
      %p236 = scmp.ne.s32.totalorder %s224, %s225
      %p237 = scmp.eq.s32.totalorder %s33, 1
      %p238 = por %p236, %p237
      %p240 = scmp.ne.s32.totalorder %s225, %s239
      %p241 = scmp.eq.s32.totalorder %s33, 0
      %p242 = por %p240, %p241
      %s243 = ssub.s32 %s34, %s46
      %p244 = scmp.eq.s32.totalorder %s243, 0
      %s246 = sadd.s32 %s245, 1
      %s247 = scalar_select %p244, %s245, %s246
      %p250 = pneg %p244
      %p251 = scmp.eq.s32.totalorder %s27, 1
      %p252 = por %p250, %p251
      %p253 = scmp.ne.s32.totalorder %s245, %s248
      %p254 = scmp.eq.s32.totalorder %s27, 0
      %p255 = por %p253, %p254
      %p256 = scmp.ne.s32.totalorder %s245, %s248
      %p257 = scmp.eq.s32.totalorder %s32, 1
      %p258 = por %p256, %p257
      %p259 = scmp.ne.s32.totalorder %s248, %s249
      %p260 = scmp.eq.s32.totalorder %s32, 0
      %p261 = por %p259, %p260
      %p262 = scmp.ne.s32.totalorder %s248, %s249
      %p263 = scmp.eq.s32.totalorder %s33, 1
      %p264 = por %p262, %p263
      %p266 = scmp.ne.s32.totalorder %s249, %s265
      %p267 = scmp.eq.s32.totalorder %s33, 0
      %p268 = por %p266, %p267
      %p269 = scmp.le.s32.totalorder 1, %s27
      %p270 = scmp.lt.s32.totalorder %s27, 3
      %p271 = pnand %p269, %p270
      %p272 = pneg %p271
      // Predicated region
      $region9: #{tpu_custom_call.1} parent=5 // pred_check
        _
      $region10: #{tpu_custom_call.1} parent=5 // pred_check_branch
        %274 = sbr.rel (%p271) target = $region12
      $region11: #{tpu_custom_call.1} parent=5 // pred_region
        %s275 = ssub.s32 %s27, 1
        // Predicated region
        $region13: #{tpu_custom_call.1} parent=11 // pred_check
          %p276 = pneg %p88
        $region14: #{tpu_custom_call.1} parent=11 // pred_check_branch
          %278 = sbr.rel (%p276) target = $region16
        $region15: #{tpu_custom_call.1} parent=11 // pred_region
          _
        $region16: #{tpu_custom_call.1} parent=11 // pred_fallthru
          _
        // Predicated region
        $region17: #{tpu_custom_call.1} parent=11 // pred_check
          %p279 = pneg %p109
        $region18: #{tpu_custom_call.1} parent=11 // pred_check_branch
          %281 = sbr.rel (%p279) target = $region20
        $region19: #{tpu_custom_call.1} parent=11 // pred_region
          _
        $region20: #{tpu_custom_call.1} parent=11 // pred_fallthru
          _
        // Predicated region
        $region21: #{tpu_custom_call.1} parent=11 // pred_check
          %p282 = pneg %p130
        $region22: #{tpu_custom_call.1} parent=11 // pred_check_branch
          %284 = sbr.rel (%p282) target = $region24
        $region23: #{tpu_custom_call.1} parent=11 // pred_region
          _
        $region24: #{tpu_custom_call.1} parent=11 // pred_fallthru
          _
        // Predicated region
        $region25: #{tpu_custom_call.1} parent=11 // pred_check
          %p285 = pneg %p151
        $region26: #{tpu_custom_call.1} parent=11 // pred_check_branch
          %287 = sbr.rel (%p285) target = $region28
        $region27: #{tpu_custom_call.1} parent=11 // pred_region
          _
        $region28: #{tpu_custom_call.1} parent=11 // pred_fallthru
          _
        // Predicated region
        $region29: #{tpu_custom_call.1} parent=11 // pred_check
          %p288 = pneg %p172
        $region30: #{tpu_custom_call.1} parent=11 // pred_check_branch
          %290 = sbr.rel (%p288) target = $region32
        $region31: #{tpu_custom_call.1} parent=11 // pred_region
          _
        $region32: #{tpu_custom_call.1} parent=11 // pred_fallthru
          _
        // Predicated region
        $region33: #{tpu_custom_call.1} parent=11 // pred_check
          %p291 = pneg %p193
        $region34: #{tpu_custom_call.1} parent=11 // pred_check_branch
          %293 = sbr.rel (%p291) target = $region36
        $region35: #{tpu_custom_call.1} parent=11 // pred_region
          _
        $region36: #{tpu_custom_call.1} parent=11 // pred_fallthru
          _
        // Predicated region
        $region37: #{tpu_custom_call.1} parent=11 // pred_check
          %p294 = pneg %p214
        $region38: #{tpu_custom_call.1} parent=11 // pred_check_branch
          %296 = sbr.rel (%p294) target = $region40
        $region39: #{tpu_custom_call.1} parent=11 // pred_region
          _
        $region40: #{tpu_custom_call.1} parent=11 // pred_fallthru
          _
        // Predicated region
        $region41: #{tpu_custom_call.1} parent=11 // pred_check
          %p297 = pneg %p235
        $region42: #{tpu_custom_call.1} parent=11 // pred_check_branch
          %299 = sbr.rel (%p297) target = $region44
        $region43: #{tpu_custom_call.1} parent=11 // pred_region
          _
        $region44: #{tpu_custom_call.1} parent=11 // pred_fallthru
          _
      $region12: #{tpu_custom_call.1} parent=5 // pred_fallthru
        _
      %p300 = scmp.lt.s32.totalorder %s27, 2
      // Predicated region
      $region45: #{tpu_custom_call.1} parent=5 // pred_check
        %p301 = pneg %p300
      $region46: #{tpu_custom_call.1} parent=5 // pred_check_branch
        %303 = sbr.rel (%p301) target = $region48
      $region47: #{tpu_custom_call.1} parent=5 // pred_region
        // Predicated region
        $region49: #{tpu_custom_call.1} parent=47 // pred_check
          %p304 = pneg %p61
        $region50: #{tpu_custom_call.1} parent=47 // pred_check_branch
          %306 = sbr.rel (%p304) target = $region52
        $region51: #{tpu_custom_call.1} parent=47 // pred_region
          %s307 = smul.u32 64, %s35
          %p308 = scmp.lt.s32.totalorder %s34, 1
          %s309 = scalar_select %p308, %s34, 1
          %p310 = scmp.lt.s32.totalorder %s307, 63
          %s311 = scalar_select %p310, %s307, 63
          %s312 = smul.addr %s309, 64
          %s313 = sadd.s32 %s311, %s312
          %s314 = smul.addr %s313, 4
          %s315 = scalar_lea.vmem %s1, %s314
          %s316 = smul.u32 64, %s35
        $region52: #{tpu_custom_call.1} parent=47 // pred_fallthru
          _
      $region48: #{tpu_custom_call.1} parent=5 // pred_fallthru
        _
      %p317 = scmp.le.s32.totalorder 1, %s27
      %p318 = scmp.lt.s32.totalorder %s27, 3
      %p319 = pnand %p317, %p318
      %p320 = pneg %p319
      // Predicated region
      $region53: #{tpu_custom_call.1} parent=5 // pred_check
        _
      $region54: #{tpu_custom_call.1} parent=5 // pred_check_branch
        %322 = sbr.rel (%p319) target = $region56
      $region55: #{tpu_custom_call.1} parent=5 // pred_region
        %s323 = ssub.s32 %s27, 1
        %s324 = smul.u32 64, %s37
        %p325 = scmp.lt.s32.totalorder %s36, 1
        %s326 = scalar_select %p325, %s36, 1
        %p327 = scmp.lt.s32.totalorder %s324, 63
        %s328 = scalar_select %p327, %s324, 63
        %s329 = smul.addr %s326, 64
        %s330 = sadd.s32 %s328, %s329
        %s331 = smul.addr %s330, 4
        %s332 = scalar_lea.vmem %s1, %s331
        %p333 = pneg %p67
        %p334 = pneg %p64
        %p335 = pneg %p88
        %p336 = pneg %p85
        %p337 = pneg %p109
        %p338 = pneg %p106
        %p339 = pneg %p130
        %p340 = pneg %p127
        %p341 = pneg %p151
        %p342 = pneg %p148
        %p343 = pneg %p172
        %p344 = pneg %p169
        %p345 = pneg %p193
        %p346 = pneg %p190
        %p347 = pneg %p214
        %p348 = pneg %p211
        %p349 = pneg %p235
        %p350 = pneg %p232
        %p351 = pneg %p261
        %p352 = pneg %p258
        %s353 = sand.u32 %s248, 1
        %s354 = scalar_lea.sflag [#allocation9], %s353
        %s355 = sand.u32 %s248, 1
        %s356 = scalar_lea.vmem [#allocation8], %s355
        %s357 = smul.u32 64, %s37
        %p358 = scmp.lt.s32.totalorder %s36, 1
        %s359 = scalar_select %p358, %s36, 1
        %p360 = scmp.lt.s32.totalorder %s357, 63
        %s361 = scalar_select %p360, %s357, 63
        %s362 = smul.addr %s359, 64
        %s363 = sadd.s32 %s361, %s362
        %s364 = smul.addr %s363, 4
        %s365 = scalar_lea.vmem %s1, %s364
        %s366 = smul.u32 64, %s37
        %p368 = scmp.eq.s32.totalorder %s37, 0
        // Predicated region
        $region57: #{tpu_custom_call.1} parent=55 // pred_check
          %p369 = pneg %p368
        $region58: #{tpu_custom_call.1} parent=55 // pred_check_branch
          %371 = sbr.rel (%p369) target = $region60
        $region59: #{tpu_custom_call.1} parent=55 // pred_region
          %vm372 = vcmask 0
          %373 = vst.msk [vmem:[#allocation2] sm:$0x1] %vm372, -1e+30
          %374 = vst.msk [vmem:[#allocation3] sm:$0x1] %vm372, 0.0
          %vm375 = vcmask 253952
          %376 = vst.msk [vmem:[#allocation4] sm:$0x1] %vm375, 0.0
        $region60: #{tpu_custom_call.1} parent=55 // pred_fallthru
          _
        %v377 = vld [vmem:[%s365] sm:$0xf]
        %v378 = vld [vmem:[%s365 + $0x4] sm:$0xf]
        %v379 = vld [vmem:[%s365 + $0x8] sm:$0xf]
        %v380 = vld [vmem:[%s365 + $0xc] sm:$0xf]
        %v381 = vld [vmem:[%s365 + $0x10] sm:$0xf]
        %v382 = vld [vmem:[%s365 + $0x14] sm:$0xf]
        %v383 = vld [vmem:[%s365 + $0x18] sm:$0xf]
        %v384 = vld [vmem:[%s365 + $0x1c] sm:$0xf]
        %v385 = vld [vmem:[%s365 + $0x20] sm:$0xf]
        %v386 = vld [vmem:[%s365 + $0x24] sm:$0xf]
        %v387 = vld [vmem:[%s365 + $0x28] sm:$0xf]
        %v388 = vld [vmem:[%s365 + $0x2c] sm:$0xf]
        %v389 = vld [vmem:[%s365 + $0x30] sm:$0xf]
        %v390 = vld [vmem:[%s365 + $0x34] sm:$0xf]
        %v391 = vld [vmem:[%s365 + $0x38] sm:$0xf]
        %v392 = vld [vmem:[%s365 + $0x3c] sm:$0xf]
        %v393 = vld [vmem:[%s365 + $0x40] sm:$0xf]
        %v394 = vld [vmem:[%s365 + $0x44] sm:$0xf]
        %v395 = vld [vmem:[%s365 + $0x48] sm:$0xf]
        %v396 = vld [vmem:[%s365 + $0x4c] sm:$0xf]
        %v397 = vld [vmem:[%s365 + $0x50] sm:$0xf]
        %v398 = vld [vmem:[%s365 + $0x54] sm:$0xf]
        %v399 = vld [vmem:[%s365 + $0x58] sm:$0xf]
        %v400 = vld [vmem:[%s365 + $0x5c] sm:$0xf]
        %v401 = vld [vmem:[%s365 + $0x60] sm:$0xf]
        %v402 = vld [vmem:[%s365 + $0x64] sm:$0xf]
        %v403 = vld [vmem:[%s365 + $0x68] sm:$0xf]
        %v404 = vld [vmem:[%s365 + $0x6c] sm:$0xf]
        %v405 = vld [vmem:[%s365 + $0x70] sm:$0xf]
        %v406 = vld [vmem:[%s365 + $0x74] sm:$0xf]
        %v407 = vld [vmem:[%s365 + $0x78] sm:$0xf]
        %v408 = vld [vmem:[%s365 + $0x7c] sm:$0xf]
        %v409 = vld [vmem:[%s365 + $0x80] sm:$0xf]
        %v410 = vld [vmem:[%s365 + $0x84] sm:$0xf]
        %v411 = vld [vmem:[%s365 + $0x88] sm:$0xf]
        %v412 = vld [vmem:[%s365 + $0x8c] sm:$0xf]
        %v413 = vld [vmem:[%s365 + $0x90] sm:$0xf]
        %v414 = vld [vmem:[%s365 + $0x94] sm:$0xf]
        %v415 = vld [vmem:[%s365 + $0x98] sm:$0xf]
        %v416 = vld [vmem:[%s365 + $0x9c] sm:$0xf]
        %v417 = vld [vmem:[%s365 + $0xa0] sm:$0xf]
        %v418 = vld [vmem:[%s365 + $0xa4] sm:$0xf]
        %v419 = vld [vmem:[%s365 + $0xa8] sm:$0xf]
        %v420 = vld [vmem:[%s365 + $0xac] sm:$0xf]
        %v421 = vld [vmem:[%s365 + $0xb0] sm:$0xf]
        %v422 = vld [vmem:[%s365 + $0xb4] sm:$0xf]
        %v423 = vld [vmem:[%s365 + $0xb8] sm:$0xf]
        %v424 = vld [vmem:[%s365 + $0xbc] sm:$0xf]
        %v425 = vld [vmem:[%s365 + $0xc0] sm:$0xf]
        %v426 = vld [vmem:[%s365 + $0xc4] sm:$0xf]
        %v427 = vld [vmem:[%s365 + $0xc8] sm:$0xf]
        %v428 = vld [vmem:[%s365 + $0xcc] sm:$0xf]
        %v429 = vld [vmem:[%s365 + $0xd0] sm:$0xf]
        %v430 = vld [vmem:[%s365 + $0xd4] sm:$0xf]
        %v431 = vld [vmem:[%s365 + $0xd8] sm:$0xf]
        %v432 = vld [vmem:[%s365 + $0xdc] sm:$0xf]
        %v433 = vld [vmem:[%s365 + $0xe0] sm:$0xf]
        %v434 = vld [vmem:[%s365 + $0xe4] sm:$0xf]
        %v435 = vld [vmem:[%s365 + $0xe8] sm:$0xf]
        %v436 = vld [vmem:[%s365 + $0xec] sm:$0xf]
        %v437 = vld [vmem:[%s365 + $0xf0] sm:$0xf]
        %v438 = vld [vmem:[%s365 + $0xf4] sm:$0xf]
        %v439 = vld [vmem:[%s365 + $0xf8] sm:$0xf]
        %v440 = vld [vmem:[%s365 + $0xfc] sm:$0xf]
        %v441 = vld [vmem:[%s2] sm:$0xf]
        %v442 = vld [vmem:[%s2 + $0x4] sm:$0xf]
        %v443 = vld [vmem:[%s2 + $0x8] sm:$0xf]
        %v444 = vld [vmem:[%s2 + $0xc] sm:$0xf]
        %v445 = vld [vmem:[%s2 + $0x10] sm:$0xf]
        %v446 = vld [vmem:[%s2 + $0x14] sm:$0xf]
        %v447 = vld [vmem:[%s2 + $0x18] sm:$0xf]
        %v448 = vld [vmem:[%s2 + $0x1c] sm:$0xf]
        %v449 = vld [vmem:[%s3] sm:$0x1]
        %v451 = vlaneseq
        %v452 = vshrl.u32 %v451, 7
        %v453 = vsub.s32 0, %v452
        %v454 = vrot.slane %v449, %v453
        %v520 = vunpack.c.l.b16 %v377
        %v521 = vunpack.c.l.b16 %v378
        %v522 = vunpack.c.l.b16 %v379
        %v523 = vunpack.c.l.b16 %v380
        %v524 = vunpack.c.l.b16 %v381
        %v525 = vunpack.c.l.b16 %v382
        %v526 = vunpack.c.l.b16 %v383
        %v527 = vunpack.c.l.b16 %v384
        %v528 = vunpack.c.l.b16 %v385
        %v529 = vunpack.c.l.b16 %v386
        %v530 = vunpack.c.l.b16 %v387
        %v531 = vunpack.c.l.b16 %v388
        %v532 = vunpack.c.l.b16 %v389
        %v533 = vunpack.c.l.b16 %v390
        %v534 = vunpack.c.l.b16 %v391
        %v535 = vunpack.c.l.b16 %v392
        %v536 = vunpack.c.l.b16 %v393
        %v537 = vunpack.c.l.b16 %v394
        %v538 = vunpack.c.l.b16 %v395
        %v539 = vunpack.c.l.b16 %v396
        %v540 = vunpack.c.l.b16 %v397
        %v541 = vunpack.c.l.b16 %v398
        %v542 = vunpack.c.l.b16 %v399
        %v543 = vunpack.c.l.b16 %v400
        %v544 = vunpack.c.l.b16 %v401
        %v545 = vunpack.c.l.b16 %v402
        %v546 = vunpack.c.l.b16 %v403
        %v547 = vunpack.c.l.b16 %v404
        %v548 = vunpack.c.l.b16 %v405
        %v549 = vunpack.c.l.b16 %v406
        %v550 = vunpack.c.l.b16 %v407
        %v551 = vunpack.c.l.b16 %v408
        %v552 = vunpack.c.l.b16 %v409
        %v553 = vunpack.c.l.b16 %v410
        %v554 = vunpack.c.l.b16 %v411
        %v555 = vunpack.c.l.b16 %v412
        %v556 = vunpack.c.l.b16 %v413
        %v557 = vunpack.c.l.b16 %v414
        %v558 = vunpack.c.l.b16 %v415
        %v559 = vunpack.c.l.b16 %v416
        %v560 = vunpack.c.l.b16 %v417
        %v561 = vunpack.c.l.b16 %v418
        %v562 = vunpack.c.l.b16 %v419
        %v563 = vunpack.c.l.b16 %v420
        %v564 = vunpack.c.l.b16 %v421
        %v565 = vunpack.c.l.b16 %v422
        %v566 = vunpack.c.l.b16 %v423
        %v567 = vunpack.c.l.b16 %v424
        %v568 = vunpack.c.l.b16 %v425
        %v569 = vunpack.c.l.b16 %v426
        %v570 = vunpack.c.l.b16 %v427
        %v571 = vunpack.c.l.b16 %v428
        %v572 = vunpack.c.l.b16 %v429
        %v573 = vunpack.c.l.b16 %v430
        %v574 = vunpack.c.l.b16 %v431
        %v575 = vunpack.c.l.b16 %v432
        %v576 = vunpack.c.l.b16 %v433
        %v577 = vunpack.c.l.b16 %v434
        %v578 = vunpack.c.l.b16 %v435
        %v579 = vunpack.c.l.b16 %v436
        %v580 = vunpack.c.l.b16 %v437
        %v581 = vunpack.c.l.b16 %v438
        %v582 = vunpack.c.l.b16 %v439
        %v583 = vunpack.c.l.b16 %v440
        %v584 = vpack.c.b16 %v521, %v520
        %v585 = vpack.c.b16 %v523, %v522
        %v586 = vpack.c.b16 %v525, %v524
        %v587 = vpack.c.b16 %v527, %v526
        %v588 = vpack.c.b16 %v529, %v528
        %v589 = vpack.c.b16 %v531, %v530
        %v590 = vpack.c.b16 %v533, %v532
        %v591 = vpack.c.b16 %v535, %v534
        %v592 = vpack.c.b16 %v537, %v536
        %v593 = vpack.c.b16 %v539, %v538
        %v594 = vpack.c.b16 %v541, %v540
        %v595 = vpack.c.b16 %v543, %v542
        %v596 = vpack.c.b16 %v545, %v544
        %v597 = vpack.c.b16 %v547, %v546
        %v598 = vpack.c.b16 %v549, %v548
        %v599 = vpack.c.b16 %v551, %v550
        %v600 = vpack.c.b16 %v553, %v552
        %v601 = vpack.c.b16 %v555, %v554
        %v602 = vpack.c.b16 %v557, %v556
        %v603 = vpack.c.b16 %v559, %v558
        %v604 = vpack.c.b16 %v561, %v560
        %v605 = vpack.c.b16 %v563, %v562
        %v606 = vpack.c.b16 %v565, %v564
        %v607 = vpack.c.b16 %v567, %v566
        %v608 = vpack.c.b16 %v569, %v568
        %v609 = vpack.c.b16 %v571, %v570
        %v610 = vpack.c.b16 %v573, %v572
        %v611 = vpack.c.b16 %v575, %v574
        %v612 = vpack.c.b16 %v577, %v576
        %v613 = vpack.c.b16 %v579, %v578
        %v614 = vpack.c.b16 %v581, %v580
        %v615 = vpack.c.b16 %v583, %v582
        %v624 = vunpack.c.l.b16 %v441
        %v625 = vunpack.c.l.b16 %v442
        %v626 = vunpack.c.l.b16 %v443
        %v627 = vunpack.c.l.b16 %v444
        %v628 = vunpack.c.l.b16 %v445
        %v629 = vunpack.c.l.b16 %v446
        %v630 = vunpack.c.l.b16 %v447
        %v631 = vunpack.c.l.b16 %v448
        %v632 = vpack.c.b16 %v625, %v624
        %v633 = vpack.c.b16 %v627, %v626
        %v634 = vpack.c.b16 %v629, %v628
        %v635 = vpack.c.b16 %v631, %v630
        %vm640 = vcmask 523264
        %v642 = vsel %vm640, %v584, 0
        %v645 = vsel %vm640, %v585, 0
        %v648 = vsel %vm640, %v586, 0
        %v651 = vsel %vm640, %v587, 0
        %v654 = vsel %vm640, %v588, 0
        %v657 = vsel %vm640, %v589, 0
        %v660 = vsel %vm640, %v590, 0
        %v663 = vsel %vm640, %v591, 0
        %v666 = vsel %vm640, %v592, 0
        %v669 = vsel %vm640, %v593, 0
        %v672 = vsel %vm640, %v594, 0
        %v675 = vsel %vm640, %v595, 0
        %v678 = vsel %vm640, %v596, 0
        %v681 = vsel %vm640, %v597, 0
        %v684 = vsel %vm640, %v598, 0
        %v687 = vsel %vm640, %v599, 0
        %v690 = vsel %vm640, %v600, 0
        %v693 = vsel %vm640, %v601, 0
        %v696 = vsel %vm640, %v602, 0
        %v699 = vsel %vm640, %v603, 0
        %v702 = vsel %vm640, %v604, 0
        %v705 = vsel %vm640, %v605, 0
        %v708 = vsel %vm640, %v606, 0
        %v711 = vsel %vm640, %v607, 0
        %v714 = vsel %vm640, %v608, 0
        %v717 = vsel %vm640, %v609, 0
        %v720 = vsel %vm640, %v610, 0
        %v723 = vsel %vm640, %v611, 0
        %v726 = vsel %vm640, %v612, 0
        %v729 = vsel %vm640, %v613, 0
        %v732 = vsel %vm640, %v614, 0
        %v735 = vsel %vm640, %v615, 0
        %737 = vmatprep.subr.bf16.mxu0 0
        %738 = vmatpush1.bf16.msra.mxu0 %v632
        %739 = vmatprep.subr.bf16.mxu0 0
        %740 = vmatpush1.bf16.msra.mxu0 %v633
        %741 = vmatprep.subr.bf16.mxu0 0
        %742 = vmatpush1.bf16.msra.mxu0 %v634
        %743 = vmatprep.subr.bf16.mxu0 0
        %744 = vmatpush1.bf16.msra.mxu0 %v635
        %745 = vmatprep.subr.bf16.mxu0 0
        %746 = vmatpush1.bf16.msra.mxu0 0
        %747 = vmatprep.subr.bf16.mxu0 0
        %748 = vmatpush1.bf16.msra.mxu0 0
        %749 = vmatprep.subr.bf16.mxu0 0
        %750 = vmatpush1.bf16.msra.mxu0 0
        %751 = vmatprep.subr.bf16.mxu0 0
        %752 = vmatpush1.bf16.msra.mxu0 0
        %753 = vmatprep.subr.bf16.mxu0 0
        %754 = vmatpush1.bf16.msra.mxu0 0
        %755 = vmatprep.subr.bf16.mxu0 0
        %756 = vmatpush1.bf16.msra.mxu0 0
        %757 = vmatprep.subr.bf16.mxu0 0
        %758 = vmatpush1.bf16.msra.mxu0 0
        %759 = vmatprep.subr.bf16.mxu0 0
        %760 = vmatpush1.bf16.msra.mxu0 0
        %761 = vmatprep.subr.bf16.mxu0 0
        %762 = vmatpush1.bf16.msra.mxu0 0
        %763 = vmatprep.subr.bf16.mxu0 0
        %764 = vmatpush1.bf16.msra.mxu0 0
        %765 = vmatprep.subr.bf16.mxu0 0
        %766 = vmatpush1.bf16.msra.mxu0 0
        %767 = vmatprep.subr.bf16.mxu0 0
        %768 = vmatpush1.bf16.msra.mxu0 0
        %769 = vmatprep.mubr.bf16.mxu0 0
        %770 = vmatmul.mubr.bf16.gmra.mrb[0].mxu0 %v642
        %v771 = vpop.f32.mrb[0].mxu0
        %v772 = vadd.f32 %v454, %v771
        %v773 = vpop.f32.mrb[0].mxu0
        %v774 = vpop.f32.mrb[0].mxu0
        %v775 = vadd.f32 %v454, %v774
        %v776 = vpop.f32.mrb[0].mxu0
        %777 = vmatprep.mubr.bf16.mxu0 0
        %778 = vmatmul.mubr.bf16.gmra.mrb[0].mxu0 %v645
        %v779 = vpop.f32.mrb[0].mxu0
        %v780 = vadd.f32 %v454, %v779
        %v781 = vpop.f32.mrb[0].mxu0
        %v782 = vpop.f32.mrb[0].mxu0
        %v783 = vadd.f32 %v454, %v782
        %v784 = vpop.f32.mrb[0].mxu0
        %785 = vmatprep.mubr.bf16.mxu0 0
        %786 = vmatmul.mubr.bf16.gmra.mrb[0].mxu0 %v648
        %v787 = vpop.f32.mrb[0].mxu0
        %v788 = vadd.f32 %v454, %v787
        %v789 = vpop.f32.mrb[0].mxu0
        %v790 = vpop.f32.mrb[0].mxu0
        %v791 = vadd.f32 %v454, %v790
        %v792 = vpop.f32.mrb[0].mxu0
        %793 = vmatprep.mubr.bf16.mxu0 0
        %794 = vmatmul.mubr.bf16.gmra.mrb[0].mxu0 %v651
        %v795 = vpop.f32.mrb[0].mxu0
        %v796 = vadd.f32 %v454, %v795
        %v797 = vpop.f32.mrb[0].mxu0
        %v798 = vpop.f32.mrb[0].mxu0
        %v799 = vadd.f32 %v454, %v798
        %v800 = vpop.f32.mrb[0].mxu0
        %801 = vmatprep.mubr.bf16.mxu0 0
        %802 = vmatmul.mubr.bf16.gmra.mrb[0].mxu0 %v654
        %v803 = vpop.f32.mrb[0].mxu0
        %v804 = vadd.f32 %v454, %v803
        %v805 = vpop.f32.mrb[0].mxu0
        %v806 = vpop.f32.mrb[0].mxu0
        %v807 = vadd.f32 %v454, %v806
        %v808 = vpop.f32.mrb[0].mxu0
        %809 = vmatprep.mubr.bf16.mxu0 0
        %810 = vmatmul.mubr.bf16.gmra.mrb[0].mxu0 %v657
        %v811 = vpop.f32.mrb[0].mxu0
        %v812 = vadd.f32 %v454, %v811
        %v813 = vpop.f32.mrb[0].mxu0
        %v814 = vpop.f32.mrb[0].mxu0
        %v815 = vadd.f32 %v454, %v814
        %v816 = vpop.f32.mrb[0].mxu0
        %817 = vmatprep.mubr.bf16.mxu0 0
        %818 = vmatmul.mubr.bf16.gmra.mrb[0].mxu0 %v660
        %v819 = vpop.f32.mrb[0].mxu0
        %v820 = vadd.f32 %v454, %v819
        %v821 = vpop.f32.mrb[0].mxu0
        %v822 = vpop.f32.mrb[0].mxu0
        %v823 = vadd.f32 %v454, %v822
        %v824 = vpop.f32.mrb[0].mxu0
        %825 = vmatprep.mubr.bf16.mxu0 0
        %826 = vmatmul.mubr.bf16.gmra.mrb[0].mxu0 %v663
        %v827 = vpop.f32.mrb[0].mxu0
        %v828 = vadd.f32 %v454, %v827
        %v829 = vpop.f32.mrb[0].mxu0
        %v830 = vpop.f32.mrb[0].mxu0
        %v831 = vadd.f32 %v454, %v830
        %v832 = vpop.f32.mrb[0].mxu0
        %833 = vmatprep.mubr.bf16.mxu0 0
        %834 = vmatmul.mubr.bf16.gmra.mrb[0].mxu0 %v666
        %v835 = vpop.f32.mrb[0].mxu0
        %v836 = vadd.f32 %v454, %v835
        %v837 = vpop.f32.mrb[0].mxu0
        %v838 = vpop.f32.mrb[0].mxu0
        %v839 = vadd.f32 %v454, %v838
        %v840 = vpop.f32.mrb[0].mxu0
        %841 = vmatprep.mubr.bf16.mxu0 0
        %842 = vmatmul.mubr.bf16.gmra.mrb[0].mxu0 %v669
        %v843 = vpop.f32.mrb[0].mxu0
        %v844 = vadd.f32 %v454, %v843
        %v845 = vpop.f32.mrb[0].mxu0
        %v846 = vpop.f32.mrb[0].mxu0
        %v847 = vadd.f32 %v454, %v846
        %v848 = vpop.f32.mrb[0].mxu0
        %849 = vmatprep.mubr.bf16.mxu0 0
        %850 = vmatmul.mubr.bf16.gmra.mrb[0].mxu0 %v672
        %v851 = vpop.f32.mrb[0].mxu0
        %v852 = vadd.f32 %v454, %v851
        %v853 = vpop.f32.mrb[0].mxu0
        %v854 = vpop.f32.mrb[0].mxu0
        %v855 = vadd.f32 %v454, %v854
        %v856 = vpop.f32.mrb[0].mxu0
        %857 = vmatprep.mubr.bf16.mxu0 0
        %858 = vmatmul.mubr.bf16.gmra.mrb[0].mxu0 %v675
        %v859 = vpop.f32.mrb[0].mxu0
        %v860 = vadd.f32 %v454, %v859
        %v861 = vpop.f32.mrb[0].mxu0
        %v862 = vpop.f32.mrb[0].mxu0
        %v863 = vadd.f32 %v454, %v862
        %v864 = vpop.f32.mrb[0].mxu0
        %865 = vmatprep.mubr.bf16.mxu0 0
        %866 = vmatmul.mubr.bf16.gmra.mrb[0].mxu0 %v678
        %v867 = vpop.f32.mrb[0].mxu0
        %v868 = vadd.f32 %v454, %v867
        %v869 = vpop.f32.mrb[0].mxu0
        %v870 = vpop.f32.mrb[0].mxu0
        %v871 = vadd.f32 %v454, %v870
        %v872 = vpop.f32.mrb[0].mxu0
        %873 = vmatprep.mubr.bf16.mxu0 0
        %874 = vmatmul.mubr.bf16.gmra.mrb[0].mxu0 %v681
        %v875 = vpop.f32.mrb[0].mxu0
        %v876 = vadd.f32 %v454, %v875
        %v877 = vpop.f32.mrb[0].mxu0
        %v878 = vpop.f32.mrb[0].mxu0
        %v879 = vadd.f32 %v454, %v878
        %v880 = vpop.f32.mrb[0].mxu0
        %881 = vmatprep.mubr.bf16.mxu0 0
        %882 = vmatmul.mubr.bf16.gmra.mrb[0].mxu0 %v684
        %v883 = vpop.f32.mrb[0].mxu0
        %v884 = vadd.f32 %v454, %v883
        %v885 = vpop.f32.mrb[0].mxu0
        %v886 = vpop.f32.mrb[0].mxu0
        %v887 = vadd.f32 %v454, %v886
        %v888 = vpop.f32.mrb[0].mxu0
        %889 = vmatprep.mubr.bf16.mxu0 0
        %890 = vmatmul.mubr.bf16.gmra.mrb[0].mxu0 %v687
        %v891 = vpop.f32.mrb[0].mxu0
        %v892 = vadd.f32 %v454, %v891
        %v893 = vpop.f32.mrb[0].mxu0
        %v894 = vpop.f32.mrb[0].mxu0
        %v895 = vadd.f32 %v454, %v894
        %v896 = vpop.f32.mrb[0].mxu0
        %897 = vmatprep.mubr.bf16.mxu0 0
        %898 = vmatmul.mubr.bf16.gmra.mrb[0].mxu0 %v690
        %v899 = vpop.f32.mrb[0].mxu0
        %v900 = vadd.f32 %v454, %v899
        %v901 = vpop.f32.mrb[0].mxu0
        %v902 = vpop.f32.mrb[0].mxu0
        %v903 = vadd.f32 %v454, %v902
        %v904 = vpop.f32.mrb[0].mxu0
        %905 = vmatprep.mubr.bf16.mxu0 0
        %906 = vmatmul.mubr.bf16.gmra.mrb[0].mxu0 %v693
        %v907 = vpop.f32.mrb[0].mxu0
        %v908 = vadd.f32 %v454, %v907
        %v909 = vpop.f32.mrb[0].mxu0
        %v910 = vpop.f32.mrb[0].mxu0
        %v911 = vadd.f32 %v454, %v910
        %v912 = vpop.f32.mrb[0].mxu0
        %913 = vmatprep.mubr.bf16.mxu0 0
        %914 = vmatmul.mubr.bf16.gmra.mrb[0].mxu0 %v696
        %v915 = vpop.f32.mrb[0].mxu0
        %v916 = vadd.f32 %v454, %v915
        %v917 = vpop.f32.mrb[0].mxu0
        %v918 = vpop.f32.mrb[0].mxu0
        %v919 = vadd.f32 %v454, %v918
        %v920 = vpop.f32.mrb[0].mxu0
        %921 = vmatprep.mubr.bf16.mxu0 0
        %922 = vmatmul.mubr.bf16.gmra.mrb[0].mxu0 %v699
        %v923 = vpop.f32.mrb[0].mxu0
        %v924 = vadd.f32 %v454, %v923
        %v925 = vpop.f32.mrb[0].mxu0
        %v926 = vpop.f32.mrb[0].mxu0
        %v927 = vadd.f32 %v454, %v926
        %v928 = vpop.f32.mrb[0].mxu0
        %929 = vmatprep.mubr.bf16.mxu0 0
        %930 = vmatmul.mubr.bf16.gmra.mrb[0].mxu0 %v702
        %v931 = vpop.f32.mrb[0].mxu0
        %v932 = vadd.f32 %v454, %v931
        %v933 = vpop.f32.mrb[0].mxu0
        %v934 = vpop.f32.mrb[0].mxu0
        %v935 = vadd.f32 %v454, %v934
        %v936 = vpop.f32.mrb[0].mxu0
        %937 = vmatprep.mubr.bf16.mxu0 0
        %938 = vmatmul.mubr.bf16.gmra.mrb[0].mxu0 %v705
        %v939 = vpop.f32.mrb[0].mxu0
        %v940 = vadd.f32 %v454, %v939
        %v941 = vpop.f32.mrb[0].mxu0
        %v942 = vpop.f32.mrb[0].mxu0
        %v943 = vadd.f32 %v454, %v942
        %v944 = vpop.f32.mrb[0].mxu0
        %945 = vmatprep.mubr.bf16.mxu0 0
        %946 = vmatmul.mubr.bf16.gmra.mrb[0].mxu0 %v708
        %v947 = vpop.f32.mrb[0].mxu0
        %v948 = vadd.f32 %v454, %v947
        %v949 = vpop.f32.mrb[0].mxu0
        %v950 = vpop.f32.mrb[0].mxu0
        %v951 = vadd.f32 %v454, %v950
        %v952 = vpop.f32.mrb[0].mxu0
        %953 = vmatprep.mubr.bf16.mxu0 0
        %954 = vmatmul.mubr.bf16.gmra.mrb[0].mxu0 %v711
        %v955 = vpop.f32.mrb[0].mxu0
        %v956 = vadd.f32 %v454, %v955
        %v957 = vpop.f32.mrb[0].mxu0
        %v958 = vpop.f32.mrb[0].mxu0
        %v959 = vadd.f32 %v454, %v958
        %v960 = vpop.f32.mrb[0].mxu0
        %961 = vmatprep.mubr.bf16.mxu0 0
        %962 = vmatmul.mubr.bf16.gmra.mrb[0].mxu0 %v714
        %v963 = vpop.f32.mrb[0].mxu0
        %v964 = vadd.f32 %v454, %v963
        %v965 = vpop.f32.mrb[0].mxu0
        %v966 = vpop.f32.mrb[0].mxu0
        %v967 = vadd.f32 %v454, %v966
        %v968 = vpop.f32.mrb[0].mxu0
        %969 = vmatprep.mubr.bf16.mxu0 0
        %970 = vmatmul.mubr.bf16.gmra.mrb[0].mxu0 %v717
        %v971 = vpop.f32.mrb[0].mxu0
        %v972 = vadd.f32 %v454, %v971
        %v973 = vpop.f32.mrb[0].mxu0
        %v974 = vpop.f32.mrb[0].mxu0
        %v975 = vadd.f32 %v454, %v974
        %v976 = vpop.f32.mrb[0].mxu0
        %977 = vmatprep.mubr.bf16.mxu0 0
        %978 = vmatmul.mubr.bf16.gmra.mrb[0].mxu0 %v720
        %v979 = vpop.f32.mrb[0].mxu0
        %v980 = vadd.f32 %v454, %v979
        %v981 = vpop.f32.mrb[0].mxu0
        %v982 = vpop.f32.mrb[0].mxu0
        %v983 = vadd.f32 %v454, %v982
        %v984 = vpop.f32.mrb[0].mxu0
        %985 = vmatprep.mubr.bf16.mxu0 0
        %986 = vmatmul.mubr.bf16.gmra.mrb[0].mxu0 %v723
        %v987 = vpop.f32.mrb[0].mxu0
        %v988 = vadd.f32 %v454, %v987
        %v989 = vpop.f32.mrb[0].mxu0
        %v990 = vpop.f32.mrb[0].mxu0
        %v991 = vadd.f32 %v454, %v990
        %v992 = vpop.f32.mrb[0].mxu0
        %993 = vmatprep.mubr.bf16.mxu0 0
        %994 = vmatmul.mubr.bf16.gmra.mrb[0].mxu0 %v726
        %v995 = vpop.f32.mrb[0].mxu0
        %v996 = vadd.f32 %v454, %v995
        %v997 = vpop.f32.mrb[0].mxu0
        %v998 = vpop.f32.mrb[0].mxu0
        %v999 = vadd.f32 %v454, %v998
        %v1000 = vpop.f32.mrb[0].mxu0
        %1001 = vmatprep.mubr.bf16.mxu0 0
        %1002 = vmatmul.mubr.bf16.gmra.mrb[0].mxu0 %v729
        %v1003 = vpop.f32.mrb[0].mxu0
        %v1004 = vadd.f32 %v454, %v1003
        %v1005 = vpop.f32.mrb[0].mxu0
        %v1006 = vpop.f32.mrb[0].mxu0
        %v1007 = vadd.f32 %v454, %v1006
        %v1008 = vpop.f32.mrb[0].mxu0
        %1009 = vmatprep.mubr.bf16.mxu0 0
        %1010 = vmatmul.mubr.bf16.gmra.mrb[0].mxu0 %v732
        %v1011 = vpop.f32.mrb[0].mxu0
        %v1012 = vadd.f32 %v454, %v1011
        %v1013 = vpop.f32.mrb[0].mxu0
        %v1014 = vpop.f32.mrb[0].mxu0
        %v1015 = vadd.f32 %v454, %v1014
        %v1016 = vpop.f32.mrb[0].mxu0
        %1017 = vmatprep.mubr.bf16.mxu0 0
        %1018 = vmatmul.mubr.bf16.gmra.mrb[0].mxu0 %v735
        %v1019 = vpop.f32.mrb[0].mxu0
        %v1020 = vadd.f32 %v454, %v1019
        %v1021 = vpop.f32.mrb[0].mxu0
        %v1022 = vpop.f32.mrb[0].mxu0
        %v1023 = vadd.f32 %v454, %v1022
        %v1024 = vpop.f32.mrb[0].mxu0
        %1025 = vdwg.mxu0
        %v1026 = vmax.f32 %v772, 0.0
        %v1027 = vmax.f32 %v775, 0.0
        %v1028 = vmax.f32 %v780, 0.0
        %v1029 = vmax.f32 %v783, 0.0
        %v1030 = vmax.f32 %v788, 0.0
        %v1031 = vmax.f32 %v791, 0.0
        %v1032 = vmax.f32 %v796, 0.0
        %v1033 = vmax.f32 %v799, 0.0
        %v1034 = vmax.f32 %v804, 0.0
        %v1035 = vmax.f32 %v807, 0.0
        %v1036 = vmax.f32 %v812, 0.0
        %v1037 = vmax.f32 %v815, 0.0
        %v1038 = vmax.f32 %v820, 0.0
        %v1039 = vmax.f32 %v823, 0.0
        %v1040 = vmax.f32 %v828, 0.0
        %v1041 = vmax.f32 %v831, 0.0
        %v1042 = vmax.f32 %v836, 0.0
        %v1043 = vmax.f32 %v839, 0.0
        %v1044 = vmax.f32 %v844, 0.0
        %v1045 = vmax.f32 %v847, 0.0
        %v1046 = vmax.f32 %v852, 0.0
        %v1047 = vmax.f32 %v855, 0.0
        %v1048 = vmax.f32 %v860, 0.0
        %v1049 = vmax.f32 %v863, 0.0
        %v1050 = vmax.f32 %v868, 0.0
        %v1051 = vmax.f32 %v871, 0.0
        %v1052 = vmax.f32 %v876, 0.0
        %v1053 = vmax.f32 %v879, 0.0
        %v1054 = vmax.f32 %v884, 0.0
        %v1055 = vmax.f32 %v887, 0.0
        %v1056 = vmax.f32 %v892, 0.0
        %v1057 = vmax.f32 %v895, 0.0
        %v1058 = vmax.f32 %v900, 0.0
        %v1059 = vmax.f32 %v903, 0.0
        %v1060 = vmax.f32 %v908, 0.0
        %v1061 = vmax.f32 %v911, 0.0
        %v1062 = vmax.f32 %v916, 0.0
        %v1063 = vmax.f32 %v919, 0.0
        %v1064 = vmax.f32 %v924, 0.0
        %v1065 = vmax.f32 %v927, 0.0
        %v1066 = vmax.f32 %v932, 0.0
        %v1067 = vmax.f32 %v935, 0.0
        %v1068 = vmax.f32 %v940, 0.0
        %v1069 = vmax.f32 %v943, 0.0
        %v1070 = vmax.f32 %v948, 0.0
        %v1071 = vmax.f32 %v951, 0.0
        %v1072 = vmax.f32 %v956, 0.0
        %v1073 = vmax.f32 %v959, 0.0
        %v1074 = vmax.f32 %v964, 0.0
        %v1075 = vmax.f32 %v967, 0.0
        %v1076 = vmax.f32 %v972, 0.0
        %v1077 = vmax.f32 %v975, 0.0
        %v1078 = vmax.f32 %v980, 0.0
        %v1079 = vmax.f32 %v983, 0.0
        %v1080 = vmax.f32 %v988, 0.0
        %v1081 = vmax.f32 %v991, 0.0
        %v1082 = vmax.f32 %v996, 0.0
        %v1083 = vmax.f32 %v999, 0.0
        %v1084 = vmax.f32 %v1004, 0.0
        %v1085 = vmax.f32 %v1007, 0.0
        %v1086 = vmax.f32 %v1012, 0.0
        %v1087 = vmax.f32 %v1015, 0.0
        %v1088 = vmax.f32 %v1020, 0.0
        %v1089 = vmax.f32 %v1023, 0.0
        %v1090 = vpack.c.bf16 %v1027, %v1026
        %v1091 = vpack.c.bf16 %v1029, %v1028
        %v1092 = vpack.c.bf16 %v1031, %v1030
        %v1093 = vpack.c.bf16 %v1033, %v1032
        %v1094 = vpack.c.bf16 %v1035, %v1034
        %v1095 = vpack.c.bf16 %v1037, %v1036
        %v1096 = vpack.c.bf16 %v1039, %v1038
        %v1097 = vpack.c.bf16 %v1041, %v1040
        %v1098 = vpack.c.bf16 %v1043, %v1042
        %v1099 = vpack.c.bf16 %v1045, %v1044
        %v1100 = vpack.c.bf16 %v1047, %v1046
        %v1101 = vpack.c.bf16 %v1049, %v1048
        %v1102 = vpack.c.bf16 %v1051, %v1050
        %v1103 = vpack.c.bf16 %v1053, %v1052
        %v1104 = vpack.c.bf16 %v1055, %v1054
        %v1105 = vpack.c.bf16 %v1057, %v1056
        %v1106 = vpack.c.bf16 %v1059, %v1058
        %v1107 = vpack.c.bf16 %v1061, %v1060
        %v1108 = vpack.c.bf16 %v1063, %v1062
        %v1109 = vpack.c.bf16 %v1065, %v1064
        %v1110 = vpack.c.bf16 %v1067, %v1066
        %v1111 = vpack.c.bf16 %v1069, %v1068
        %v1112 = vpack.c.bf16 %v1071, %v1070
        %v1113 = vpack.c.bf16 %v1073, %v1072
        %v1114 = vpack.c.bf16 %v1075, %v1074
        %v1115 = vpack.c.bf16 %v1077, %v1076
        %v1116 = vpack.c.bf16 %v1079, %v1078
        %v1117 = vpack.c.bf16 %v1081, %v1080
        %v1118 = vpack.c.bf16 %v1083, %v1082
        %v1119 = vpack.c.bf16 %v1085, %v1084
        %v1120 = vpack.c.bf16 %v1087, %v1086
        %v1121 = vpack.c.bf16 %v1089, %v1088
        %v1122 = vld [vmem:[%s4] sm:$0xff]
        %v1123 = vld [vmem:[%s4 + $0x8] sm:$0xff]
        %v1124 = vld [vmem:[%s4 + $0x10] sm:$0xff]
        %v1125 = vld [vmem:[%s4 + $0x18] sm:$0xff]
        %v1126 = vld [vmem:[%s5] sm:$0x3]
        %v1128 = vlaneseq
        %v1129 = vshrl.u32 %v1128, 7
        %v1130 = vsub.s32 0, %v1129
        %v1131 = vrot.slane %v1126, %v1130
        %v1132 = vlaneseq
        %v1133 = vshrl.u32 %v1132, 7
        %v1134 = vsub.s32 1, %v1133
        %v1135 = vrot.slane %v1126, %v1134
        %v1142 = vunpack.c.l.b16 %v1122
        %v1143 = vunpack.c.h.b16 %v1122
        %v1144 = vunpack.c.l.b16 %v1123
        %v1145 = vunpack.c.h.b16 %v1123
        %v1146 = vunpack.c.l.b16 %v1124
        %v1147 = vunpack.c.h.b16 %v1124
        %v1148 = vunpack.c.l.b16 %v1125
        %v1149 = vunpack.c.h.b16 %v1125
        %v1150 = vpack.c.b16 %v1144, %v1142
        %v1151 = vpack.c.b16 %v1145, %v1143
        %v1152 = vpack.c.b16 %v1148, %v1146
        %v1153 = vpack.c.b16 %v1149, %v1147
        %vm1158 = vcmask 261120
        %v1160 = vsel %vm1158, %v1090, 0
        %v1163 = vsel %vm1158, %v1091, 0
        %v1166 = vsel %vm1158, %v1092, 0
        %v1169 = vsel %vm1158, %v1093, 0
        %v1172 = vsel %vm1158, %v1094, 0
        %v1175 = vsel %vm1158, %v1095, 0
        %v1178 = vsel %vm1158, %v1096, 0
        %v1181 = vsel %vm1158, %v1097, 0
        %v1184 = vsel %vm1158, %v1098, 0
        %v1187 = vsel %vm1158, %v1099, 0
        %v1190 = vsel %vm1158, %v1100, 0
        %v1193 = vsel %vm1158, %v1101, 0
        %v1196 = vsel %vm1158, %v1102, 0
        %v1199 = vsel %vm1158, %v1103, 0
        %v1202 = vsel %vm1158, %v1104, 0
        %v1205 = vsel %vm1158, %v1105, 0
        %v1208 = vsel %vm1158, %v1106, 0
        %v1211 = vsel %vm1158, %v1107, 0
        %v1214 = vsel %vm1158, %v1108, 0
        %v1217 = vsel %vm1158, %v1109, 0
        %v1220 = vsel %vm1158, %v1110, 0
        %v1223 = vsel %vm1158, %v1111, 0
        %v1226 = vsel %vm1158, %v1112, 0
        %v1229 = vsel %vm1158, %v1113, 0
        %v1232 = vsel %vm1158, %v1114, 0
        %v1235 = vsel %vm1158, %v1115, 0
        %v1238 = vsel %vm1158, %v1116, 0
        %v1241 = vsel %vm1158, %v1117, 0
        %v1244 = vsel %vm1158, %v1118, 0
        %v1247 = vsel %vm1158, %v1119, 0
        %v1250 = vsel %vm1158, %v1120, 0
        %v1253 = vsel %vm1158, %v1121, 0
        %1255 = vmatprep.subr.bf16.mxu0 %v1151
        %1256 = vmatpush1.bf16.msra.mxu0 %v1150
        %1257 = vmatprep.subr.bf16.mxu0 %v1153
        %1258 = vmatpush1.bf16.msra.mxu0 %v1152
        %1259 = vmatprep.subr.bf16.mxu0 0
        %1260 = vmatpush1.bf16.msra.mxu0 0
        %1261 = vmatprep.subr.bf16.mxu0 0
        %1262 = vmatpush1.bf16.msra.mxu0 0
        %1263 = vmatprep.subr.bf16.mxu0 0
        %1264 = vmatpush1.bf16.msra.mxu0 0
        %1265 = vmatprep.subr.bf16.mxu0 0
        %1266 = vmatpush1.bf16.msra.mxu0 0
        %1267 = vmatprep.subr.bf16.mxu0 0
        %1268 = vmatpush1.bf16.msra.mxu0 0
        %1269 = vmatprep.subr.bf16.mxu0 0
        %1270 = vmatpush1.bf16.msra.mxu0 0
        %1271 = vmatprep.subr.bf16.mxu0 0
        %1272 = vmatpush1.bf16.msra.mxu0 0
        %1273 = vmatprep.subr.bf16.mxu0 0
        %1274 = vmatpush1.bf16.msra.mxu0 0
        %1275 = vmatprep.subr.bf16.mxu0 0
        %1276 = vmatpush1.bf16.msra.mxu0 0
        %1277 = vmatprep.subr.bf16.mxu0 0
        %1278 = vmatpush1.bf16.msra.mxu0 0
        %1279 = vmatprep.subr.bf16.mxu0 0
        %1280 = vmatpush1.bf16.msra.mxu0 0
        %1281 = vmatprep.subr.bf16.mxu0 0
        %1282 = vmatpush1.bf16.msra.mxu0 0
        %1283 = vmatprep.subr.bf16.mxu0 0
        %1284 = vmatpush1.bf16.msra.mxu0 0
        %1285 = vmatprep.subr.bf16.mxu0 0
        %1286 = vmatpush1.bf16.msra.mxu0 0
        %1287 = vmatprep.mubr.bf16.mxu0 0
        %1288 = vmatmul.mubr.bf16.gmra.mrb[0].mxu0 %v1160
        %v1289 = vpop.f32.mrb[0].mxu0
        %v1290 = vadd.f32 %v1131, %v1289
        %v1291 = vpop.f32.mrb[0].mxu0
        %v1292 = vadd.f32 %v1135, %v1291
        %v1293 = vpop.f32.mrb[0].mxu0
        %v1294 = vadd.f32 %v1131, %v1293
        %v1295 = vpop.f32.mrb[0].mxu0
        %v1296 = vadd.f32 %v1135, %v1295
        %1297 = vmatprep.mubr.bf16.mxu0 0
        %1298 = vmatmul.mubr.bf16.gmra.mrb[0].mxu0 %v1163
        %v1299 = vpop.f32.mrb[0].mxu0
        %v1300 = vadd.f32 %v1131, %v1299
        %v1301 = vpop.f32.mrb[0].mxu0
        %v1302 = vadd.f32 %v1135, %v1301
        %v1303 = vpop.f32.mrb[0].mxu0
        %v1304 = vadd.f32 %v1131, %v1303
        %v1305 = vpop.f32.mrb[0].mxu0
        %v1306 = vadd.f32 %v1135, %v1305
        %1307 = vmatprep.mubr.bf16.mxu0 0
        %1308 = vmatmul.mubr.bf16.gmra.mrb[0].mxu0 %v1166
        %v1309 = vpop.f32.mrb[0].mxu0
        %v1310 = vadd.f32 %v1131, %v1309
        %v1311 = vpop.f32.mrb[0].mxu0
        %v1312 = vadd.f32 %v1135, %v1311
        %v1313 = vpop.f32.mrb[0].mxu0
        %v1314 = vadd.f32 %v1131, %v1313
        %v1315 = vpop.f32.mrb[0].mxu0
        %v1316 = vadd.f32 %v1135, %v1315
        %1317 = vmatprep.mubr.bf16.mxu0 0
        %1318 = vmatmul.mubr.bf16.gmra.mrb[0].mxu0 %v1169
        %v1319 = vpop.f32.mrb[0].mxu0
        %v1320 = vadd.f32 %v1131, %v1319
        %v1321 = vpop.f32.mrb[0].mxu0
        %v1322 = vadd.f32 %v1135, %v1321
        %v1323 = vpop.f32.mrb[0].mxu0
        %v1324 = vadd.f32 %v1131, %v1323
        %v1325 = vpop.f32.mrb[0].mxu0
        %v1326 = vadd.f32 %v1135, %v1325
        %1327 = vmatprep.mubr.bf16.mxu0 0
        %1328 = vmatmul.mubr.bf16.gmra.mrb[0].mxu0 %v1172
        %v1329 = vpop.f32.mrb[0].mxu0
        %v1330 = vadd.f32 %v1131, %v1329
        %v1331 = vpop.f32.mrb[0].mxu0
        %v1332 = vadd.f32 %v1135, %v1331
        %v1333 = vpop.f32.mrb[0].mxu0
        %v1334 = vadd.f32 %v1131, %v1333
        %v1335 = vpop.f32.mrb[0].mxu0
        %v1336 = vadd.f32 %v1135, %v1335
        %1337 = vmatprep.mubr.bf16.mxu0 0
        %1338 = vmatmul.mubr.bf16.gmra.mrb[0].mxu0 %v1175
        %v1339 = vpop.f32.mrb[0].mxu0
        %v1340 = vadd.f32 %v1131, %v1339
        %v1341 = vpop.f32.mrb[0].mxu0
        %v1342 = vadd.f32 %v1135, %v1341
        %v1343 = vpop.f32.mrb[0].mxu0
        %v1344 = vadd.f32 %v1131, %v1343
        %v1345 = vpop.f32.mrb[0].mxu0
        %v1346 = vadd.f32 %v1135, %v1345
        %1347 = vmatprep.mubr.bf16.mxu0 0
        %1348 = vmatmul.mubr.bf16.gmra.mrb[0].mxu0 %v1178
        %v1349 = vpop.f32.mrb[0].mxu0
        %v1350 = vadd.f32 %v1131, %v1349
        %v1351 = vpop.f32.mrb[0].mxu0
        %v1352 = vadd.f32 %v1135, %v1351
        %v1353 = vpop.f32.mrb[0].mxu0
        %v1354 = vadd.f32 %v1131, %v1353
        %v1355 = vpop.f32.mrb[0].mxu0
        %v1356 = vadd.f32 %v1135, %v1355
        %1357 = vmatprep.mubr.bf16.mxu0 0
        %1358 = vmatmul.mubr.bf16.gmra.mrb[0].mxu0 %v1181
        %v1359 = vpop.f32.mrb[0].mxu0
        %v1360 = vadd.f32 %v1131, %v1359
        %v1361 = vpop.f32.mrb[0].mxu0
        %v1362 = vadd.f32 %v1135, %v1361
        %v1363 = vpop.f32.mrb[0].mxu0
        %v1364 = vadd.f32 %v1131, %v1363
        %v1365 = vpop.f32.mrb[0].mxu0
        %v1366 = vadd.f32 %v1135, %v1365
        %1367 = vmatprep.mubr.bf16.mxu0 0
        %1368 = vmatmul.mubr.bf16.gmra.mrb[0].mxu0 %v1184
        %v1369 = vpop.f32.mrb[0].mxu0
        %v1370 = vadd.f32 %v1131, %v1369
        %v1371 = vpop.f32.mrb[0].mxu0
        %v1372 = vadd.f32 %v1135, %v1371
        %v1373 = vpop.f32.mrb[0].mxu0
        %v1374 = vadd.f32 %v1131, %v1373
        %v1375 = vpop.f32.mrb[0].mxu0
        %v1376 = vadd.f32 %v1135, %v1375
        %1377 = vmatprep.mubr.bf16.mxu0 0
        %1378 = vmatmul.mubr.bf16.gmra.mrb[0].mxu0 %v1187
        %v1379 = vpop.f32.mrb[0].mxu0
        %v1380 = vadd.f32 %v1131, %v1379
        %v1381 = vpop.f32.mrb[0].mxu0
        %v1382 = vadd.f32 %v1135, %v1381
        %v1383 = vpop.f32.mrb[0].mxu0
        %v1384 = vadd.f32 %v1131, %v1383
        %v1385 = vpop.f32.mrb[0].mxu0
        %v1386 = vadd.f32 %v1135, %v1385
        %1387 = vmatprep.mubr.bf16.mxu0 0
        %1388 = vmatmul.mubr.bf16.gmra.mrb[0].mxu0 %v1190
        %v1389 = vpop.f32.mrb[0].mxu0
        %v1390 = vadd.f32 %v1131, %v1389
        %v1391 = vpop.f32.mrb[0].mxu0
        %v1392 = vadd.f32 %v1135, %v1391
        %v1393 = vpop.f32.mrb[0].mxu0
        %v1394 = vadd.f32 %v1131, %v1393
        %v1395 = vpop.f32.mrb[0].mxu0
        %v1396 = vadd.f32 %v1135, %v1395
        %1397 = vmatprep.mubr.bf16.mxu0 0
        %1398 = vmatmul.mubr.bf16.gmra.mrb[0].mxu0 %v1193
        %v1399 = vpop.f32.mrb[0].mxu0
        %v1400 = vadd.f32 %v1131, %v1399
        %v1401 = vpop.f32.mrb[0].mxu0
        %v1402 = vadd.f32 %v1135, %v1401
        %v1403 = vpop.f32.mrb[0].mxu0
        %v1404 = vadd.f32 %v1131, %v1403
        %v1405 = vpop.f32.mrb[0].mxu0
        %v1406 = vadd.f32 %v1135, %v1405
        %1407 = vmatprep.mubr.bf16.mxu0 0
        %1408 = vmatmul.mubr.bf16.gmra.mrb[0].mxu0 %v1196
        %v1409 = vpop.f32.mrb[0].mxu0
        %v1410 = vadd.f32 %v1131, %v1409
        %v1411 = vpop.f32.mrb[0].mxu0
        %v1412 = vadd.f32 %v1135, %v1411
        %v1413 = vpop.f32.mrb[0].mxu0
        %v1414 = vadd.f32 %v1131, %v1413
        %v1415 = vpop.f32.mrb[0].mxu0
        %v1416 = vadd.f32 %v1135, %v1415
        %1417 = vmatprep.mubr.bf16.mxu0 0
        %1418 = vmatmul.mubr.bf16.gmra.mrb[0].mxu0 %v1199
        %v1419 = vpop.f32.mrb[0].mxu0
        %v1420 = vadd.f32 %v1131, %v1419
        %v1421 = vpop.f32.mrb[0].mxu0
        %v1422 = vadd.f32 %v1135, %v1421
        %v1423 = vpop.f32.mrb[0].mxu0
        %v1424 = vadd.f32 %v1131, %v1423
        %v1425 = vpop.f32.mrb[0].mxu0
        %v1426 = vadd.f32 %v1135, %v1425
        %1427 = vmatprep.mubr.bf16.mxu0 0
        %1428 = vmatmul.mubr.bf16.gmra.mrb[0].mxu0 %v1202
        %v1429 = vpop.f32.mrb[0].mxu0
        %v1430 = vadd.f32 %v1131, %v1429
        %v1431 = vpop.f32.mrb[0].mxu0
        %v1432 = vadd.f32 %v1135, %v1431
        %v1433 = vpop.f32.mrb[0].mxu0
        %v1434 = vadd.f32 %v1131, %v1433
        %v1435 = vpop.f32.mrb[0].mxu0
        %v1436 = vadd.f32 %v1135, %v1435
        %1437 = vmatprep.mubr.bf16.mxu0 0
        %1438 = vmatmul.mubr.bf16.gmra.mrb[0].mxu0 %v1205
        %v1439 = vpop.f32.mrb[0].mxu0
        %v1440 = vadd.f32 %v1131, %v1439
        %v1441 = vpop.f32.mrb[0].mxu0
        %v1442 = vadd.f32 %v1135, %v1441
        %v1443 = vpop.f32.mrb[0].mxu0
        %v1444 = vadd.f32 %v1131, %v1443
        %v1445 = vpop.f32.mrb[0].mxu0
        %v1446 = vadd.f32 %v1135, %v1445
        %1447 = vmatprep.mubr.bf16.mxu0 0
        %1448 = vmatmul.mubr.bf16.gmra.mrb[0].mxu0 %v1208
        %v1449 = vpop.f32.mrb[0].mxu0
        %v1450 = vadd.f32 %v1131, %v1449
        %v1451 = vpop.f32.mrb[0].mxu0
        %v1452 = vadd.f32 %v1135, %v1451
        %v1453 = vpop.f32.mrb[0].mxu0
        %v1454 = vadd.f32 %v1131, %v1453
        %v1455 = vpop.f32.mrb[0].mxu0
        %v1456 = vadd.f32 %v1135, %v1455
        %1457 = vmatprep.mubr.bf16.mxu0 0
        %1458 = vmatmul.mubr.bf16.gmra.mrb[0].mxu0 %v1211
        %v1459 = vpop.f32.mrb[0].mxu0
        %v1460 = vadd.f32 %v1131, %v1459
        %v1461 = vpop.f32.mrb[0].mxu0
        %v1462 = vadd.f32 %v1135, %v1461
        %v1463 = vpop.f32.mrb[0].mxu0
        %v1464 = vadd.f32 %v1131, %v1463
        %v1465 = vpop.f32.mrb[0].mxu0
        %v1466 = vadd.f32 %v1135, %v1465
        %1467 = vmatprep.mubr.bf16.mxu0 0
        %1468 = vmatmul.mubr.bf16.gmra.mrb[0].mxu0 %v1214
        %v1469 = vpop.f32.mrb[0].mxu0
        %v1470 = vadd.f32 %v1131, %v1469
        %v1471 = vpop.f32.mrb[0].mxu0
        %v1472 = vadd.f32 %v1135, %v1471
        %v1473 = vpop.f32.mrb[0].mxu0
        %v1474 = vadd.f32 %v1131, %v1473
        %v1475 = vpop.f32.mrb[0].mxu0
        %v1476 = vadd.f32 %v1135, %v1475
        %1477 = vmatprep.mubr.bf16.mxu0 0
        %1478 = vmatmul.mubr.bf16.gmra.mrb[0].mxu0 %v1217
        %v1479 = vpop.f32.mrb[0].mxu0
        %v1480 = vadd.f32 %v1131, %v1479
        %v1481 = vpop.f32.mrb[0].mxu0
        %v1482 = vadd.f32 %v1135, %v1481
        %v1483 = vpop.f32.mrb[0].mxu0
        %v1484 = vadd.f32 %v1131, %v1483
        %v1485 = vpop.f32.mrb[0].mxu0
        %v1486 = vadd.f32 %v1135, %v1485
        %1487 = vmatprep.mubr.bf16.mxu0 0
        %1488 = vmatmul.mubr.bf16.gmra.mrb[0].mxu0 %v1220
        %v1489 = vpop.f32.mrb[0].mxu0
        %v1490 = vadd.f32 %v1131, %v1489
        %v1491 = vpop.f32.mrb[0].mxu0
        %v1492 = vadd.f32 %v1135, %v1491
        %v1493 = vpop.f32.mrb[0].mxu0
        %v1494 = vadd.f32 %v1131, %v1493
        %v1495 = vpop.f32.mrb[0].mxu0
        %v1496 = vadd.f32 %v1135, %v1495
        %1497 = vmatprep.mubr.bf16.mxu0 0
        %1498 = vmatmul.mubr.bf16.gmra.mrb[0].mxu0 %v1223
        %v1499 = vpop.f32.mrb[0].mxu0
        %v1500 = vadd.f32 %v1131, %v1499
        %v1501 = vpop.f32.mrb[0].mxu0
        %v1502 = vadd.f32 %v1135, %v1501
        %v1503 = vpop.f32.mrb[0].mxu0
        %v1504 = vadd.f32 %v1131, %v1503
        %v1505 = vpop.f32.mrb[0].mxu0
        %v1506 = vadd.f32 %v1135, %v1505
        %1507 = vmatprep.mubr.bf16.mxu0 0
        %1508 = vmatmul.mubr.bf16.gmra.mrb[0].mxu0 %v1226
        %v1509 = vpop.f32.mrb[0].mxu0
        %v1510 = vadd.f32 %v1131, %v1509
        %v1511 = vpop.f32.mrb[0].mxu0
        %v1512 = vadd.f32 %v1135, %v1511
        %v1513 = vpop.f32.mrb[0].mxu0
        %v1514 = vadd.f32 %v1131, %v1513
        %v1515 = vpop.f32.mrb[0].mxu0
        %v1516 = vadd.f32 %v1135, %v1515
        %1517 = vmatprep.mubr.bf16.mxu0 0
        %1518 = vmatmul.mubr.bf16.gmra.mrb[0].mxu0 %v1229
        %v1519 = vpop.f32.mrb[0].mxu0
        %v1520 = vadd.f32 %v1131, %v1519
        %v1521 = vpop.f32.mrb[0].mxu0
        %v1522 = vadd.f32 %v1135, %v1521
        %v1523 = vpop.f32.mrb[0].mxu0
        %v1524 = vadd.f32 %v1131, %v1523
        %v1525 = vpop.f32.mrb[0].mxu0
        %v1526 = vadd.f32 %v1135, %v1525
        %1527 = vmatprep.mubr.bf16.mxu0 0
        %1528 = vmatmul.mubr.bf16.gmra.mrb[0].mxu0 %v1232
        %v1529 = vpop.f32.mrb[0].mxu0
        %v1530 = vadd.f32 %v1131, %v1529
        %v1531 = vpop.f32.mrb[0].mxu0
        %v1532 = vadd.f32 %v1135, %v1531
        %v1533 = vpop.f32.mrb[0].mxu0
        %v1534 = vadd.f32 %v1131, %v1533
        %v1535 = vpop.f32.mrb[0].mxu0
        %v1536 = vadd.f32 %v1135, %v1535
        %1537 = vmatprep.mubr.bf16.mxu0 0
        %1538 = vmatmul.mubr.bf16.gmra.mrb[0].mxu0 %v1235
        %v1539 = vpop.f32.mrb[0].mxu0
        %v1540 = vadd.f32 %v1131, %v1539
        %v1541 = vpop.f32.mrb[0].mxu0
        %v1542 = vadd.f32 %v1135, %v1541
        %v1543 = vpop.f32.mrb[0].mxu0
        %v1544 = vadd.f32 %v1131, %v1543
        %v1545 = vpop.f32.mrb[0].mxu0
        %v1546 = vadd.f32 %v1135, %v1545
        %1547 = vmatprep.mubr.bf16.mxu0 0
        %1548 = vmatmul.mubr.bf16.gmra.mrb[0].mxu0 %v1238
        %v1549 = vpop.f32.mrb[0].mxu0
        %v1550 = vadd.f32 %v1131, %v1549
        %v1551 = vpop.f32.mrb[0].mxu0
        %v1552 = vadd.f32 %v1135, %v1551
        %v1553 = vpop.f32.mrb[0].mxu0
        %v1554 = vadd.f32 %v1131, %v1553
        %v1555 = vpop.f32.mrb[0].mxu0
        %v1556 = vadd.f32 %v1135, %v1555
        %1557 = vmatprep.mubr.bf16.mxu0 0
        %1558 = vmatmul.mubr.bf16.gmra.mrb[0].mxu0 %v1241
        %v1559 = vpop.f32.mrb[0].mxu0
        %v1560 = vadd.f32 %v1131, %v1559
        %v1561 = vpop.f32.mrb[0].mxu0
        %v1562 = vadd.f32 %v1135, %v1561
        %v1563 = vpop.f32.mrb[0].mxu0
        %v1564 = vadd.f32 %v1131, %v1563
        %v1565 = vpop.f32.mrb[0].mxu0
        %v1566 = vadd.f32 %v1135, %v1565
        %1567 = vmatprep.mubr.bf16.mxu0 0
        %1568 = vmatmul.mubr.bf16.gmra.mrb[0].mxu0 %v1244
        %v1569 = vpop.f32.mrb[0].mxu0
        %v1570 = vadd.f32 %v1131, %v1569
        %v1571 = vpop.f32.mrb[0].mxu0
        %v1572 = vadd.f32 %v1135, %v1571
        %v1573 = vpop.f32.mrb[0].mxu0
        %v1574 = vadd.f32 %v1131, %v1573
        %v1575 = vpop.f32.mrb[0].mxu0
        %v1576 = vadd.f32 %v1135, %v1575
        %1577 = vmatprep.mubr.bf16.mxu0 0
        %1578 = vmatmul.mubr.bf16.gmra.mrb[0].mxu0 %v1247
        %v1579 = vpop.f32.mrb[0].mxu0
        %v1580 = vadd.f32 %v1131, %v1579
        %v1581 = vpop.f32.mrb[0].mxu0
        %v1582 = vadd.f32 %v1135, %v1581
        %v1583 = vpop.f32.mrb[0].mxu0
        %v1584 = vadd.f32 %v1131, %v1583
        %v1585 = vpop.f32.mrb[0].mxu0
        %v1586 = vadd.f32 %v1135, %v1585
        %1587 = vmatprep.mubr.bf16.mxu0 0
        %1588 = vmatmul.mubr.bf16.gmra.mrb[0].mxu0 %v1250
        %v1589 = vpop.f32.mrb[0].mxu0
        %v1590 = vadd.f32 %v1131, %v1589
        %v1591 = vpop.f32.mrb[0].mxu0
        %v1592 = vadd.f32 %v1135, %v1591
        %v1593 = vpop.f32.mrb[0].mxu0
        %v1594 = vadd.f32 %v1131, %v1593
        %v1595 = vpop.f32.mrb[0].mxu0
        %v1596 = vadd.f32 %v1135, %v1595
        %1597 = vmatprep.mubr.bf16.mxu0 0
        %1598 = vmatmul.mubr.bf16.gmra.mrb[0].mxu0 %v1253
        %v1599 = vpop.f32.mrb[0].mxu0
        %v1600 = vadd.f32 %v1131, %v1599
        %v1601 = vpop.f32.mrb[0].mxu0
        %v1602 = vadd.f32 %v1135, %v1601
        %v1603 = vpop.f32.mrb[0].mxu0
        %v1604 = vadd.f32 %v1131, %v1603
        %v1605 = vpop.f32.mrb[0].mxu0
        %v1606 = vadd.f32 %v1135, %v1605
        %1607 = vdwg.mxu0
        %v1608 = vtanh.pop %v1290
        %v1609 = vtanh.pop %v1294
        %v1610 = vtanh.pop %v1300
        %v1611 = vtanh.pop %v1304
        %v1612 = vtanh.pop %v1310
        %v1613 = vtanh.pop %v1314
        %v1614 = vtanh.pop %v1320
        %v1615 = vtanh.pop %v1324
        %v1616 = vtanh.pop %v1330
        %v1617 = vtanh.pop %v1334
        %v1618 = vtanh.pop %v1340
        %v1619 = vtanh.pop %v1344
        %v1620 = vtanh.pop %v1350
        %v1621 = vtanh.pop %v1354
        %v1622 = vtanh.pop %v1360
        %v1623 = vtanh.pop %v1364
        %v1624 = vtanh.pop %v1370
        %v1625 = vtanh.pop %v1374
        %v1626 = vtanh.pop %v1380
        %v1627 = vtanh.pop %v1384
        %v1628 = vtanh.pop %v1390
        %v1629 = vtanh.pop %v1394
        %v1630 = vtanh.pop %v1400
        %v1631 = vtanh.pop %v1404
        %v1632 = vtanh.pop %v1410
        %v1633 = vtanh.pop %v1414
        %v1634 = vtanh.pop %v1420
        %v1635 = vtanh.pop %v1424
        %v1636 = vtanh.pop %v1430
        %v1637 = vtanh.pop %v1434
        %v1638 = vtanh.pop %v1440
        %v1639 = vtanh.pop %v1444
        %v1640 = vtanh.pop %v1450
        %v1641 = vtanh.pop %v1454
        %v1642 = vtanh.pop %v1460
        %v1643 = vtanh.pop %v1464
        %v1644 = vtanh.pop %v1470
        %v1645 = vtanh.pop %v1474
        %v1646 = vtanh.pop %v1480
        %v1647 = vtanh.pop %v1484
        %v1648 = vtanh.pop %v1490
        %v1649 = vtanh.pop %v1494
        %v1650 = vtanh.pop %v1500
        %v1651 = vtanh.pop %v1504
        %v1652 = vtanh.pop %v1510
        %v1653 = vtanh.pop %v1514
        %v1654 = vtanh.pop %v1520
        %v1655 = vtanh.pop %v1524
        %v1656 = vtanh.pop %v1530
        %v1657 = vtanh.pop %v1534
        %v1658 = vtanh.pop %v1540
        %v1659 = vtanh.pop %v1544
        %v1660 = vtanh.pop %v1550
        %v1661 = vtanh.pop %v1554
        %v1662 = vtanh.pop %v1560
        %v1663 = vtanh.pop %v1564
        %v1664 = vtanh.pop %v1570
        %v1665 = vtanh.pop %v1574
        %v1666 = vtanh.pop %v1580
        %v1667 = vtanh.pop %v1584
        %v1668 = vtanh.pop %v1590
        %v1669 = vtanh.pop %v1594
        %v1670 = vtanh.pop %v1600
        %v1671 = vtanh.pop %v1604
        %v1672 = vxor.u32 %v1292, 2147483648
        %v1673 = vxor.u32 %v1296, 2147483648
        %v1674 = vxor.u32 %v1302, 2147483648
        %v1675 = vxor.u32 %v1306, 2147483648
        %v1676 = vxor.u32 %v1312, 2147483648
        %v1677 = vxor.u32 %v1316, 2147483648
        %v1678 = vxor.u32 %v1322, 2147483648
        %v1679 = vxor.u32 %v1326, 2147483648
        %v1680 = vxor.u32 %v1332, 2147483648
        %v1681 = vxor.u32 %v1336, 2147483648
        %v1682 = vxor.u32 %v1342, 2147483648
        %v1683 = vxor.u32 %v1346, 2147483648
        %v1684 = vxor.u32 %v1352, 2147483648
        %v1685 = vxor.u32 %v1356, 2147483648
        %v1686 = vxor.u32 %v1362, 2147483648
        %v1687 = vxor.u32 %v1366, 2147483648
        %v1688 = vxor.u32 %v1372, 2147483648
        %v1689 = vxor.u32 %v1376, 2147483648
        %v1690 = vxor.u32 %v1382, 2147483648
        %v1691 = vxor.u32 %v1386, 2147483648
        %v1692 = vxor.u32 %v1392, 2147483648
        %v1693 = vxor.u32 %v1396, 2147483648
        %v1694 = vxor.u32 %v1402, 2147483648
        %v1695 = vxor.u32 %v1406, 2147483648
        %v1696 = vxor.u32 %v1412, 2147483648
        %v1697 = vxor.u32 %v1416, 2147483648
        %v1698 = vxor.u32 %v1422, 2147483648
        %v1699 = vxor.u32 %v1426, 2147483648
        %v1700 = vxor.u32 %v1432, 2147483648
        %v1701 = vxor.u32 %v1436, 2147483648
        %v1702 = vxor.u32 %v1442, 2147483648
        %v1703 = vxor.u32 %v1446, 2147483648
        %v1704 = vxor.u32 %v1452, 2147483648
        %v1705 = vxor.u32 %v1456, 2147483648
        %v1706 = vxor.u32 %v1462, 2147483648
        %v1707 = vxor.u32 %v1466, 2147483648
        %v1708 = vxor.u32 %v1472, 2147483648
        %v1709 = vxor.u32 %v1476, 2147483648
        %v1710 = vxor.u32 %v1482, 2147483648
        %v1711 = vxor.u32 %v1486, 2147483648
        %v1712 = vxor.u32 %v1492, 2147483648
        %v1713 = vxor.u32 %v1496, 2147483648
        %v1714 = vxor.u32 %v1502, 2147483648
        %v1715 = vxor.u32 %v1506, 2147483648
        %v1716 = vxor.u32 %v1512, 2147483648
        %v1717 = vxor.u32 %v1516, 2147483648
        %v1718 = vxor.u32 %v1522, 2147483648
        %v1719 = vxor.u32 %v1526, 2147483648
        %v1720 = vxor.u32 %v1532, 2147483648
        %v1721 = vxor.u32 %v1536, 2147483648
        %v1722 = vxor.u32 %v1542, 2147483648
        %v1723 = vxor.u32 %v1546, 2147483648
        %v1724 = vxor.u32 %v1552, 2147483648
        %v1725 = vxor.u32 %v1556, 2147483648
        %v1726 = vxor.u32 %v1562, 2147483648
        %v1727 = vxor.u32 %v1566, 2147483648
        %v1728 = vxor.u32 %v1572, 2147483648
        %v1729 = vxor.u32 %v1576, 2147483648
        %v1730 = vxor.u32 %v1582, 2147483648
        %v1731 = vxor.u32 %v1586, 2147483648
        %v1732 = vxor.u32 %v1592, 2147483648
        %v1733 = vxor.u32 %v1596, 2147483648
        %v1734 = vxor.u32 %v1602, 2147483648
        %v1735 = vxor.u32 %v1606, 2147483648
        %v1736 = vmul.f32 %v1672, 1.442695
        %v1737 = vpow.pop %v1736
        %v1738 = vmul.f32 %v1673, 1.442695
        %v1739 = vpow.pop %v1738
        %v1740 = vmul.f32 %v1674, 1.442695
        %v1741 = vpow.pop %v1740
        %v1742 = vmul.f32 %v1675, 1.442695
        %v1743 = vpow.pop %v1742
        %v1744 = vmul.f32 %v1676, 1.442695
        %v1745 = vpow.pop %v1744
        %v1746 = vmul.f32 %v1677, 1.442695
        %v1747 = vpow.pop %v1746
        %v1748 = vmul.f32 %v1678, 1.442695
        %v1749 = vpow.pop %v1748
        %v1750 = vmul.f32 %v1679, 1.442695
        %v1751 = vpow.pop %v1750
        %v1752 = vmul.f32 %v1680, 1.442695
        %v1753 = vpow.pop %v1752
        %v1754 = vmul.f32 %v1681, 1.442695
        %v1755 = vpow.pop %v1754
        %v1756 = vmul.f32 %v1682, 1.442695
        %v1757 = vpow.pop %v1756
        %v1758 = vmul.f32 %v1683, 1.442695
        %v1759 = vpow.pop %v1758
        %v1760 = vmul.f32 %v1684, 1.442695
        %v1761 = vpow.pop %v1760
        %v1762 = vmul.f32 %v1685, 1.442695
        %v1763 = vpow.pop %v1762
        %v1764 = vmul.f32 %v1686, 1.442695
        %v1765 = vpow.pop %v1764
        %v1766 = vmul.f32 %v1687, 1.442695
        %v1767 = vpow.pop %v1766
        %v1768 = vmul.f32 %v1688, 1.442695
        %v1769 = vpow.pop %v1768
        %v1770 = vmul.f32 %v1689, 1.442695
        %v1771 = vpow.pop %v1770
        %v1772 = vmul.f32 %v1690, 1.442695
        %v1773 = vpow.pop %v1772
        %v1774 = vmul.f32 %v1691, 1.442695
        %v1775 = vpow.pop %v1774
        %v1776 = vmul.f32 %v1692, 1.442695
        %v1777 = vpow.pop %v1776
        %v1778 = vmul.f32 %v1693, 1.442695
        %v1779 = vpow.pop %v1778
        %v1780 = vmul.f32 %v1694, 1.442695
        %v1781 = vpow.pop %v1780
        %v1782 = vmul.f32 %v1695, 1.442695
        %v1783 = vpow.pop %v1782
        %v1784 = vmul.f32 %v1696, 1.442695
        %v1785 = vpow.pop %v1784
        %v1786 = vmul.f32 %v1697, 1.442695
        %v1787 = vpow.pop %v1786
        %v1788 = vmul.f32 %v1698, 1.442695
        %v1789 = vpow.pop %v1788
        %v1790 = vmul.f32 %v1699, 1.442695
        %v1791 = vpow.pop %v1790
        %v1792 = vmul.f32 %v1700, 1.442695
        %v1793 = vpow.pop %v1792
        %v1794 = vmul.f32 %v1701, 1.442695
        %v1795 = vpow.pop %v1794
        %v1796 = vmul.f32 %v1702, 1.442695
        %v1797 = vpow.pop %v1796
        %v1798 = vmul.f32 %v1703, 1.442695
        %v1799 = vpow.pop %v1798
        %v1800 = vmul.f32 %v1704, 1.442695
        %v1801 = vpow.pop %v1800
        %v1802 = vmul.f32 %v1705, 1.442695
        %v1803 = vpow.pop %v1802
        %v1804 = vmul.f32 %v1706, 1.442695
        %v1805 = vpow.pop %v1804
        %v1806 = vmul.f32 %v1707, 1.442695
        %v1807 = vpow.pop %v1806
        %v1808 = vmul.f32 %v1708, 1.442695
        %v1809 = vpow.pop %v1808
        %v1810 = vmul.f32 %v1709, 1.442695
        %v1811 = vpow.pop %v1810
        %v1812 = vmul.f32 %v1710, 1.442695
        %v1813 = vpow.pop %v1812
        %v1814 = vmul.f32 %v1711, 1.442695
        %v1815 = vpow.pop %v1814
        %v1816 = vmul.f32 %v1712, 1.442695
        %v1817 = vpow.pop %v1816
        %v1818 = vmul.f32 %v1713, 1.442695
        %v1819 = vpow.pop %v1818
        %v1820 = vmul.f32 %v1714, 1.442695
        %v1821 = vpow.pop %v1820
        %v1822 = vmul.f32 %v1715, 1.442695
        %v1823 = vpow.pop %v1822
        %v1824 = vmul.f32 %v1716, 1.442695
        %v1825 = vpow.pop %v1824
        %v1826 = vmul.f32 %v1717, 1.442695
        %v1827 = vpow.pop %v1826
        %v1828 = vmul.f32 %v1718, 1.442695
        %v1829 = vpow.pop %v1828
        %v1830 = vmul.f32 %v1719, 1.442695
        %v1831 = vpow.pop %v1830
        %v1832 = vmul.f32 %v1720, 1.442695
        %v1833 = vpow.pop %v1832
        %v1834 = vmul.f32 %v1721, 1.442695
        %v1835 = vpow.pop %v1834
        %v1836 = vmul.f32 %v1722, 1.442695
        %v1837 = vpow.pop %v1836
        %v1838 = vmul.f32 %v1723, 1.442695
        %v1839 = vpow.pop %v1838
        %v1840 = vmul.f32 %v1724, 1.442695
        %v1841 = vpow.pop %v1840
        %v1842 = vmul.f32 %v1725, 1.442695
        %v1843 = vpow.pop %v1842
        %v1844 = vmul.f32 %v1726, 1.442695
        %v1845 = vpow.pop %v1844
        %v1846 = vmul.f32 %v1727, 1.442695
        %v1847 = vpow.pop %v1846
        %v1848 = vmul.f32 %v1728, 1.442695
        %v1849 = vpow.pop %v1848
        %v1850 = vmul.f32 %v1729, 1.442695
        %v1851 = vpow.pop %v1850
        %v1852 = vmul.f32 %v1730, 1.442695
        %v1853 = vpow.pop %v1852
        %v1854 = vmul.f32 %v1731, 1.442695
        %v1855 = vpow.pop %v1854
        %v1856 = vmul.f32 %v1732, 1.442695
        %v1857 = vpow.pop %v1856
        %v1858 = vmul.f32 %v1733, 1.442695
        %v1859 = vpow.pop %v1858
        %v1860 = vmul.f32 %v1734, 1.442695
        %v1861 = vpow.pop %v1860
        %v1862 = vmul.f32 %v1735, 1.442695
        %v1863 = vpow.pop %v1862
        %v1864 = vadd.f32 %v1737, 1.0
        %v1865 = vadd.f32 %v1739, 1.0
        %v1866 = vadd.f32 %v1741, 1.0
        %v1867 = vadd.f32 %v1743, 1.0
        %v1868 = vadd.f32 %v1745, 1.0
        %v1869 = vadd.f32 %v1747, 1.0
        %v1870 = vadd.f32 %v1749, 1.0
        %v1871 = vadd.f32 %v1751, 1.0
        %v1872 = vadd.f32 %v1753, 1.0
        %v1873 = vadd.f32 %v1755, 1.0
        %v1874 = vadd.f32 %v1757, 1.0
        %v1875 = vadd.f32 %v1759, 1.0
        %v1876 = vadd.f32 %v1761, 1.0
        %v1877 = vadd.f32 %v1763, 1.0
        %v1878 = vadd.f32 %v1765, 1.0
        %v1879 = vadd.f32 %v1767, 1.0
        %v1880 = vadd.f32 %v1769, 1.0
        %v1881 = vadd.f32 %v1771, 1.0
        %v1882 = vadd.f32 %v1773, 1.0
        %v1883 = vadd.f32 %v1775, 1.0
        %v1884 = vadd.f32 %v1777, 1.0
        %v1885 = vadd.f32 %v1779, 1.0
        %v1886 = vadd.f32 %v1781, 1.0
        %v1887 = vadd.f32 %v1783, 1.0
        %v1888 = vadd.f32 %v1785, 1.0
        %v1889 = vadd.f32 %v1787, 1.0
        %v1890 = vadd.f32 %v1789, 1.0
        %v1891 = vadd.f32 %v1791, 1.0
        %v1892 = vadd.f32 %v1793, 1.0
        %v1893 = vadd.f32 %v1795, 1.0
        %v1894 = vadd.f32 %v1797, 1.0
        %v1895 = vadd.f32 %v1799, 1.0
        %v1896 = vadd.f32 %v1801, 1.0
        %v1897 = vadd.f32 %v1803, 1.0
        %v1898 = vadd.f32 %v1805, 1.0
        %v1899 = vadd.f32 %v1807, 1.0
        %v1900 = vadd.f32 %v1809, 1.0
        %v1901 = vadd.f32 %v1811, 1.0
        %v1902 = vadd.f32 %v1813, 1.0
        %v1903 = vadd.f32 %v1815, 1.0
        %v1904 = vadd.f32 %v1817, 1.0
        %v1905 = vadd.f32 %v1819, 1.0
        %v1906 = vadd.f32 %v1821, 1.0
        %v1907 = vadd.f32 %v1823, 1.0
        %v1908 = vadd.f32 %v1825, 1.0
        %v1909 = vadd.f32 %v1827, 1.0
        %v1910 = vadd.f32 %v1829, 1.0
        %v1911 = vadd.f32 %v1831, 1.0
        %v1912 = vadd.f32 %v1833, 1.0
        %v1913 = vadd.f32 %v1835, 1.0
        %v1914 = vadd.f32 %v1837, 1.0
        %v1915 = vadd.f32 %v1839, 1.0
        %v1916 = vadd.f32 %v1841, 1.0
        %v1917 = vadd.f32 %v1843, 1.0
        %v1918 = vadd.f32 %v1845, 1.0
        %v1919 = vadd.f32 %v1847, 1.0
        %v1920 = vadd.f32 %v1849, 1.0
        %v1921 = vadd.f32 %v1851, 1.0
        %v1922 = vadd.f32 %v1853, 1.0
        %v1923 = vadd.f32 %v1855, 1.0
        %v1924 = vadd.f32 %v1857, 1.0
        %v1925 = vadd.f32 %v1859, 1.0
        %v1926 = vadd.f32 %v1861, 1.0
        %v1927 = vadd.f32 %v1863, 1.0
        %v1928 = vrcp.pop %v1864
        %v1929 = vmul.f32 1.0, %v1928
        %v1930 = vrcp.pop %v1865
        %v1931 = vmul.f32 1.0, %v1930
        %v1932 = vrcp.pop %v1866
        %v1933 = vmul.f32 1.0, %v1932
        %v1934 = vrcp.pop %v1867
        %v1935 = vmul.f32 1.0, %v1934
        %v1936 = vrcp.pop %v1868
        %v1937 = vmul.f32 1.0, %v1936
        %v1938 = vrcp.pop %v1869
        %v1939 = vmul.f32 1.0, %v1938
        %v1940 = vrcp.pop %v1870
        %v1941 = vmul.f32 1.0, %v1940
        %v1942 = vrcp.pop %v1871
        %v1943 = vmul.f32 1.0, %v1942
        %v1944 = vrcp.pop %v1872
        %v1945 = vmul.f32 1.0, %v1944
        %v1946 = vrcp.pop %v1873
        %v1947 = vmul.f32 1.0, %v1946
        %v1948 = vrcp.pop %v1874
        %v1949 = vmul.f32 1.0, %v1948
        %v1950 = vrcp.pop %v1875
        %v1951 = vmul.f32 1.0, %v1950
        %v1952 = vrcp.pop %v1876
        %v1953 = vmul.f32 1.0, %v1952
        %v1954 = vrcp.pop %v1877
        %v1955 = vmul.f32 1.0, %v1954
        %v1956 = vrcp.pop %v1878
        %v1957 = vmul.f32 1.0, %v1956
        %v1958 = vrcp.pop %v1879
        %v1959 = vmul.f32 1.0, %v1958
        %v1960 = vrcp.pop %v1880
        %v1961 = vmul.f32 1.0, %v1960
        %v1962 = vrcp.pop %v1881
        %v1963 = vmul.f32 1.0, %v1962
        %v1964 = vrcp.pop %v1882
        %v1965 = vmul.f32 1.0, %v1964
        %v1966 = vrcp.pop %v1883
        %v1967 = vmul.f32 1.0, %v1966
        %v1968 = vrcp.pop %v1884
        %v1969 = vmul.f32 1.0, %v1968
        %v1970 = vrcp.pop %v1885
        %v1971 = vmul.f32 1.0, %v1970
        %v1972 = vrcp.pop %v1886
        %v1973 = vmul.f32 1.0, %v1972
        %v1974 = vrcp.pop %v1887
        %v1975 = vmul.f32 1.0, %v1974
        %v1976 = vrcp.pop %v1888
        %v1977 = vmul.f32 1.0, %v1976
        %v1978 = vrcp.pop %v1889
        %v1979 = vmul.f32 1.0, %v1978
        %v1980 = vrcp.pop %v1890
        %v1981 = vmul.f32 1.0, %v1980
        %v1982 = vrcp.pop %v1891
        %v1983 = vmul.f32 1.0, %v1982
        %v1984 = vrcp.pop %v1892
        %v1985 = vmul.f32 1.0, %v1984
        %v1986 = vrcp.pop %v1893
        %v1987 = vmul.f32 1.0, %v1986
        %v1988 = vrcp.pop %v1894
        %v1989 = vmul.f32 1.0, %v1988
        %v1990 = vrcp.pop %v1895
        %v1991 = vmul.f32 1.0, %v1990
        %v1992 = vrcp.pop %v1896
        %v1993 = vmul.f32 1.0, %v1992
        %v1994 = vrcp.pop %v1897
        %v1995 = vmul.f32 1.0, %v1994
        %v1996 = vrcp.pop %v1898
        %v1997 = vmul.f32 1.0, %v1996
        %v1998 = vrcp.pop %v1899
        %v1999 = vmul.f32 1.0, %v1998
        %v2000 = vrcp.pop %v1900
        %v2001 = vmul.f32 1.0, %v2000
        %v2002 = vrcp.pop %v1901
        %v2003 = vmul.f32 1.0, %v2002
        %v2004 = vrcp.pop %v1902
        %v2005 = vmul.f32 1.0, %v2004
        %v2006 = vrcp.pop %v1903
        %v2007 = vmul.f32 1.0, %v2006
        %v2008 = vrcp.pop %v1904
        %v2009 = vmul.f32 1.0, %v2008
        %v2010 = vrcp.pop %v1905
        %v2011 = vmul.f32 1.0, %v2010
        %v2012 = vrcp.pop %v1906
        %v2013 = vmul.f32 1.0, %v2012
        %v2014 = vrcp.pop %v1907
        %v2015 = vmul.f32 1.0, %v2014
        %v2016 = vrcp.pop %v1908
        %v2017 = vmul.f32 1.0, %v2016
        %v2018 = vrcp.pop %v1909
        %v2019 = vmul.f32 1.0, %v2018
        %v2020 = vrcp.pop %v1910
        %v2021 = vmul.f32 1.0, %v2020
        %v2022 = vrcp.pop %v1911
        %v2023 = vmul.f32 1.0, %v2022
        %v2024 = vrcp.pop %v1912
        %v2025 = vmul.f32 1.0, %v2024
        %v2026 = vrcp.pop %v1913
        %v2027 = vmul.f32 1.0, %v2026
        %v2028 = vrcp.pop %v1914
        %v2029 = vmul.f32 1.0, %v2028
        %v2030 = vrcp.pop %v1915
        %v2031 = vmul.f32 1.0, %v2030
        %v2032 = vrcp.pop %v1916
        %v2033 = vmul.f32 1.0, %v2032
        %v2034 = vrcp.pop %v1917
        %v2035 = vmul.f32 1.0, %v2034
        %v2036 = vrcp.pop %v1918
        %v2037 = vmul.f32 1.0, %v2036
        %v2038 = vrcp.pop %v1919
        %v2039 = vmul.f32 1.0, %v2038
        %v2040 = vrcp.pop %v1920
        %v2041 = vmul.f32 1.0, %v2040
        %v2042 = vrcp.pop %v1921
        %v2043 = vmul.f32 1.0, %v2042
        %v2044 = vrcp.pop %v1922
        %v2045 = vmul.f32 1.0, %v2044
        %v2046 = vrcp.pop %v1923
        %v2047 = vmul.f32 1.0, %v2046
        %v2048 = vrcp.pop %v1924
        %v2049 = vmul.f32 1.0, %v2048
        %v2050 = vrcp.pop %v1925
        %v2051 = vmul.f32 1.0, %v2050
        %v2052 = vrcp.pop %v1926
        %v2053 = vmul.f32 1.0, %v2052
        %v2054 = vrcp.pop %v1927
        %v2055 = vmul.f32 1.0, %v2054
        %v2056 = vmul.f32 %v1608, %v1929
        %v2057 = vmul.f32 %v1609, %v1931
        %v2058 = vmul.f32 %v1610, %v1933
        %v2059 = vmul.f32 %v1611, %v1935
        %v2060 = vmul.f32 %v1612, %v1937
        %v2061 = vmul.f32 %v1613, %v1939
        %v2062 = vmul.f32 %v1614, %v1941
        %v2063 = vmul.f32 %v1615, %v1943
        %v2064 = vmul.f32 %v1616, %v1945
        %v2065 = vmul.f32 %v1617, %v1947
        %v2066 = vmul.f32 %v1618, %v1949
        %v2067 = vmul.f32 %v1619, %v1951
        %v2068 = vmul.f32 %v1620, %v1953
        %v2069 = vmul.f32 %v1621, %v1955
        %v2070 = vmul.f32 %v1622, %v1957
        %v2071 = vmul.f32 %v1623, %v1959
        %v2072 = vmul.f32 %v1624, %v1961
        %v2073 = vmul.f32 %v1625, %v1963
        %v2074 = vmul.f32 %v1626, %v1965
        %v2075 = vmul.f32 %v1627, %v1967
        %v2076 = vmul.f32 %v1628, %v1969
        %v2077 = vmul.f32 %v1629, %v1971
        %v2078 = vmul.f32 %v1630, %v1973
        %v2079 = vmul.f32 %v1631, %v1975
        %v2080 = vmul.f32 %v1632, %v1977
        %v2081 = vmul.f32 %v1633, %v1979
        %v2082 = vmul.f32 %v1634, %v1981
        %v2083 = vmul.f32 %v1635, %v1983
        %v2084 = vmul.f32 %v1636, %v1985
        %v2085 = vmul.f32 %v1637, %v1987
        %v2086 = vmul.f32 %v1638, %v1989
        %v2087 = vmul.f32 %v1639, %v1991
        %v2088 = vmul.f32 %v1640, %v1993
        %v2089 = vmul.f32 %v1641, %v1995
        %v2090 = vmul.f32 %v1642, %v1997
        %v2091 = vmul.f32 %v1643, %v1999
        %v2092 = vmul.f32 %v1644, %v2001
        %v2093 = vmul.f32 %v1645, %v2003
        %v2094 = vmul.f32 %v1646, %v2005
        %v2095 = vmul.f32 %v1647, %v2007
        %v2096 = vmul.f32 %v1648, %v2009
        %v2097 = vmul.f32 %v1649, %v2011
        %v2098 = vmul.f32 %v1650, %v2013
        %v2099 = vmul.f32 %v1651, %v2015
        %v2100 = vmul.f32 %v1652, %v2017
        %v2101 = vmul.f32 %v1653, %v2019
        %v2102 = vmul.f32 %v1654, %v2021
        %v2103 = vmul.f32 %v1655, %v2023
        %v2104 = vmul.f32 %v1656, %v2025
        %v2105 = vmul.f32 %v1657, %v2027
        %v2106 = vmul.f32 %v1658, %v2029
        %v2107 = vmul.f32 %v1659, %v2031
        %v2108 = vmul.f32 %v1660, %v2033
        %v2109 = vmul.f32 %v1661, %v2035
        %v2110 = vmul.f32 %v1662, %v2037
        %v2111 = vmul.f32 %v1663, %v2039
        %v2112 = vmul.f32 %v1664, %v2041
        %v2113 = vmul.f32 %v1665, %v2043
        %v2114 = vmul.f32 %v1666, %v2045
        %v2115 = vmul.f32 %v1667, %v2047
        %v2116 = vmul.f32 %v1668, %v2049
        %v2117 = vmul.f32 %v1669, %v2051
        %v2118 = vmul.f32 %v1670, %v2053
        %v2119 = vmul.f32 %v1671, %v2055
        %v2120 = vld [vmem:[%s6] sm:$0xff]
        %v2121 = vld [vmem:[%s6 + $0x8] sm:$0xff]
        %v2122 = vld [vmem:[%s6 + $0x10] sm:$0xff]
        %v2123 = vld [vmem:[%s6 + $0x18] sm:$0xff]
        %v2124 = vld [vmem:[%s6 + $0x20] sm:$0xff]
        %v2125 = vld [vmem:[%s6 + $0x28] sm:$0xff]
        %v2126 = vld [vmem:[%s6 + $0x30] sm:$0xff]
        %v2127 = vld [vmem:[%s6 + $0x38] sm:$0xff]
        %v2128 = vld [vmem:[%s6 + $0x40] sm:$0xff]
        %v2129 = vld [vmem:[%s6 + $0x48] sm:$0xff]
        %v2130 = vld [vmem:[%s6 + $0x50] sm:$0xff]
        %v2131 = vld [vmem:[%s6 + $0x58] sm:$0xff]
        %v2132 = vld [vmem:[%s6 + $0x60] sm:$0xff]
        %v2133 = vld [vmem:[%s6 + $0x68] sm:$0xff]
        %v2134 = vld [vmem:[%s6 + $0x70] sm:$0xff]
        %v2135 = vld [vmem:[%s6 + $0x78] sm:$0xff]
        %v2136 = vld [vmem:[#allocation7] sm:$0x1]
        %v2138 = vlaneseq
        %v2139 = vshrl.u32 %v2138, 7
        %v2140 = vsub.s32 0, %v2139
        %v2141 = vrot.slane %v2136, %v2140
        %2143 = vmatprep.subr.mxu0 0.0
        %2144 = vmatpush1.msra.mxu0 %v2120
        %2145 = vmatprep.subr.mxu0 0.0
        %2146 = vmatpush1.msra.mxu0 %v2121
        %2147 = vmatprep.subr.mxu0 0.0
        %2148 = vmatpush1.msra.mxu0 %v2122
        %2149 = vmatprep.subr.mxu0 0.0
        %2150 = vmatpush1.msra.mxu0 %v2123
        %2151 = vmatprep.subr.mxu0 0.0
        %2152 = vmatpush1.msra.mxu0 %v2124
        %2153 = vmatprep.subr.mxu0 0.0
        %2154 = vmatpush1.msra.mxu0 %v2125
        %2155 = vmatprep.subr.mxu0 0.0
        %2156 = vmatpush1.msra.mxu0 %v2126
        %2157 = vmatprep.subr.mxu0 0.0
        %2158 = vmatpush1.msra.mxu0 %v2127
        %2159 = vmatprep.subr.mxu0 0.0
        %2160 = vmatpush1.msra.mxu0 %v2128
        %2161 = vmatprep.subr.mxu0 0.0
        %2162 = vmatpush1.msra.mxu0 %v2129
        %2163 = vmatprep.subr.mxu0 0.0
        %2164 = vmatpush1.msra.mxu0 %v2130
        %2165 = vmatprep.subr.mxu0 0.0
        %2166 = vmatpush1.msra.mxu0 %v2131
        %2167 = vmatprep.subr.mxu0 0.0
        %2168 = vmatpush1.msra.mxu0 %v2132
        %2169 = vmatprep.subr.mxu0 0.0
        %2170 = vmatpush1.msra.mxu0 %v2133
        %2171 = vmatprep.subr.mxu0 0.0
        %2172 = vmatpush1.msra.mxu0 %v2134
        %2173 = vmatprep.subr.mxu0 0.0
        %2174 = vmatpush1.msra.mxu0 %v2135
        %2175 = vmatprep.subr.mxu0 0.0
        %2176 = vmatpush1.msra.mxu0 0.0
        %2177 = vmatprep.subr.mxu0 0.0
        %2178 = vmatpush1.msra.mxu0 0.0
        %2179 = vmatprep.subr.mxu0 0.0
        %2180 = vmatpush1.msra.mxu0 0.0
        %2181 = vmatprep.subr.mxu0 0.0
        %2182 = vmatpush1.msra.mxu0 0.0
        %2183 = vmatprep.subr.mxu0 0.0
        %2184 = vmatpush1.msra.mxu0 0.0
        %2185 = vmatprep.subr.mxu0 0.0
        %2186 = vmatpush1.msra.mxu0 0.0
        %2187 = vmatprep.subr.mxu0 0.0
        %2188 = vmatpush1.msra.mxu0 0.0
        %2189 = vmatprep.subr.mxu0 0.0
        %2190 = vmatpush1.msra.mxu0 0.0
        %2191 = vmatprep.subr.mxu0 0.0
        %2192 = vmatpush1.msra.mxu0 0.0
        %2193 = vmatprep.subr.mxu0 0.0
        %2194 = vmatpush1.msra.mxu0 0.0
        %2195 = vmatprep.subr.mxu0 0.0
        %2196 = vmatpush1.msra.mxu0 0.0
        %2197 = vmatprep.subr.mxu0 0.0
        %2198 = vmatpush1.msra.mxu0 0.0
        %2199 = vmatprep.subr.mxu0 0.0
        %2200 = vmatpush1.msra.mxu0 0.0
        %2201 = vmatprep.subr.mxu0 0.0
        %2202 = vmatpush1.msra.mxu0 0.0
        %2203 = vmatprep.subr.mxu0 0.0
        %2204 = vmatpush1.msra.mxu0 0.0
        %2205 = vmatprep.subr.mxu0 0.0
        %2206 = vmatpush1.msra.mxu0 0.0
        %2207 = vmatprep.mubr.f32.mxu0 0.0
        %2208 = vmatmul.mubr.f32.gmra.mrb[0].mxu0 %v2056
        %v2209 = vpop.f32.mrb[0].mxu0
        %v2210 = vadd.f32 %v2141, %v2209
        %v2211 = vpop.f32.mrb[0].mxu0
        %2212 = vmatprep.mubr.f32.mxu0 0.0
        %2213 = vmatmul.mubr.f32.gmra.mrb[0].mxu0 %v2057
        %v2214 = vpop.f32.mrb[0].mxu0
        %v2215 = vadd.f32 %v2141, %v2214
        %v2216 = vpop.f32.mrb[0].mxu0
        %2217 = vmatprep.mubr.f32.mxu0 0.0
        %2218 = vmatmul.mubr.f32.gmra.mrb[0].mxu0 %v2058
        %v2219 = vpop.f32.mrb[0].mxu0
        %v2220 = vadd.f32 %v2141, %v2219
        %v2221 = vpop.f32.mrb[0].mxu0
        %2222 = vmatprep.mubr.f32.mxu0 0.0
        %2223 = vmatmul.mubr.f32.gmra.mrb[0].mxu0 %v2059
        %v2224 = vpop.f32.mrb[0].mxu0
        %v2225 = vadd.f32 %v2141, %v2224
        %v2226 = vpop.f32.mrb[0].mxu0
        %2227 = vmatprep.mubr.f32.mxu0 0.0
        %2228 = vmatmul.mubr.f32.gmra.mrb[0].mxu0 %v2060
        %v2229 = vpop.f32.mrb[0].mxu0
        %v2230 = vadd.f32 %v2141, %v2229
        %v2231 = vpop.f32.mrb[0].mxu0
        %2232 = vmatprep.mubr.f32.mxu0 0.0
        %2233 = vmatmul.mubr.f32.gmra.mrb[0].mxu0 %v2061
        %v2234 = vpop.f32.mrb[0].mxu0
        %v2235 = vadd.f32 %v2141, %v2234
        %v2236 = vpop.f32.mrb[0].mxu0
        %2237 = vmatprep.mubr.f32.mxu0 0.0
        %2238 = vmatmul.mubr.f32.gmra.mrb[0].mxu0 %v2062
        %v2239 = vpop.f32.mrb[0].mxu0
        %v2240 = vadd.f32 %v2141, %v2239
        %v2241 = vpop.f32.mrb[0].mxu0
        %2242 = vmatprep.mubr.f32.mxu0 0.0
        %2243 = vmatmul.mubr.f32.gmra.mrb[0].mxu0 %v2063
        %v2244 = vpop.f32.mrb[0].mxu0
        %v2245 = vadd.f32 %v2141, %v2244
        %v2246 = vpop.f32.mrb[0].mxu0
        %2247 = vmatprep.mubr.f32.mxu0 0.0
        %2248 = vmatmul.mubr.f32.gmra.mrb[0].mxu0 %v2064
        %v2249 = vpop.f32.mrb[0].mxu0
        %v2250 = vadd.f32 %v2141, %v2249
        %v2251 = vpop.f32.mrb[0].mxu0
        %2252 = vmatprep.mubr.f32.mxu0 0.0
        %2253 = vmatmul.mubr.f32.gmra.mrb[0].mxu0 %v2065
        %v2254 = vpop.f32.mrb[0].mxu0
        %v2255 = vadd.f32 %v2141, %v2254
        %v2256 = vpop.f32.mrb[0].mxu0
        %2257 = vmatprep.mubr.f32.mxu0 0.0
        %2258 = vmatmul.mubr.f32.gmra.mrb[0].mxu0 %v2066
        %v2259 = vpop.f32.mrb[0].mxu0
        %v2260 = vadd.f32 %v2141, %v2259
        %v2261 = vpop.f32.mrb[0].mxu0
        %2262 = vmatprep.mubr.f32.mxu0 0.0
        %2263 = vmatmul.mubr.f32.gmra.mrb[0].mxu0 %v2067
        %v2264 = vpop.f32.mrb[0].mxu0
        %v2265 = vadd.f32 %v2141, %v2264
        %v2266 = vpop.f32.mrb[0].mxu0
        %2267 = vmatprep.mubr.f32.mxu0 0.0
        %2268 = vmatmul.mubr.f32.gmra.mrb[0].mxu0 %v2068
        %v2269 = vpop.f32.mrb[0].mxu0
        %v2270 = vadd.f32 %v2141, %v2269
        %v2271 = vpop.f32.mrb[0].mxu0
        %2272 = vmatprep.mubr.f32.mxu0 0.0
        %2273 = vmatmul.mubr.f32.gmra.mrb[0].mxu0 %v2069
        %v2274 = vpop.f32.mrb[0].mxu0
        %v2275 = vadd.f32 %v2141, %v2274
        %v2276 = vpop.f32.mrb[0].mxu0
        %2277 = vmatprep.mubr.f32.mxu0 0.0
        %2278 = vmatmul.mubr.f32.gmra.mrb[0].mxu0 %v2070
        %v2279 = vpop.f32.mrb[0].mxu0
        %v2280 = vadd.f32 %v2141, %v2279
        %v2281 = vpop.f32.mrb[0].mxu0
        %2282 = vmatprep.mubr.f32.mxu0 0.0
        %2283 = vmatmul.mubr.f32.gmra.mrb[0].mxu0 %v2071
        %v2284 = vpop.f32.mrb[0].mxu0
        %v2285 = vadd.f32 %v2141, %v2284
        %v2286 = vpop.f32.mrb[0].mxu0
        %2287 = vmatprep.mubr.f32.mxu0 0.0
        %2288 = vmatmul.mubr.f32.gmra.mrb[0].mxu0 %v2072
        %v2289 = vpop.f32.mrb[0].mxu0
        %v2290 = vadd.f32 %v2141, %v2289
        %v2291 = vpop.f32.mrb[0].mxu0
        %2292 = vmatprep.mubr.f32.mxu0 0.0
        %2293 = vmatmul.mubr.f32.gmra.mrb[0].mxu0 %v2073
        %v2294 = vpop.f32.mrb[0].mxu0
        %v2295 = vadd.f32 %v2141, %v2294
        %v2296 = vpop.f32.mrb[0].mxu0
        %2297 = vmatprep.mubr.f32.mxu0 0.0
        %2298 = vmatmul.mubr.f32.gmra.mrb[0].mxu0 %v2074
        %v2299 = vpop.f32.mrb[0].mxu0
        %v2300 = vadd.f32 %v2141, %v2299
        %v2301 = vpop.f32.mrb[0].mxu0
        %2302 = vmatprep.mubr.f32.mxu0 0.0
        %2303 = vmatmul.mubr.f32.gmra.mrb[0].mxu0 %v2075
        %v2304 = vpop.f32.mrb[0].mxu0
        %v2305 = vadd.f32 %v2141, %v2304
        %v2306 = vpop.f32.mrb[0].mxu0
        %2307 = vmatprep.mubr.f32.mxu0 0.0
        %2308 = vmatmul.mubr.f32.gmra.mrb[0].mxu0 %v2076
        %v2309 = vpop.f32.mrb[0].mxu0
        %v2310 = vadd.f32 %v2141, %v2309
        %v2311 = vpop.f32.mrb[0].mxu0
        %2312 = vmatprep.mubr.f32.mxu0 0.0
        %2313 = vmatmul.mubr.f32.gmra.mrb[0].mxu0 %v2077
        %v2314 = vpop.f32.mrb[0].mxu0
        %v2315 = vadd.f32 %v2141, %v2314
        %v2316 = vpop.f32.mrb[0].mxu0
        %2317 = vmatprep.mubr.f32.mxu0 0.0
        %2318 = vmatmul.mubr.f32.gmra.mrb[0].mxu0 %v2078
        %v2319 = vpop.f32.mrb[0].mxu0
        %v2320 = vadd.f32 %v2141, %v2319
        %v2321 = vpop.f32.mrb[0].mxu0
        %2322 = vmatprep.mubr.f32.mxu0 0.0
        %2323 = vmatmul.mubr.f32.gmra.mrb[0].mxu0 %v2079
        %v2324 = vpop.f32.mrb[0].mxu0
        %v2325 = vadd.f32 %v2141, %v2324
        %v2326 = vpop.f32.mrb[0].mxu0
        %2327 = vmatprep.mubr.f32.mxu0 0.0
        %2328 = vmatmul.mubr.f32.gmra.mrb[0].mxu0 %v2080
        %v2329 = vpop.f32.mrb[0].mxu0
        %v2330 = vadd.f32 %v2141, %v2329
        %v2331 = vpop.f32.mrb[0].mxu0
        %2332 = vmatprep.mubr.f32.mxu0 0.0
        %2333 = vmatmul.mubr.f32.gmra.mrb[0].mxu0 %v2081
        %v2334 = vpop.f32.mrb[0].mxu0
        %v2335 = vadd.f32 %v2141, %v2334
        %v2336 = vpop.f32.mrb[0].mxu0
        %2337 = vmatprep.mubr.f32.mxu0 0.0
        %2338 = vmatmul.mubr.f32.gmra.mrb[0].mxu0 %v2082
        %v2339 = vpop.f32.mrb[0].mxu0
        %v2340 = vadd.f32 %v2141, %v2339
        %v2341 = vpop.f32.mrb[0].mxu0
        %2342 = vmatprep.mubr.f32.mxu0 0.0
        %2343 = vmatmul.mubr.f32.gmra.mrb[0].mxu0 %v2083
        %v2344 = vpop.f32.mrb[0].mxu0
        %v2345 = vadd.f32 %v2141, %v2344
        %v2346 = vpop.f32.mrb[0].mxu0
        %2347 = vmatprep.mubr.f32.mxu0 0.0
        %2348 = vmatmul.mubr.f32.gmra.mrb[0].mxu0 %v2084
        %v2349 = vpop.f32.mrb[0].mxu0
        %v2350 = vadd.f32 %v2141, %v2349
        %v2351 = vpop.f32.mrb[0].mxu0
        %2352 = vmatprep.mubr.f32.mxu0 0.0
        %2353 = vmatmul.mubr.f32.gmra.mrb[0].mxu0 %v2085
        %v2354 = vpop.f32.mrb[0].mxu0
        %v2355 = vadd.f32 %v2141, %v2354
        %v2356 = vpop.f32.mrb[0].mxu0
        %2357 = vmatprep.mubr.f32.mxu0 0.0
        %2358 = vmatmul.mubr.f32.gmra.mrb[0].mxu0 %v2086
        %v2359 = vpop.f32.mrb[0].mxu0
        %v2360 = vadd.f32 %v2141, %v2359
        %v2361 = vpop.f32.mrb[0].mxu0
        %2362 = vmatprep.mubr.f32.mxu0 0.0
        %2363 = vmatmul.mubr.f32.gmra.mrb[0].mxu0 %v2087
        %v2364 = vpop.f32.mrb[0].mxu0
        %v2365 = vadd.f32 %v2141, %v2364
        %v2366 = vpop.f32.mrb[0].mxu0
        %2367 = vmatprep.mubr.f32.mxu0 0.0
        %2368 = vmatmul.mubr.f32.gmra.mrb[0].mxu0 %v2088
        %v2369 = vpop.f32.mrb[0].mxu0
        %v2370 = vadd.f32 %v2141, %v2369
        %v2371 = vpop.f32.mrb[0].mxu0
        %2372 = vmatprep.mubr.f32.mxu0 0.0
        %2373 = vmatmul.mubr.f32.gmra.mrb[0].mxu0 %v2089
        %v2374 = vpop.f32.mrb[0].mxu0
        %v2375 = vadd.f32 %v2141, %v2374
        %v2376 = vpop.f32.mrb[0].mxu0
        %2377 = vmatprep.mubr.f32.mxu0 0.0
        %2378 = vmatmul.mubr.f32.gmra.mrb[0].mxu0 %v2090
        %v2379 = vpop.f32.mrb[0].mxu0
        %v2380 = vadd.f32 %v2141, %v2379
        %v2381 = vpop.f32.mrb[0].mxu0
        %2382 = vmatprep.mubr.f32.mxu0 0.0
        %2383 = vmatmul.mubr.f32.gmra.mrb[0].mxu0 %v2091
        %v2384 = vpop.f32.mrb[0].mxu0
        %v2385 = vadd.f32 %v2141, %v2384
        %v2386 = vpop.f32.mrb[0].mxu0
        %2387 = vmatprep.mubr.f32.mxu0 0.0
        %2388 = vmatmul.mubr.f32.gmra.mrb[0].mxu0 %v2092
        %v2389 = vpop.f32.mrb[0].mxu0
        %v2390 = vadd.f32 %v2141, %v2389
        %v2391 = vpop.f32.mrb[0].mxu0
        %2392 = vmatprep.mubr.f32.mxu0 0.0
        %2393 = vmatmul.mubr.f32.gmra.mrb[0].mxu0 %v2093
        %v2394 = vpop.f32.mrb[0].mxu0
        %v2395 = vadd.f32 %v2141, %v2394
        %v2396 = vpop.f32.mrb[0].mxu0
        %2397 = vmatprep.mubr.f32.mxu0 0.0
        %2398 = vmatmul.mubr.f32.gmra.mrb[0].mxu0 %v2094
        %v2399 = vpop.f32.mrb[0].mxu0
        %v2400 = vadd.f32 %v2141, %v2399
        %v2401 = vpop.f32.mrb[0].mxu0
        %2402 = vmatprep.mubr.f32.mxu0 0.0
        %2403 = vmatmul.mubr.f32.gmra.mrb[0].mxu0 %v2095
        %v2404 = vpop.f32.mrb[0].mxu0
        %v2405 = vadd.f32 %v2141, %v2404
        %v2406 = vpop.f32.mrb[0].mxu0
        %2407 = vmatprep.mubr.f32.mxu0 0.0
        %2408 = vmatmul.mubr.f32.gmra.mrb[0].mxu0 %v2096
        %v2409 = vpop.f32.mrb[0].mxu0
        %v2410 = vadd.f32 %v2141, %v2409
        %v2411 = vpop.f32.mrb[0].mxu0
        %2412 = vmatprep.mubr.f32.mxu0 0.0
        %2413 = vmatmul.mubr.f32.gmra.mrb[0].mxu0 %v2097
        %v2414 = vpop.f32.mrb[0].mxu0
        %v2415 = vadd.f32 %v2141, %v2414
        %v2416 = vpop.f32.mrb[0].mxu0
        %2417 = vmatprep.mubr.f32.mxu0 0.0
        %2418 = vmatmul.mubr.f32.gmra.mrb[0].mxu0 %v2098
        %v2419 = vpop.f32.mrb[0].mxu0
        %v2420 = vadd.f32 %v2141, %v2419
        %v2421 = vpop.f32.mrb[0].mxu0
        %2422 = vmatprep.mubr.f32.mxu0 0.0
        %2423 = vmatmul.mubr.f32.gmra.mrb[0].mxu0 %v2099
        %v2424 = vpop.f32.mrb[0].mxu0
        %v2425 = vadd.f32 %v2141, %v2424
        %v2426 = vpop.f32.mrb[0].mxu0
        %2427 = vmatprep.mubr.f32.mxu0 0.0
        %2428 = vmatmul.mubr.f32.gmra.mrb[0].mxu0 %v2100
        %v2429 = vpop.f32.mrb[0].mxu0
        %v2430 = vadd.f32 %v2141, %v2429
        %v2431 = vpop.f32.mrb[0].mxu0
        %2432 = vmatprep.mubr.f32.mxu0 0.0
        %2433 = vmatmul.mubr.f32.gmra.mrb[0].mxu0 %v2101
        %v2434 = vpop.f32.mrb[0].mxu0
        %v2435 = vadd.f32 %v2141, %v2434
        %v2436 = vpop.f32.mrb[0].mxu0
        %2437 = vmatprep.mubr.f32.mxu0 0.0
        %2438 = vmatmul.mubr.f32.gmra.mrb[0].mxu0 %v2102
        %v2439 = vpop.f32.mrb[0].mxu0
        %v2440 = vadd.f32 %v2141, %v2439
        %v2441 = vpop.f32.mrb[0].mxu0
        %2442 = vmatprep.mubr.f32.mxu0 0.0
        %2443 = vmatmul.mubr.f32.gmra.mrb[0].mxu0 %v2103
        %v2444 = vpop.f32.mrb[0].mxu0
        %v2445 = vadd.f32 %v2141, %v2444
        %v2446 = vpop.f32.mrb[0].mxu0
        %2447 = vmatprep.mubr.f32.mxu0 0.0
        %2448 = vmatmul.mubr.f32.gmra.mrb[0].mxu0 %v2104
        %v2449 = vpop.f32.mrb[0].mxu0
        %v2450 = vadd.f32 %v2141, %v2449
        %v2451 = vpop.f32.mrb[0].mxu0
        %2452 = vmatprep.mubr.f32.mxu0 0.0
        %2453 = vmatmul.mubr.f32.gmra.mrb[0].mxu0 %v2105
        %v2454 = vpop.f32.mrb[0].mxu0
        %v2455 = vadd.f32 %v2141, %v2454
        %v2456 = vpop.f32.mrb[0].mxu0
        %2457 = vmatprep.mubr.f32.mxu0 0.0
        %2458 = vmatmul.mubr.f32.gmra.mrb[0].mxu0 %v2106
        %v2459 = vpop.f32.mrb[0].mxu0
        %v2460 = vadd.f32 %v2141, %v2459
        %v2461 = vpop.f32.mrb[0].mxu0
        %2462 = vmatprep.mubr.f32.mxu0 0.0
        %2463 = vmatmul.mubr.f32.gmra.mrb[0].mxu0 %v2107
        %v2464 = vpop.f32.mrb[0].mxu0
        %v2465 = vadd.f32 %v2141, %v2464
        %v2466 = vpop.f32.mrb[0].mxu0
        %2467 = vmatprep.mubr.f32.mxu0 0.0
        %2468 = vmatmul.mubr.f32.gmra.mrb[0].mxu0 %v2108
        %v2469 = vpop.f32.mrb[0].mxu0
        %v2470 = vadd.f32 %v2141, %v2469
        %v2471 = vpop.f32.mrb[0].mxu0
        %2472 = vmatprep.mubr.f32.mxu0 0.0
        %2473 = vmatmul.mubr.f32.gmra.mrb[0].mxu0 %v2109
        %v2474 = vpop.f32.mrb[0].mxu0
        %v2475 = vadd.f32 %v2141, %v2474
        %v2476 = vpop.f32.mrb[0].mxu0
        %2477 = vmatprep.mubr.f32.mxu0 0.0
        %2478 = vmatmul.mubr.f32.gmra.mrb[0].mxu0 %v2110
        %v2479 = vpop.f32.mrb[0].mxu0
        %v2480 = vadd.f32 %v2141, %v2479
        %v2481 = vpop.f32.mrb[0].mxu0
        %2482 = vmatprep.mubr.f32.mxu0 0.0
        %2483 = vmatmul.mubr.f32.gmra.mrb[0].mxu0 %v2111
        %v2484 = vpop.f32.mrb[0].mxu0
        %v2485 = vadd.f32 %v2141, %v2484
        %v2486 = vpop.f32.mrb[0].mxu0
        %2487 = vmatprep.mubr.f32.mxu0 0.0
        %2488 = vmatmul.mubr.f32.gmra.mrb[0].mxu0 %v2112
        %v2489 = vpop.f32.mrb[0].mxu0
        %v2490 = vadd.f32 %v2141, %v2489
        %v2491 = vpop.f32.mrb[0].mxu0
        %2492 = vmatprep.mubr.f32.mxu0 0.0
        %2493 = vmatmul.mubr.f32.gmra.mrb[0].mxu0 %v2113
        %v2494 = vpop.f32.mrb[0].mxu0
        %v2495 = vadd.f32 %v2141, %v2494
        %v2496 = vpop.f32.mrb[0].mxu0
        %2497 = vmatprep.mubr.f32.mxu0 0.0
        %2498 = vmatmul.mubr.f32.gmra.mrb[0].mxu0 %v2114
        %v2499 = vpop.f32.mrb[0].mxu0
        %v2500 = vadd.f32 %v2141, %v2499
        %v2501 = vpop.f32.mrb[0].mxu0
        %2502 = vmatprep.mubr.f32.mxu0 0.0
        %2503 = vmatmul.mubr.f32.gmra.mrb[0].mxu0 %v2115
        %v2504 = vpop.f32.mrb[0].mxu0
        %v2505 = vadd.f32 %v2141, %v2504
        %v2506 = vpop.f32.mrb[0].mxu0
        %2507 = vmatprep.mubr.f32.mxu0 0.0
        %2508 = vmatmul.mubr.f32.gmra.mrb[0].mxu0 %v2116
        %v2509 = vpop.f32.mrb[0].mxu0
        %v2510 = vadd.f32 %v2141, %v2509
        %v2511 = vpop.f32.mrb[0].mxu0
        %2512 = vmatprep.mubr.f32.mxu0 0.0
        %2513 = vmatmul.mubr.f32.gmra.mrb[0].mxu0 %v2117
        %v2514 = vpop.f32.mrb[0].mxu0
        %v2515 = vadd.f32 %v2141, %v2514
        %v2516 = vpop.f32.mrb[0].mxu0
        %2517 = vmatprep.mubr.f32.mxu0 0.0
        %2518 = vmatmul.mubr.f32.gmra.mrb[0].mxu0 %v2118
        %v2519 = vpop.f32.mrb[0].mxu0
        %v2520 = vadd.f32 %v2141, %v2519
        %v2521 = vpop.f32.mrb[0].mxu0
        %2522 = vmatprep.mubr.f32.mxu0 0.0
        %2523 = vmatmul.mubr.f32.gmra.mrb[0].mxu0 %v2119
        %v2524 = vpop.f32.mrb[0].mxu0
        %v2525 = vadd.f32 %v2141, %v2524
        %v2526 = vpop.f32.mrb[0].mxu0
        %2527 = vdwg.mxu0
        %s2528 = smul.u32 %s37, 512
        %v2529 = vlaneseq
        %v2530 = vshrl.u32 %v2529, 7
        %v2531 = vadd.s32 %v2530, 8
        %v2532 = vadd.s32 %v2530, 16
        %v2533 = vadd.s32 %v2530, 24
        %v2534 = vadd.s32 %v2530, 32
        %v2535 = vadd.s32 %v2530, 40
        %v2536 = vadd.s32 %v2530, 48
        %v2537 = vadd.s32 %v2530, 56
        %v2538 = vadd.s32 %v2530, 64
        %v2539 = vadd.s32 %v2530, 72
        %v2540 = vadd.s32 %v2530, 80
        %v2541 = vadd.s32 %v2530, 88
        %v2542 = vadd.s32 %v2530, 96
        %v2543 = vadd.s32 %v2530, 104
        %v2544 = vadd.s32 %v2530, 112
        %v2545 = vadd.s32 %v2530, 120
        %v2546 = vadd.s32 %v2530, 128
        %v2547 = vadd.s32 %v2530, 136
        %v2548 = vadd.s32 %v2530, 144
        %v2549 = vadd.s32 %v2530, 152
        %v2550 = vadd.s32 %v2530, 160
        %v2551 = vadd.s32 %v2530, 168
        %v2552 = vadd.s32 %v2530, 176
        %v2553 = vadd.s32 %v2530, 184
        %v2554 = vadd.s32 %v2530, 192
        %v2555 = vadd.s32 %v2530, 200
        %v2556 = vadd.s32 %v2530, 208
        %v2557 = vadd.s32 %v2530, 216
        %v2558 = vadd.s32 %v2530, 224
        %v2559 = vadd.s32 %v2530, 232
        %v2560 = vadd.s32 %v2530, 240
        %v2561 = vadd.s32 %v2530, 248
        %v2562 = vadd.s32 %v2530, 256
        %v2563 = vadd.s32 %v2530, 264
        %v2564 = vadd.s32 %v2530, 272
        %v2565 = vadd.s32 %v2530, 280
        %v2566 = vadd.s32 %v2530, 288
        %v2567 = vadd.s32 %v2530, 296
        %v2568 = vadd.s32 %v2530, 304
        %v2569 = vadd.s32 %v2530, 312
        %v2570 = vadd.s32 %v2530, 320
        %v2571 = vadd.s32 %v2530, 328
        %v2572 = vadd.s32 %v2530, 336
        %v2573 = vadd.s32 %v2530, 344
        %v2574 = vadd.s32 %v2530, 352
        %v2575 = vadd.s32 %v2530, 360
        %v2576 = vadd.s32 %v2530, 368
        %v2577 = vadd.s32 %v2530, 376
        %v2578 = vadd.s32 %v2530, 384
        %v2579 = vadd.s32 %v2530, 392
        %v2580 = vadd.s32 %v2530, 400
        %v2581 = vadd.s32 %v2530, 408
        %v2582 = vadd.s32 %v2530, 416
        %v2583 = vadd.s32 %v2530, 424
        %v2584 = vadd.s32 %v2530, 432
        %v2585 = vadd.s32 %v2530, 440
        %v2586 = vadd.s32 %v2530, 448
        %v2587 = vadd.s32 %v2530, 456
        %v2588 = vadd.s32 %v2530, 464
        %v2589 = vadd.s32 %v2530, 472
        %v2590 = vadd.s32 %v2530, 480
        %v2591 = vadd.s32 %v2530, 488
        %v2592 = vadd.s32 %v2530, 496
        %v2593 = vadd.s32 %v2530, 504
        %v2594 = vstv %s2528
        %v2595 = vadd.s32 %v2594, %v2530
        %v2596 = vadd.s32 %v2594, %v2531
        %v2597 = vadd.s32 %v2594, %v2532
        %v2598 = vadd.s32 %v2594, %v2533
        %v2599 = vadd.s32 %v2594, %v2534
        %v2600 = vadd.s32 %v2594, %v2535
        %v2601 = vadd.s32 %v2594, %v2536
        %v2602 = vadd.s32 %v2594, %v2537
        %v2603 = vadd.s32 %v2594, %v2538
        %v2604 = vadd.s32 %v2594, %v2539
        %v2605 = vadd.s32 %v2594, %v2540
        %v2606 = vadd.s32 %v2594, %v2541
        %v2607 = vadd.s32 %v2594, %v2542
        %v2608 = vadd.s32 %v2594, %v2543
        %v2609 = vadd.s32 %v2594, %v2544
        %v2610 = vadd.s32 %v2594, %v2545
        %v2611 = vadd.s32 %v2594, %v2546
        %v2612 = vadd.s32 %v2594, %v2547
        %v2613 = vadd.s32 %v2594, %v2548
        %v2614 = vadd.s32 %v2594, %v2549
        %v2615 = vadd.s32 %v2594, %v2550
        %v2616 = vadd.s32 %v2594, %v2551
        %v2617 = vadd.s32 %v2594, %v2552
        %v2618 = vadd.s32 %v2594, %v2553
        %v2619 = vadd.s32 %v2594, %v2554
        %v2620 = vadd.s32 %v2594, %v2555
        %v2621 = vadd.s32 %v2594, %v2556
        %v2622 = vadd.s32 %v2594, %v2557
        %v2623 = vadd.s32 %v2594, %v2558
        %v2624 = vadd.s32 %v2594, %v2559
        %v2625 = vadd.s32 %v2594, %v2560
        %v2626 = vadd.s32 %v2594, %v2561
        %v2627 = vadd.s32 %v2594, %v2562
        %v2628 = vadd.s32 %v2594, %v2563
        %v2629 = vadd.s32 %v2594, %v2564
        %v2630 = vadd.s32 %v2594, %v2565
        %v2631 = vadd.s32 %v2594, %v2566
        %v2632 = vadd.s32 %v2594, %v2567
        %v2633 = vadd.s32 %v2594, %v2568
        %v2634 = vadd.s32 %v2594, %v2569
        %v2635 = vadd.s32 %v2594, %v2570
        %v2636 = vadd.s32 %v2594, %v2571
        %v2637 = vadd.s32 %v2594, %v2572
        %v2638 = vadd.s32 %v2594, %v2573
        %v2639 = vadd.s32 %v2594, %v2574
        %v2640 = vadd.s32 %v2594, %v2575
        %v2641 = vadd.s32 %v2594, %v2576
        %v2642 = vadd.s32 %v2594, %v2577
        %v2643 = vadd.s32 %v2594, %v2578
        %v2644 = vadd.s32 %v2594, %v2579
        %v2645 = vadd.s32 %v2594, %v2580
        %v2646 = vadd.s32 %v2594, %v2581
        %v2647 = vadd.s32 %v2594, %v2582
        %v2648 = vadd.s32 %v2594, %v2583
        %v2649 = vadd.s32 %v2594, %v2584
        %v2650 = vadd.s32 %v2594, %v2585
        %v2651 = vadd.s32 %v2594, %v2586
        %v2652 = vadd.s32 %v2594, %v2587
        %v2653 = vadd.s32 %v2594, %v2588
        %v2654 = vadd.s32 %v2594, %v2589
        %v2655 = vadd.s32 %v2594, %v2590
        %v2656 = vadd.s32 %v2594, %v2591
        %v2657 = vadd.s32 %v2594, %v2592
        %v2658 = vadd.s32 %v2594, %v2593
        %s2659 = sld [smem:[#allocation6 + %s36]]
        %v2660 = vstv %s2659
        %vm2661 = vcmp.lt.s32.totalorder %v2595, %v2660
        %vm2662 = vcmp.lt.s32.totalorder %v2596, %v2660
        %vm2663 = vcmp.lt.s32.totalorder %v2597, %v2660
        %vm2664 = vcmp.lt.s32.totalorder %v2598, %v2660
        %vm2665 = vcmp.lt.s32.totalorder %v2599, %v2660
        %vm2666 = vcmp.lt.s32.totalorder %v2600, %v2660
        %vm2667 = vcmp.lt.s32.totalorder %v2601, %v2660
        %vm2668 = vcmp.lt.s32.totalorder %v2602, %v2660
        %vm2669 = vcmp.lt.s32.totalorder %v2603, %v2660
        %vm2670 = vcmp.lt.s32.totalorder %v2604, %v2660
        %vm2671 = vcmp.lt.s32.totalorder %v2605, %v2660
        %vm2672 = vcmp.lt.s32.totalorder %v2606, %v2660
        %vm2673 = vcmp.lt.s32.totalorder %v2607, %v2660
        %vm2674 = vcmp.lt.s32.totalorder %v2608, %v2660
        %vm2675 = vcmp.lt.s32.totalorder %v2609, %v2660
        %vm2676 = vcmp.lt.s32.totalorder %v2610, %v2660
        %vm2677 = vcmp.lt.s32.totalorder %v2611, %v2660
        %vm2678 = vcmp.lt.s32.totalorder %v2612, %v2660
        %vm2679 = vcmp.lt.s32.totalorder %v2613, %v2660
        %vm2680 = vcmp.lt.s32.totalorder %v2614, %v2660
        %vm2681 = vcmp.lt.s32.totalorder %v2615, %v2660
        %vm2682 = vcmp.lt.s32.totalorder %v2616, %v2660
        %vm2683 = vcmp.lt.s32.totalorder %v2617, %v2660
        %vm2684 = vcmp.lt.s32.totalorder %v2618, %v2660
        %vm2685 = vcmp.lt.s32.totalorder %v2619, %v2660
        %vm2686 = vcmp.lt.s32.totalorder %v2620, %v2660
        %vm2687 = vcmp.lt.s32.totalorder %v2621, %v2660
        %vm2688 = vcmp.lt.s32.totalorder %v2622, %v2660
        %vm2689 = vcmp.lt.s32.totalorder %v2623, %v2660
        %vm2690 = vcmp.lt.s32.totalorder %v2624, %v2660
        %vm2691 = vcmp.lt.s32.totalorder %v2625, %v2660
        %vm2692 = vcmp.lt.s32.totalorder %v2626, %v2660
        %vm2693 = vcmp.lt.s32.totalorder %v2627, %v2660
        %vm2694 = vcmp.lt.s32.totalorder %v2628, %v2660
        %vm2695 = vcmp.lt.s32.totalorder %v2629, %v2660
        %vm2696 = vcmp.lt.s32.totalorder %v2630, %v2660
        %vm2697 = vcmp.lt.s32.totalorder %v2631, %v2660
        %vm2698 = vcmp.lt.s32.totalorder %v2632, %v2660
        %vm2699 = vcmp.lt.s32.totalorder %v2633, %v2660
        %vm2700 = vcmp.lt.s32.totalorder %v2634, %v2660
        %vm2701 = vcmp.lt.s32.totalorder %v2635, %v2660
        %vm2702 = vcmp.lt.s32.totalorder %v2636, %v2660
        %vm2703 = vcmp.lt.s32.totalorder %v2637, %v2660
        %vm2704 = vcmp.lt.s32.totalorder %v2638, %v2660
        %vm2705 = vcmp.lt.s32.totalorder %v2639, %v2660
        %vm2706 = vcmp.lt.s32.totalorder %v2640, %v2660
        %vm2707 = vcmp.lt.s32.totalorder %v2641, %v2660
        %vm2708 = vcmp.lt.s32.totalorder %v2642, %v2660
        %vm2709 = vcmp.lt.s32.totalorder %v2643, %v2660
        %vm2710 = vcmp.lt.s32.totalorder %v2644, %v2660
        %vm2711 = vcmp.lt.s32.totalorder %v2645, %v2660
        %vm2712 = vcmp.lt.s32.totalorder %v2646, %v2660
        %vm2713 = vcmp.lt.s32.totalorder %v2647, %v2660
        %vm2714 = vcmp.lt.s32.totalorder %v2648, %v2660
        %vm2715 = vcmp.lt.s32.totalorder %v2649, %v2660
        %vm2716 = vcmp.lt.s32.totalorder %v2650, %v2660
        %vm2717 = vcmp.lt.s32.totalorder %v2651, %v2660
        %vm2718 = vcmp.lt.s32.totalorder %v2652, %v2660
        %vm2719 = vcmp.lt.s32.totalorder %v2653, %v2660
        %vm2720 = vcmp.lt.s32.totalorder %v2654, %v2660
        %vm2721 = vcmp.lt.s32.totalorder %v2655, %v2660
        %vm2722 = vcmp.lt.s32.totalorder %v2656, %v2660
        %vm2723 = vcmp.lt.s32.totalorder %v2657, %v2660
        %vm2724 = vcmp.lt.s32.totalorder %v2658, %v2660
        %v2725 = vsel %vm2661, %v2210, -1e+30
        %v2726 = vsel %vm2662, %v2215, -1e+30
        %v2727 = vsel %vm2663, %v2220, -1e+30
        %v2728 = vsel %vm2664, %v2225, -1e+30
        %v2729 = vsel %vm2665, %v2230, -1e+30
        %v2730 = vsel %vm2666, %v2235, -1e+30
        %v2731 = vsel %vm2667, %v2240, -1e+30
        %v2732 = vsel %vm2668, %v2245, -1e+30
        %v2733 = vsel %vm2669, %v2250, -1e+30
        %v2734 = vsel %vm2670, %v2255, -1e+30
        %v2735 = vsel %vm2671, %v2260, -1e+30
        %v2736 = vsel %vm2672, %v2265, -1e+30
        %v2737 = vsel %vm2673, %v2270, -1e+30
        %v2738 = vsel %vm2674, %v2275, -1e+30
        %v2739 = vsel %vm2675, %v2280, -1e+30
        %v2740 = vsel %vm2676, %v2285, -1e+30
        %v2741 = vsel %vm2677, %v2290, -1e+30
        %v2742 = vsel %vm2678, %v2295, -1e+30
        %v2743 = vsel %vm2679, %v2300, -1e+30
        %v2744 = vsel %vm2680, %v2305, -1e+30
        %v2745 = vsel %vm2681, %v2310, -1e+30
        %v2746 = vsel %vm2682, %v2315, -1e+30
        %v2747 = vsel %vm2683, %v2320, -1e+30
        %v2748 = vsel %vm2684, %v2325, -1e+30
        %v2749 = vsel %vm2685, %v2330, -1e+30
        %v2750 = vsel %vm2686, %v2335, -1e+30
        %v2751 = vsel %vm2687, %v2340, -1e+30
        %v2752 = vsel %vm2688, %v2345, -1e+30
        %v2753 = vsel %vm2689, %v2350, -1e+30
        %v2754 = vsel %vm2690, %v2355, -1e+30
        %v2755 = vsel %vm2691, %v2360, -1e+30
        %v2756 = vsel %vm2692, %v2365, -1e+30
        %v2757 = vsel %vm2693, %v2370, -1e+30
        %v2758 = vsel %vm2694, %v2375, -1e+30
        %v2759 = vsel %vm2695, %v2380, -1e+30
        %v2760 = vsel %vm2696, %v2385, -1e+30
        %v2761 = vsel %vm2697, %v2390, -1e+30
        %v2762 = vsel %vm2698, %v2395, -1e+30
        %v2763 = vsel %vm2699, %v2400, -1e+30
        %v2764 = vsel %vm2700, %v2405, -1e+30
        %v2765 = vsel %vm2701, %v2410, -1e+30
        %v2766 = vsel %vm2702, %v2415, -1e+30
        %v2767 = vsel %vm2703, %v2420, -1e+30
        %v2768 = vsel %vm2704, %v2425, -1e+30
        %v2769 = vsel %vm2705, %v2430, -1e+30
        %v2770 = vsel %vm2706, %v2435, -1e+30
        %v2771 = vsel %vm2707, %v2440, -1e+30
        %v2772 = vsel %vm2708, %v2445, -1e+30
        %v2773 = vsel %vm2709, %v2450, -1e+30
        %v2774 = vsel %vm2710, %v2455, -1e+30
        %v2775 = vsel %vm2711, %v2460, -1e+30
        %v2776 = vsel %vm2712, %v2465, -1e+30
        %v2777 = vsel %vm2713, %v2470, -1e+30
        %v2778 = vsel %vm2714, %v2475, -1e+30
        %v2779 = vsel %vm2715, %v2480, -1e+30
        %v2780 = vsel %vm2716, %v2485, -1e+30
        %v2781 = vsel %vm2717, %v2490, -1e+30
        %v2782 = vsel %vm2718, %v2495, -1e+30
        %v2783 = vsel %vm2719, %v2500, -1e+30
        %v2784 = vsel %vm2720, %v2505, -1e+30
        %v2785 = vsel %vm2721, %v2510, -1e+30
        %v2786 = vsel %vm2722, %v2515, -1e+30
        %v2787 = vsel %vm2723, %v2520, -1e+30
        %v2788 = vsel %vm2724, %v2525, -1e+30
        %v2789 = vld [vmem:[#allocation2] sm:$0x1]
        %vm2790 = vcmask 7168
        %v2791 = vsel %vm2790, %v2725, -inf
        %v2792 = vsel %vm2790, %v2726, -inf
        %v2793 = vsel %vm2790, %v2727, -inf
        %v2794 = vsel %vm2790, %v2728, -inf
        %v2795 = vsel %vm2790, %v2729, -inf
        %v2796 = vmax.f32 %v2791, %v2795
        %v2797 = vsel %vm2790, %v2730, -inf
        %v2798 = vmax.f32 %v2792, %v2797
        %v2799 = vsel %vm2790, %v2731, -inf
        %v2800 = vmax.f32 %v2793, %v2799
        %v2801 = vsel %vm2790, %v2732, -inf
        %v2802 = vmax.f32 %v2794, %v2801
        %v2803 = vsel %vm2790, %v2733, -inf
        %v2804 = vmax.f32 %v2796, %v2803
        %v2805 = vsel %vm2790, %v2734, -inf
        %v2806 = vmax.f32 %v2798, %v2805
        %v2807 = vsel %vm2790, %v2735, -inf
        %v2808 = vmax.f32 %v2800, %v2807
        %v2809 = vsel %vm2790, %v2736, -inf
        %v2810 = vmax.f32 %v2802, %v2809
        %v2811 = vsel %vm2790, %v2737, -inf
        %v2812 = vmax.f32 %v2804, %v2811
        %v2813 = vsel %vm2790, %v2738, -inf
        %v2814 = vmax.f32 %v2806, %v2813
        %v2815 = vsel %vm2790, %v2739, -inf
        %v2816 = vmax.f32 %v2808, %v2815
        %v2817 = vsel %vm2790, %v2740, -inf
        %v2818 = vmax.f32 %v2810, %v2817
        %v2819 = vsel %vm2790, %v2741, -inf
        %v2820 = vmax.f32 %v2812, %v2819
        %v2821 = vsel %vm2790, %v2742, -inf
        %v2822 = vmax.f32 %v2814, %v2821
        %v2823 = vsel %vm2790, %v2743, -inf
        %v2824 = vmax.f32 %v2816, %v2823
        %v2825 = vsel %vm2790, %v2744, -inf
        %v2826 = vmax.f32 %v2818, %v2825
        %v2827 = vsel %vm2790, %v2745, -inf
        %v2828 = vmax.f32 %v2820, %v2827
        %v2829 = vsel %vm2790, %v2746, -inf
        %v2830 = vmax.f32 %v2822, %v2829
        %v2831 = vsel %vm2790, %v2747, -inf
        %v2832 = vmax.f32 %v2824, %v2831
        %v2833 = vsel %vm2790, %v2748, -inf
        %v2834 = vmax.f32 %v2826, %v2833
        %v2835 = vsel %vm2790, %v2749, -inf
        %v2836 = vmax.f32 %v2828, %v2835
        %v2837 = vsel %vm2790, %v2750, -inf
        %v2838 = vmax.f32 %v2830, %v2837
        %v2839 = vsel %vm2790, %v2751, -inf
        %v2840 = vmax.f32 %v2832, %v2839
        %v2841 = vsel %vm2790, %v2752, -inf
        %v2842 = vmax.f32 %v2834, %v2841
        %v2843 = vsel %vm2790, %v2753, -inf
        %v2844 = vmax.f32 %v2836, %v2843
        %v2845 = vsel %vm2790, %v2754, -inf
        %v2846 = vmax.f32 %v2838, %v2845
        %v2847 = vsel %vm2790, %v2755, -inf
        %v2848 = vmax.f32 %v2840, %v2847
        %v2849 = vsel %vm2790, %v2756, -inf
        %v2850 = vmax.f32 %v2842, %v2849
        %v2851 = vsel %vm2790, %v2757, -inf
        %v2852 = vmax.f32 %v2844, %v2851
        %v2853 = vsel %vm2790, %v2758, -inf
        %v2854 = vmax.f32 %v2846, %v2853
        %v2855 = vsel %vm2790, %v2759, -inf
        %v2856 = vmax.f32 %v2848, %v2855
        %v2857 = vsel %vm2790, %v2760, -inf
        %v2858 = vmax.f32 %v2850, %v2857
        %v2859 = vsel %vm2790, %v2761, -inf
        %v2860 = vmax.f32 %v2852, %v2859
        %v2861 = vsel %vm2790, %v2762, -inf
        %v2862 = vmax.f32 %v2854, %v2861
        %v2863 = vsel %vm2790, %v2763, -inf
        %v2864 = vmax.f32 %v2856, %v2863
        %v2865 = vsel %vm2790, %v2764, -inf
        %v2866 = vmax.f32 %v2858, %v2865
        %v2867 = vsel %vm2790, %v2765, -inf
        %v2868 = vmax.f32 %v2860, %v2867
        %v2869 = vsel %vm2790, %v2766, -inf
        %v2870 = vmax.f32 %v2862, %v2869
        %v2871 = vsel %vm2790, %v2767, -inf
        %v2872 = vmax.f32 %v2864, %v2871
        %v2873 = vsel %vm2790, %v2768, -inf
        %v2874 = vmax.f32 %v2866, %v2873
        %v2875 = vsel %vm2790, %v2769, -inf
        %v2876 = vmax.f32 %v2868, %v2875
        %v2877 = vsel %vm2790, %v2770, -inf
        %v2878 = vmax.f32 %v2870, %v2877
        %v2879 = vsel %vm2790, %v2771, -inf
        %v2880 = vmax.f32 %v2872, %v2879
        %v2881 = vsel %vm2790, %v2772, -inf
        %v2882 = vmax.f32 %v2874, %v2881
        %v2883 = vsel %vm2790, %v2773, -inf
        %v2884 = vmax.f32 %v2876, %v2883
        %v2885 = vsel %vm2790, %v2774, -inf
        %v2886 = vmax.f32 %v2878, %v2885
        %v2887 = vsel %vm2790, %v2775, -inf
        %v2888 = vmax.f32 %v2880, %v2887
        %v2889 = vsel %vm2790, %v2776, -inf
        %v2890 = vmax.f32 %v2882, %v2889
        %v2891 = vsel %vm2790, %v2777, -inf
        %v2892 = vmax.f32 %v2884, %v2891
        %v2893 = vsel %vm2790, %v2778, -inf
        %v2894 = vmax.f32 %v2886, %v2893
        %v2895 = vsel %vm2790, %v2779, -inf
        %v2896 = vmax.f32 %v2888, %v2895
        %v2897 = vsel %vm2790, %v2780, -inf
        %v2898 = vmax.f32 %v2890, %v2897
        %v2899 = vsel %vm2790, %v2781, -inf
        %v2900 = vmax.f32 %v2892, %v2899
        %v2901 = vsel %vm2790, %v2782, -inf
        %v2902 = vmax.f32 %v2894, %v2901
        %v2903 = vsel %vm2790, %v2783, -inf
        %v2904 = vmax.f32 %v2896, %v2903
        %v2905 = vsel %vm2790, %v2784, -inf
        %v2906 = vmax.f32 %v2898, %v2905
        %v2907 = vsel %vm2790, %v2785, -inf
        %v2908 = vmax.f32 %v2900, %v2907
        %v2909 = vsel %vm2790, %v2786, -inf
        %v2910 = vmax.f32 %v2902, %v2909
        %v2911 = vsel %vm2790, %v2787, -inf
        %v2912 = vmax.f32 %v2904, %v2911
        %v2913 = vsel %vm2790, %v2788, -inf
        %v2914 = vmax.f32 %v2906, %v2913
        %v2915 = vmax.f32 %v2908, %v2910
        %v2916 = vmax.f32 %v2912, %v2914
        %v2917 = vmax.f32 %v2915, %v2916
        %v2918 = vrot.slane %v2917, 4
        %v2919 = vmax.f32 %v2917, %v2918
        %v2920 = vrot.slane %v2919, 2
        %v2921 = vmax.f32 %v2919, %v2920
        %v2922 = vrot.slane %v2921, 1
        %v2923 = vmax.f32 %v2921, %v2922
        %v2924 = vmax.f32 %v2789, %v2923
        %v2925 = vsub.f32 %v2789, %v2924
        %v2926 = vmul.f32 %v2925, 1.442695
        %v2927 = vpow.pop %v2926
        %v2929 = vlaneseq
        %v2930 = vshrl.u32 %v2929, 7
        %v2931 = vsub.s32 0, %v2930
        %v2932 = vrot.slane %v2924, %v2931
        %v2934 = vsub.f32 %v2725, %v2932
        %v2935 = vsub.f32 %v2726, %v2932
        %v2936 = vsub.f32 %v2727, %v2932
        %v2937 = vsub.f32 %v2728, %v2932
        %v2938 = vsub.f32 %v2729, %v2932
        %v2939 = vsub.f32 %v2730, %v2932
        %v2940 = vsub.f32 %v2731, %v2932
        %v2941 = vsub.f32 %v2732, %v2932
        %v2942 = vsub.f32 %v2733, %v2932
        %v2943 = vsub.f32 %v2734, %v2932
        %v2944 = vsub.f32 %v2735, %v2932
        %v2945 = vsub.f32 %v2736, %v2932
        %v2946 = vsub.f32 %v2737, %v2932
        %v2947 = vsub.f32 %v2738, %v2932
        %v2948 = vsub.f32 %v2739, %v2932
        %v2949 = vsub.f32 %v2740, %v2932
        %v2950 = vsub.f32 %v2741, %v2932
        %v2951 = vsub.f32 %v2742, %v2932
        %v2952 = vsub.f32 %v2743, %v2932
        %v2953 = vsub.f32 %v2744, %v2932
        %v2954 = vsub.f32 %v2745, %v2932
        %v2955 = vsub.f32 %v2746, %v2932
        %v2956 = vsub.f32 %v2747, %v2932
        %v2957 = vsub.f32 %v2748, %v2932
        %v2958 = vsub.f32 %v2749, %v2932
        %v2959 = vsub.f32 %v2750, %v2932
        %v2960 = vsub.f32 %v2751, %v2932
        %v2961 = vsub.f32 %v2752, %v2932
        %v2962 = vsub.f32 %v2753, %v2932
        %v2963 = vsub.f32 %v2754, %v2932
        %v2964 = vsub.f32 %v2755, %v2932
        %v2965 = vsub.f32 %v2756, %v2932
        %v2966 = vsub.f32 %v2757, %v2932
        %v2967 = vsub.f32 %v2758, %v2932
        %v2968 = vsub.f32 %v2759, %v2932
        %v2969 = vsub.f32 %v2760, %v2932
        %v2970 = vsub.f32 %v2761, %v2932
        %v2971 = vsub.f32 %v2762, %v2932
        %v2972 = vsub.f32 %v2763, %v2932
        %v2973 = vsub.f32 %v2764, %v2932
        %v2974 = vsub.f32 %v2765, %v2932
        %v2975 = vsub.f32 %v2766, %v2932
        %v2976 = vsub.f32 %v2767, %v2932
        %v2977 = vsub.f32 %v2768, %v2932
        %v2978 = vsub.f32 %v2769, %v2932
        %v2979 = vsub.f32 %v2770, %v2932
        %v2980 = vsub.f32 %v2771, %v2932
        %v2981 = vsub.f32 %v2772, %v2932
        %v2982 = vsub.f32 %v2773, %v2932
        %v2983 = vsub.f32 %v2774, %v2932
        %v2984 = vsub.f32 %v2775, %v2932
        %v2985 = vsub.f32 %v2776, %v2932
        %v2986 = vsub.f32 %v2777, %v2932
        %v2987 = vsub.f32 %v2778, %v2932
        %v2988 = vsub.f32 %v2779, %v2932
        %v2989 = vsub.f32 %v2780, %v2932
        %v2990 = vsub.f32 %v2781, %v2932
        %v2991 = vsub.f32 %v2782, %v2932
        %v2992 = vsub.f32 %v2783, %v2932
        %v2993 = vsub.f32 %v2784, %v2932
        %v2994 = vsub.f32 %v2785, %v2932
        %v2995 = vsub.f32 %v2786, %v2932
        %v2996 = vsub.f32 %v2787, %v2932
        %v2997 = vsub.f32 %v2788, %v2932
        %v2998 = vmul.f32 %v2934, 1.442695
        %v2999 = vpow.pop %v2998
        %v3000 = vmul.f32 %v2935, 1.442695
        %v3001 = vpow.pop %v3000
        %v3002 = vmul.f32 %v2936, 1.442695
        %v3003 = vpow.pop %v3002
        %v3004 = vmul.f32 %v2937, 1.442695
        %v3005 = vpow.pop %v3004
        %v3006 = vmul.f32 %v2938, 1.442695
        %v3007 = vpow.pop %v3006
        %v3008 = vmul.f32 %v2939, 1.442695
        %v3009 = vpow.pop %v3008
        %v3010 = vmul.f32 %v2940, 1.442695
        %v3011 = vpow.pop %v3010
        %v3012 = vmul.f32 %v2941, 1.442695
        %v3013 = vpow.pop %v3012
        %v3014 = vmul.f32 %v2942, 1.442695
        %v3015 = vpow.pop %v3014
        %v3016 = vmul.f32 %v2943, 1.442695
        %v3017 = vpow.pop %v3016
        %v3018 = vmul.f32 %v2944, 1.442695
        %v3019 = vpow.pop %v3018
        %v3020 = vmul.f32 %v2945, 1.442695
        %v3021 = vpow.pop %v3020
        %v3022 = vmul.f32 %v2946, 1.442695
        %v3023 = vpow.pop %v3022
        %v3024 = vmul.f32 %v2947, 1.442695
        %v3025 = vpow.pop %v3024
        %v3026 = vmul.f32 %v2948, 1.442695
        %v3027 = vpow.pop %v3026
        %v3028 = vmul.f32 %v2949, 1.442695
        %v3029 = vpow.pop %v3028
        %v3030 = vmul.f32 %v2950, 1.442695
        %v3031 = vpow.pop %v3030
        %v3032 = vmul.f32 %v2951, 1.442695
        %v3033 = vpow.pop %v3032
        %v3034 = vmul.f32 %v2952, 1.442695
        %v3035 = vpow.pop %v3034
        %v3036 = vmul.f32 %v2953, 1.442695
        %v3037 = vpow.pop %v3036
        %v3038 = vmul.f32 %v2954, 1.442695
        %v3039 = vpow.pop %v3038
        %v3040 = vmul.f32 %v2955, 1.442695
        %v3041 = vpow.pop %v3040
        %v3042 = vmul.f32 %v2956, 1.442695
        %v3043 = vpow.pop %v3042
        %v3044 = vmul.f32 %v2957, 1.442695
        %v3045 = vpow.pop %v3044
        %v3046 = vmul.f32 %v2958, 1.442695
        %v3047 = vpow.pop %v3046
        %v3048 = vmul.f32 %v2959, 1.442695
        %v3049 = vpow.pop %v3048
        %v3050 = vmul.f32 %v2960, 1.442695
        %v3051 = vpow.pop %v3050
        %v3052 = vmul.f32 %v2961, 1.442695
        %v3053 = vpow.pop %v3052
        %v3054 = vmul.f32 %v2962, 1.442695
        %v3055 = vpow.pop %v3054
        %v3056 = vmul.f32 %v2963, 1.442695
        %v3057 = vpow.pop %v3056
        %v3058 = vmul.f32 %v2964, 1.442695
        %v3059 = vpow.pop %v3058
        %v3060 = vmul.f32 %v2965, 1.442695
        %v3061 = vpow.pop %v3060
        %v3062 = vmul.f32 %v2966, 1.442695
        %v3063 = vpow.pop %v3062
        %v3064 = vmul.f32 %v2967, 1.442695
        %v3065 = vpow.pop %v3064
        %v3066 = vmul.f32 %v2968, 1.442695
        %v3067 = vpow.pop %v3066
        %v3068 = vmul.f32 %v2969, 1.442695
        %v3069 = vpow.pop %v3068
        %v3070 = vmul.f32 %v2970, 1.442695
        %v3071 = vpow.pop %v3070
        %v3072 = vmul.f32 %v2971, 1.442695
        %v3073 = vpow.pop %v3072
        %v3074 = vmul.f32 %v2972, 1.442695
        %v3075 = vpow.pop %v3074
        %v3076 = vmul.f32 %v2973, 1.442695
        %v3077 = vpow.pop %v3076
        %v3078 = vmul.f32 %v2974, 1.442695
        %v3079 = vpow.pop %v3078
        %v3080 = vmul.f32 %v2975, 1.442695
        %v3081 = vpow.pop %v3080
        %v3082 = vmul.f32 %v2976, 1.442695
        %v3083 = vpow.pop %v3082
        %v3084 = vmul.f32 %v2977, 1.442695
        %v3085 = vpow.pop %v3084
        %v3086 = vmul.f32 %v2978, 1.442695
        %v3087 = vpow.pop %v3086
        %v3088 = vmul.f32 %v2979, 1.442695
        %v3089 = vpow.pop %v3088
        %v3090 = vmul.f32 %v2980, 1.442695
        %v3091 = vpow.pop %v3090
        %v3092 = vmul.f32 %v2981, 1.442695
        %v3093 = vpow.pop %v3092
        %v3094 = vmul.f32 %v2982, 1.442695
        %v3095 = vpow.pop %v3094
        %v3096 = vmul.f32 %v2983, 1.442695
        %v3097 = vpow.pop %v3096
        %v3098 = vmul.f32 %v2984, 1.442695
        %v3099 = vpow.pop %v3098
        %v3100 = vmul.f32 %v2985, 1.442695
        %v3101 = vpow.pop %v3100
        %v3102 = vmul.f32 %v2986, 1.442695
        %v3103 = vpow.pop %v3102
        %v3104 = vmul.f32 %v2987, 1.442695
        %v3105 = vpow.pop %v3104
        %v3106 = vmul.f32 %v2988, 1.442695
        %v3107 = vpow.pop %v3106
        %v3108 = vmul.f32 %v2989, 1.442695
        %v3109 = vpow.pop %v3108
        %v3110 = vmul.f32 %v2990, 1.442695
        %v3111 = vpow.pop %v3110
        %v3112 = vmul.f32 %v2991, 1.442695
        %v3113 = vpow.pop %v3112
        %v3114 = vmul.f32 %v2992, 1.442695
        %v3115 = vpow.pop %v3114
        %v3116 = vmul.f32 %v2993, 1.442695
        %v3117 = vpow.pop %v3116
        %v3118 = vmul.f32 %v2994, 1.442695
        %v3119 = vpow.pop %v3118
        %v3120 = vmul.f32 %v2995, 1.442695
        %v3121 = vpow.pop %v3120
        %v3122 = vmul.f32 %v2996, 1.442695
        %v3123 = vpow.pop %v3122
        %v3124 = vmul.f32 %v2997, 1.442695
        %v3125 = vpow.pop %v3124
        %v3126 = vld [vmem:[#allocation3] sm:$0x1]
        %v3127 = vmul.f32 %v2927, %v3126
        %v3128 = vsel %vm2790, %v2999, 0.0
        %v3129 = vsel %vm2790, %v3001, 0.0
        %v3130 = vadd.f32 %v3128, %v3129
        %v3131 = vsel %vm2790, %v3003, 0.0
        %v3132 = vadd.f32 %v3130, %v3131
        %v3133 = vsel %vm2790, %v3005, 0.0
        %v3134 = vadd.f32 %v3132, %v3133
        %v3135 = vsel %vm2790, %v3007, 0.0
        %v3136 = vadd.f32 %v3134, %v3135
        %v3137 = vsel %vm2790, %v3009, 0.0
        %v3138 = vadd.f32 %v3136, %v3137
        %v3139 = vsel %vm2790, %v3011, 0.0
        %v3140 = vadd.f32 %v3138, %v3139
        %v3141 = vsel %vm2790, %v3013, 0.0
        %v3142 = vadd.f32 %v3140, %v3141
        %v3143 = vsel %vm2790, %v3015, 0.0
        %v3144 = vadd.f32 %v3142, %v3143
        %v3145 = vsel %vm2790, %v3017, 0.0
        %v3146 = vadd.f32 %v3144, %v3145
        %v3147 = vsel %vm2790, %v3019, 0.0
        %v3148 = vadd.f32 %v3146, %v3147
        %v3149 = vsel %vm2790, %v3021, 0.0
        %v3150 = vadd.f32 %v3148, %v3149
        %v3151 = vsel %vm2790, %v3023, 0.0
        %v3152 = vadd.f32 %v3150, %v3151
        %v3153 = vsel %vm2790, %v3025, 0.0
        %v3154 = vadd.f32 %v3152, %v3153
        %v3155 = vsel %vm2790, %v3027, 0.0
        %v3156 = vadd.f32 %v3154, %v3155
        %v3157 = vsel %vm2790, %v3029, 0.0
        %v3158 = vadd.f32 %v3156, %v3157
        %v3159 = vsel %vm2790, %v3031, 0.0
        %v3160 = vadd.f32 %v3158, %v3159
        %v3161 = vsel %vm2790, %v3033, 0.0
        %v3162 = vadd.f32 %v3160, %v3161
        %v3163 = vsel %vm2790, %v3035, 0.0
        %v3164 = vadd.f32 %v3162, %v3163
        %v3165 = vsel %vm2790, %v3037, 0.0
        %v3166 = vadd.f32 %v3164, %v3165
        %v3167 = vsel %vm2790, %v3039, 0.0
        %v3168 = vadd.f32 %v3166, %v3167
        %v3169 = vsel %vm2790, %v3041, 0.0
        %v3170 = vadd.f32 %v3168, %v3169
        %v3171 = vsel %vm2790, %v3043, 0.0
        %v3172 = vadd.f32 %v3170, %v3171
        %v3173 = vsel %vm2790, %v3045, 0.0
        %v3174 = vadd.f32 %v3172, %v3173
        %v3175 = vsel %vm2790, %v3047, 0.0
        %v3176 = vadd.f32 %v3174, %v3175
        %v3177 = vsel %vm2790, %v3049, 0.0
        %v3178 = vadd.f32 %v3176, %v3177
        %v3179 = vsel %vm2790, %v3051, 0.0
        %v3180 = vadd.f32 %v3178, %v3179
        %v3181 = vsel %vm2790, %v3053, 0.0
        %v3182 = vadd.f32 %v3180, %v3181
        %v3183 = vsel %vm2790, %v3055, 0.0
        %v3184 = vadd.f32 %v3182, %v3183
        %v3185 = vsel %vm2790, %v3057, 0.0
        %v3186 = vadd.f32 %v3184, %v3185
        %v3187 = vsel %vm2790, %v3059, 0.0
        %v3188 = vadd.f32 %v3186, %v3187
        %v3189 = vsel %vm2790, %v3061, 0.0
        %v3190 = vadd.f32 %v3188, %v3189
        %v3191 = vsel %vm2790, %v3063, 0.0
        %v3192 = vadd.f32 %v3190, %v3191
        %v3193 = vsel %vm2790, %v3065, 0.0
        %v3194 = vadd.f32 %v3192, %v3193
        %v3195 = vsel %vm2790, %v3067, 0.0
        %v3196 = vadd.f32 %v3194, %v3195
        %v3197 = vsel %vm2790, %v3069, 0.0
        %v3198 = vadd.f32 %v3196, %v3197
        %v3199 = vsel %vm2790, %v3071, 0.0
        %v3200 = vadd.f32 %v3198, %v3199
        %v3201 = vsel %vm2790, %v3073, 0.0
        %v3202 = vadd.f32 %v3200, %v3201
        %v3203 = vsel %vm2790, %v3075, 0.0
        %v3204 = vadd.f32 %v3202, %v3203
        %v3205 = vsel %vm2790, %v3077, 0.0
        %v3206 = vadd.f32 %v3204, %v3205
        %v3207 = vsel %vm2790, %v3079, 0.0
        %v3208 = vadd.f32 %v3206, %v3207
        %v3209 = vsel %vm2790, %v3081, 0.0
        %v3210 = vadd.f32 %v3208, %v3209
        %v3211 = vsel %vm2790, %v3083, 0.0
        %v3212 = vadd.f32 %v3210, %v3211
        %v3213 = vsel %vm2790, %v3085, 0.0
        %v3214 = vadd.f32 %v3212, %v3213
        %v3215 = vsel %vm2790, %v3087, 0.0
        %v3216 = vadd.f32 %v3214, %v3215
        %v3217 = vsel %vm2790, %v3089, 0.0
        %v3218 = vadd.f32 %v3216, %v3217
        %v3219 = vsel %vm2790, %v3091, 0.0
        %v3220 = vadd.f32 %v3218, %v3219
        %v3221 = vsel %vm2790, %v3093, 0.0
        %v3222 = vadd.f32 %v3220, %v3221
        %v3223 = vsel %vm2790, %v3095, 0.0
        %v3224 = vadd.f32 %v3222, %v3223
        %v3225 = vsel %vm2790, %v3097, 0.0
        %v3226 = vadd.f32 %v3224, %v3225
        %v3227 = vsel %vm2790, %v3099, 0.0
        %v3228 = vadd.f32 %v3226, %v3227
        %v3229 = vsel %vm2790, %v3101, 0.0
        %v3230 = vadd.f32 %v3228, %v3229
        %v3231 = vsel %vm2790, %v3103, 0.0
        %v3232 = vadd.f32 %v3230, %v3231
        %v3233 = vsel %vm2790, %v3105, 0.0
        %v3234 = vadd.f32 %v3232, %v3233
        %v3235 = vsel %vm2790, %v3107, 0.0
        %v3236 = vadd.f32 %v3234, %v3235
        %v3237 = vsel %vm2790, %v3109, 0.0
        %v3238 = vadd.f32 %v3236, %v3237
        %v3239 = vsel %vm2790, %v3111, 0.0
        %v3240 = vadd.f32 %v3238, %v3239
        %v3241 = vsel %vm2790, %v3113, 0.0
        %v3242 = vadd.f32 %v3240, %v3241
        %v3243 = vsel %vm2790, %v3115, 0.0
        %v3244 = vadd.f32 %v3242, %v3243
        %v3245 = vsel %vm2790, %v3117, 0.0
        %v3246 = vadd.f32 %v3244, %v3245
        %v3247 = vsel %vm2790, %v3119, 0.0
        %v3248 = vadd.f32 %v3246, %v3247
        %v3249 = vsel %vm2790, %v3121, 0.0
        %v3250 = vadd.f32 %v3248, %v3249
        %v3251 = vsel %vm2790, %v3123, 0.0
        %v3252 = vadd.f32 %v3250, %v3251
        %v3253 = vsel %vm2790, %v3125, 0.0
        %v3254 = vadd.f32 %v3252, %v3253
        %v3255 = vrot.slane %v3254, 4
        %v3256 = vadd.f32 %v3254, %v3255
        %v3257 = vrot.slane %v3256, 2
        %v3258 = vadd.f32 %v3256, %v3257
        %v3259 = vrot.slane %v3258, 1
        %v3260 = vadd.f32 %v3258, %v3259
        %v3261 = vadd.f32 %v3127, %v3260
        %vm3262 = vcmask 0
        %3263 = vst.msk [vmem:[#allocation3] sm:$0x1] %vm3262, %v3261
        %v3264 = vld [vmem:[#allocation4] sm:$0x1]
        %3266 = vset.pattern.permute.xlu0 0
        %3267 = vperm.xlu0 %3266, %v2927
        %v3268 = vpop.permute.xlu0 %3267
        %v3270 = vlaneseq
        %v3271 = vshrl.u32 %v3270, 7
        %v3272 = vsub.s32 0, %v3271
        %v3273 = vrot.slane %v3268, %v3272
        %v3274 = vmul.f32 %v3273, %v3264
        %3275 = vxpose.xlu0.b32.start [1/16] %v2999, 128
        %3276 = vxpose.xlu0.b32.cont [2/16] %v3001, 128
        %3277 = vxpose.xlu0.b32.cont [3/16] %v3003, 128
        %3278 = vxpose.xlu0.b32.cont [4/16] %v3005, 128
        %3279 = vxpose.xlu0.b32.cont [5/16] %v3007, 128
        %3280 = vxpose.xlu0.b32.cont [6/16] %v3009, 128
        %3281 = vxpose.xlu0.b32.cont [7/16] %v3011, 128
        %3282 = vxpose.xlu0.b32.cont [8/16] %v3013, 128
        %3283 = vxpose.xlu0.b32.cont [9/16] %v3015, 128
        %3284 = vxpose.xlu0.b32.cont [10/16] %v3017, 128
        %3285 = vxpose.xlu0.b32.cont [11/16] %v3019, 128
        %3286 = vxpose.xlu0.b32.cont [12/16] %v3021, 128
        %3287 = vxpose.xlu0.b32.cont [13/16] %v3023, 128
        %3288 = vxpose.xlu0.b32.cont [14/16] %v3025, 128
        %3289 = vxpose.xlu0.b32.cont [15/16] %v3027, 128
        %3290 = vxpose.xlu0.b32.end [16/16] %v3029, 128
        %v3291 = vpop.trf.xlu0
        %v3292 = vpop.trf.xlu0
        %v3293 = vpop.trf.xlu0
        %v3294 = vpop.trf.xlu0
        %v3295 = vpop.trf.xlu0
        %v3296 = vpop.trf.xlu0
        %v3297 = vpop.trf.xlu0
        %v3298 = vpop.trf.xlu0
        %v3299 = vpop.trf.xlu0
        %v3300 = vpop.trf.xlu0
        %v3301 = vpop.trf.xlu0
        %v3302 = vpop.trf.xlu0
        %v3303 = vpop.trf.xlu0
        %v3304 = vpop.trf.xlu0
        %v3305 = vpop.trf.xlu0
        %v3306 = vpop.trf.xlu0
        %3307 = vxpose.xlu0.b32.start [1/16] %v3031, 128
        %3308 = vxpose.xlu0.b32.cont [2/16] %v3033, 128
        %3309 = vxpose.xlu0.b32.cont [3/16] %v3035, 128
        %3310 = vxpose.xlu0.b32.cont [4/16] %v3037, 128
        %3311 = vxpose.xlu0.b32.cont [5/16] %v3039, 128
        %3312 = vxpose.xlu0.b32.cont [6/16] %v3041, 128
        %3313 = vxpose.xlu0.b32.cont [7/16] %v3043, 128
        %3314 = vxpose.xlu0.b32.cont [8/16] %v3045, 128
        %3315 = vxpose.xlu0.b32.cont [9/16] %v3047, 128
        %3316 = vxpose.xlu0.b32.cont [10/16] %v3049, 128
        %3317 = vxpose.xlu0.b32.cont [11/16] %v3051, 128
        %3318 = vxpose.xlu0.b32.cont [12/16] %v3053, 128
        %3319 = vxpose.xlu0.b32.cont [13/16] %v3055, 128
        %3320 = vxpose.xlu0.b32.cont [14/16] %v3057, 128
        %3321 = vxpose.xlu0.b32.cont [15/16] %v3059, 128
        %3322 = vxpose.xlu0.b32.end [16/16] %v3061, 128
        %v3323 = vpop.trf.xlu0
        %v3324 = vpop.trf.xlu0
        %v3325 = vpop.trf.xlu0
        %v3326 = vpop.trf.xlu0
        %v3327 = vpop.trf.xlu0
        %v3328 = vpop.trf.xlu0
        %v3329 = vpop.trf.xlu0
        %v3330 = vpop.trf.xlu0
        %v3331 = vpop.trf.xlu0
        %v3332 = vpop.trf.xlu0
        %v3333 = vpop.trf.xlu0
        %v3334 = vpop.trf.xlu0
        %v3335 = vpop.trf.xlu0
        %v3336 = vpop.trf.xlu0
        %v3337 = vpop.trf.xlu0
        %v3338 = vpop.trf.xlu0
        %3339 = vxpose.xlu0.b32.start [1/16] %v3063, 128
        %3340 = vxpose.xlu0.b32.cont [2/16] %v3065, 128
        %3341 = vxpose.xlu0.b32.cont [3/16] %v3067, 128
        %3342 = vxpose.xlu0.b32.cont [4/16] %v3069, 128
        %3343 = vxpose.xlu0.b32.cont [5/16] %v3071, 128
        %3344 = vxpose.xlu0.b32.cont [6/16] %v3073, 128
        %3345 = vxpose.xlu0.b32.cont [7/16] %v3075, 128
        %3346 = vxpose.xlu0.b32.cont [8/16] %v3077, 128
        %3347 = vxpose.xlu0.b32.cont [9/16] %v3079, 128
        %3348 = vxpose.xlu0.b32.cont [10/16] %v3081, 128
        %3349 = vxpose.xlu0.b32.cont [11/16] %v3083, 128
        %3350 = vxpose.xlu0.b32.cont [12/16] %v3085, 128
        %3351 = vxpose.xlu0.b32.cont [13/16] %v3087, 128
        %3352 = vxpose.xlu0.b32.cont [14/16] %v3089, 128
        %3353 = vxpose.xlu0.b32.cont [15/16] %v3091, 128
        %3354 = vxpose.xlu0.b32.end [16/16] %v3093, 128
        %v3355 = vpop.trf.xlu0
        %v3356 = vpop.trf.xlu0
        %v3357 = vpop.trf.xlu0
        %v3358 = vpop.trf.xlu0
        %v3359 = vpop.trf.xlu0
        %v3360 = vpop.trf.xlu0
        %v3361 = vpop.trf.xlu0
        %v3362 = vpop.trf.xlu0
        %v3363 = vpop.trf.xlu0
        %v3364 = vpop.trf.xlu0
        %v3365 = vpop.trf.xlu0
        %v3366 = vpop.trf.xlu0
        %v3367 = vpop.trf.xlu0
        %v3368 = vpop.trf.xlu0
        %v3369 = vpop.trf.xlu0
        %v3370 = vpop.trf.xlu0
        %3371 = vxpose.xlu0.b32.start [1/16] %v3095, 128
        %3372 = vxpose.xlu0.b32.cont [2/16] %v3097, 128
        %3373 = vxpose.xlu0.b32.cont [3/16] %v3099, 128
        %3374 = vxpose.xlu0.b32.cont [4/16] %v3101, 128
        %3375 = vxpose.xlu0.b32.cont [5/16] %v3103, 128
        %3376 = vxpose.xlu0.b32.cont [6/16] %v3105, 128
        %3377 = vxpose.xlu0.b32.cont [7/16] %v3107, 128
        %3378 = vxpose.xlu0.b32.cont [8/16] %v3109, 128
        %3379 = vxpose.xlu0.b32.cont [9/16] %v3111, 128
        %3380 = vxpose.xlu0.b32.cont [10/16] %v3113, 128
        %3381 = vxpose.xlu0.b32.cont [11/16] %v3115, 128
        %3382 = vxpose.xlu0.b32.cont [12/16] %v3117, 128
        %3383 = vxpose.xlu0.b32.cont [13/16] %v3119, 128
        %3384 = vxpose.xlu0.b32.cont [14/16] %v3121, 128
        %3385 = vxpose.xlu0.b32.cont [15/16] %v3123, 128
        %3386 = vxpose.xlu0.b32.end [16/16] %v3125, 128
        %v3387 = vpop.trf.xlu0
        %v3388 = vpop.trf.xlu0
        %v3389 = vpop.trf.xlu0
        %v3390 = vpop.trf.xlu0
        %v3391 = vpop.trf.xlu0
        %v3392 = vpop.trf.xlu0
        %v3393 = vpop.trf.xlu0
        %v3394 = vpop.trf.xlu0
        %v3395 = vpop.trf.xlu0
        %v3396 = vpop.trf.xlu0
        %v3397 = vpop.trf.xlu0
        %v3398 = vpop.trf.xlu0
        %v3399 = vpop.trf.xlu0
        %v3400 = vpop.trf.xlu0
        %v3401 = vpop.trf.xlu0
        %v3402 = vpop.trf.xlu0
        %3403 = vmatprep.subr.mxu0 0.0
        %3404 = vmatpush1.msra.mxu0 %v1026
        %3405 = vmatprep.subr.mxu0 0.0
        %3406 = vmatpush1.msra.mxu0 %v1027
        %3407 = vmatprep.subr.mxu0 0.0
        %3408 = vmatpush1.msra.mxu0 %v1028
        %3409 = vmatprep.subr.mxu0 0.0
        %3410 = vmatpush1.msra.mxu0 %v1029
        %3411 = vmatprep.subr.mxu0 0.0
        %3412 = vmatpush1.msra.mxu0 %v1030
        %3413 = vmatprep.subr.mxu0 0.0
        %3414 = vmatpush1.msra.mxu0 %v1031
        %3415 = vmatprep.subr.mxu0 0.0
        %3416 = vmatpush1.msra.mxu0 %v1032
        %3417 = vmatprep.subr.mxu0 0.0
        %3418 = vmatpush1.msra.mxu0 %v1033
        %3419 = vmatprep.subr.mxu0 0.0
        %3420 = vmatpush1.msra.mxu0 %v1034
        %3421 = vmatprep.subr.mxu0 0.0
        %3422 = vmatpush1.msra.mxu0 %v1035
        %3423 = vmatprep.subr.mxu0 0.0
        %3424 = vmatpush1.msra.mxu0 %v1036
        %3425 = vmatprep.subr.mxu0 0.0
        %3426 = vmatpush1.msra.mxu0 %v1037
        %3427 = vmatprep.subr.mxu0 0.0
        %3428 = vmatpush1.msra.mxu0 %v1038
        %3429 = vmatprep.subr.mxu0 0.0
        %3430 = vmatpush1.msra.mxu0 %v1039
        %3431 = vmatprep.subr.mxu0 0.0
        %3432 = vmatpush1.msra.mxu0 %v1040
        %3433 = vmatprep.subr.mxu0 0.0
        %3434 = vmatpush1.msra.mxu0 %v1041
        %3435 = vmatprep.subr.mxu0 0.0
        %3436 = vmatpush1.msra.mxu0 %v1042
        %3437 = vmatprep.subr.mxu0 0.0
        %3438 = vmatpush1.msra.mxu0 %v1043
        %3439 = vmatprep.subr.mxu0 0.0
        %3440 = vmatpush1.msra.mxu0 %v1044
        %3441 = vmatprep.subr.mxu0 0.0
        %3442 = vmatpush1.msra.mxu0 %v1045
        %3443 = vmatprep.subr.mxu0 0.0
        %3444 = vmatpush1.msra.mxu0 %v1046
        %3445 = vmatprep.subr.mxu0 0.0
        %3446 = vmatpush1.msra.mxu0 %v1047
        %3447 = vmatprep.subr.mxu0 0.0
        %3448 = vmatpush1.msra.mxu0 %v1048
        %3449 = vmatprep.subr.mxu0 0.0
        %3450 = vmatpush1.msra.mxu0 %v1049
        %3451 = vmatprep.subr.mxu0 0.0
        %3452 = vmatpush1.msra.mxu0 %v1050
        %3453 = vmatprep.subr.mxu0 0.0
        %3454 = vmatpush1.msra.mxu0 %v1051
        %3455 = vmatprep.subr.mxu0 0.0
        %3456 = vmatpush1.msra.mxu0 %v1052
        %3457 = vmatprep.subr.mxu0 0.0
        %3458 = vmatpush1.msra.mxu0 %v1053
        %3459 = vmatprep.subr.mxu0 0.0
        %3460 = vmatpush1.msra.mxu0 %v1054
        %3461 = vmatprep.subr.mxu0 0.0
        %3462 = vmatpush1.msra.mxu0 %v1055
        %3463 = vmatprep.subr.mxu0 0.0
        %3464 = vmatpush1.msra.mxu0 %v1056
        %3465 = vmatprep.subr.mxu0 0.0
        %3466 = vmatpush1.msra.mxu0 %v1057
        %3467 = vmatprep.mubr.f32.mxu0 %v3323
        %3468 = vmatmul.mubr.f32.gmra.mrb[0].mxu0 %v3291
        %v3469 = vpop.f32.mrb[0].mxu0
        %v3470 = vadd.f32 0.0, %v3469
        %v3471 = vpop.f32.mrb[0].mxu0
        %3472 = vdwg.mxu0
        %3473 = vmatprep.subr.mxu0 0.0
        %3474 = vmatpush1.msra.mxu0 %v1058
        %3475 = vmatprep.subr.mxu0 0.0
        %3476 = vmatpush1.msra.mxu0 %v1059
        %3477 = vmatprep.subr.mxu0 0.0
        %3478 = vmatpush1.msra.mxu0 %v1060
        %3479 = vmatprep.subr.mxu0 0.0
        %3480 = vmatpush1.msra.mxu0 %v1061
        %3481 = vmatprep.subr.mxu0 0.0
        %3482 = vmatpush1.msra.mxu0 %v1062
        %3483 = vmatprep.subr.mxu0 0.0
        %3484 = vmatpush1.msra.mxu0 %v1063
        %3485 = vmatprep.subr.mxu0 0.0
        %3486 = vmatpush1.msra.mxu0 %v1064
        %3487 = vmatprep.subr.mxu0 0.0
        %3488 = vmatpush1.msra.mxu0 %v1065
        %3489 = vmatprep.subr.mxu0 0.0
        %3490 = vmatpush1.msra.mxu0 %v1066
        %3491 = vmatprep.subr.mxu0 0.0
        %3492 = vmatpush1.msra.mxu0 %v1067
        %3493 = vmatprep.subr.mxu0 0.0
        %3494 = vmatpush1.msra.mxu0 %v1068
        %3495 = vmatprep.subr.mxu0 0.0
        %3496 = vmatpush1.msra.mxu0 %v1069
        %3497 = vmatprep.subr.mxu0 0.0
        %3498 = vmatpush1.msra.mxu0 %v1070
        %3499 = vmatprep.subr.mxu0 0.0
        %3500 = vmatpush1.msra.mxu0 %v1071
        %3501 = vmatprep.subr.mxu0 0.0
        %3502 = vmatpush1.msra.mxu0 %v1072
        %3503 = vmatprep.subr.mxu0 0.0
        %3504 = vmatpush1.msra.mxu0 %v1073
        %3505 = vmatprep.subr.mxu0 0.0
        %3506 = vmatpush1.msra.mxu0 %v1074
        %3507 = vmatprep.subr.mxu0 0.0
        %3508 = vmatpush1.msra.mxu0 %v1075
        %3509 = vmatprep.subr.mxu0 0.0
        %3510 = vmatpush1.msra.mxu0 %v1076
        %3511 = vmatprep.subr.mxu0 0.0
        %3512 = vmatpush1.msra.mxu0 %v1077
        %3513 = vmatprep.subr.mxu0 0.0
        %3514 = vmatpush1.msra.mxu0 %v1078
        %3515 = vmatprep.subr.mxu0 0.0
        %3516 = vmatpush1.msra.mxu0 %v1079
        %3517 = vmatprep.subr.mxu0 0.0
        %3518 = vmatpush1.msra.mxu0 %v1080
        %3519 = vmatprep.subr.mxu0 0.0
        %3520 = vmatpush1.msra.mxu0 %v1081
        %3521 = vmatprep.subr.mxu0 0.0
        %3522 = vmatpush1.msra.mxu0 %v1082
        %3523 = vmatprep.subr.mxu0 0.0
        %3524 = vmatpush1.msra.mxu0 %v1083
        %3525 = vmatprep.subr.mxu0 0.0
        %3526 = vmatpush1.msra.mxu0 %v1084
        %3527 = vmatprep.subr.mxu0 0.0
        %3528 = vmatpush1.msra.mxu0 %v1085
        %3529 = vmatprep.subr.mxu0 0.0
        %3530 = vmatpush1.msra.mxu0 %v1086
        %3531 = vmatprep.subr.mxu0 0.0
        %3532 = vmatpush1.msra.mxu0 %v1087
        %3533 = vmatprep.subr.mxu0 0.0
        %3534 = vmatpush1.msra.mxu0 %v1088
        %3535 = vmatprep.subr.mxu0 0.0
        %3536 = vmatpush1.msra.mxu0 %v1089
        %3537 = vmatprep.mubr.f32.mxu0 %v3387
        %3538 = vmatmul.mubr.f32.gmra.mrb[0].mxu0 %v3355
        %v3539 = vpop.f32.mrb[0].mxu0
        %v3540 = vadd.f32 %v3470, %v3539
        %v3541 = vpop.f32.mrb[0].mxu0
        %3542 = vdwg.mxu0
        %v3543 = vadd.f32 %v3274, %v3540
        %vm3544 = vcmask 253952
        %3545 = vst.msk [vmem:[#allocation4] sm:$0x1] %vm3544, %v3543
        %3546 = vst.msk [vmem:[#allocation2] sm:$0x1] %vm3262, %v2924
        // Predicated region
        $region61: #{tpu_custom_call.1} parent=55 // pred_check
          %p3547 = pneg %p368
        $region62: #{tpu_custom_call.1} parent=55 // pred_check_branch
          %3549 = sbr.rel (%p3547) target = $region64
        $region63: #{tpu_custom_call.1} parent=55 // pred_region
          %v3550 = vld [vmem:[#allocation3] sm:$0x1]
          %v3551 = vmax.f32 %v3550, 1e-30
          %v3552 = vrcp.pop %v3551
          %v3553 = vmul.f32 1.0, %v3552
          %v3554 = vld [vmem:[#allocation4] sm:$0x1]
          %3556 = vset.pattern.permute.xlu0 0
          %3557 = vperm.xlu0 %3556, %v3553
          %v3558 = vpop.permute.xlu0 %3557
          %v3560 = vlaneseq
          %v3561 = vshrl.u32 %v3560, 7
          %v3562 = vsub.s32 0, %v3561
          %v3563 = vrot.slane %v3558, %v3562
          %v3564 = vmul.f32 %v3554, %v3563
          %v3565 = vld [vmem:[%s8] sm:$0xff]
          %v3566 = vld [vmem:[%s8 + $0x8] sm:$0xff]
          %v3567 = vld [vmem:[%s8 + $0x10] sm:$0xff]
          %v3568 = vld [vmem:[%s8 + $0x18] sm:$0xff]
          %v3569 = vld [vmem:[%s9] sm:$0x1]
          %v3571 = vsel %vm1158, %v3564, 0
          %3573 = vmatprep.subr.mxu0 0.0
          %3574 = vmatpush1.msra.mxu0 %v3565
          %3575 = vmatprep.subr.mxu0 0.0
          %3576 = vmatpush1.msra.mxu0 %v3566
          %3577 = vmatprep.subr.mxu0 0.0
          %3578 = vmatpush1.msra.mxu0 %v3567
          %3579 = vmatprep.subr.mxu0 0.0
          %3580 = vmatpush1.msra.mxu0 %v3568
          %3581 = vmatprep.subr.mxu0 0.0
          %3582 = vmatpush1.msra.mxu0 0.0
          %3583 = vmatprep.subr.mxu0 0.0
          %3584 = vmatpush1.msra.mxu0 0.0
          %3585 = vmatprep.subr.mxu0 0.0
          %3586 = vmatpush1.msra.mxu0 0.0
          %3587 = vmatprep.subr.mxu0 0.0
          %3588 = vmatpush1.msra.mxu0 0.0
          %3589 = vmatprep.subr.mxu0 0.0
          %3590 = vmatpush1.msra.mxu0 0.0
          %3591 = vmatprep.subr.mxu0 0.0
          %3592 = vmatpush1.msra.mxu0 0.0
          %3593 = vmatprep.subr.mxu0 0.0
          %3594 = vmatpush1.msra.mxu0 0.0
          %3595 = vmatprep.subr.mxu0 0.0
          %3596 = vmatpush1.msra.mxu0 0.0
          %3597 = vmatprep.subr.mxu0 0.0
          %3598 = vmatpush1.msra.mxu0 0.0
          %3599 = vmatprep.subr.mxu0 0.0
          %3600 = vmatpush1.msra.mxu0 0.0
          %3601 = vmatprep.subr.mxu0 0.0
          %3602 = vmatpush1.msra.mxu0 0.0
          %3603 = vmatprep.subr.mxu0 0.0
          %3604 = vmatpush1.msra.mxu0 0.0
          %3605 = vmatprep.subr.mxu0 0.0
          %3606 = vmatpush1.msra.mxu0 0.0
          %3607 = vmatprep.subr.mxu0 0.0
          %3608 = vmatpush1.msra.mxu0 0.0
          %3609 = vmatprep.subr.mxu0 0.0
          %3610 = vmatpush1.msra.mxu0 0.0
          %3611 = vmatprep.subr.mxu0 0.0
          %3612 = vmatpush1.msra.mxu0 0.0
          %3613 = vmatprep.subr.mxu0 0.0
          %3614 = vmatpush1.msra.mxu0 0.0
          %3615 = vmatprep.subr.mxu0 0.0
          %3616 = vmatpush1.msra.mxu0 0.0
          %3617 = vmatprep.subr.mxu0 0.0
          %3618 = vmatpush1.msra.mxu0 0.0
          %3619 = vmatprep.subr.mxu0 0.0
          %3620 = vmatpush1.msra.mxu0 0.0
          %3621 = vmatprep.subr.mxu0 0.0
          %3622 = vmatpush1.msra.mxu0 0.0
          %3623 = vmatprep.subr.mxu0 0.0
          %3624 = vmatpush1.msra.mxu0 0.0
          %3625 = vmatprep.subr.mxu0 0.0
          %3626 = vmatpush1.msra.mxu0 0.0
          %3627 = vmatprep.subr.mxu0 0.0
          %3628 = vmatpush1.msra.mxu0 0.0
          %3629 = vmatprep.subr.mxu0 0.0
          %3630 = vmatpush1.msra.mxu0 0.0
          %3631 = vmatprep.subr.mxu0 0.0
          %3632 = vmatpush1.msra.mxu0 0.0
          %3633 = vmatprep.subr.mxu0 0.0
          %3634 = vmatpush1.msra.mxu0 0.0
          %3635 = vmatprep.subr.mxu0 0.0
          %3636 = vmatpush1.msra.mxu0 0.0
          %3637 = vmatprep.mubr.f32.mxu0 0.0
          %3638 = vmatmul.mubr.f32.gmra.mrb[0].mxu0 %v3571
          %v3639 = vpop.f32.mrb[0].mxu0
          %v3640 = vadd.f32 %v3569, %v3639
          %v3641 = vpop.f32.mrb[0].mxu0
          %3642 = vdwg.mxu0
          %vm3643 = vcmask 8192
          %v3644 = vsel %vm3643, %v3640, -inf
          %3645 = vmax.xlane.f32.xlu0 %v3644
          %v3646 = vpop.xlane.xlu0 %3645
          %v3647 = vsub.f32 %v3640, %v3646
          %v3648 = vmul.f32 %v3647, 1.442695
          %v3649 = vpow.pop %v3648
          %v3650 = vsel %vm3643, %v3649, 0.0
          %3651 = vadd.xlane.f32.xlu0 %v3650
          %v3652 = vpop.xlane.xlu0 %3651
          %v3653 = vrcp.pop %v3652
          %v3654 = vmul.f32 1.0, %v3653
          %v3655 = vmul.f32 %v3649, %v3654
          %v3656 = vlaneseq
          %v3657 = vand.u32 %v3656, 127
          %vm3658 = vcmp.eq.f32.partialorder %v3640, %v3646
          %v3659 = vsel %vm3658, %v3657, 2
          %v3660 = vsel %vm3643, %v3659, 2147483647
          %v3661 = vand.u32 %v3660, 65535
          %v3662 = vshra.s32 %v3660, 16
          %v3663 = vcvt.s32.f32 %v3661
          %v3664 = vcvt.s32.f32 %v3662
          %3665 = vmin.xlane.f32.xlu0 %v3664
          %v3666 = vpop.xlane.xlu0 %3665
          %vm3667 = vcmp.eq.f32.partialorder %v3664, %v3666
          %v3668 = vsel %vm3667, %v3663, inf
          %3669 = vmin.xlane.f32.xlu0 %v3668
          %v3670 = vpop.xlane.xlu0 %3669
          %v3671 = vcvt.f32.s32 %v3670
          %v3672 = vcvt.f32.s32 %v3666
          %v3673 = vshll.u32 %v3672, 16
          %v3674 = vadd.s32 %v3673, %v3671
          %v3675 = vcvt.s32.f32 %v3674
          %3677 = vrot.lane.b32.xlu0 %v3655, 2
          %v3678 = vpop.permute.xlu0 %3677
          %vm3680 = vcmask 15360
          %v3681 = vsel %vm3680, %v3640, %v3678
          %vm3682 = vcmask 31744
          %v3683 = vsel %vm3682, %v3681, %v3675
          %vm3684 = vcmask 39936
          %v3685 = vsel %vm3684, %v3683, 0.0
          %3686 = vst [vmem:[%s356] sm:$0x1] %v3685
        $region64: #{tpu_custom_call.1} parent=55 // pred_fallthru
          _
        %s3687 = sand.u32 %s248, 1
        %s3688 = scalar_lea.sflag [#allocation9], %s3687
        %s3689 = sand.u32 %s248, 1
        %s3690 = scalar_lea.vmem [#allocation8], %s3689
        // Predicated region
        $region65: #{tpu_custom_call.1} parent=55 // pred_check
          %p3691 = pneg %p258
        $region66: #{tpu_custom_call.1} parent=55 // pred_check_branch
          %3693 = sbr.rel (%p3691) target = $region68
        $region67: #{tpu_custom_call.1} parent=55 // pred_region
          %s3695 = ssub.s32 16, 16
          %3696 = vsyncadd %s3688, %s3695
          %s3697 = smul.addr %s36, 16
          %s3698 = scalar_lea.hbm %s10, %s3697
          %s3700 = sshll.u32 %s3690, 4
          %s3701 = int_to_ptr.vmem [resolvable:$true] %s3700
          %3703 = dma.vmem_to_hbm [thread:$0]  %s3701, 16, %s3698, %s3688
        $region68: #{tpu_custom_call.1} parent=55 // pred_fallthru
          _
      $region56: #{tpu_custom_call.1} parent=5 // pred_fallthru
        _
      %p3704 = scmp.le.s32.totalorder 2, %s27
      // Predicated region
      $region69: #{tpu_custom_call.1} parent=5 // pred_check
        %p3705 = pneg %p3704
      $region70: #{tpu_custom_call.1} parent=5 // pred_check_branch
        %3707 = sbr.rel (%p3705) target = $region72
      $region71: #{tpu_custom_call.1} parent=5 // pred_region
        %s3708 = ssub.s32 %s27, 2
        // Predicated region
        $region73: #{tpu_custom_call.1} parent=71 // pred_check
          %p3709 = pneg %p264
        $region74: #{tpu_custom_call.1} parent=71 // pred_check_branch
          %3711 = sbr.rel (%p3709) target = $region76
        $region75: #{tpu_custom_call.1} parent=71 // pred_region
          %s3712 = sand.u32 %s249, 1
          %s3713 = scalar_lea.sflag [#allocation9], %s3712
          %s3714 = sand.u32 %s249, 1
          %s3715 = scalar_lea.vmem [#allocation8], %s3714
          %3716 = dma.done %s3713, 16
        $region76: #{tpu_custom_call.1} parent=71 // pred_fallthru
          _
      $region72: #{tpu_custom_call.1} parent=5 // pred_fallthru
        _
    $region6: #{tpu_custom_call.1} parent=1 // loop_footer
      %s31 = sadd.s32 1, %s27
    $region7: #{tpu_custom_call.1} parent=1 // loop_footer_branch
      %26 = sbr.rel target = $region3
    $region8: #{tpu_custom_call.1} parent=1 // loop_exit
      _
    %3717 = vsyncpa [#allocation9], 1
    %s3718 = scalar_lea.sflag [#allocation9], 1
    %3719 = vsyncpa %s3718, 1

</llo_original>
